<compile_context>
chip_gen: v7x
topology: tpu7x:2x2x1
jax: 0.10.0
libtpu: 0.0.40
codegen_flags: <defaults>
</compile_context>

<pallas_src>
import math
from functools import partial

import jax
import jax.numpy as jnp
from jax.experimental import pallas as pl
from jax.experimental.pallas import tpu as pltpu

# ----- module hyper-parameters (small-shape instantiation of the PyTorch module) -----
INPUT_DIM = 1
HID_DIM = 32          # hid_dim (chosen so head_dim = 8; module default was 4)
N_LAYERS = 3
N_HEADS = 4
HEAD_DIM = HID_DIM // N_HEADS
PF_DIM = 48           # dim_feedforward
SEQ_LENGTH = 101      # positional-embedding table size (we use a shorter sequence)
LN_EPS = 1e-5
EMB_SCALE = math.sqrt(HID_DIM)          # self.scale = sqrt(hid_dim)  (folded into tok weights)
ATTN_SCALE = 1.0 / math.sqrt(HEAD_DIM)  # MHA q scaling               (folded into q weights)

_VMEM = pl.BlockSpec(memory_space=pltpu.MemorySpace.VMEM)


# ----------------------------- in-kernel math helpers -----------------------------
def _erf(x):
    # Abramowitz & Stegun 7.1.26, |err| < 1.5e-7 (float32 precision); exp + approx-recip on EUP.
    a1, a2, a3, a4, a5 = 0.254829592, -0.284496736, 1.421413741, -1.453152027, 1.061405429
    p = 0.3275911
    sgn = jnp.where(x >= 0.0, 1.0, -1.0)
    ax = jnp.abs(x)
    t = pl.reciprocal(1.0 + p * ax, approx=True)   # EUP, not a VALU divide
    poly = ((((a5 * t + a4) * t + a3) * t + a2) * t + a1) * t
    return sgn * (1.0 - poly * jnp.exp(-ax * ax))


def _gelu(x):
    # exact (erf-based) GELU, matching torch.nn.functional.gelu(approximate='none')
    return 0.5 * x * (1.0 + _erf(x * 0.7071067811865476))


def _layer_norm(x, w, b):
    mu = jnp.mean(x, axis=-1, keepdims=True)
    xc = x - mu
    var = jnp.mean(xc * xc, axis=-1, keepdims=True)
    return xc * jax.lax.rsqrt(var + LN_EPS) * w + b


def _encoder_layer(x, attn_scr, wqkv, bqkv, wo, bo, ln1w, ln1b, w1, b1, w2, b2,
                   ln2w, ln2b, batch, seq):
    """One post-norm nn.TransformerEncoderLayer on a (B*S, HID) activation slab."""
    D, Dh, H = HID_DIM, HEAD_DIM, N_HEADS
    BS = batch * seq

    # ---- fused QKV projection (q columns already pre-scaled by 1/sqrt(head_dim)) ----
    qkv = jnp.dot(x, wqkv, preferred_element_type=jnp.float32) + bqkv     # (BS, 3*D)
    q3 = qkv[:, 0 * D:1 * D].reshape(batch, seq, D)                        # (B, S, D)
    k3 = qkv[:, 1 * D:2 * D].reshape(batch, seq, D)
    v3 = qkv[:, 2 * D:3 * D].reshape(batch, seq, D)

    # ---- attention: batched over B, per-head unrolled (H=4); results stored to VMEM scratch ----
    for h in range(H):
        c0, c1 = h * Dh, (h + 1) * Dh
        s = jnp.einsum('bqd,bkd->bqk', q3[:, :, c0:c1], k3[:, :, c0:c1],
                       preferred_element_type=jnp.float32)                # (B, S, S)
        s = s - jnp.max(s, axis=-1, keepdims=True)
        e = jnp.exp(s)
        p = e * pl.reciprocal(jnp.sum(e, axis=-1, keepdims=True), approx=True)
        attn_scr[:, :, c0:c1] = jnp.einsum('bqk,bkd->bqd', p, v3[:, :, c0:c1],
                                           preferred_element_type=jnp.float32)

    # ---- fused output projection ----
    attn = attn_scr[...].reshape(BS, D)
    attn = jnp.dot(attn, wo, preferred_element_type=jnp.float32) + bo

    # ---- residual + post-LayerNorm 1 (dropout = identity) ----
    x = _layer_norm(x + attn, ln1w, ln1b)

    # ---- feed-forward: linear1 -> exact GELU -> linear2, residual + post-LayerNorm 2 ----
    h1 = _gelu(jnp.dot(x, w1, preferred_element_type=jnp.float32) + b1)
    ff = jnp.dot(h1, w2, preferred_element_type=jnp.float32) + b2
    return _layer_norm(x + ff, ln2w, ln2b)


# ----------------------------------- fused kernel -----------------------------------
def _encoder_kernel(src_ref, tokw_ref, tokb_ref, pos_ref,
                    wqkv_ref, bqkv_ref, wo_ref, bo_ref,
                    ln1w_ref, ln1b_ref, w1_ref, b1_ref, w2_ref, b2_ref,
                    ln2w_ref, ln2b_ref,
                    out_ref, attn_scr, *, batch, seq):
    """Embedding + N_LAYERS encoder layers; activations resident in VMEM throughout."""
    # --- embedding: (x @ W^T + b) * sqrt(hid) + pos_embedding ---
    # sqrt(hid) is pre-folded into tokw/tokb; pos slab is precomputed (BS, D) outside the kernel.
    x = src_ref[...] * tokw_ref[...] + tokb_ref[...] + pos_ref[...]       # (BS, D)
    # nn.Dropout is identity at inference.

    # --- encoder layers (static unroll; weights indexed from layer-stacked slabs) ---
    for l in range(N_LAYERS):
        x = _encoder_layer(x, attn_scr,
                           wqkv_ref[l], bqkv_ref[l], wo_ref[l], bo_ref[l],
                           ln1w_ref[l], ln1b_ref[l],
                           w1_ref[l], b1_ref[l], w2_ref[l], b2_ref[l],
                           ln2w_ref[l], ln2b_ref[l],
                           batch, seq)

    out_ref[...] = x


# ------------------------------- parameters (synthetic) -------------------------------
def init_params(key):
    """Parameters in PyTorch (out, in) layout."""
    keys = jax.random.split(key, 2 + N_LAYERS)

    def nrm(k, shape, std=0.05):
        return std * jax.random.normal(k, shape, dtype=jnp.float32)

    ktw, ktb = jax.random.split(keys[0])
    params = {
        'tok_w': nrm(ktw, (HID_DIM, INPUT_DIM)),       # torch Linear weight layout (out, in)
        'tok_b': nrm(ktb, (HID_DIM,)),
        'pos_emb': nrm(keys[1], (SEQ_LENGTH, HID_DIM)),
        'layers': [],
    }
    for i in range(N_LAYERS):
        ks = jax.random.split(keys[2 + i], 8)
        params['layers'].append({
            'in_proj_w': nrm(ks[0], (3 * HID_DIM, HID_DIM)),
            'in_proj_b': nrm(ks[1], (3 * HID_DIM,)),
            'out_proj_w': nrm(ks[2], (HID_DIM, HID_DIM)),
            'out_proj_b': nrm(ks[3], (HID_DIM,)),
            'lin1_w': nrm(ks[4], (PF_DIM, HID_DIM)),
            'lin1_b': nrm(ks[5], (PF_DIM,)),
            'lin2_w': nrm(ks[6], (HID_DIM, PF_DIM)),
            'lin2_b': nrm(ks[7], (HID_DIM,)),
            'ln1_w': jnp.ones((HID_DIM,), jnp.float32),
            'ln1_b': jnp.zeros((HID_DIM,), jnp.float32),
            'ln2_w': jnp.ones((HID_DIM,), jnp.float32),
            'ln2_b': jnp.zeros((HID_DIM,), jnp.float32),
        })
    return params


def pack_params(params):
    """One-time conversion of torch-layout weights into kernel-layout, layer-stacked slabs.
    All constant scales are folded here (free: packing cost, not per-call)."""
    f32 = jnp.float32
    packed = {
        # sqrt(hid) folded into BOTH weight and bias: (x@W^T + b)*s == x@(W^T*s) + b*s
        'tok_wT': (params['tok_w'].T * EMB_SCALE).astype(f32),            # (INPUT_DIM, HID)
        'tok_b': (params['tok_b'] * EMB_SCALE).reshape(1, HID_DIM).astype(f32),
        'pos_emb': params['pos_emb'].astype(f32),                         # (SEQ_LENGTH, HID)
    }
    # 1/sqrt(head_dim) folded into the q third of the fused QKV weight + bias.
    qkv_scale = jnp.concatenate(
        [jnp.full((HID_DIM,), ATTN_SCALE, f32), jnp.ones((2 * HID_DIM,), f32)]
    ).reshape(1, 3 * HID_DIM)

    w_qkv, b_qkv, w_o, b_o = [], [], [], []
    ln1w, ln1b, w1, b1, w2, b2, ln2w, ln2b = [], [], [], [], [], [], [], []
    for lyr in params['layers']:
        w_qkv.append(lyr['in_proj_w'].T * qkv_scale)                      # (HID, 3*HID): [q|k|v]
        b_qkv.append(lyr['in_proj_b'].reshape(1, 3 * HID_DIM) * qkv_scale)
        w_o.append(lyr['out_proj_w'].T)                                   # (HID, HID)
        b_o.append(lyr['out_proj_b'].reshape(1, HID_DIM))
        ln1w.append(lyr['ln1_w'].reshape(1, HID_DIM))
        ln1b.append(lyr['ln1_b'].reshape(1, HID_DIM))
        w1.append(lyr['lin1_w'].T)                                        # (HID, PF)
        b1.append(lyr['lin1_b'].reshape(1, PF_DIM))
        w2.append(lyr['lin2_w'].T)                                        # (PF, HID)
        b2.append(lyr['lin2_b'].reshape(1, HID_DIM))
        ln2w.append(lyr['ln2_w'].reshape(1, HID_DIM))
        ln2b.append(lyr['ln2_b'].reshape(1, HID_DIM))
    stack = lambda xs: jnp.stack([x.astype(f32) for x in xs], axis=0)     # (L, ...)
    packed.update({
        'w_qkv': stack(w_qkv), 'b_qkv': stack(b_qkv),
        'w_o': stack(w_o), 'b_o': stack(b_o),
        'ln1_w': stack(ln1w), 'ln1_b': stack(ln1b),
        'w1': stack(w1), 'b1': stack(b1),
        'w2': stack(w2), 'b2': stack(b2),
        'ln2_w': stack(ln2w), 'ln2_b': stack(ln2b),
    })
    return packed


# ----------------------------------- forward -----------------------------------
def transformer_encoder_forward(src, packed):
    B, S, in_dim = src.shape
    assert in_dim == INPUT_DIM and S <= SEQ_LENGTH
    BS = B * S
    f32 = jnp.float32

    src2 = src.reshape(BS, INPUT_DIM).astype(f32)
    # positional slab built OUTSIDE the kernel (batch-major rows, matching the (B,S)->(BS) reshape)
    pos_bs = jnp.tile(packed['pos_emb'][:S], (B, 1))                      # (BS, HID)

    args = (
        src2, packed['tok_wT'], packed['tok_b'], pos_bs,
        packed['w_qkv'], packed['b_qkv'], packed['w_o'], packed['b_o'],
        packed['ln1_w'], packed['ln1_b'],
        packed['w1'], packed['b1'], packed['w2'], packed['b2'],
        packed['ln2_w'], packed['ln2_b'],
    )

    out2 = pl.pallas_call(
        partial(_encoder_kernel, batch=B, seq=S),
        out_shape=jax.ShapeDtypeStruct((BS, HID_DIM), f32),
        in_specs=[_VMEM] * len(args),
        out_specs=_VMEM,
        scratch_shapes=[pltpu.VMEM((B, S, HID_DIM), f32)],   # per-head attention output slab
    )(*args)
    return out2.reshape(B, S, HID_DIM)


if __name__ == "__main__":
    key = jax.random.PRNGKey(0)
    kp, kx = jax.random.split(key)
    params = init_params(kp)
    packed = pack_params(params)       # weight packing + scale folding done once, not per forward

    B, S = 2, 8
    src = jax.random.normal(kx, (B, S, INPUT_DIM), dtype=jnp.float32)

    out = transformer_encoder_forward(src, packed)
    out = jax.block_until_ready(out)

    assert out.shape == (B, S, HID_DIM), out.shape
    assert bool(jnp.all(jnp.isfinite(out)))
    print("KERNEL_OK")
</pallas_src>

<mosaic_0001>
module attributes {stable_mosaic.version = 11 : i64} {
  func.func @_encoder_kernel(%arg0: memref<16x1xf32, #tpu.memory_space<vmem>>, %arg1: memref<1x32xf32, #tpu.memory_space<vmem>>, %arg2: memref<1x32xf32, #tpu.memory_space<vmem>>, %arg3: memref<16x32xf32, #tpu.memory_space<vmem>>, %arg4: memref<3x32x96xf32, #tpu.memory_space<vmem>>, %arg5: memref<3x1x96xf32, #tpu.memory_space<vmem>>, %arg6: memref<3x32x32xf32, #tpu.memory_space<vmem>>, %arg7: memref<3x1x32xf32, #tpu.memory_space<vmem>>, %arg8: memref<3x1x32xf32, #tpu.memory_space<vmem>>, %arg9: memref<3x1x32xf32, #tpu.memory_space<vmem>>, %arg10: memref<3x32x48xf32, #tpu.memory_space<vmem>>, %arg11: memref<3x1x48xf32, #tpu.memory_space<vmem>>, %arg12: memref<3x48x32xf32, #tpu.memory_space<vmem>>, %arg13: memref<3x1x32xf32, #tpu.memory_space<vmem>>, %arg14: memref<3x1x32xf32, #tpu.memory_space<vmem>>, %arg15: memref<3x1x32xf32, #tpu.memory_space<vmem>>, %arg16: memref<16x32xf32, #tpu.memory_space<vmem>>, %arg17: memref<2x8x32xf32, #tpu.memory_space<vmem>>) attributes {dimension_semantics = [], scalar_prefetch = 0 : i64, scratch_operands = 1 : i64, tpu.core_type = #tpu.core_type<tc>} {
    %c0 = arith.constant 0 : index
    %c0_0 = arith.constant 0 : index
    %0 = vector.load %arg0[%c0, %c0_0] : memref<16x1xf32, #tpu.memory_space<vmem>>, vector<16x1xf32>
    %c0_1 = arith.constant 0 : index
    %c0_2 = arith.constant 0 : index
    %1 = vector.load %arg1[%c0_1, %c0_2] : memref<1x32xf32, #tpu.memory_space<vmem>>, vector<1x32xf32>
    %2 = vector.broadcast %0 : vector<16x1xf32> to vector<16x32xf32>
    %3 = vector.broadcast %1 : vector<1x32xf32> to vector<16x32xf32>
    %4 = arith.mulf %2, %3 : vector<16x32xf32>
    %c0_3 = arith.constant 0 : index
    %c0_4 = arith.constant 0 : index
    %5 = vector.load %arg2[%c0_3, %c0_4] : memref<1x32xf32, #tpu.memory_space<vmem>>, vector<1x32xf32>
    %6 = vector.broadcast %5 : vector<1x32xf32> to vector<16x32xf32>
    %7 = arith.addf %4, %6 : vector<16x32xf32>
    %c0_5 = arith.constant 0 : index
    %c0_6 = arith.constant 0 : index
    %8 = vector.load %arg3[%c0_5, %c0_6] : memref<16x32xf32, #tpu.memory_space<vmem>>, vector<16x32xf32>
    %9 = arith.addf %7, %8 : vector<16x32xf32>
    %c0_7 = arith.constant 0 : index
    %c0_8 = arith.constant 0 : index
    %c0_9 = arith.constant 0 : index
    %10 = vector.load %arg4[%c0_7, %c0_8, %c0_9] : memref<3x32x96xf32, #tpu.memory_space<vmem>>, vector<1x32x96xf32>
    %11 = vector.shape_cast %10 : vector<1x32x96xf32> to vector<32x96xf32>
    %c0_10 = arith.constant 0 : index
    %c0_11 = arith.constant 0 : index
    %c0_12 = arith.constant 0 : index
    %12 = vector.load %arg5[%c0_10, %c0_11, %c0_12] : memref<3x1x96xf32, #tpu.memory_space<vmem>>, vector<1x1x96xf32>
    %13 = vector.shape_cast %12 : vector<1x1x96xf32> to vector<1x96xf32>
    %c0_13 = arith.constant 0 : index
    %c0_14 = arith.constant 0 : index
    %c0_15 = arith.constant 0 : index
    %14 = vector.load %arg6[%c0_13, %c0_14, %c0_15] : memref<3x32x32xf32, #tpu.memory_space<vmem>>, vector<1x32x32xf32>
    %15 = vector.shape_cast %14 : vector<1x32x32xf32> to vector<32x32xf32>
    %c0_16 = arith.constant 0 : index
    %c0_17 = arith.constant 0 : index
    %c0_18 = arith.constant 0 : index
    %16 = vector.load %arg7[%c0_16, %c0_17, %c0_18] : memref<3x1x32xf32, #tpu.memory_space<vmem>>, vector<1x1x32xf32>
    %17 = vector.shape_cast %16 : vector<1x1x32xf32> to vector<1x32xf32>
    %c0_19 = arith.constant 0 : index
    %c0_20 = arith.constant 0 : index
    %c0_21 = arith.constant 0 : index
    %18 = vector.load %arg8[%c0_19, %c0_20, %c0_21] : memref<3x1x32xf32, #tpu.memory_space<vmem>>, vector<1x1x32xf32>
    %19 = vector.shape_cast %18 : vector<1x1x32xf32> to vector<1x32xf32>
    %c0_22 = arith.constant 0 : index
    %c0_23 = arith.constant 0 : index
    %c0_24 = arith.constant 0 : index
    %20 = vector.load %arg9[%c0_22, %c0_23, %c0_24] : memref<3x1x32xf32, #tpu.memory_space<vmem>>, vector<1x1x32xf32>
    %21 = vector.shape_cast %20 : vector<1x1x32xf32> to vector<1x32xf32>
    %c0_25 = arith.constant 0 : index
    %c0_26 = arith.constant 0 : index
    %c0_27 = arith.constant 0 : index
    %22 = vector.load %arg10[%c0_25, %c0_26, %c0_27] : memref<3x32x48xf32, #tpu.memory_space<vmem>>, vector<1x32x48xf32>
    %23 = vector.shape_cast %22 : vector<1x32x48xf32> to vector<32x48xf32>
    %c0_28 = arith.constant 0 : index
    %c0_29 = arith.constant 0 : index
    %c0_30 = arith.constant 0 : index
    %24 = vector.load %arg11[%c0_28, %c0_29, %c0_30] : memref<3x1x48xf32, #tpu.memory_space<vmem>>, vector<1x1x48xf32>
    %25 = vector.shape_cast %24 : vector<1x1x48xf32> to vector<1x48xf32>
    %c0_31 = arith.constant 0 : index
    %c0_32 = arith.constant 0 : index
    %c0_33 = arith.constant 0 : index
    %26 = vector.load %arg12[%c0_31, %c0_32, %c0_33] : memref<3x48x32xf32, #tpu.memory_space<vmem>>, vector<1x48x32xf32>
    %27 = vector.shape_cast %26 : vector<1x48x32xf32> to vector<48x32xf32>
    %c0_34 = arith.constant 0 : index
    %c0_35 = arith.constant 0 : index
    %c0_36 = arith.constant 0 : index
    %28 = vector.load %arg13[%c0_34, %c0_35, %c0_36] : memref<3x1x32xf32, #tpu.memory_space<vmem>>, vector<1x1x32xf32>
    %29 = vector.shape_cast %28 : vector<1x1x32xf32> to vector<1x32xf32>
    %c0_37 = arith.constant 0 : index
    %c0_38 = arith.constant 0 : index
    %c0_39 = arith.constant 0 : index
    %30 = vector.load %arg14[%c0_37, %c0_38, %c0_39] : memref<3x1x32xf32, #tpu.memory_space<vmem>>, vector<1x1x32xf32>
    %31 = vector.shape_cast %30 : vector<1x1x32xf32> to vector<1x32xf32>
    %c0_40 = arith.constant 0 : index
    %c0_41 = arith.constant 0 : index
    %c0_42 = arith.constant 0 : index
    %32 = vector.load %arg15[%c0_40, %c0_41, %c0_42] : memref<3x1x32xf32, #tpu.memory_space<vmem>>, vector<1x1x32xf32>
    %33 = vector.shape_cast %32 : vector<1x1x32xf32> to vector<1x32xf32>
    %cst = arith.constant dense<0.000000e+00> : vector<16x96xf32>
    %34 = tpu.matmul %9, %11, %cst {dimension_numbers = #tpu.dot_dimension_numbers<[1], [0], [0], [1], [0, 0, 1, 1], [], []>} : vector<16x32xf32>, vector<32x96xf32>, vector<16x96xf32> -> vector<16x96xf32>
    %35 = vector.broadcast %13 : vector<1x96xf32> to vector<16x96xf32>
    %36 = arith.addf %34, %35 : vector<16x96xf32>
    %37 = vector.extract_strided_slice %36 {offsets = [0, 0], sizes = [16, 32], strides = [1, 1]} : vector<16x96xf32> to vector<16x32xf32>
    %38 = vector.shape_cast %37 : vector<16x32xf32> to vector<2x8x32xf32>
    %39 = vector.extract_strided_slice %36 {offsets = [0, 32], sizes = [16, 32], strides = [1, 1]} : vector<16x96xf32> to vector<16x32xf32>
    %40 = vector.shape_cast %39 : vector<16x32xf32> to vector<2x8x32xf32>
    %41 = vector.extract_strided_slice %36 {offsets = [0, 64], sizes = [16, 32], strides = [1, 1]} : vector<16x96xf32> to vector<16x32xf32>
    %42 = vector.shape_cast %41 : vector<16x32xf32> to vector<2x8x32xf32>
    %43 = vector.extract_strided_slice %38 {offsets = [0, 0, 0], sizes = [2, 8, 8], strides = [1, 1, 1]} : vector<2x8x32xf32> to vector<2x8x8xf32>
    %44 = vector.extract_strided_slice %40 {offsets = [0, 0, 0], sizes = [2, 8, 8], strides = [1, 1, 1]} : vector<2x8x32xf32> to vector<2x8x8xf32>
    "tpu.trace_start"() <{level = 10 : i32, message = "bqd,bkd->bqk"}> : () -> ()
    %cst_43 = arith.constant dense<0.000000e+00> : vector<2x8x8xf32>
    %45 = tpu.matmul %43, %44, %cst_43 {dimension_numbers = #tpu.dot_dimension_numbers<[2], [2], [1], [1], [0, 0, 0, 1, 1, 1], [0], [0]>} : vector<2x8x8xf32>, vector<2x8x8xf32>, vector<2x8x8xf32> -> vector<2x8x8xf32>
    "tpu.trace_stop"() : () -> ()
    %cst_44 = arith.constant dense<0xFF800000> : vector<2x8xf32>
    %46 = vector.multi_reduction <maximumf>, %45, %cst_44 [2] : vector<2x8x8xf32> to vector<2x8xf32>
    %47 = vector.shape_cast %46 : vector<2x8xf32> to vector<2x8x1xf32>
    %48 = vector.broadcast %47 : vector<2x8x1xf32> to vector<2x8x8xf32>
    %49 = arith.subf %45, %48 : vector<2x8x8xf32>
    %50 = math.exp %49 : vector<2x8x8xf32>
    %cst_45 = arith.constant dense<0.000000e+00> : vector<2x8xf32>
    %51 = vector.multi_reduction <add>, %50, %cst_45 [2] : vector<2x8x8xf32> to vector<2x8xf32>
    %52 = vector.shape_cast %51 : vector<2x8xf32> to vector<2x8x1xf32>
    %53 = tpu.reciprocal %52 {approx = true} : vector<2x8x1xf32> -> vector<2x8x1xf32>
    %54 = vector.broadcast %53 : vector<2x8x1xf32> to vector<2x8x8xf32>
    %55 = arith.mulf %50, %54 : vector<2x8x8xf32>
    %56 = vector.extract_strided_slice %42 {offsets = [0, 0, 0], sizes = [2, 8, 8], strides = [1, 1, 1]} : vector<2x8x32xf32> to vector<2x8x8xf32>
    "tpu.trace_start"() <{level = 10 : i32, message = "bqk,bkd->bqd"}> : () -> ()
    %cst_46 = arith.constant dense<0.000000e+00> : vector<2x8x8xf32>
    %57 = tpu.matmul %55, %56, %cst_46 {dimension_numbers = #tpu.dot_dimension_numbers<[2], [1], [1], [2], [0, 0, 0, 1, 1, 2], [0], [0]>} : vector<2x8x8xf32>, vector<2x8x8xf32>, vector<2x8x8xf32> -> vector<2x8x8xf32>
    "tpu.trace_stop"() : () -> ()
    %c0_47 = arith.constant 0 : index
    %c0_48 = arith.constant 0 : index
    %c0_49 = arith.constant 0 : index
    %58 = vector.load %arg17[%c0_47, %c0_48, %c0_49] : memref<2x8x32xf32, #tpu.memory_space<vmem>>, vector<2x8x8xf32>
    tpu.vector_store %arg17[%c0_47, %c0_48, %c0_49], %57 {strides = array<i32>} : memref<2x8x32xf32, #tpu.memory_space<vmem>>, vector<2x8x8xf32>,
    %59 = vector.extract_strided_slice %38 {offsets = [0, 0, 8], sizes = [2, 8, 8], strides = [1, 1, 1]} : vector<2x8x32xf32> to vector<2x8x8xf32>
    %60 = vector.extract_strided_slice %40 {offsets = [0, 0, 8], sizes = [2, 8, 8], strides = [1, 1, 1]} : vector<2x8x32xf32> to vector<2x8x8xf32>
    "tpu.trace_start"() <{level = 10 : i32, message = "bqd,bkd->bqk"}> : () -> ()
    %cst_50 = arith.constant dense<0.000000e+00> : vector<2x8x8xf32>
    %61 = tpu.matmul %59, %60, %cst_50 {dimension_numbers = #tpu.dot_dimension_numbers<[2], [2], [1], [1], [0, 0, 0, 1, 1, 1], [0], [0]>} : vector<2x8x8xf32>, vector<2x8x8xf32>, vector<2x8x8xf32> -> vector<2x8x8xf32>
    "tpu.trace_stop"() : () -> ()
    %cst_51 = arith.constant dense<0xFF800000> : vector<2x8xf32>
    %62 = vector.multi_reduction <maximumf>, %61, %cst_51 [2] : vector<2x8x8xf32> to vector<2x8xf32>
    %63 = vector.shape_cast %62 : vector<2x8xf32> to vector<2x8x1xf32>
    %64 = vector.broadcast %63 : vector<2x8x1xf32> to vector<2x8x8xf32>
    %65 = arith.subf %61, %64 : vector<2x8x8xf32>
    %66 = math.exp %65 : vector<2x8x8xf32>
    %cst_52 = arith.constant dense<0.000000e+00> : vector<2x8xf32>
    %67 = vector.multi_reduction <add>, %66, %cst_52 [2] : vector<2x8x8xf32> to vector<2x8xf32>
    %68 = vector.shape_cast %67 : vector<2x8xf32> to vector<2x8x1xf32>
    %69 = tpu.reciprocal %68 {approx = true} : vector<2x8x1xf32> -> vector<2x8x1xf32>
    %70 = vector.broadcast %69 : vector<2x8x1xf32> to vector<2x8x8xf32>
    %71 = arith.mulf %66, %70 : vector<2x8x8xf32>
    %72 = vector.extract_strided_slice %42 {offsets = [0, 0, 8], sizes = [2, 8, 8], strides = [1, 1, 1]} : vector<2x8x32xf32> to vector<2x8x8xf32>
    "tpu.trace_start"() <{level = 10 : i32, message = "bqk,bkd->bqd"}> : () -> ()
    %cst_53 = arith.constant dense<0.000000e+00> : vector<2x8x8xf32>
    %73 = tpu.matmul %71, %72, %cst_53 {dimension_numbers = #tpu.dot_dimension_numbers<[2], [1], [1], [2], [0, 0, 0, 1, 1, 2], [0], [0]>} : vector<2x8x8xf32>, vector<2x8x8xf32>, vector<2x8x8xf32> -> vector<2x8x8xf32>
    "tpu.trace_stop"() : () -> ()
    %c0_54 = arith.constant 0 : index
    %c0_55 = arith.constant 0 : index
    %c8 = arith.constant 8 : index
    %74 = vector.load %arg17[%c0_54, %c0_55, %c8] : memref<2x8x32xf32, #tpu.memory_space<vmem>>, vector<2x8x8xf32>
    tpu.vector_store %arg17[%c0_54, %c0_55, %c8], %73 {strides = array<i32>} : memref<2x8x32xf32, #tpu.memory_space<vmem>>, vector<2x8x8xf32>,
    %75 = vector.extract_strided_slice %38 {offsets = [0, 0, 16], sizes = [2, 8, 8], strides = [1, 1, 1]} : vector<2x8x32xf32> to vector<2x8x8xf32>
    %76 = vector.extract_strided_slice %40 {offsets = [0, 0, 16], sizes = [2, 8, 8], strides = [1, 1, 1]} : vector<2x8x32xf32> to vector<2x8x8xf32>
    "tpu.trace_start"() <{level = 10 : i32, message = "bqd,bkd->bqk"}> : () -> ()
    %cst_56 = arith.constant dense<0.000000e+00> : vector<2x8x8xf32>
    %77 = tpu.matmul %75, %76, %cst_56 {dimension_numbers = #tpu.dot_dimension_numbers<[2], [2], [1], [1], [0, 0, 0, 1, 1, 1], [0], [0]>} : vector<2x8x8xf32>, vector<2x8x8xf32>, vector<2x8x8xf32> -> vector<2x8x8xf32>
    "tpu.trace_stop"() : () -> ()
    %cst_57 = arith.constant dense<0xFF800000> : vector<2x8xf32>
    %78 = vector.multi_reduction <maximumf>, %77, %cst_57 [2] : vector<2x8x8xf32> to vector<2x8xf32>
    %79 = vector.shape_cast %78 : vector<2x8xf32> to vector<2x8x1xf32>
    %80 = vector.broadcast %79 : vector<2x8x1xf32> to vector<2x8x8xf32>
    %81 = arith.subf %77, %80 : vector<2x8x8xf32>
    %82 = math.exp %81 : vector<2x8x8xf32>
    %cst_58 = arith.constant dense<0.000000e+00> : vector<2x8xf32>
    %83 = vector.multi_reduction <add>, %82, %cst_58 [2] : vector<2x8x8xf32> to vector<2x8xf32>
    %84 = vector.shape_cast %83 : vector<2x8xf32> to vector<2x8x1xf32>
    %85 = tpu.reciprocal %84 {approx = true} : vector<2x8x1xf32> -> vector<2x8x1xf32>
    %86 = vector.broadcast %85 : vector<2x8x1xf32> to vector<2x8x8xf32>
    %87 = arith.mulf %82, %86 : vector<2x8x8xf32>
    %88 = vector.extract_strided_slice %42 {offsets = [0, 0, 16], sizes = [2, 8, 8], strides = [1, 1, 1]} : vector<2x8x32xf32> to vector<2x8x8xf32>
    "tpu.trace_start"() <{level = 10 : i32, message = "bqk,bkd->bqd"}> : () -> ()
    %cst_59 = arith.constant dense<0.000000e+00> : vector<2x8x8xf32>
    %89 = tpu.matmul %87, %88, %cst_59 {dimension_numbers = #tpu.dot_dimension_numbers<[2], [1], [1], [2], [0, 0, 0, 1, 1, 2], [0], [0]>} : vector<2x8x8xf32>, vector<2x8x8xf32>, vector<2x8x8xf32> -> vector<2x8x8xf32>
    "tpu.trace_stop"() : () -> ()
    %c0_60 = arith.constant 0 : index
    %c0_61 = arith.constant 0 : index
    %c16 = arith.constant 16 : index
    %90 = vector.load %arg17[%c0_60, %c0_61, %c16] : memref<2x8x32xf32, #tpu.memory_space<vmem>>, vector<2x8x8xf32>
    tpu.vector_store %arg17[%c0_60, %c0_61, %c16], %89 {strides = array<i32>} : memref<2x8x32xf32, #tpu.memory_space<vmem>>, vector<2x8x8xf32>,
    %91 = vector.extract_strided_slice %38 {offsets = [0, 0, 24], sizes = [2, 8, 8], strides = [1, 1, 1]} : vector<2x8x32xf32> to vector<2x8x8xf32>
    %92 = vector.extract_strided_slice %40 {offsets = [0, 0, 24], sizes = [2, 8, 8], strides = [1, 1, 1]} : vector<2x8x32xf32> to vector<2x8x8xf32>
    "tpu.trace_start"() <{level = 10 : i32, message = "bqd,bkd->bqk"}> : () -> ()
    %cst_62 = arith.constant dense<0.000000e+00> : vector<2x8x8xf32>
    %93 = tpu.matmul %91, %92, %cst_62 {dimension_numbers = #tpu.dot_dimension_numbers<[2], [2], [1], [1], [0, 0, 0, 1, 1, 1], [0], [0]>} : vector<2x8x8xf32>, vector<2x8x8xf32>, vector<2x8x8xf32> -> vector<2x8x8xf32>
    "tpu.trace_stop"() : () -> ()
    %cst_63 = arith.constant dense<0xFF800000> : vector<2x8xf32>
    %94 = vector.multi_reduction <maximumf>, %93, %cst_63 [2] : vector<2x8x8xf32> to vector<2x8xf32>
    %95 = vector.shape_cast %94 : vector<2x8xf32> to vector<2x8x1xf32>
    %96 = vector.broadcast %95 : vector<2x8x1xf32> to vector<2x8x8xf32>
    %97 = arith.subf %93, %96 : vector<2x8x8xf32>
    %98 = math.exp %97 : vector<2x8x8xf32>
    %cst_64 = arith.constant dense<0.000000e+00> : vector<2x8xf32>
    %99 = vector.multi_reduction <add>, %98, %cst_64 [2] : vector<2x8x8xf32> to vector<2x8xf32>
    %100 = vector.shape_cast %99 : vector<2x8xf32> to vector<2x8x1xf32>
    %101 = tpu.reciprocal %100 {approx = true} : vector<2x8x1xf32> -> vector<2x8x1xf32>
    %102 = vector.broadcast %101 : vector<2x8x1xf32> to vector<2x8x8xf32>
    %103 = arith.mulf %98, %102 : vector<2x8x8xf32>
    %104 = vector.extract_strided_slice %42 {offsets = [0, 0, 24], sizes = [2, 8, 8], strides = [1, 1, 1]} : vector<2x8x32xf32> to vector<2x8x8xf32>
    "tpu.trace_start"() <{level = 10 : i32, message = "bqk,bkd->bqd"}> : () -> ()
    %cst_65 = arith.constant dense<0.000000e+00> : vector<2x8x8xf32>
    %105 = tpu.matmul %103, %104, %cst_65 {dimension_numbers = #tpu.dot_dimension_numbers<[2], [1], [1], [2], [0, 0, 0, 1, 1, 2], [0], [0]>} : vector<2x8x8xf32>, vector<2x8x8xf32>, vector<2x8x8xf32> -> vector<2x8x8xf32>
    "tpu.trace_stop"() : () -> ()
    %c0_66 = arith.constant 0 : index
    %c0_67 = arith.constant 0 : index
    %c24 = arith.constant 24 : index
    %106 = vector.load %arg17[%c0_66, %c0_67, %c24] : memref<2x8x32xf32, #tpu.memory_space<vmem>>, vector<2x8x8xf32>
    tpu.vector_store %arg17[%c0_66, %c0_67, %c24], %105 {strides = array<i32>} : memref<2x8x32xf32, #tpu.memory_space<vmem>>, vector<2x8x8xf32>,
    %c0_68 = arith.constant 0 : index
    %c0_69 = arith.constant 0 : index
    %c0_70 = arith.constant 0 : index
    %107 = vector.load %arg17[%c0_68, %c0_69, %c0_70] : memref<2x8x32xf32, #tpu.memory_space<vmem>>, vector<2x8x32xf32>
    %108 = vector.shape_cast %107 : vector<2x8x32xf32> to vector<16x32xf32>
    %cst_71 = arith.constant dense<0.000000e+00> : vector<16x32xf32>
    %109 = tpu.matmul %108, %15, %cst_71 {dimension_numbers = #tpu.dot_dimension_numbers<[1], [0], [0], [1], [0, 0, 1, 1], [], []>} : vector<16x32xf32>, vector<32x32xf32>, vector<16x32xf32> -> vector<16x32xf32>
    %110 = vector.broadcast %17 : vector<1x32xf32> to vector<16x32xf32>
    %111 = arith.addf %109, %110 : vector<16x32xf32>
    %112 = arith.addf %9, %111 : vector<16x32xf32>
    %cst_72 = arith.constant dense<0.000000e+00> : vector<16xf32>
    %113 = vector.multi_reduction <add>, %112, %cst_72 [1] : vector<16x32xf32> to vector<16xf32>
    %114 = vector.shape_cast %113 : vector<16xf32> to vector<16x1xf32>
    %cst_73 = arith.constant 3.200000e+01 : f32
    %115 = vector.broadcast %cst_73 : f32 to vector<16x1xf32>
    %116 = arith.divf %114, %115 : vector<16x1xf32>
    %117 = vector.broadcast %116 : vector<16x1xf32> to vector<16x32xf32>
    %118 = arith.subf %112, %117 : vector<16x32xf32>
    %119 = arith.mulf %118, %118 : vector<16x32xf32>
    %cst_74 = arith.constant dense<0.000000e+00> : vector<16xf32>
    %120 = vector.multi_reduction <add>, %119, %cst_74 [1] : vector<16x32xf32> to vector<16xf32>
    %121 = vector.shape_cast %120 : vector<16xf32> to vector<16x1xf32>
    %cst_75 = arith.constant 3.200000e+01 : f32
    %122 = vector.broadcast %cst_75 : f32 to vector<16x1xf32>
    %123 = arith.divf %121, %122 : vector<16x1xf32>
    %cst_76 = arith.constant 9.99999974E-6 : f32
    %124 = vector.broadcast %cst_76 : f32 to vector<16x1xf32>
    %125 = arith.addf %123, %124 : vector<16x1xf32>
    %126 = math.rsqrt %125 : vector<16x1xf32>
    %127 = vector.broadcast %126 : vector<16x1xf32> to vector<16x32xf32>
    %128 = arith.mulf %118, %127 : vector<16x32xf32>
    %129 = vector.broadcast %19 : vector<1x32xf32> to vector<16x32xf32>
    %130 = arith.mulf %128, %129 : vector<16x32xf32>
    %131 = vector.broadcast %21 : vector<1x32xf32> to vector<16x32xf32>
    %132 = arith.addf %130, %131 : vector<16x32xf32>
    %cst_77 = arith.constant dense<0.000000e+00> : vector<16x48xf32>
    %133 = tpu.matmul %132, %23, %cst_77 {dimension_numbers = #tpu.dot_dimension_numbers<[1], [0], [0], [1], [0, 0, 1, 1], [], []>} : vector<16x32xf32>, vector<32x48xf32>, vector<16x48xf32> -> vector<16x48xf32>
    %134 = vector.broadcast %25 : vector<1x48xf32> to vector<16x48xf32>
    %135 = arith.addf %133, %134 : vector<16x48xf32>
    %cst_78 = arith.constant 5.000000e-01 : f32
    %136 = vector.broadcast %cst_78 : f32 to vector<16x48xf32>
    %137 = arith.mulf %136, %135 : vector<16x48xf32>
    %cst_79 = arith.constant 0.707106769 : f32
    %138 = vector.broadcast %cst_79 : f32 to vector<16x48xf32>
    %139 = arith.mulf %135, %138 : vector<16x48xf32>
    %cst_80 = arith.constant 0.000000e+00 : f32
    %140 = vector.broadcast %cst_80 : f32 to vector<16x48xf32>
    %141 = arith.cmpf oge, %139, %140 : vector<16x48xf32>
    %cst_81 = arith.constant 1.000000e+00 : f32
    %cst_82 = arith.constant -1.000000e+00 : f32
    %142 = vector.broadcast %cst_81 : f32 to vector<16x48xf32>
    %143 = vector.broadcast %cst_82 : f32 to vector<16x48xf32>
    %144 = arith.select %141, %142, %143 : vector<16x48xi1>, vector<16x48xf32>
    %145 = math.absf %139 : vector<16x48xf32>
    %cst_83 = arith.constant 0.327591091 : f32
    %146 = vector.broadcast %cst_83 : f32 to vector<16x48xf32>
    %147 = arith.mulf %146, %145 : vector<16x48xf32>
    %cst_84 = arith.constant 1.000000e+00 : f32
    %148 = vector.broadcast %cst_84 : f32 to vector<16x48xf32>
    %149 = arith.addf %148, %147 : vector<16x48xf32>
    %150 = tpu.reciprocal %149 {approx = true} : vector<16x48xf32> -> vector<16x48xf32>
    %cst_85 = arith.constant 1.06140542 : f32
    %151 = vector.broadcast %cst_85 : f32 to vector<16x48xf32>
    %152 = arith.mulf %151, %150 : vector<16x48xf32>
    %cst_86 = arith.constant -1.45315206 : f32
    %153 = vector.broadcast %cst_86 : f32 to vector<16x48xf32>
    %154 = arith.addf %152, %153 : vector<16x48xf32>
    %155 = arith.mulf %154, %150 : vector<16x48xf32>
    %cst_87 = arith.constant 1.42141378 : f32
    %156 = vector.broadcast %cst_87 : f32 to vector<16x48xf32>
    %157 = arith.addf %155, %156 : vector<16x48xf32>
    %158 = arith.mulf %157, %150 : vector<16x48xf32>
    %cst_88 = arith.constant -0.284496725 : f32
    %159 = vector.broadcast %cst_88 : f32 to vector<16x48xf32>
    %160 = arith.addf %158, %159 : vector<16x48xf32>
    %161 = arith.mulf %160, %150 : vector<16x48xf32>
    %cst_89 = arith.constant 0.254829586 : f32
    %162 = vector.broadcast %cst_89 : f32 to vector<16x48xf32>
    %163 = arith.addf %161, %162 : vector<16x48xf32>
    %164 = arith.mulf %163, %150 : vector<16x48xf32>
    %cst_90 = arith.constant 0.000000e+00 : f32
    %165 = vector.broadcast %cst_90 : f32 to vector<16x48xf32>
    %166 = arith.subf %165, %145 : vector<16x48xf32>
    %167 = arith.mulf %166, %145 : vector<16x48xf32>
    %168 = math.exp %167 : vector<16x48xf32>
    %169 = arith.mulf %164, %168 : vector<16x48xf32>
    %cst_91 = arith.constant 1.000000e+00 : f32
    %170 = vector.broadcast %cst_91 : f32 to vector<16x48xf32>
    %171 = arith.subf %170, %169 : vector<16x48xf32>
    %172 = arith.mulf %144, %171 : vector<16x48xf32>
    %cst_92 = arith.constant 1.000000e+00 : f32
    %173 = vector.broadcast %cst_92 : f32 to vector<16x48xf32>
    %174 = arith.addf %173, %172 : vector<16x48xf32>
    %175 = arith.mulf %137, %174 : vector<16x48xf32>
    %cst_93 = arith.constant dense<0.000000e+00> : vector<16x32xf32>
    %176 = tpu.matmul %175, %27, %cst_93 {dimension_numbers = #tpu.dot_dimension_numbers<[1], [0], [0], [1], [0, 0, 1, 1], [], []>} : vector<16x48xf32>, vector<48x32xf32>, vector<16x32xf32> -> vector<16x32xf32>
    %177 = vector.broadcast %29 : vector<1x32xf32> to vector<16x32xf32>
    %178 = arith.addf %176, %177 : vector<16x32xf32>
    %179 = arith.addf %132, %178 : vector<16x32xf32>
    %cst_94 = arith.constant dense<0.000000e+00> : vector<16xf32>
    %180 = vector.multi_reduction <add>, %179, %cst_94 [1] : vector<16x32xf32> to vector<16xf32>
    %181 = vector.shape_cast %180 : vector<16xf32> to vector<16x1xf32>
    %cst_95 = arith.constant 3.200000e+01 : f32
    %182 = vector.broadcast %cst_95 : f32 to vector<16x1xf32>
    %183 = arith.divf %181, %182 : vector<16x1xf32>
    %184 = vector.broadcast %183 : vector<16x1xf32> to vector<16x32xf32>
    %185 = arith.subf %179, %184 : vector<16x32xf32>
    %186 = arith.mulf %185, %185 : vector<16x32xf32>
    %cst_96 = arith.constant dense<0.000000e+00> : vector<16xf32>
    %187 = vector.multi_reduction <add>, %186, %cst_96 [1] : vector<16x32xf32> to vector<16xf32>
    %188 = vector.shape_cast %187 : vector<16xf32> to vector<16x1xf32>
    %cst_97 = arith.constant 3.200000e+01 : f32
    %189 = vector.broadcast %cst_97 : f32 to vector<16x1xf32>
    %190 = arith.divf %188, %189 : vector<16x1xf32>
    %cst_98 = arith.constant 9.99999974E-6 : f32
    %191 = vector.broadcast %cst_98 : f32 to vector<16x1xf32>
    %192 = arith.addf %190, %191 : vector<16x1xf32>
    %193 = math.rsqrt %192 : vector<16x1xf32>
    %194 = vector.broadcast %193 : vector<16x1xf32> to vector<16x32xf32>
    %195 = arith.mulf %185, %194 : vector<16x32xf32>
    %196 = vector.broadcast %31 : vector<1x32xf32> to vector<16x32xf32>
    %197 = arith.mulf %195, %196 : vector<16x32xf32>
    %198 = vector.broadcast %33 : vector<1x32xf32> to vector<16x32xf32>
    %199 = arith.addf %197, %198 : vector<16x32xf32>
    %c1 = arith.constant 1 : index
    %c0_99 = arith.constant 0 : index
    %c0_100 = arith.constant 0 : index
    %200 = vector.load %arg4[%c1, %c0_99, %c0_100] : memref<3x32x96xf32, #tpu.memory_space<vmem>>, vector<1x32x96xf32>
    %201 = vector.shape_cast %200 : vector<1x32x96xf32> to vector<32x96xf32>
    %c1_101 = arith.constant 1 : index
    %c0_102 = arith.constant 0 : index
    %c0_103 = arith.constant 0 : index
    %202 = vector.load %arg5[%c1_101, %c0_102, %c0_103] : memref<3x1x96xf32, #tpu.memory_space<vmem>>, vector<1x1x96xf32>
    %203 = vector.shape_cast %202 : vector<1x1x96xf32> to vector<1x96xf32>
    %c1_104 = arith.constant 1 : index
    %c0_105 = arith.constant 0 : index
    %c0_106 = arith.constant 0 : index
    %204 = vector.load %arg6[%c1_104, %c0_105, %c0_106] : memref<3x32x32xf32, #tpu.memory_space<vmem>>, vector<1x32x32xf32>
    %205 = vector.shape_cast %204 : vector<1x32x32xf32> to vector<32x32xf32>
    %c1_107 = arith.constant 1 : index
    %c0_108 = arith.constant 0 : index
    %c0_109 = arith.constant 0 : index
    %206 = vector.load %arg7[%c1_107, %c0_108, %c0_109] : memref<3x1x32xf32, #tpu.memory_space<vmem>>, vector<1x1x32xf32>
    %207 = vector.shape_cast %206 : vector<1x1x32xf32> to vector<1x32xf32>
    %c1_110 = arith.constant 1 : index
    %c0_111 = arith.constant 0 : index
    %c0_112 = arith.constant 0 : index
    %208 = vector.load %arg8[%c1_110, %c0_111, %c0_112] : memref<3x1x32xf32, #tpu.memory_space<vmem>>, vector<1x1x32xf32>
    %209 = vector.shape_cast %208 : vector<1x1x32xf32> to vector<1x32xf32>
    %c1_113 = arith.constant 1 : index
    %c0_114 = arith.constant 0 : index
    %c0_115 = arith.constant 0 : index
    %210 = vector.load %arg9[%c1_113, %c0_114, %c0_115] : memref<3x1x32xf32, #tpu.memory_space<vmem>>, vector<1x1x32xf32>
    %211 = vector.shape_cast %210 : vector<1x1x32xf32> to vector<1x32xf32>
    %c1_116 = arith.constant 1 : index
    %c0_117 = arith.constant 0 : index
    %c0_118 = arith.constant 0 : index
    %212 = vector.load %arg10[%c1_116, %c0_117, %c0_118] : memref<3x32x48xf32, #tpu.memory_space<vmem>>, vector<1x32x48xf32>
    %213 = vector.shape_cast %212 : vector<1x32x48xf32> to vector<32x48xf32>
    %c1_119 = arith.constant 1 : index
    %c0_120 = arith.constant 0 : index
    %c0_121 = arith.constant 0 : index
    %214 = vector.load %arg11[%c1_119, %c0_120, %c0_121] : memref<3x1x48xf32, #tpu.memory_space<vmem>>, vector<1x1x48xf32>
    %215 = vector.shape_cast %214 : vector<1x1x48xf32> to vector<1x48xf32>
    %c1_122 = arith.constant 1 : index
    %c0_123 = arith.constant 0 : index
    %c0_124 = arith.constant 0 : index
    %216 = vector.load %arg12[%c1_122, %c0_123, %c0_124] : memref<3x48x32xf32, #tpu.memory_space<vmem>>, vector<1x48x32xf32>
    %217 = vector.shape_cast %216 : vector<1x48x32xf32> to vector<48x32xf32>
    %c1_125 = arith.constant 1 : index
    %c0_126 = arith.constant 0 : index
    %c0_127 = arith.constant 0 : index
    %218 = vector.load %arg13[%c1_125, %c0_126, %c0_127] : memref<3x1x32xf32, #tpu.memory_space<vmem>>, vector<1x1x32xf32>
    %219 = vector.shape_cast %218 : vector<1x1x32xf32> to vector<1x32xf32>
    %c1_128 = arith.constant 1 : index
    %c0_129 = arith.constant 0 : index
    %c0_130 = arith.constant 0 : index
    %220 = vector.load %arg14[%c1_128, %c0_129, %c0_130] : memref<3x1x32xf32, #tpu.memory_space<vmem>>, vector<1x1x32xf32>
    %221 = vector.shape_cast %220 : vector<1x1x32xf32> to vector<1x32xf32>
    %c1_131 = arith.constant 1 : index
    %c0_132 = arith.constant 0 : index
    %c0_133 = arith.constant 0 : index
    %222 = vector.load %arg15[%c1_131, %c0_132, %c0_133] : memref<3x1x32xf32, #tpu.memory_space<vmem>>, vector<1x1x32xf32>
    %223 = vector.shape_cast %222 : vector<1x1x32xf32> to vector<1x32xf32>
    %cst_134 = arith.constant dense<0.000000e+00> : vector<16x96xf32>
    %224 = tpu.matmul %199, %201, %cst_134 {dimension_numbers = #tpu.dot_dimension_numbers<[1], [0], [0], [1], [0, 0, 1, 1], [], []>} : vector<16x32xf32>, vector<32x96xf32>, vector<16x96xf32> -> vector<16x96xf32>
    %225 = vector.broadcast %203 : vector<1x96xf32> to vector<16x96xf32>
    %226 = arith.addf %224, %225 : vector<16x96xf32>
    %227 = vector.extract_strided_slice %226 {offsets = [0, 0], sizes = [16, 32], strides = [1, 1]} : vector<16x96xf32> to vector<16x32xf32>
    %228 = vector.shape_cast %227 : vector<16x32xf32> to vector<2x8x32xf32>
    %229 = vector.extract_strided_slice %226 {offsets = [0, 32], sizes = [16, 32], strides = [1, 1]} : vector<16x96xf32> to vector<16x32xf32>
    %230 = vector.shape_cast %229 : vector<16x32xf32> to vector<2x8x32xf32>
    %231 = vector.extract_strided_slice %226 {offsets = [0, 64], sizes = [16, 32], strides = [1, 1]} : vector<16x96xf32> to vector<16x32xf32>
    %232 = vector.shape_cast %231 : vector<16x32xf32> to vector<2x8x32xf32>
    %233 = vector.extract_strided_slice %228 {offsets = [0, 0, 0], sizes = [2, 8, 8], strides = [1, 1, 1]} : vector<2x8x32xf32> to vector<2x8x8xf32>
    %234 = vector.extract_strided_slice %230 {offsets = [0, 0, 0], sizes = [2, 8, 8], strides = [1, 1, 1]} : vector<2x8x32xf32> to vector<2x8x8xf32>
    "tpu.trace_start"() <{level = 10 : i32, message = "bqd,bkd->bqk"}> : () -> ()
    %cst_135 = arith.constant dense<0.000000e+00> : vector<2x8x8xf32>
    %235 = tpu.matmul %233, %234, %cst_135 {dimension_numbers = #tpu.dot_dimension_numbers<[2], [2], [1], [1], [0, 0, 0, 1, 1, 1], [0], [0]>} : vector<2x8x8xf32>, vector<2x8x8xf32>, vector<2x8x8xf32> -> vector<2x8x8xf32>
    "tpu.trace_stop"() : () -> ()
    %cst_136 = arith.constant dense<0xFF800000> : vector<2x8xf32>
    %236 = vector.multi_reduction <maximumf>, %235, %cst_136 [2] : vector<2x8x8xf32> to vector<2x8xf32>
    %237 = vector.shape_cast %236 : vector<2x8xf32> to vector<2x8x1xf32>
    %238 = vector.broadcast %237 : vector<2x8x1xf32> to vector<2x8x8xf32>
    %239 = arith.subf %235, %238 : vector<2x8x8xf32>
    %240 = math.exp %239 : vector<2x8x8xf32>
    %cst_137 = arith.constant dense<0.000000e+00> : vector<2x8xf32>
    %241 = vector.multi_reduction <add>, %240, %cst_137 [2] : vector<2x8x8xf32> to vector<2x8xf32>
    %242 = vector.shape_cast %241 : vector<2x8xf32> to vector<2x8x1xf32>
    %243 = tpu.reciprocal %242 {approx = true} : vector<2x8x1xf32> -> vector<2x8x1xf32>
    %244 = vector.broadcast %243 : vector<2x8x1xf32> to vector<2x8x8xf32>
    %245 = arith.mulf %240, %244 : vector<2x8x8xf32>
    %246 = vector.extract_strided_slice %232 {offsets = [0, 0, 0], sizes = [2, 8, 8], strides = [1, 1, 1]} : vector<2x8x32xf32> to vector<2x8x8xf32>
    "tpu.trace_start"() <{level = 10 : i32, message = "bqk,bkd->bqd"}> : () -> ()
    %cst_138 = arith.constant dense<0.000000e+00> : vector<2x8x8xf32>
    %247 = tpu.matmul %245, %246, %cst_138 {dimension_numbers = #tpu.dot_dimension_numbers<[2], [1], [1], [2], [0, 0, 0, 1, 1, 2], [0], [0]>} : vector<2x8x8xf32>, vector<2x8x8xf32>, vector<2x8x8xf32> -> vector<2x8x8xf32>
    "tpu.trace_stop"() : () -> ()
    %c0_139 = arith.constant 0 : index
    %c0_140 = arith.constant 0 : index
    %c0_141 = arith.constant 0 : index
    %248 = vector.load %arg17[%c0_139, %c0_140, %c0_141] : memref<2x8x32xf32, #tpu.memory_space<vmem>>, vector<2x8x8xf32>
    tpu.vector_store %arg17[%c0_139, %c0_140, %c0_141], %247 {strides = array<i32>} : memref<2x8x32xf32, #tpu.memory_space<vmem>>, vector<2x8x8xf32>,
    %249 = vector.extract_strided_slice %228 {offsets = [0, 0, 8], sizes = [2, 8, 8], strides = [1, 1, 1]} : vector<2x8x32xf32> to vector<2x8x8xf32>
    %250 = vector.extract_strided_slice %230 {offsets = [0, 0, 8], sizes = [2, 8, 8], strides = [1, 1, 1]} : vector<2x8x32xf32> to vector<2x8x8xf32>
    "tpu.trace_start"() <{level = 10 : i32, message = "bqd,bkd->bqk"}> : () -> ()
    %cst_142 = arith.constant dense<0.000000e+00> : vector<2x8x8xf32>
    %251 = tpu.matmul %249, %250, %cst_142 {dimension_numbers = #tpu.dot_dimension_numbers<[2], [2], [1], [1], [0, 0, 0, 1, 1, 1], [0], [0]>} : vector<2x8x8xf32>, vector<2x8x8xf32>, vector<2x8x8xf32> -> vector<2x8x8xf32>
    "tpu.trace_stop"() : () -> ()
    %cst_143 = arith.constant dense<0xFF800000> : vector<2x8xf32>
    %252 = vector.multi_reduction <maximumf>, %251, %cst_143 [2] : vector<2x8x8xf32> to vector<2x8xf32>
    %253 = vector.shape_cast %252 : vector<2x8xf32> to vector<2x8x1xf32>
    %254 = vector.broadcast %253 : vector<2x8x1xf32> to vector<2x8x8xf32>
    %255 = arith.subf %251, %254 : vector<2x8x8xf32>
    %256 = math.exp %255 : vector<2x8x8xf32>
    %cst_144 = arith.constant dense<0.000000e+00> : vector<2x8xf32>
    %257 = vector.multi_reduction <add>, %256, %cst_144 [2] : vector<2x8x8xf32> to vector<2x8xf32>
    %258 = vector.shape_cast %257 : vector<2x8xf32> to vector<2x8x1xf32>
    %259 = tpu.reciprocal %258 {approx = true} : vector<2x8x1xf32> -> vector<2x8x1xf32>
    %260 = vector.broadcast %259 : vector<2x8x1xf32> to vector<2x8x8xf32>
    %261 = arith.mulf %256, %260 : vector<2x8x8xf32>
    %262 = vector.extract_strided_slice %232 {offsets = [0, 0, 8], sizes = [2, 8, 8], strides = [1, 1, 1]} : vector<2x8x32xf32> to vector<2x8x8xf32>
    "tpu.trace_start"() <{level = 10 : i32, message = "bqk,bkd->bqd"}> : () -> ()
    %cst_145 = arith.constant dense<0.000000e+00> : vector<2x8x8xf32>
    %263 = tpu.matmul %261, %262, %cst_145 {dimension_numbers = #tpu.dot_dimension_numbers<[2], [1], [1], [2], [0, 0, 0, 1, 1, 2], [0], [0]>} : vector<2x8x8xf32>, vector<2x8x8xf32>, vector<2x8x8xf32> -> vector<2x8x8xf32>
    "tpu.trace_stop"() : () -> ()
    %c0_146 = arith.constant 0 : index
    %c0_147 = arith.constant 0 : index
    %c8_148 = arith.constant 8 : index
    %264 = vector.load %arg17[%c0_146, %c0_147, %c8_148] : memref<2x8x32xf32, #tpu.memory_space<vmem>>, vector<2x8x8xf32>
    tpu.vector_store %arg17[%c0_146, %c0_147, %c8_148], %263 {strides = array<i32>} : memref<2x8x32xf32, #tpu.memory_space<vmem>>, vector<2x8x8xf32>,
    %265 = vector.extract_strided_slice %228 {offsets = [0, 0, 16], sizes = [2, 8, 8], strides = [1, 1, 1]} : vector<2x8x32xf32> to vector<2x8x8xf32>
    %266 = vector.extract_strided_slice %230 {offsets = [0, 0, 16], sizes = [2, 8, 8], strides = [1, 1, 1]} : vector<2x8x32xf32> to vector<2x8x8xf32>
    "tpu.trace_start"() <{level = 10 : i32, message = "bqd,bkd->bqk"}> : () -> ()
    %cst_149 = arith.constant dense<0.000000e+00> : vector<2x8x8xf32>
    %267 = tpu.matmul %265, %266, %cst_149 {dimension_numbers = #tpu.dot_dimension_numbers<[2], [2], [1], [1], [0, 0, 0, 1, 1, 1], [0], [0]>} : vector<2x8x8xf32>, vector<2x8x8xf32>, vector<2x8x8xf32> -> vector<2x8x8xf32>
    "tpu.trace_stop"() : () -> ()
    %cst_150 = arith.constant dense<0xFF800000> : vector<2x8xf32>
    %268 = vector.multi_reduction <maximumf>, %267, %cst_150 [2] : vector<2x8x8xf32> to vector<2x8xf32>
    %269 = vector.shape_cast %268 : vector<2x8xf32> to vector<2x8x1xf32>
    %270 = vector.broadcast %269 : vector<2x8x1xf32> to vector<2x8x8xf32>
    %271 = arith.subf %267, %270 : vector<2x8x8xf32>
    %272 = math.exp %271 : vector<2x8x8xf32>
    %cst_151 = arith.constant dense<0.000000e+00> : vector<2x8xf32>
    %273 = vector.multi_reduction <add>, %272, %cst_151 [2] : vector<2x8x8xf32> to vector<2x8xf32>
    %274 = vector.shape_cast %273 : vector<2x8xf32> to vector<2x8x1xf32>
    %275 = tpu.reciprocal %274 {approx = true} : vector<2x8x1xf32> -> vector<2x8x1xf32>
    %276 = vector.broadcast %275 : vector<2x8x1xf32> to vector<2x8x8xf32>
    %277 = arith.mulf %272, %276 : vector<2x8x8xf32>
    %278 = vector.extract_strided_slice %232 {offsets = [0, 0, 16], sizes = [2, 8, 8], strides = [1, 1, 1]} : vector<2x8x32xf32> to vector<2x8x8xf32>
    "tpu.trace_start"() <{level = 10 : i32, message = "bqk,bkd->bqd"}> : () -> ()
    %cst_152 = arith.constant dense<0.000000e+00> : vector<2x8x8xf32>
    %279 = tpu.matmul %277, %278, %cst_152 {dimension_numbers = #tpu.dot_dimension_numbers<[2], [1], [1], [2], [0, 0, 0, 1, 1, 2], [0], [0]>} : vector<2x8x8xf32>, vector<2x8x8xf32>, vector<2x8x8xf32> -> vector<2x8x8xf32>
    "tpu.trace_stop"() : () -> ()
    %c0_153 = arith.constant 0 : index
    %c0_154 = arith.constant 0 : index
    %c16_155 = arith.constant 16 : index
    %280 = vector.load %arg17[%c0_153, %c0_154, %c16_155] : memref<2x8x32xf32, #tpu.memory_space<vmem>>, vector<2x8x8xf32>
    tpu.vector_store %arg17[%c0_153, %c0_154, %c16_155], %279 {strides = array<i32>} : memref<2x8x32xf32, #tpu.memory_space<vmem>>, vector<2x8x8xf32>,
    %281 = vector.extract_strided_slice %228 {offsets = [0, 0, 24], sizes = [2, 8, 8], strides = [1, 1, 1]} : vector<2x8x32xf32> to vector<2x8x8xf32>
    %282 = vector.extract_strided_slice %230 {offsets = [0, 0, 24], sizes = [2, 8, 8], strides = [1, 1, 1]} : vector<2x8x32xf32> to vector<2x8x8xf32>
    "tpu.trace_start"() <{level = 10 : i32, message = "bqd,bkd->bqk"}> : () -> ()
    %cst_156 = arith.constant dense<0.000000e+00> : vector<2x8x8xf32>
    %283 = tpu.matmul %281, %282, %cst_156 {dimension_numbers = #tpu.dot_dimension_numbers<[2], [2], [1], [1], [0, 0, 0, 1, 1, 1], [0], [0]>} : vector<2x8x8xf32>, vector<2x8x8xf32>, vector<2x8x8xf32> -> vector<2x8x8xf32>
    "tpu.trace_stop"() : () -> ()
    %cst_157 = arith.constant dense<0xFF800000> : vector<2x8xf32>
    %284 = vector.multi_reduction <maximumf>, %283, %cst_157 [2] : vector<2x8x8xf32> to vector<2x8xf32>
    %285 = vector.shape_cast %284 : vector<2x8xf32> to vector<2x8x1xf32>
    %286 = vector.broadcast %285 : vector<2x8x1xf32> to vector<2x8x8xf32>
    %287 = arith.subf %283, %286 : vector<2x8x8xf32>
    %288 = math.exp %287 : vector<2x8x8xf32>
    %cst_158 = arith.constant dense<0.000000e+00> : vector<2x8xf32>
    %289 = vector.multi_reduction <add>, %288, %cst_158 [2] : vector<2x8x8xf32> to vector<2x8xf32>
    %290 = vector.shape_cast %289 : vector<2x8xf32> to vector<2x8x1xf32>
    %291 = tpu.reciprocal %290 {approx = true} : vector<2x8x1xf32> -> vector<2x8x1xf32>
    %292 = vector.broadcast %291 : vector<2x8x1xf32> to vector<2x8x8xf32>
    %293 = arith.mulf %288, %292 : vector<2x8x8xf32>
    %294 = vector.extract_strided_slice %232 {offsets = [0, 0, 24], sizes = [2, 8, 8], strides = [1, 1, 1]} : vector<2x8x32xf32> to vector<2x8x8xf32>
    "tpu.trace_start"() <{level = 10 : i32, message = "bqk,bkd->bqd"}> : () -> ()
    %cst_159 = arith.constant dense<0.000000e+00> : vector<2x8x8xf32>
    %295 = tpu.matmul %293, %294, %cst_159 {dimension_numbers = #tpu.dot_dimension_numbers<[2], [1], [1], [2], [0, 0, 0, 1, 1, 2], [0], [0]>} : vector<2x8x8xf32>, vector<2x8x8xf32>, vector<2x8x8xf32> -> vector<2x8x8xf32>
    "tpu.trace_stop"() : () -> ()
    %c0_160 = arith.constant 0 : index
    %c0_161 = arith.constant 0 : index
    %c24_162 = arith.constant 24 : index
    %296 = vector.load %arg17[%c0_160, %c0_161, %c24_162] : memref<2x8x32xf32, #tpu.memory_space<vmem>>, vector<2x8x8xf32>
    tpu.vector_store %arg17[%c0_160, %c0_161, %c24_162], %295 {strides = array<i32>} : memref<2x8x32xf32, #tpu.memory_space<vmem>>, vector<2x8x8xf32>,
    %c0_163 = arith.constant 0 : index
    %c0_164 = arith.constant 0 : index
    %c0_165 = arith.constant 0 : index
    %297 = vector.load %arg17[%c0_163, %c0_164, %c0_165] : memref<2x8x32xf32, #tpu.memory_space<vmem>>, vector<2x8x32xf32>
    %298 = vector.shape_cast %297 : vector<2x8x32xf32> to vector<16x32xf32>
    %cst_166 = arith.constant dense<0.000000e+00> : vector<16x32xf32>
    %299 = tpu.matmul %298, %205, %cst_166 {dimension_numbers = #tpu.dot_dimension_numbers<[1], [0], [0], [1], [0, 0, 1, 1], [], []>} : vector<16x32xf32>, vector<32x32xf32>, vector<16x32xf32> -> vector<16x32xf32>
    %300 = vector.broadcast %207 : vector<1x32xf32> to vector<16x32xf32>
    %301 = arith.addf %299, %300 : vector<16x32xf32>
    %302 = arith.addf %199, %301 : vector<16x32xf32>
    %cst_167 = arith.constant dense<0.000000e+00> : vector<16xf32>
    %303 = vector.multi_reduction <add>, %302, %cst_167 [1] : vector<16x32xf32> to vector<16xf32>
    %304 = vector.shape_cast %303 : vector<16xf32> to vector<16x1xf32>
    %cst_168 = arith.constant 3.200000e+01 : f32
    %305 = vector.broadcast %cst_168 : f32 to vector<16x1xf32>
    %306 = arith.divf %304, %305 : vector<16x1xf32>
    %307 = vector.broadcast %306 : vector<16x1xf32> to vector<16x32xf32>
    %308 = arith.subf %302, %307 : vector<16x32xf32>
    %309 = arith.mulf %308, %308 : vector<16x32xf32>
    %cst_169 = arith.constant dense<0.000000e+00> : vector<16xf32>
    %310 = vector.multi_reduction <add>, %309, %cst_169 [1] : vector<16x32xf32> to vector<16xf32>
    %311 = vector.shape_cast %310 : vector<16xf32> to vector<16x1xf32>
    %cst_170 = arith.constant 3.200000e+01 : f32
    %312 = vector.broadcast %cst_170 : f32 to vector<16x1xf32>
    %313 = arith.divf %311, %312 : vector<16x1xf32>
    %cst_171 = arith.constant 9.99999974E-6 : f32
    %314 = vector.broadcast %cst_171 : f32 to vector<16x1xf32>
    %315 = arith.addf %313, %314 : vector<16x1xf32>
    %316 = math.rsqrt %315 : vector<16x1xf32>
    %317 = vector.broadcast %316 : vector<16x1xf32> to vector<16x32xf32>
    %318 = arith.mulf %308, %317 : vector<16x32xf32>
    %319 = vector.broadcast %209 : vector<1x32xf32> to vector<16x32xf32>
    %320 = arith.mulf %318, %319 : vector<16x32xf32>
    %321 = vector.broadcast %211 : vector<1x32xf32> to vector<16x32xf32>
    %322 = arith.addf %320, %321 : vector<16x32xf32>
    %cst_172 = arith.constant dense<0.000000e+00> : vector<16x48xf32>
    %323 = tpu.matmul %322, %213, %cst_172 {dimension_numbers = #tpu.dot_dimension_numbers<[1], [0], [0], [1], [0, 0, 1, 1], [], []>} : vector<16x32xf32>, vector<32x48xf32>, vector<16x48xf32> -> vector<16x48xf32>
    %324 = vector.broadcast %215 : vector<1x48xf32> to vector<16x48xf32>
    %325 = arith.addf %323, %324 : vector<16x48xf32>
    %cst_173 = arith.constant 5.000000e-01 : f32
    %326 = vector.broadcast %cst_173 : f32 to vector<16x48xf32>
    %327 = arith.mulf %326, %325 : vector<16x48xf32>
    %cst_174 = arith.constant 0.707106769 : f32
    %328 = vector.broadcast %cst_174 : f32 to vector<16x48xf32>
    %329 = arith.mulf %325, %328 : vector<16x48xf32>
    %cst_175 = arith.constant 0.000000e+00 : f32
    %330 = vector.broadcast %cst_175 : f32 to vector<16x48xf32>
    %331 = arith.cmpf oge, %329, %330 : vector<16x48xf32>
    %cst_176 = arith.constant 1.000000e+00 : f32
    %cst_177 = arith.constant -1.000000e+00 : f32
    %332 = vector.broadcast %cst_176 : f32 to vector<16x48xf32>
    %333 = vector.broadcast %cst_177 : f32 to vector<16x48xf32>
    %334 = arith.select %331, %332, %333 : vector<16x48xi1>, vector<16x48xf32>
    %335 = math.absf %329 : vector<16x48xf32>
    %cst_178 = arith.constant 0.327591091 : f32
    %336 = vector.broadcast %cst_178 : f32 to vector<16x48xf32>
    %337 = arith.mulf %336, %335 : vector<16x48xf32>
    %cst_179 = arith.constant 1.000000e+00 : f32
    %338 = vector.broadcast %cst_179 : f32 to vector<16x48xf32>
    %339 = arith.addf %338, %337 : vector<16x48xf32>
    %340 = tpu.reciprocal %339 {approx = true} : vector<16x48xf32> -> vector<16x48xf32>
    %cst_180 = arith.constant 1.06140542 : f32
    %341 = vector.broadcast %cst_180 : f32 to vector<16x48xf32>
    %342 = arith.mulf %341, %340 : vector<16x48xf32>
    %cst_181 = arith.constant -1.45315206 : f32
    %343 = vector.broadcast %cst_181 : f32 to vector<16x48xf32>
    %344 = arith.addf %342, %343 : vector<16x48xf32>
    %345 = arith.mulf %344, %340 : vector<16x48xf32>
    %cst_182 = arith.constant 1.42141378 : f32
    %346 = vector.broadcast %cst_182 : f32 to vector<16x48xf32>
    %347 = arith.addf %345, %346 : vector<16x48xf32>
    %348 = arith.mulf %347, %340 : vector<16x48xf32>
    %cst_183 = arith.constant -0.284496725 : f32
    %349 = vector.broadcast %cst_183 : f32 to vector<16x48xf32>
    %350 = arith.addf %348, %349 : vector<16x48xf32>
    %351 = arith.mulf %350, %340 : vector<16x48xf32>
    %cst_184 = arith.constant 0.254829586 : f32
    %352 = vector.broadcast %cst_184 : f32 to vector<16x48xf32>
    %353 = arith.addf %351, %352 : vector<16x48xf32>
    %354 = arith.mulf %353, %340 : vector<16x48xf32>
    %cst_185 = arith.constant 0.000000e+00 : f32
    %355 = vector.broadcast %cst_185 : f32 to vector<16x48xf32>
    %356 = arith.subf %355, %335 : vector<16x48xf32>
    %357 = arith.mulf %356, %335 : vector<16x48xf32>
    %358 = math.exp %357 : vector<16x48xf32>
    %359 = arith.mulf %354, %358 : vector<16x48xf32>
    %cst_186 = arith.constant 1.000000e+00 : f32
    %360 = vector.broadcast %cst_186 : f32 to vector<16x48xf32>
    %361 = arith.subf %360, %359 : vector<16x48xf32>
    %362 = arith.mulf %334, %361 : vector<16x48xf32>
    %cst_187 = arith.constant 1.000000e+00 : f32
    %363 = vector.broadcast %cst_187 : f32 to vector<16x48xf32>
    %364 = arith.addf %363, %362 : vector<16x48xf32>
    %365 = arith.mulf %327, %364 : vector<16x48xf32>
    %cst_188 = arith.constant dense<0.000000e+00> : vector<16x32xf32>
    %366 = tpu.matmul %365, %217, %cst_188 {dimension_numbers = #tpu.dot_dimension_numbers<[1], [0], [0], [1], [0, 0, 1, 1], [], []>} : vector<16x48xf32>, vector<48x32xf32>, vector<16x32xf32> -> vector<16x32xf32>
    %367 = vector.broadcast %219 : vector<1x32xf32> to vector<16x32xf32>
    %368 = arith.addf %366, %367 : vector<16x32xf32>
    %369 = arith.addf %322, %368 : vector<16x32xf32>
    %cst_189 = arith.constant dense<0.000000e+00> : vector<16xf32>
    %370 = vector.multi_reduction <add>, %369, %cst_189 [1] : vector<16x32xf32> to vector<16xf32>
    %371 = vector.shape_cast %370 : vector<16xf32> to vector<16x1xf32>
    %cst_190 = arith.constant 3.200000e+01 : f32
    %372 = vector.broadcast %cst_190 : f32 to vector<16x1xf32>
    %373 = arith.divf %371, %372 : vector<16x1xf32>
    %374 = vector.broadcast %373 : vector<16x1xf32> to vector<16x32xf32>
    %375 = arith.subf %369, %374 : vector<16x32xf32>
    %376 = arith.mulf %375, %375 : vector<16x32xf32>
    %cst_191 = arith.constant dense<0.000000e+00> : vector<16xf32>
    %377 = vector.multi_reduction <add>, %376, %cst_191 [1] : vector<16x32xf32> to vector<16xf32>
    %378 = vector.shape_cast %377 : vector<16xf32> to vector<16x1xf32>
    %cst_192 = arith.constant 3.200000e+01 : f32
    %379 = vector.broadcast %cst_192 : f32 to vector<16x1xf32>
    %380 = arith.divf %378, %379 : vector<16x1xf32>
    %cst_193 = arith.constant 9.99999974E-6 : f32
    %381 = vector.broadcast %cst_193 : f32 to vector<16x1xf32>
    %382 = arith.addf %380, %381 : vector<16x1xf32>
    %383 = math.rsqrt %382 : vector<16x1xf32>
    %384 = vector.broadcast %383 : vector<16x1xf32> to vector<16x32xf32>
    %385 = arith.mulf %375, %384 : vector<16x32xf32>
    %386 = vector.broadcast %221 : vector<1x32xf32> to vector<16x32xf32>
    %387 = arith.mulf %385, %386 : vector<16x32xf32>
    %388 = vector.broadcast %223 : vector<1x32xf32> to vector<16x32xf32>
    %389 = arith.addf %387, %388 : vector<16x32xf32>
    %c2 = arith.constant 2 : index
    %c0_194 = arith.constant 0 : index
    %c0_195 = arith.constant 0 : index
    %390 = vector.load %arg4[%c2, %c0_194, %c0_195] : memref<3x32x96xf32, #tpu.memory_space<vmem>>, vector<1x32x96xf32>
    %391 = vector.shape_cast %390 : vector<1x32x96xf32> to vector<32x96xf32>
    %c2_196 = arith.constant 2 : index
    %c0_197 = arith.constant 0 : index
    %c0_198 = arith.constant 0 : index
    %392 = vector.load %arg5[%c2_196, %c0_197, %c0_198] : memref<3x1x96xf32, #tpu.memory_space<vmem>>, vector<1x1x96xf32>
    %393 = vector.shape_cast %392 : vector<1x1x96xf32> to vector<1x96xf32>
    %c2_199 = arith.constant 2 : index
    %c0_200 = arith.constant 0 : index
    %c0_201 = arith.constant 0 : index
    %394 = vector.load %arg6[%c2_199, %c0_200, %c0_201] : memref<3x32x32xf32, #tpu.memory_space<vmem>>, vector<1x32x32xf32>
    %395 = vector.shape_cast %394 : vector<1x32x32xf32> to vector<32x32xf32>
    %c2_202 = arith.constant 2 : index
    %c0_203 = arith.constant 0 : index
    %c0_204 = arith.constant 0 : index
    %396 = vector.load %arg7[%c2_202, %c0_203, %c0_204] : memref<3x1x32xf32, #tpu.memory_space<vmem>>, vector<1x1x32xf32>
    %397 = vector.shape_cast %396 : vector<1x1x32xf32> to vector<1x32xf32>
    %c2_205 = arith.constant 2 : index
    %c0_206 = arith.constant 0 : index
    %c0_207 = arith.constant 0 : index
    %398 = vector.load %arg8[%c2_205, %c0_206, %c0_207] : memref<3x1x32xf32, #tpu.memory_space<vmem>>, vector<1x1x32xf32>
    %399 = vector.shape_cast %398 : vector<1x1x32xf32> to vector<1x32xf32>
    %c2_208 = arith.constant 2 : index
    %c0_209 = arith.constant 0 : index
    %c0_210 = arith.constant 0 : index
    %400 = vector.load %arg9[%c2_208, %c0_209, %c0_210] : memref<3x1x32xf32, #tpu.memory_space<vmem>>, vector<1x1x32xf32>
    %401 = vector.shape_cast %400 : vector<1x1x32xf32> to vector<1x32xf32>
    %c2_211 = arith.constant 2 : index
    %c0_212 = arith.constant 0 : index
    %c0_213 = arith.constant 0 : index
    %402 = vector.load %arg10[%c2_211, %c0_212, %c0_213] : memref<3x32x48xf32, #tpu.memory_space<vmem>>, vector<1x32x48xf32>
    %403 = vector.shape_cast %402 : vector<1x32x48xf32> to vector<32x48xf32>
    %c2_214 = arith.constant 2 : index
    %c0_215 = arith.constant 0 : index
    %c0_216 = arith.constant 0 : index
    %404 = vector.load %arg11[%c2_214, %c0_215, %c0_216] : memref<3x1x48xf32, #tpu.memory_space<vmem>>, vector<1x1x48xf32>
    %405 = vector.shape_cast %404 : vector<1x1x48xf32> to vector<1x48xf32>
    %c2_217 = arith.constant 2 : index
    %c0_218 = arith.constant 0 : index
    %c0_219 = arith.constant 0 : index
    %406 = vector.load %arg12[%c2_217, %c0_218, %c0_219] : memref<3x48x32xf32, #tpu.memory_space<vmem>>, vector<1x48x32xf32>
    %407 = vector.shape_cast %406 : vector<1x48x32xf32> to vector<48x32xf32>
    %c2_220 = arith.constant 2 : index
    %c0_221 = arith.constant 0 : index
    %c0_222 = arith.constant 0 : index
    %408 = vector.load %arg13[%c2_220, %c0_221, %c0_222] : memref<3x1x32xf32, #tpu.memory_space<vmem>>, vector<1x1x32xf32>
    %409 = vector.shape_cast %408 : vector<1x1x32xf32> to vector<1x32xf32>
    %c2_223 = arith.constant 2 : index
    %c0_224 = arith.constant 0 : index
    %c0_225 = arith.constant 0 : index
    %410 = vector.load %arg14[%c2_223, %c0_224, %c0_225] : memref<3x1x32xf32, #tpu.memory_space<vmem>>, vector<1x1x32xf32>
    %411 = vector.shape_cast %410 : vector<1x1x32xf32> to vector<1x32xf32>
    %c2_226 = arith.constant 2 : index
    %c0_227 = arith.constant 0 : index
    %c0_228 = arith.constant 0 : index
    %412 = vector.load %arg15[%c2_226, %c0_227, %c0_228] : memref<3x1x32xf32, #tpu.memory_space<vmem>>, vector<1x1x32xf32>
    %413 = vector.shape_cast %412 : vector<1x1x32xf32> to vector<1x32xf32>
    %cst_229 = arith.constant dense<0.000000e+00> : vector<16x96xf32>
    %414 = tpu.matmul %389, %391, %cst_229 {dimension_numbers = #tpu.dot_dimension_numbers<[1], [0], [0], [1], [0, 0, 1, 1], [], []>} : vector<16x32xf32>, vector<32x96xf32>, vector<16x96xf32> -> vector<16x96xf32>
    %415 = vector.broadcast %393 : vector<1x96xf32> to vector<16x96xf32>
    %416 = arith.addf %414, %415 : vector<16x96xf32>
    %417 = vector.extract_strided_slice %416 {offsets = [0, 0], sizes = [16, 32], strides = [1, 1]} : vector<16x96xf32> to vector<16x32xf32>
    %418 = vector.shape_cast %417 : vector<16x32xf32> to vector<2x8x32xf32>
    %419 = vector.extract_strided_slice %416 {offsets = [0, 32], sizes = [16, 32], strides = [1, 1]} : vector<16x96xf32> to vector<16x32xf32>
    %420 = vector.shape_cast %419 : vector<16x32xf32> to vector<2x8x32xf32>
    %421 = vector.extract_strided_slice %416 {offsets = [0, 64], sizes = [16, 32], strides = [1, 1]} : vector<16x96xf32> to vector<16x32xf32>
    %422 = vector.shape_cast %421 : vector<16x32xf32> to vector<2x8x32xf32>
    %423 = vector.extract_strided_slice %418 {offsets = [0, 0, 0], sizes = [2, 8, 8], strides = [1, 1, 1]} : vector<2x8x32xf32> to vector<2x8x8xf32>
    %424 = vector.extract_strided_slice %420 {offsets = [0, 0, 0], sizes = [2, 8, 8], strides = [1, 1, 1]} : vector<2x8x32xf32> to vector<2x8x8xf32>
    "tpu.trace_start"() <{level = 10 : i32, message = "bqd,bkd->bqk"}> : () -> ()
    %cst_230 = arith.constant dense<0.000000e+00> : vector<2x8x8xf32>
    %425 = tpu.matmul %423, %424, %cst_230 {dimension_numbers = #tpu.dot_dimension_numbers<[2], [2], [1], [1], [0, 0, 0, 1, 1, 1], [0], [0]>} : vector<2x8x8xf32>, vector<2x8x8xf32>, vector<2x8x8xf32> -> vector<2x8x8xf32>
    "tpu.trace_stop"() : () -> ()
    %cst_231 = arith.constant dense<0xFF800000> : vector<2x8xf32>
    %426 = vector.multi_reduction <maximumf>, %425, %cst_231 [2] : vector<2x8x8xf32> to vector<2x8xf32>
    %427 = vector.shape_cast %426 : vector<2x8xf32> to vector<2x8x1xf32>
    %428 = vector.broadcast %427 : vector<2x8x1xf32> to vector<2x8x8xf32>
    %429 = arith.subf %425, %428 : vector<2x8x8xf32>
    %430 = math.exp %429 : vector<2x8x8xf32>
    %cst_232 = arith.constant dense<0.000000e+00> : vector<2x8xf32>
    %431 = vector.multi_reduction <add>, %430, %cst_232 [2] : vector<2x8x8xf32> to vector<2x8xf32>
    %432 = vector.shape_cast %431 : vector<2x8xf32> to vector<2x8x1xf32>
    %433 = tpu.reciprocal %432 {approx = true} : vector<2x8x1xf32> -> vector<2x8x1xf32>
    %434 = vector.broadcast %433 : vector<2x8x1xf32> to vector<2x8x8xf32>
    %435 = arith.mulf %430, %434 : vector<2x8x8xf32>
    %436 = vector.extract_strided_slice %422 {offsets = [0, 0, 0], sizes = [2, 8, 8], strides = [1, 1, 1]} : vector<2x8x32xf32> to vector<2x8x8xf32>
    "tpu.trace_start"() <{level = 10 : i32, message = "bqk,bkd->bqd"}> : () -> ()
    %cst_233 = arith.constant dense<0.000000e+00> : vector<2x8x8xf32>
    %437 = tpu.matmul %435, %436, %cst_233 {dimension_numbers = #tpu.dot_dimension_numbers<[2], [1], [1], [2], [0, 0, 0, 1, 1, 2], [0], [0]>} : vector<2x8x8xf32>, vector<2x8x8xf32>, vector<2x8x8xf32> -> vector<2x8x8xf32>
    "tpu.trace_stop"() : () -> ()
    %c0_234 = arith.constant 0 : index
    %c0_235 = arith.constant 0 : index
    %c0_236 = arith.constant 0 : index
    %438 = vector.load %arg17[%c0_234, %c0_235, %c0_236] : memref<2x8x32xf32, #tpu.memory_space<vmem>>, vector<2x8x8xf32>
    tpu.vector_store %arg17[%c0_234, %c0_235, %c0_236], %437 {strides = array<i32>} : memref<2x8x32xf32, #tpu.memory_space<vmem>>, vector<2x8x8xf32>,
    %439 = vector.extract_strided_slice %418 {offsets = [0, 0, 8], sizes = [2, 8, 8], strides = [1, 1, 1]} : vector<2x8x32xf32> to vector<2x8x8xf32>
    %440 = vector.extract_strided_slice %420 {offsets = [0, 0, 8], sizes = [2, 8, 8], strides = [1, 1, 1]} : vector<2x8x32xf32> to vector<2x8x8xf32>
    "tpu.trace_start"() <{level = 10 : i32, message = "bqd,bkd->bqk"}> : () -> ()
    %cst_237 = arith.constant dense<0.000000e+00> : vector<2x8x8xf32>
    %441 = tpu.matmul %439, %440, %cst_237 {dimension_numbers = #tpu.dot_dimension_numbers<[2], [2], [1], [1], [0, 0, 0, 1, 1, 1], [0], [0]>} : vector<2x8x8xf32>, vector<2x8x8xf32>, vector<2x8x8xf32> -> vector<2x8x8xf32>
    "tpu.trace_stop"() : () -> ()
    %cst_238 = arith.constant dense<0xFF800000> : vector<2x8xf32>
    %442 = vector.multi_reduction <maximumf>, %441, %cst_238 [2] : vector<2x8x8xf32> to vector<2x8xf32>
    %443 = vector.shape_cast %442 : vector<2x8xf32> to vector<2x8x1xf32>
    %444 = vector.broadcast %443 : vector<2x8x1xf32> to vector<2x8x8xf32>
    %445 = arith.subf %441, %444 : vector<2x8x8xf32>
    %446 = math.exp %445 : vector<2x8x8xf32>
    %cst_239 = arith.constant dense<0.000000e+00> : vector<2x8xf32>
    %447 = vector.multi_reduction <add>, %446, %cst_239 [2] : vector<2x8x8xf32> to vector<2x8xf32>
    %448 = vector.shape_cast %447 : vector<2x8xf32> to vector<2x8x1xf32>
    %449 = tpu.reciprocal %448 {approx = true} : vector<2x8x1xf32> -> vector<2x8x1xf32>
    %450 = vector.broadcast %449 : vector<2x8x1xf32> to vector<2x8x8xf32>
    %451 = arith.mulf %446, %450 : vector<2x8x8xf32>
    %452 = vector.extract_strided_slice %422 {offsets = [0, 0, 8], sizes = [2, 8, 8], strides = [1, 1, 1]} : vector<2x8x32xf32> to vector<2x8x8xf32>
    "tpu.trace_start"() <{level = 10 : i32, message = "bqk,bkd->bqd"}> : () -> ()
    %cst_240 = arith.constant dense<0.000000e+00> : vector<2x8x8xf32>
    %453 = tpu.matmul %451, %452, %cst_240 {dimension_numbers = #tpu.dot_dimension_numbers<[2], [1], [1], [2], [0, 0, 0, 1, 1, 2], [0], [0]>} : vector<2x8x8xf32>, vector<2x8x8xf32>, vector<2x8x8xf32> -> vector<2x8x8xf32>
    "tpu.trace_stop"() : () -> ()
    %c0_241 = arith.constant 0 : index
    %c0_242 = arith.constant 0 : index
    %c8_243 = arith.constant 8 : index
    %454 = vector.load %arg17[%c0_241, %c0_242, %c8_243] : memref<2x8x32xf32, #tpu.memory_space<vmem>>, vector<2x8x8xf32>
    tpu.vector_store %arg17[%c0_241, %c0_242, %c8_243], %453 {strides = array<i32>} : memref<2x8x32xf32, #tpu.memory_space<vmem>>, vector<2x8x8xf32>,
    %455 = vector.extract_strided_slice %418 {offsets = [0, 0, 16], sizes = [2, 8, 8], strides = [1, 1, 1]} : vector<2x8x32xf32> to vector<2x8x8xf32>
    %456 = vector.extract_strided_slice %420 {offsets = [0, 0, 16], sizes = [2, 8, 8], strides = [1, 1, 1]} : vector<2x8x32xf32> to vector<2x8x8xf32>
    "tpu.trace_start"() <{level = 10 : i32, message = "bqd,bkd->bqk"}> : () -> ()
    %cst_244 = arith.constant dense<0.000000e+00> : vector<2x8x8xf32>
    %457 = tpu.matmul %455, %456, %cst_244 {dimension_numbers = #tpu.dot_dimension_numbers<[2], [2], [1], [1], [0, 0, 0, 1, 1, 1], [0], [0]>} : vector<2x8x8xf32>, vector<2x8x8xf32>, vector<2x8x8xf32> -> vector<2x8x8xf32>
    "tpu.trace_stop"() : () -> ()
    %cst_245 = arith.constant dense<0xFF800000> : vector<2x8xf32>
    %458 = vector.multi_reduction <maximumf>, %457, %cst_245 [2] : vector<2x8x8xf32> to vector<2x8xf32>
    %459 = vector.shape_cast %458 : vector<2x8xf32> to vector<2x8x1xf32>
    %460 = vector.broadcast %459 : vector<2x8x1xf32> to vector<2x8x8xf32>
    %461 = arith.subf %457, %460 : vector<2x8x8xf32>
    %462 = math.exp %461 : vector<2x8x8xf32>
    %cst_246 = arith.constant dense<0.000000e+00> : vector<2x8xf32>
    %463 = vector.multi_reduction <add>, %462, %cst_246 [2] : vector<2x8x8xf32> to vector<2x8xf32>
    %464 = vector.shape_cast %463 : vector<2x8xf32> to vector<2x8x1xf32>
    %465 = tpu.reciprocal %464 {approx = true} : vector<2x8x1xf32> -> vector<2x8x1xf32>
    %466 = vector.broadcast %465 : vector<2x8x1xf32> to vector<2x8x8xf32>
    %467 = arith.mulf %462, %466 : vector<2x8x8xf32>
    %468 = vector.extract_strided_slice %422 {offsets = [0, 0, 16], sizes = [2, 8, 8], strides = [1, 1, 1]} : vector<2x8x32xf32> to vector<2x8x8xf32>
    "tpu.trace_start"() <{level = 10 : i32, message = "bqk,bkd->bqd"}> : () -> ()
    %cst_247 = arith.constant dense<0.000000e+00> : vector<2x8x8xf32>
    %469 = tpu.matmul %467, %468, %cst_247 {dimension_numbers = #tpu.dot_dimension_numbers<[2], [1], [1], [2], [0, 0, 0, 1, 1, 2], [0], [0]>} : vector<2x8x8xf32>, vector<2x8x8xf32>, vector<2x8x8xf32> -> vector<2x8x8xf32>
    "tpu.trace_stop"() : () -> ()
    %c0_248 = arith.constant 0 : index
    %c0_249 = arith.constant 0 : index
    %c16_250 = arith.constant 16 : index
    %470 = vector.load %arg17[%c0_248, %c0_249, %c16_250] : memref<2x8x32xf32, #tpu.memory_space<vmem>>, vector<2x8x8xf32>
    tpu.vector_store %arg17[%c0_248, %c0_249, %c16_250], %469 {strides = array<i32>} : memref<2x8x32xf32, #tpu.memory_space<vmem>>, vector<2x8x8xf32>,
    %471 = vector.extract_strided_slice %418 {offsets = [0, 0, 24], sizes = [2, 8, 8], strides = [1, 1, 1]} : vector<2x8x32xf32> to vector<2x8x8xf32>
    %472 = vector.extract_strided_slice %420 {offsets = [0, 0, 24], sizes = [2, 8, 8], strides = [1, 1, 1]} : vector<2x8x32xf32> to vector<2x8x8xf32>
    "tpu.trace_start"() <{level = 10 : i32, message = "bqd,bkd->bqk"}> : () -> ()
    %cst_251 = arith.constant dense<0.000000e+00> : vector<2x8x8xf32>
    %473 = tpu.matmul %471, %472, %cst_251 {dimension_numbers = #tpu.dot_dimension_numbers<[2], [2], [1], [1], [0, 0, 0, 1, 1, 1], [0], [0]>} : vector<2x8x8xf32>, vector<2x8x8xf32>, vector<2x8x8xf32> -> vector<2x8x8xf32>
    "tpu.trace_stop"() : () -> ()
    %cst_252 = arith.constant dense<0xFF800000> : vector<2x8xf32>
    %474 = vector.multi_reduction <maximumf>, %473, %cst_252 [2] : vector<2x8x8xf32> to vector<2x8xf32>
    %475 = vector.shape_cast %474 : vector<2x8xf32> to vector<2x8x1xf32>
    %476 = vector.broadcast %475 : vector<2x8x1xf32> to vector<2x8x8xf32>
    %477 = arith.subf %473, %476 : vector<2x8x8xf32>
    %478 = math.exp %477 : vector<2x8x8xf32>
    %cst_253 = arith.constant dense<0.000000e+00> : vector<2x8xf32>
    %479 = vector.multi_reduction <add>, %478, %cst_253 [2] : vector<2x8x8xf32> to vector<2x8xf32>
    %480 = vector.shape_cast %479 : vector<2x8xf32> to vector<2x8x1xf32>
    %481 = tpu.reciprocal %480 {approx = true} : vector<2x8x1xf32> -> vector<2x8x1xf32>
    %482 = vector.broadcast %481 : vector<2x8x1xf32> to vector<2x8x8xf32>
    %483 = arith.mulf %478, %482 : vector<2x8x8xf32>
    %484 = vector.extract_strided_slice %422 {offsets = [0, 0, 24], sizes = [2, 8, 8], strides = [1, 1, 1]} : vector<2x8x32xf32> to vector<2x8x8xf32>
    "tpu.trace_start"() <{level = 10 : i32, message = "bqk,bkd->bqd"}> : () -> ()
    %cst_254 = arith.constant dense<0.000000e+00> : vector<2x8x8xf32>
    %485 = tpu.matmul %483, %484, %cst_254 {dimension_numbers = #tpu.dot_dimension_numbers<[2], [1], [1], [2], [0, 0, 0, 1, 1, 2], [0], [0]>} : vector<2x8x8xf32>, vector<2x8x8xf32>, vector<2x8x8xf32> -> vector<2x8x8xf32>
    "tpu.trace_stop"() : () -> ()
    %c0_255 = arith.constant 0 : index
    %c0_256 = arith.constant 0 : index
    %c24_257 = arith.constant 24 : index
    %486 = vector.load %arg17[%c0_255, %c0_256, %c24_257] : memref<2x8x32xf32, #tpu.memory_space<vmem>>, vector<2x8x8xf32>
    tpu.vector_store %arg17[%c0_255, %c0_256, %c24_257], %485 {strides = array<i32>} : memref<2x8x32xf32, #tpu.memory_space<vmem>>, vector<2x8x8xf32>,
    %c0_258 = arith.constant 0 : index
    %c0_259 = arith.constant 0 : index
    %c0_260 = arith.constant 0 : index
    %487 = vector.load %arg17[%c0_258, %c0_259, %c0_260] : memref<2x8x32xf32, #tpu.memory_space<vmem>>, vector<2x8x32xf32>
    %488 = vector.shape_cast %487 : vector<2x8x32xf32> to vector<16x32xf32>
    %cst_261 = arith.constant dense<0.000000e+00> : vector<16x32xf32>
    %489 = tpu.matmul %488, %395, %cst_261 {dimension_numbers = #tpu.dot_dimension_numbers<[1], [0], [0], [1], [0, 0, 1, 1], [], []>} : vector<16x32xf32>, vector<32x32xf32>, vector<16x32xf32> -> vector<16x32xf32>
    %490 = vector.broadcast %397 : vector<1x32xf32> to vector<16x32xf32>
    %491 = arith.addf %489, %490 : vector<16x32xf32>
    %492 = arith.addf %389, %491 : vector<16x32xf32>
    %cst_262 = arith.constant dense<0.000000e+00> : vector<16xf32>
    %493 = vector.multi_reduction <add>, %492, %cst_262 [1] : vector<16x32xf32> to vector<16xf32>
    %494 = vector.shape_cast %493 : vector<16xf32> to vector<16x1xf32>
    %cst_263 = arith.constant 3.200000e+01 : f32
    %495 = vector.broadcast %cst_263 : f32 to vector<16x1xf32>
    %496 = arith.divf %494, %495 : vector<16x1xf32>
    %497 = vector.broadcast %496 : vector<16x1xf32> to vector<16x32xf32>
    %498 = arith.subf %492, %497 : vector<16x32xf32>
    %499 = arith.mulf %498, %498 : vector<16x32xf32>
    %cst_264 = arith.constant dense<0.000000e+00> : vector<16xf32>
    %500 = vector.multi_reduction <add>, %499, %cst_264 [1] : vector<16x32xf32> to vector<16xf32>
    %501 = vector.shape_cast %500 : vector<16xf32> to vector<16x1xf32>
    %cst_265 = arith.constant 3.200000e+01 : f32
    %502 = vector.broadcast %cst_265 : f32 to vector<16x1xf32>
    %503 = arith.divf %501, %502 : vector<16x1xf32>
    %cst_266 = arith.constant 9.99999974E-6 : f32
    %504 = vector.broadcast %cst_266 : f32 to vector<16x1xf32>
    %505 = arith.addf %503, %504 : vector<16x1xf32>
    %506 = math.rsqrt %505 : vector<16x1xf32>
    %507 = vector.broadcast %506 : vector<16x1xf32> to vector<16x32xf32>
    %508 = arith.mulf %498, %507 : vector<16x32xf32>
    %509 = vector.broadcast %399 : vector<1x32xf32> to vector<16x32xf32>
    %510 = arith.mulf %508, %509 : vector<16x32xf32>
    %511 = vector.broadcast %401 : vector<1x32xf32> to vector<16x32xf32>
    %512 = arith.addf %510, %511 : vector<16x32xf32>
    %cst_267 = arith.constant dense<0.000000e+00> : vector<16x48xf32>
    %513 = tpu.matmul %512, %403, %cst_267 {dimension_numbers = #tpu.dot_dimension_numbers<[1], [0], [0], [1], [0, 0, 1, 1], [], []>} : vector<16x32xf32>, vector<32x48xf32>, vector<16x48xf32> -> vector<16x48xf32>
    %514 = vector.broadcast %405 : vector<1x48xf32> to vector<16x48xf32>
    %515 = arith.addf %513, %514 : vector<16x48xf32>
    %cst_268 = arith.constant 5.000000e-01 : f32
    %516 = vector.broadcast %cst_268 : f32 to vector<16x48xf32>
    %517 = arith.mulf %516, %515 : vector<16x48xf32>
    %cst_269 = arith.constant 0.707106769 : f32
    %518 = vector.broadcast %cst_269 : f32 to vector<16x48xf32>
    %519 = arith.mulf %515, %518 : vector<16x48xf32>
    %cst_270 = arith.constant 0.000000e+00 : f32
    %520 = vector.broadcast %cst_270 : f32 to vector<16x48xf32>
    %521 = arith.cmpf oge, %519, %520 : vector<16x48xf32>
    %cst_271 = arith.constant 1.000000e+00 : f32
    %cst_272 = arith.constant -1.000000e+00 : f32
    %522 = vector.broadcast %cst_271 : f32 to vector<16x48xf32>
    %523 = vector.broadcast %cst_272 : f32 to vector<16x48xf32>
    %524 = arith.select %521, %522, %523 : vector<16x48xi1>, vector<16x48xf32>
    %525 = math.absf %519 : vector<16x48xf32>
    %cst_273 = arith.constant 0.327591091 : f32
    %526 = vector.broadcast %cst_273 : f32 to vector<16x48xf32>
    %527 = arith.mulf %526, %525 : vector<16x48xf32>
    %cst_274 = arith.constant 1.000000e+00 : f32
    %528 = vector.broadcast %cst_274 : f32 to vector<16x48xf32>
    %529 = arith.addf %528, %527 : vector<16x48xf32>
    %530 = tpu.reciprocal %529 {approx = true} : vector<16x48xf32> -> vector<16x48xf32>
    %cst_275 = arith.constant 1.06140542 : f32
    %531 = vector.broadcast %cst_275 : f32 to vector<16x48xf32>
    %532 = arith.mulf %531, %530 : vector<16x48xf32>
    %cst_276 = arith.constant -1.45315206 : f32
    %533 = vector.broadcast %cst_276 : f32 to vector<16x48xf32>
    %534 = arith.addf %532, %533 : vector<16x48xf32>
    %535 = arith.mulf %534, %530 : vector<16x48xf32>
    %cst_277 = arith.constant 1.42141378 : f32
    %536 = vector.broadcast %cst_277 : f32 to vector<16x48xf32>
    %537 = arith.addf %535, %536 : vector<16x48xf32>
    %538 = arith.mulf %537, %530 : vector<16x48xf32>
    %cst_278 = arith.constant -0.284496725 : f32
    %539 = vector.broadcast %cst_278 : f32 to vector<16x48xf32>
    %540 = arith.addf %538, %539 : vector<16x48xf32>
    %541 = arith.mulf %540, %530 : vector<16x48xf32>
    %cst_279 = arith.constant 0.254829586 : f32
    %542 = vector.broadcast %cst_279 : f32 to vector<16x48xf32>
    %543 = arith.addf %541, %542 : vector<16x48xf32>
    %544 = arith.mulf %543, %530 : vector<16x48xf32>
    %cst_280 = arith.constant 0.000000e+00 : f32
    %545 = vector.broadcast %cst_280 : f32 to vector<16x48xf32>
    %546 = arith.subf %545, %525 : vector<16x48xf32>
    %547 = arith.mulf %546, %525 : vector<16x48xf32>
    %548 = math.exp %547 : vector<16x48xf32>
    %549 = arith.mulf %544, %548 : vector<16x48xf32>
    %cst_281 = arith.constant 1.000000e+00 : f32
    %550 = vector.broadcast %cst_281 : f32 to vector<16x48xf32>
    %551 = arith.subf %550, %549 : vector<16x48xf32>
    %552 = arith.mulf %524, %551 : vector<16x48xf32>
    %cst_282 = arith.constant 1.000000e+00 : f32
    %553 = vector.broadcast %cst_282 : f32 to vector<16x48xf32>
    %554 = arith.addf %553, %552 : vector<16x48xf32>
    %555 = arith.mulf %517, %554 : vector<16x48xf32>
    %cst_283 = arith.constant dense<0.000000e+00> : vector<16x32xf32>
    %556 = tpu.matmul %555, %407, %cst_283 {dimension_numbers = #tpu.dot_dimension_numbers<[1], [0], [0], [1], [0, 0, 1, 1], [], []>} : vector<16x48xf32>, vector<48x32xf32>, vector<16x32xf32> -> vector<16x32xf32>
    %557 = vector.broadcast %409 : vector<1x32xf32> to vector<16x32xf32>
    %558 = arith.addf %556, %557 : vector<16x32xf32>
    %559 = arith.addf %512, %558 : vector<16x32xf32>
    %cst_284 = arith.constant dense<0.000000e+00> : vector<16xf32>
    %560 = vector.multi_reduction <add>, %559, %cst_284 [1] : vector<16x32xf32> to vector<16xf32>
    %561 = vector.shape_cast %560 : vector<16xf32> to vector<16x1xf32>
    %cst_285 = arith.constant 3.200000e+01 : f32
    %562 = vector.broadcast %cst_285 : f32 to vector<16x1xf32>
    %563 = arith.divf %561, %562 : vector<16x1xf32>
    %564 = vector.broadcast %563 : vector<16x1xf32> to vector<16x32xf32>
    %565 = arith.subf %559, %564 : vector<16x32xf32>
    %566 = arith.mulf %565, %565 : vector<16x32xf32>
    %cst_286 = arith.constant dense<0.000000e+00> : vector<16xf32>
    %567 = vector.multi_reduction <add>, %566, %cst_286 [1] : vector<16x32xf32> to vector<16xf32>
    %568 = vector.shape_cast %567 : vector<16xf32> to vector<16x1xf32>
    %cst_287 = arith.constant 3.200000e+01 : f32
    %569 = vector.broadcast %cst_287 : f32 to vector<16x1xf32>
    %570 = arith.divf %568, %569 : vector<16x1xf32>
    %cst_288 = arith.constant 9.99999974E-6 : f32
    %571 = vector.broadcast %cst_288 : f32 to vector<16x1xf32>
    %572 = arith.addf %570, %571 : vector<16x1xf32>
    %573 = math.rsqrt %572 : vector<16x1xf32>
    %574 = vector.broadcast %573 : vector<16x1xf32> to vector<16x32xf32>
    %575 = arith.mulf %565, %574 : vector<16x32xf32>
    %576 = vector.broadcast %411 : vector<1x32xf32> to vector<16x32xf32>
    %577 = arith.mulf %575, %576 : vector<16x32xf32>
    %578 = vector.broadcast %413 : vector<1x32xf32> to vector<16x32xf32>
    %579 = arith.addf %577, %578 : vector<16x32xf32>
    %c0_289 = arith.constant 0 : index
    %c0_290 = arith.constant 0 : index
    %580 = vector.load %arg16[%c0_289, %c0_290] : memref<16x32xf32, #tpu.memory_space<vmem>>, vector<16x32xf32>
    tpu.vector_store %arg16[%c0_289, %c0_290], %579 {strides = array<i32>} : memref<16x32xf32, #tpu.memory_space<vmem>>, vector<16x32xf32>,
    return
  }
}

</mosaic_0001>

<llo_original>
// kernel: tpu_custom_call.1
$region0: #{tpu_custom_call.1}
  #allocation0 [shape = 'u32[]', space=smem, size = 0x4, offset = 0x4, fixed_abs, tag = 'smem constant byte address 0x4 - core index']
  #allocation1 [shape = 'u32[144,128]{1,0:T(1,128)}', space=vmem, size = 0x12000, scoped, tag = 'internal scratch']
  #allocation2 [shape = 'f32[2,8,32]{2,1,0:T(8,128)}', space=vmem, size = 0x2000, scoped, tag = 'scratch operand']
  %s0 = inlined_call_operand.vmem [shape: f32[16,1], index: 0, kind: input, shape index: {}]
  %s1 = inlined_call_operand.hbm [shape: f32[1,32], index: 1, kind: input, shape index: {}]
  %s2 = inlined_call_operand.hbm [shape: f32[1,32], index: 2, kind: input, shape index: {}]
  %s3 = inlined_call_operand.hbm [shape: f32[16,32], index: 3, kind: input, shape index: {}]
  %s4 = inlined_call_operand.vmem [shape: f32[3,32,96], index: 4, kind: input, shape index: {}]
  %s5 = inlined_call_operand.vmem [shape: f32[3,1,96], index: 5, kind: input, shape index: {}]
  %s6 = inlined_call_operand.vmem [shape: f32[3,32,32], index: 6, kind: input, shape index: {}]
  %s7 = inlined_call_operand.hbm [shape: f32[3,1,32], index: 7, kind: input, shape index: {}]
  %s8 = inlined_call_operand.hbm [shape: f32[3,1,32], index: 8, kind: input, shape index: {}]
  %s9 = inlined_call_operand.hbm [shape: f32[3,1,32], index: 9, kind: input, shape index: {}]
  %s10 = inlined_call_operand.vmem [shape: f32[3,32,48], index: 10, kind: input, shape index: {}]
  %s11 = inlined_call_operand.vmem [shape: f32[3,1,48], index: 11, kind: input, shape index: {}]
  %s12 = inlined_call_operand.vmem [shape: f32[3,48,32], index: 12, kind: input, shape index: {}]
  %s13 = inlined_call_operand.vmem [shape: f32[3,1,32], index: 13, kind: input, shape index: {}]
  %s14 = inlined_call_operand.vmem [shape: f32[3,1,32], index: 14, kind: input, shape index: {}]
  %s15 = inlined_call_operand.vmem [shape: f32[3,1,32], index: 15, kind: input, shape index: {}]
  %s16 = inlined_call_operand.hbm [shape: f32[16,32], index: 16, kind: output, shape index: {}]
  %s17 = sld [smem:[#allocation0]]
  $region98: #{tpu_custom_call.1} parent=0
    _
  %s19 = ssub.s32 1, %s17
  %s20 = scalar_select 0, %s19, %s17
  $region1: #{tpu_custom_call.1} parent=0
    #allocation3 [shape = 'u8[512]{0}', space=vmem, size = 0x400, scoped, tag = 'input window, operand 1, single buffered']
    #allocation4 [shape = 's32[1]{0}', space=sflag, size = 0x4, scoped, tag = 'scoped memory for tpu_custom_call.1']
    #allocation5 [shape = 's32[1]{0}', space=sflag, size = 0x4, scoped, tag = 'scoped memory for tpu_custom_call.1']
    #allocation6 [shape = 'u8[512]{0}', space=vmem, size = 0x400, scoped, tag = 'input window, operand 2, single buffered']
    #allocation7 [shape = 's32[1]{0}', space=sflag, size = 0x4, scoped, tag = 'scoped memory for tpu_custom_call.1']
    #allocation8 [shape = 'u8[8192]{0}', space=vmem, size = 0x2000, scoped, tag = 'input window, operand 3, single buffered']
    #allocation9 [shape = 'u8[1536]{0}', space=vmem, size = 0x800, scoped, tag = 'input window, operand 7, single buffered']
    #allocation10 [shape = 's32[1]{0}', space=sflag, size = 0x4, scoped, tag = 'scoped memory for tpu_custom_call.1']
    #allocation11 [shape = 'u8[1536]{0}', space=vmem, size = 0x800, scoped, tag = 'input window, operand 8, single buffered']
    #allocation12 [shape = 'u8[1536]{0}', space=vmem, size = 0x800, scoped, tag = 'input window, operand 9, single buffered']
    #allocation13 [shape = 's32[1]{0}', space=sflag, size = 0x4, scoped, tag = 'scoped memory for tpu_custom_call.1']
    #allocation14 [shape = 'u8[8192]{0}', space=vmem, size = 0x2000, scoped, tag = 'output window, operand 0, single buffered']
    %21 = vsyncpa [#allocation4], 0
    %22 = vsyncpa [#allocation7], 0
    %23 = vsyncpa [#allocation10], 0
    %24 = vsyncpa [#allocation13], 0
    %25 = vsyncpa [#allocation5], 0
    // Predicated region
    $region2: #{tpu_custom_call.1} parent=1 // pred_check
      _
    $region3: #{tpu_custom_call.1} parent=1 // pred_check_branch
      %27 = sbr.rel (0) target = $region5
    $region4: #{tpu_custom_call.1} parent=1 // pred_region
      _
    $region5: #{tpu_custom_call.1} parent=1 // pred_fallthru
      _
    // Predicated region
    $region6: #{tpu_custom_call.1} parent=1 // pred_check
      _
    $region7: #{tpu_custom_call.1} parent=1 // pred_check_branch
      %29 = sbr.rel (0) target = $region9
    $region8: #{tpu_custom_call.1} parent=1 // pred_region
      %s31 = ssub.s32 16, 16
      %32 = vsyncadd [#allocation4], %s31
      %s34 = sshll.u32 [#allocation3], 4
      %s35 = int_to_ptr.vmem [resolvable:$true] %s34
      %37 = dma.hbm_to_vmem [thread:$0]  %s1, 16, %s35, [#allocation4]
    $region9: #{tpu_custom_call.1} parent=1 // pred_fallthru
      _
    // Predicated region
    $region10: #{tpu_custom_call.1} parent=1 // pred_check
      _
    $region11: #{tpu_custom_call.1} parent=1 // pred_check_branch
      %39 = sbr.rel (0) target = $region13
    $region12: #{tpu_custom_call.1} parent=1 // pred_region
      %s41 = ssub.s32 16, 16
      %42 = vsyncadd [#allocation7], %s41
      %s44 = sshll.u32 [#allocation6], 4
      %s45 = int_to_ptr.vmem [resolvable:$true] %s44
      %47 = dma.hbm_to_vmem [thread:$0]  %s2, 16, %s45, [#allocation7]
    $region13: #{tpu_custom_call.1} parent=1 // pred_fallthru
      _
    // Predicated region
    $region14: #{tpu_custom_call.1} parent=1 // pred_check
      _
    $region15: #{tpu_custom_call.1} parent=1 // pred_check_branch
      %49 = sbr.rel (0) target = $region17
    $region16: #{tpu_custom_call.1} parent=1 // pred_region
      %s51 = ssub.s32 256, 256
      %52 = vsyncadd [#allocation7], %s51
      %s53 = sshll.u32 [#allocation8], 4
      %s54 = int_to_ptr.vmem [resolvable:$true] %s53
      %59 = dma.hbm_to_vmem [thread:$0]  %s3, 256, %s54, [#allocation7], 128, 128, 8
    $region17: #{tpu_custom_call.1} parent=1 // pred_fallthru
      _
    // Predicated region
    $region18: #{tpu_custom_call.1} parent=1 // pred_check
      _
    $region19: #{tpu_custom_call.1} parent=1 // pred_check_branch
      %61 = sbr.rel (0) target = $region21
    $region20: #{tpu_custom_call.1} parent=1 // pred_region
      _
    $region21: #{tpu_custom_call.1} parent=1 // pred_fallthru
      _
    // Predicated region
    $region22: #{tpu_custom_call.1} parent=1 // pred_check
      _
    $region23: #{tpu_custom_call.1} parent=1 // pred_check_branch
      %63 = sbr.rel (0) target = $region25
    $region24: #{tpu_custom_call.1} parent=1 // pred_region
      _
    $region25: #{tpu_custom_call.1} parent=1 // pred_fallthru
      _
    // Predicated region
    $region26: #{tpu_custom_call.1} parent=1 // pred_check
      _
    $region27: #{tpu_custom_call.1} parent=1 // pred_check_branch
      %65 = sbr.rel (0) target = $region29
    $region28: #{tpu_custom_call.1} parent=1 // pred_region
      _
    $region29: #{tpu_custom_call.1} parent=1 // pred_fallthru
      _
    // Predicated region
    $region30: #{tpu_custom_call.1} parent=1 // pred_check
      _
    $region31: #{tpu_custom_call.1} parent=1 // pred_check_branch
      %67 = sbr.rel (0) target = $region33
    $region32: #{tpu_custom_call.1} parent=1 // pred_region
      %s69 = ssub.s32 48, 48
      %70 = vsyncadd [#allocation10], %s69
      %s71 = sshll.u32 [#allocation9], 4
      %s72 = int_to_ptr.vmem [resolvable:$true] %s71
      %77 = dma.hbm_to_vmem [thread:$0]  %s7, 48, %s72, [#allocation10], 16, 16, 1
    $region33: #{tpu_custom_call.1} parent=1 // pred_fallthru
      _
    // Predicated region
    $region34: #{tpu_custom_call.1} parent=1 // pred_check
      _
    $region35: #{tpu_custom_call.1} parent=1 // pred_check_branch
      %79 = sbr.rel (0) target = $region37
    $region36: #{tpu_custom_call.1} parent=1 // pred_region
      %s81 = ssub.s32 48, 48
      %82 = vsyncadd [#allocation10], %s81
      %s83 = sshll.u32 [#allocation11], 4
      %s84 = int_to_ptr.vmem [resolvable:$true] %s83
      %89 = dma.hbm_to_vmem [thread:$0]  %s8, 48, %s84, [#allocation10], 16, 16, 1
    $region37: #{tpu_custom_call.1} parent=1 // pred_fallthru
      _
    // Predicated region
    $region38: #{tpu_custom_call.1} parent=1 // pred_check
      _
    $region39: #{tpu_custom_call.1} parent=1 // pred_check_branch
      %91 = sbr.rel (0) target = $region41
    $region40: #{tpu_custom_call.1} parent=1 // pred_region
      %s93 = ssub.s32 48, 48
      %94 = vsyncadd [#allocation13], %s93
      %s95 = sshll.u32 [#allocation12], 4
      %s96 = int_to_ptr.vmem [resolvable:$true] %s95
      %101 = dma.hbm_to_vmem [thread:$0]  %s9, 48, %s96, [#allocation13], 16, 16, 1
    $region41: #{tpu_custom_call.1} parent=1 // pred_fallthru
      _
    // Predicated region
    $region42: #{tpu_custom_call.1} parent=1 // pred_check
      _
    $region43: #{tpu_custom_call.1} parent=1 // pred_check_branch
      %103 = sbr.rel (0) target = $region45
    $region44: #{tpu_custom_call.1} parent=1 // pred_region
      _
    $region45: #{tpu_custom_call.1} parent=1 // pred_fallthru
      _
    // Predicated region
    $region46: #{tpu_custom_call.1} parent=1 // pred_check
      _
    $region47: #{tpu_custom_call.1} parent=1 // pred_check_branch
      %105 = sbr.rel (0) target = $region49
    $region48: #{tpu_custom_call.1} parent=1 // pred_region
      _
    $region49: #{tpu_custom_call.1} parent=1 // pred_fallthru
      _
    // Predicated region
    $region50: #{tpu_custom_call.1} parent=1 // pred_check
      _
    $region51: #{tpu_custom_call.1} parent=1 // pred_check_branch
      %107 = sbr.rel (0) target = $region53
    $region52: #{tpu_custom_call.1} parent=1 // pred_region
      _
    $region53: #{tpu_custom_call.1} parent=1 // pred_fallthru
      _
    // Predicated region
    $region54: #{tpu_custom_call.1} parent=1 // pred_check
      _
    $region55: #{tpu_custom_call.1} parent=1 // pred_check_branch
      %109 = sbr.rel (0) target = $region57
    $region56: #{tpu_custom_call.1} parent=1 // pred_region
      _
    $region57: #{tpu_custom_call.1} parent=1 // pred_fallthru
      _
    // Predicated region
    $region58: #{tpu_custom_call.1} parent=1 // pred_check
      _
    $region59: #{tpu_custom_call.1} parent=1 // pred_check_branch
      %111 = sbr.rel (0) target = $region61
    $region60: #{tpu_custom_call.1} parent=1 // pred_region
      _
    $region61: #{tpu_custom_call.1} parent=1 // pred_fallthru
      _
    // Predicated region
    $region62: #{tpu_custom_call.1} parent=1 // pred_check
      _
    $region63: #{tpu_custom_call.1} parent=1 // pred_check_branch
      %113 = sbr.rel (0) target = $region65
    $region64: #{tpu_custom_call.1} parent=1 // pred_region
      _
    $region65: #{tpu_custom_call.1} parent=1 // pred_fallthru
      _
    // Predicated region
    $region66: #{tpu_custom_call.1} parent=1 // pred_check
      _
    $region67: #{tpu_custom_call.1} parent=1 // pred_check_branch
      %115 = sbr.rel (0) target = $region69
    $region68: #{tpu_custom_call.1} parent=1 // pred_region
      %116 = dma.done [#allocation4], 16
    $region69: #{tpu_custom_call.1} parent=1 // pred_fallthru
      _
    // Predicated region
    $region70: #{tpu_custom_call.1} parent=1 // pred_check
      _
    $region71: #{tpu_custom_call.1} parent=1 // pred_check_branch
      %118 = sbr.rel (0) target = $region73
    $region72: #{tpu_custom_call.1} parent=1 // pred_region
      %119 = dma.done [#allocation7], 16
    $region73: #{tpu_custom_call.1} parent=1 // pred_fallthru
      _
    // Predicated region
    $region74: #{tpu_custom_call.1} parent=1 // pred_check
      _
    $region75: #{tpu_custom_call.1} parent=1 // pred_check_branch
      %121 = sbr.rel (0) target = $region77
    $region76: #{tpu_custom_call.1} parent=1 // pred_region
      %122 = dma.done [#allocation7], 256
    $region77: #{tpu_custom_call.1} parent=1 // pred_fallthru
      _
    // Predicated region
    $region78: #{tpu_custom_call.1} parent=1 // pred_check
      _
    $region79: #{tpu_custom_call.1} parent=1 // pred_check_branch
      %124 = sbr.rel (0) target = $region81
    $region80: #{tpu_custom_call.1} parent=1 // pred_region
      %125 = dma.done [#allocation10], 48
    $region81: #{tpu_custom_call.1} parent=1 // pred_fallthru
      _
    // Predicated region
    $region82: #{tpu_custom_call.1} parent=1 // pred_check
      _
    $region83: #{tpu_custom_call.1} parent=1 // pred_check_branch
      %127 = sbr.rel (0) target = $region85
    $region84: #{tpu_custom_call.1} parent=1 // pred_region
      %128 = dma.done [#allocation10], 48
    $region85: #{tpu_custom_call.1} parent=1 // pred_fallthru
      _
    // Predicated region
    $region86: #{tpu_custom_call.1} parent=1 // pred_check
      _
    $region87: #{tpu_custom_call.1} parent=1 // pred_check_branch
      %130 = sbr.rel (0) target = $region89
    $region88: #{tpu_custom_call.1} parent=1 // pred_region
      %131 = dma.done [#allocation13], 48
    $region89: #{tpu_custom_call.1} parent=1 // pred_fallthru
      _
    %v132 = vld [vmem:[%s0] sm:$0xff]
    %v133 = vld [vmem:[%s0 + $0x8] sm:$0xff]
    %v134 = vld [vmem:[#allocation3] sm:$0x1]
    %136 = vset.pattern.permute.xlu0 0
    %137 = vperm.xlu0 %136, %v132
    %v138 = vpop.permute.xlu0 %137
    %141 = vset.pattern.permute.xlu0 0
    %142 = vperm.xlu0 %141, %v133
    %v143 = vpop.permute.xlu0 %142
    %v146 = vlaneseq
    %v147 = vshrl.u32 %v146, 7
    %v148 = vsub.s32 0, %v147
    %v149 = vrot.slane %v134, %v148
    %v151 = vmul.f32 %v138, %v149
    %v152 = vmul.f32 %v143, %v149
    %v153 = vld [vmem:[#allocation6] sm:$0x1]
    %v155 = vlaneseq
    %v156 = vshrl.u32 %v155, 7
    %v157 = vsub.s32 0, %v156
    %v158 = vrot.slane %v153, %v157
    %v160 = vadd.f32 %v151, %v158
    %v161 = vadd.f32 %v152, %v158
    %v162 = vld [vmem:[#allocation8] sm:$0xff]
    %v163 = vld [vmem:[#allocation8 + $0x8] sm:$0xff]
    %v164 = vadd.f32 %v160, %v162
    %v165 = vadd.f32 %v161, %v163
    %v166 = vld [vmem:[%s4] sm:$0xff]
    %v167 = vld [vmem:[%s4 + $0x8] sm:$0xff]
    %v168 = vld [vmem:[%s4 + $0x10] sm:$0xff]
    %v169 = vld [vmem:[%s4 + $0x18] sm:$0xff]
    %v170 = vld [vmem:[%s5] sm:$0x1]
    %v171 = vld [vmem:[%s6] sm:$0xff]
    %v172 = vld [vmem:[%s6 + $0x8] sm:$0xff]
    %v173 = vld [vmem:[%s6 + $0x10] sm:$0xff]
    %v174 = vld [vmem:[%s6 + $0x18] sm:$0xff]
    %v175 = vld [vmem:[#allocation9] sm:$0x1]
    %v176 = vld [vmem:[#allocation11] sm:$0x1]
    %v177 = vld [vmem:[#allocation12] sm:$0x1]
    %v178 = vld [vmem:[%s10] sm:$0xff]
    %v179 = vld [vmem:[%s10 + $0x8] sm:$0xff]
    %v180 = vld [vmem:[%s10 + $0x10] sm:$0xff]
    %v181 = vld [vmem:[%s10 + $0x18] sm:$0xff]
    %v182 = vld [vmem:[%s11] sm:$0x1]
    %v183 = vld [vmem:[%s12] sm:$0xff]
    %v184 = vld [vmem:[%s12 + $0x8] sm:$0xff]
    %v185 = vld [vmem:[%s12 + $0x10] sm:$0xff]
    %v186 = vld [vmem:[%s12 + $0x18] sm:$0xff]
    %v187 = vld [vmem:[%s12 + $0x20] sm:$0xff]
    %v188 = vld [vmem:[%s12 + $0x28] sm:$0xff]
    %v189 = vld [vmem:[%s13] sm:$0x1]
    %v190 = vld [vmem:[%s14] sm:$0x1]
    %v191 = vld [vmem:[%s15] sm:$0x1]
    %v193 = vlaneseq
    %v194 = vshrl.u32 %v193, 7
    %v195 = vsub.s32 0, %v194
    %v196 = vrot.slane %v170, %v195
    %vm198 = vcmask 261120
    %v200 = vsel %vm198, %v164, 0
    %v203 = vsel %vm198, %v165, 0
    %205 = vmatprep.subr.mxu0 0.0
    %206 = vmatpush1.msra.mxu0 %v166
    %207 = vmatprep.subr.mxu0 0.0
    %208 = vmatpush1.msra.mxu0 %v167
    %209 = vmatprep.subr.mxu0 0.0
    %210 = vmatpush1.msra.mxu0 %v168
    %211 = vmatprep.subr.mxu0 0.0
    %212 = vmatpush1.msra.mxu0 %v169
    %213 = vmatprep.subr.mxu0 0.0
    %214 = vmatpush1.msra.mxu0 0.0
    %215 = vmatprep.subr.mxu0 0.0
    %216 = vmatpush1.msra.mxu0 0.0
    %217 = vmatprep.subr.mxu0 0.0
    %218 = vmatpush1.msra.mxu0 0.0
    %219 = vmatprep.subr.mxu0 0.0
    %220 = vmatpush1.msra.mxu0 0.0
    %221 = vmatprep.subr.mxu0 0.0
    %222 = vmatpush1.msra.mxu0 0.0
    %223 = vmatprep.subr.mxu0 0.0
    %224 = vmatpush1.msra.mxu0 0.0
    %225 = vmatprep.subr.mxu0 0.0
    %226 = vmatpush1.msra.mxu0 0.0
    %227 = vmatprep.subr.mxu0 0.0
    %228 = vmatpush1.msra.mxu0 0.0
    %229 = vmatprep.subr.mxu0 0.0
    %230 = vmatpush1.msra.mxu0 0.0
    %231 = vmatprep.subr.mxu0 0.0
    %232 = vmatpush1.msra.mxu0 0.0
    %233 = vmatprep.subr.mxu0 0.0
    %234 = vmatpush1.msra.mxu0 0.0
    %235 = vmatprep.subr.mxu0 0.0
    %236 = vmatpush1.msra.mxu0 0.0
    %237 = vmatprep.subr.mxu0 0.0
    %238 = vmatpush1.msra.mxu0 0.0
    %239 = vmatprep.subr.mxu0 0.0
    %240 = vmatpush1.msra.mxu0 0.0
    %241 = vmatprep.subr.mxu0 0.0
    %242 = vmatpush1.msra.mxu0 0.0
    %243 = vmatprep.subr.mxu0 0.0
    %244 = vmatpush1.msra.mxu0 0.0
    %245 = vmatprep.subr.mxu0 0.0
    %246 = vmatpush1.msra.mxu0 0.0
    %247 = vmatprep.subr.mxu0 0.0
    %248 = vmatpush1.msra.mxu0 0.0
    %249 = vmatprep.subr.mxu0 0.0
    %250 = vmatpush1.msra.mxu0 0.0
    %251 = vmatprep.subr.mxu0 0.0
    %252 = vmatpush1.msra.mxu0 0.0
    %253 = vmatprep.subr.mxu0 0.0
    %254 = vmatpush1.msra.mxu0 0.0
    %255 = vmatprep.subr.mxu0 0.0
    %256 = vmatpush1.msra.mxu0 0.0
    %257 = vmatprep.subr.mxu0 0.0
    %258 = vmatpush1.msra.mxu0 0.0
    %259 = vmatprep.subr.mxu0 0.0
    %260 = vmatpush1.msra.mxu0 0.0
    %261 = vmatprep.subr.mxu0 0.0
    %262 = vmatpush1.msra.mxu0 0.0
    %263 = vmatprep.subr.mxu0 0.0
    %264 = vmatpush1.msra.mxu0 0.0
    %265 = vmatprep.subr.mxu0 0.0
    %266 = vmatpush1.msra.mxu0 0.0
    %267 = vmatprep.subr.mxu0 0.0
    %268 = vmatpush1.msra.mxu0 0.0
    %269 = vmatprep.mubr.f32.mxu0 0.0
    %270 = vmatmul.mubr.f32.gmra.mrb[0].mxu0 %v200
    %v271 = vpop.f32.mrb[0].mxu0
    %v272 = vadd.f32 %v196, %v271
    %v273 = vpop.f32.mrb[0].mxu0
    %274 = vmatprep.mubr.f32.mxu0 0.0
    %275 = vmatmul.mubr.f32.gmra.mrb[0].mxu0 %v203
    %v276 = vpop.f32.mrb[0].mxu0
    %v277 = vadd.f32 %v196, %v276
    %v278 = vpop.f32.mrb[0].mxu0
    %279 = vdwg.mxu0
    %281 = vrot.lane.b32.xlu0 %v272, 96
    %v282 = vpop.permute.xlu0 %281
    %vm283 = vcmask 64512
    %v284 = vsel %vm283, %v272, 0
    %v286 = vsel %vm283, %v282, 0
    %288 = vmatprep.subr.mxu0 0.0
    %289 = vmatpush1.xpose.msra.mxu0 %v286
    %290 = vmatprep.subr.mxu0 0.0
    %291 = vmatpush1.xpose.msra.mxu0 0.0
    %292 = vmatprep.subr.mxu0 0.0
    %293 = vmatpush1.xpose.msra.mxu0 0.0
    %294 = vmatprep.subr.mxu0 0.0
    %295 = vmatpush1.xpose.msra.mxu0 0.0
    %296 = vmatprep.subr.mxu0 0.0
    %297 = vmatpush1.xpose.msra.mxu0 0.0
    %298 = vmatprep.subr.mxu0 0.0
    %299 = vmatpush1.xpose.msra.mxu0 0.0
    %300 = vmatprep.subr.mxu0 0.0
    %301 = vmatpush1.xpose.msra.mxu0 0.0
    %302 = vmatprep.subr.mxu0 0.0
    %303 = vmatpush1.xpose.msra.mxu0 0.0
    %304 = vmatprep.subr.mxu0 0.0
    %305 = vmatpush1.xpose.msra.mxu0 0.0
    %306 = vmatprep.subr.mxu0 0.0
    %307 = vmatpush1.xpose.msra.mxu0 0.0
    %308 = vmatprep.subr.mxu0 0.0
    %309 = vmatpush1.xpose.msra.mxu0 0.0
    %310 = vmatprep.subr.mxu0 0.0
    %311 = vmatpush1.xpose.msra.mxu0 0.0
    %312 = vmatprep.subr.mxu0 0.0
    %313 = vmatpush1.xpose.msra.mxu0 0.0
    %314 = vmatprep.subr.mxu0 0.0
    %315 = vmatpush1.xpose.msra.mxu0 0.0
    %316 = vmatprep.subr.mxu0 0.0
    %317 = vmatpush1.xpose.msra.mxu0 0.0
    %318 = vmatprep.subr.mxu0 0.0
    %319 = vmatpush1.xpose.msra.mxu0 0.0
    %320 = vmatprep.subr.mxu0 0.0
    %321 = vmatpush1.xpose.msra.mxu0 0.0
    %322 = vmatprep.subr.mxu0 0.0
    %323 = vmatpush1.xpose.msra.mxu0 0.0
    %324 = vmatprep.subr.mxu0 0.0
    %325 = vmatpush1.xpose.msra.mxu0 0.0
    %326 = vmatprep.subr.mxu0 0.0
    %327 = vmatpush1.xpose.msra.mxu0 0.0
    %328 = vmatprep.subr.mxu0 0.0
    %329 = vmatpush1.xpose.msra.mxu0 0.0
    %330 = vmatprep.subr.mxu0 0.0
    %331 = vmatpush1.xpose.msra.mxu0 0.0
    %332 = vmatprep.subr.mxu0 0.0
    %333 = vmatpush1.xpose.msra.mxu0 0.0
    %334 = vmatprep.subr.mxu0 0.0
    %335 = vmatpush1.xpose.msra.mxu0 0.0
    %336 = vmatprep.subr.mxu0 0.0
    %337 = vmatpush1.xpose.msra.mxu0 0.0
    %338 = vmatprep.subr.mxu0 0.0
    %339 = vmatpush1.xpose.msra.mxu0 0.0
    %340 = vmatprep.subr.mxu0 0.0
    %341 = vmatpush1.xpose.msra.mxu0 0.0
    %342 = vmatprep.subr.mxu0 0.0
    %343 = vmatpush1.xpose.msra.mxu0 0.0
    %344 = vmatprep.subr.mxu0 0.0
    %345 = vmatpush1.xpose.msra.mxu0 0.0
    %346 = vmatprep.subr.mxu0 0.0
    %347 = vmatpush1.xpose.msra.mxu0 0.0
    %348 = vmatprep.subr.mxu0 0.0
    %349 = vmatpush1.xpose.msra.mxu0 0.0
    %350 = vmatprep.subr.mxu0 0.0
    %351 = vmatpush1.xpose.msra.mxu0 0.0
    %352 = vmatprep.mubr.f32.mxu0 0.0
    %353 = vmatmul.mubr.f32.gmra.mrb[0].mxu0 %v284
    %v354 = vpop.f32.mrb[0].mxu0
    %v355 = vadd.f32 0.0, %v354
    %v356 = vpop.f32.mrb[0].mxu0
    %357 = vdwg.mxu0
    %359 = vrot.lane.b32.xlu0 %v277, 96
    %v360 = vpop.permute.xlu0 %359
    %v361 = vsel %vm283, %v277, 0
    %v363 = vsel %vm283, %v360, 0
    %365 = vmatprep.subr.mxu0 0.0
    %366 = vmatpush1.xpose.msra.mxu0 %v363
    %367 = vmatprep.subr.mxu0 0.0
    %368 = vmatpush1.xpose.msra.mxu0 0.0
    %369 = vmatprep.subr.mxu0 0.0
    %370 = vmatpush1.xpose.msra.mxu0 0.0
    %371 = vmatprep.subr.mxu0 0.0
    %372 = vmatpush1.xpose.msra.mxu0 0.0
    %373 = vmatprep.subr.mxu0 0.0
    %374 = vmatpush1.xpose.msra.mxu0 0.0
    %375 = vmatprep.subr.mxu0 0.0
    %376 = vmatpush1.xpose.msra.mxu0 0.0
    %377 = vmatprep.subr.mxu0 0.0
    %378 = vmatpush1.xpose.msra.mxu0 0.0
    %379 = vmatprep.subr.mxu0 0.0
    %380 = vmatpush1.xpose.msra.mxu0 0.0
    %381 = vmatprep.subr.mxu0 0.0
    %382 = vmatpush1.xpose.msra.mxu0 0.0
    %383 = vmatprep.subr.mxu0 0.0
    %384 = vmatpush1.xpose.msra.mxu0 0.0
    %385 = vmatprep.subr.mxu0 0.0
    %386 = vmatpush1.xpose.msra.mxu0 0.0
    %387 = vmatprep.subr.mxu0 0.0
    %388 = vmatpush1.xpose.msra.mxu0 0.0
    %389 = vmatprep.subr.mxu0 0.0
    %390 = vmatpush1.xpose.msra.mxu0 0.0
    %391 = vmatprep.subr.mxu0 0.0
    %392 = vmatpush1.xpose.msra.mxu0 0.0
    %393 = vmatprep.subr.mxu0 0.0
    %394 = vmatpush1.xpose.msra.mxu0 0.0
    %395 = vmatprep.subr.mxu0 0.0
    %396 = vmatpush1.xpose.msra.mxu0 0.0
    %397 = vmatprep.subr.mxu0 0.0
    %398 = vmatpush1.xpose.msra.mxu0 0.0
    %399 = vmatprep.subr.mxu0 0.0
    %400 = vmatpush1.xpose.msra.mxu0 0.0
    %401 = vmatprep.subr.mxu0 0.0
    %402 = vmatpush1.xpose.msra.mxu0 0.0
    %403 = vmatprep.subr.mxu0 0.0
    %404 = vmatpush1.xpose.msra.mxu0 0.0
    %405 = vmatprep.subr.mxu0 0.0
    %406 = vmatpush1.xpose.msra.mxu0 0.0
    %407 = vmatprep.subr.mxu0 0.0
    %408 = vmatpush1.xpose.msra.mxu0 0.0
    %409 = vmatprep.subr.mxu0 0.0
    %410 = vmatpush1.xpose.msra.mxu0 0.0
    %411 = vmatprep.subr.mxu0 0.0
    %412 = vmatpush1.xpose.msra.mxu0 0.0
    %413 = vmatprep.subr.mxu0 0.0
    %414 = vmatpush1.xpose.msra.mxu0 0.0
    %415 = vmatprep.subr.mxu0 0.0
    %416 = vmatpush1.xpose.msra.mxu0 0.0
    %417 = vmatprep.subr.mxu0 0.0
    %418 = vmatpush1.xpose.msra.mxu0 0.0
    %419 = vmatprep.subr.mxu0 0.0
    %420 = vmatpush1.xpose.msra.mxu0 0.0
    %421 = vmatprep.subr.mxu0 0.0
    %422 = vmatpush1.xpose.msra.mxu0 0.0
    %423 = vmatprep.subr.mxu0 0.0
    %424 = vmatpush1.xpose.msra.mxu0 0.0
    %425 = vmatprep.subr.mxu0 0.0
    %426 = vmatpush1.xpose.msra.mxu0 0.0
    %427 = vmatprep.subr.mxu0 0.0
    %428 = vmatpush1.xpose.msra.mxu0 0.0
    %429 = vmatprep.mubr.f32.mxu0 0.0
    %430 = vmatmul.mubr.f32.gmra.mrb[0].mxu0 %v361
    %v431 = vpop.f32.mrb[0].mxu0
    %v432 = vadd.f32 0.0, %v431
    %v433 = vpop.f32.mrb[0].mxu0
    %434 = vdwg.mxu0
    %v435 = vsel %vm283, %v355, -inf
    %436 = vmax.xlane.f32.xlu0 %v435
    %v437 = vpop.xlane.xlu0 %436
    %v438 = vsel %vm283, %v432, -inf
    %439 = vmax.xlane.f32.xlu0 %v438
    %v440 = vpop.xlane.xlu0 %439
    %v441 = vsub.f32 %v355, %v437
    %v442 = vsub.f32 %v432, %v440
    %v443 = vmul.f32 %v441, 1.442695
    %v444 = vpow.pop %v443
    %v445 = vmul.f32 %v442, 1.442695
    %v446 = vpow.pop %v445
    %v447 = vsel %vm283, %v444, 0.0
    %448 = vadd.xlane.f32.xlu0 %v447
    %v449 = vpop.xlane.xlu0 %448
    %v450 = vsel %vm283, %v446, 0.0
    %451 = vadd.xlane.f32.xlu0 %v450
    %v452 = vpop.xlane.xlu0 %451
    %v453 = vrcp.pop %v449
    %v454 = vrcp.pop %v452
    %v455 = vmul.f32 %v444, %v453
    %v456 = vmul.f32 %v446, %v454
    %457 = vrot.lane.b32.xlu0 %v272, 64
    %v458 = vpop.permute.xlu0 %457
    %v461 = vsel %vm283, %v455, 0
    %463 = vmatprep.subr.mxu0 0.0
    %464 = vmatpush1.msra.mxu0 %v458
    %465 = vmatprep.subr.mxu0 0.0
    %466 = vmatpush1.msra.mxu0 0.0
    %467 = vmatprep.subr.mxu0 0.0
    %468 = vmatpush1.msra.mxu0 0.0
    %469 = vmatprep.subr.mxu0 0.0
    %470 = vmatpush1.msra.mxu0 0.0
    %471 = vmatprep.subr.mxu0 0.0
    %472 = vmatpush1.msra.mxu0 0.0
    %473 = vmatprep.subr.mxu0 0.0
    %474 = vmatpush1.msra.mxu0 0.0
    %475 = vmatprep.subr.mxu0 0.0
    %476 = vmatpush1.msra.mxu0 0.0
    %477 = vmatprep.subr.mxu0 0.0
    %478 = vmatpush1.msra.mxu0 0.0
    %479 = vmatprep.subr.mxu0 0.0
    %480 = vmatpush1.msra.mxu0 0.0
    %481 = vmatprep.subr.mxu0 0.0
    %482 = vmatpush1.msra.mxu0 0.0
    %483 = vmatprep.subr.mxu0 0.0
    %484 = vmatpush1.msra.mxu0 0.0
    %485 = vmatprep.subr.mxu0 0.0
    %486 = vmatpush1.msra.mxu0 0.0
    %487 = vmatprep.subr.mxu0 0.0
    %488 = vmatpush1.msra.mxu0 0.0
    %489 = vmatprep.subr.mxu0 0.0
    %490 = vmatpush1.msra.mxu0 0.0
    %491 = vmatprep.subr.mxu0 0.0
    %492 = vmatpush1.msra.mxu0 0.0
    %493 = vmatprep.subr.mxu0 0.0
    %494 = vmatpush1.msra.mxu0 0.0
    %495 = vmatprep.subr.mxu0 0.0
    %496 = vmatpush1.msra.mxu0 0.0
    %497 = vmatprep.subr.mxu0 0.0
    %498 = vmatpush1.msra.mxu0 0.0
    %499 = vmatprep.subr.mxu0 0.0
    %500 = vmatpush1.msra.mxu0 0.0
    %501 = vmatprep.subr.mxu0 0.0
    %502 = vmatpush1.msra.mxu0 0.0
    %503 = vmatprep.subr.mxu0 0.0
    %504 = vmatpush1.msra.mxu0 0.0
    %505 = vmatprep.subr.mxu0 0.0
    %506 = vmatpush1.msra.mxu0 0.0
    %507 = vmatprep.subr.mxu0 0.0
    %508 = vmatpush1.msra.mxu0 0.0
    %509 = vmatprep.subr.mxu0 0.0
    %510 = vmatpush1.msra.mxu0 0.0
    %511 = vmatprep.subr.mxu0 0.0
    %512 = vmatpush1.msra.mxu0 0.0
    %513 = vmatprep.subr.mxu0 0.0
    %514 = vmatpush1.msra.mxu0 0.0
    %515 = vmatprep.subr.mxu0 0.0
    %516 = vmatpush1.msra.mxu0 0.0
    %517 = vmatprep.subr.mxu0 0.0
    %518 = vmatpush1.msra.mxu0 0.0
    %519 = vmatprep.subr.mxu0 0.0
    %520 = vmatpush1.msra.mxu0 0.0
    %521 = vmatprep.subr.mxu0 0.0
    %522 = vmatpush1.msra.mxu0 0.0
    %523 = vmatprep.subr.mxu0 0.0
    %524 = vmatpush1.msra.mxu0 0.0
    %525 = vmatprep.subr.mxu0 0.0
    %526 = vmatpush1.msra.mxu0 0.0
    %527 = vmatprep.mubr.f32.mxu0 0.0
    %528 = vmatmul.mubr.f32.gmra.mrb[0].mxu0 %v461
    %v529 = vpop.f32.mrb[0].mxu0
    %v530 = vadd.f32 0.0, %v529
    %v531 = vpop.f32.mrb[0].mxu0
    %532 = vdwg.mxu0
    %533 = vrot.lane.b32.xlu0 %v277, 64
    %v534 = vpop.permute.xlu0 %533
    %v537 = vsel %vm283, %v456, 0
    %539 = vmatprep.subr.mxu0 0.0
    %540 = vmatpush1.msra.mxu0 %v534
    %541 = vmatprep.subr.mxu0 0.0
    %542 = vmatpush1.msra.mxu0 0.0
    %543 = vmatprep.subr.mxu0 0.0
    %544 = vmatpush1.msra.mxu0 0.0
    %545 = vmatprep.subr.mxu0 0.0
    %546 = vmatpush1.msra.mxu0 0.0
    %547 = vmatprep.subr.mxu0 0.0
    %548 = vmatpush1.msra.mxu0 0.0
    %549 = vmatprep.subr.mxu0 0.0
    %550 = vmatpush1.msra.mxu0 0.0
    %551 = vmatprep.subr.mxu0 0.0
    %552 = vmatpush1.msra.mxu0 0.0
    %553 = vmatprep.subr.mxu0 0.0
    %554 = vmatpush1.msra.mxu0 0.0
    %555 = vmatprep.subr.mxu0 0.0
    %556 = vmatpush1.msra.mxu0 0.0
    %557 = vmatprep.subr.mxu0 0.0
    %558 = vmatpush1.msra.mxu0 0.0
    %559 = vmatprep.subr.mxu0 0.0
    %560 = vmatpush1.msra.mxu0 0.0
    %561 = vmatprep.subr.mxu0 0.0
    %562 = vmatpush1.msra.mxu0 0.0
    %563 = vmatprep.subr.mxu0 0.0
    %564 = vmatpush1.msra.mxu0 0.0
    %565 = vmatprep.subr.mxu0 0.0
    %566 = vmatpush1.msra.mxu0 0.0
    %567 = vmatprep.subr.mxu0 0.0
    %568 = vmatpush1.msra.mxu0 0.0
    %569 = vmatprep.subr.mxu0 0.0
    %570 = vmatpush1.msra.mxu0 0.0
    %571 = vmatprep.subr.mxu0 0.0
    %572 = vmatpush1.msra.mxu0 0.0
    %573 = vmatprep.subr.mxu0 0.0
    %574 = vmatpush1.msra.mxu0 0.0
    %575 = vmatprep.subr.mxu0 0.0
    %576 = vmatpush1.msra.mxu0 0.0
    %577 = vmatprep.subr.mxu0 0.0
    %578 = vmatpush1.msra.mxu0 0.0
    %579 = vmatprep.subr.mxu0 0.0
    %580 = vmatpush1.msra.mxu0 0.0
    %581 = vmatprep.subr.mxu0 0.0
    %582 = vmatpush1.msra.mxu0 0.0
    %583 = vmatprep.subr.mxu0 0.0
    %584 = vmatpush1.msra.mxu0 0.0
    %585 = vmatprep.subr.mxu0 0.0
    %586 = vmatpush1.msra.mxu0 0.0
    %587 = vmatprep.subr.mxu0 0.0
    %588 = vmatpush1.msra.mxu0 0.0
    %589 = vmatprep.subr.mxu0 0.0
    %590 = vmatpush1.msra.mxu0 0.0
    %591 = vmatprep.subr.mxu0 0.0
    %592 = vmatpush1.msra.mxu0 0.0
    %593 = vmatprep.subr.mxu0 0.0
    %594 = vmatpush1.msra.mxu0 0.0
    %595 = vmatprep.subr.mxu0 0.0
    %596 = vmatpush1.msra.mxu0 0.0
    %597 = vmatprep.subr.mxu0 0.0
    %598 = vmatpush1.msra.mxu0 0.0
    %599 = vmatprep.subr.mxu0 0.0
    %600 = vmatpush1.msra.mxu0 0.0
    %601 = vmatprep.subr.mxu0 0.0
    %602 = vmatpush1.msra.mxu0 0.0
    %603 = vmatprep.mubr.f32.mxu0 0.0
    %604 = vmatmul.mubr.f32.gmra.mrb[0].mxu0 %v537
    %v605 = vpop.f32.mrb[0].mxu0
    %v606 = vadd.f32 0.0, %v605
    %v607 = vpop.f32.mrb[0].mxu0
    %608 = vdwg.mxu0
    %609 = vst.msk [vmem:[#allocation2] sm:$0xff] %vm283, %v530
    %610 = vst.msk [vmem:[#allocation2 + $0x8] sm:$0xff] %vm283, %v606
    %611 = vrot.lane.b32.xlu0 %v272, 120
    %v612 = vpop.permute.xlu0 %611
    %613 = vrot.lane.b32.xlu0 %v272, 88
    %v614 = vpop.permute.xlu0 %613
    %v615 = vsel %vm283, %v612, 0
    %v617 = vsel %vm283, %v614, 0
    %619 = vmatprep.subr.mxu0 0.0
    %620 = vmatpush1.xpose.msra.mxu0 %v617
    %621 = vmatprep.subr.mxu0 0.0
    %622 = vmatpush1.xpose.msra.mxu0 0.0
    %623 = vmatprep.subr.mxu0 0.0
    %624 = vmatpush1.xpose.msra.mxu0 0.0
    %625 = vmatprep.subr.mxu0 0.0
    %626 = vmatpush1.xpose.msra.mxu0 0.0
    %627 = vmatprep.subr.mxu0 0.0
    %628 = vmatpush1.xpose.msra.mxu0 0.0
    %629 = vmatprep.subr.mxu0 0.0
    %630 = vmatpush1.xpose.msra.mxu0 0.0
    %631 = vmatprep.subr.mxu0 0.0
    %632 = vmatpush1.xpose.msra.mxu0 0.0
    %633 = vmatprep.subr.mxu0 0.0
    %634 = vmatpush1.xpose.msra.mxu0 0.0
    %635 = vmatprep.subr.mxu0 0.0
    %636 = vmatpush1.xpose.msra.mxu0 0.0
    %637 = vmatprep.subr.mxu0 0.0
    %638 = vmatpush1.xpose.msra.mxu0 0.0
    %639 = vmatprep.subr.mxu0 0.0
    %640 = vmatpush1.xpose.msra.mxu0 0.0
    %641 = vmatprep.subr.mxu0 0.0
    %642 = vmatpush1.xpose.msra.mxu0 0.0
    %643 = vmatprep.subr.mxu0 0.0
    %644 = vmatpush1.xpose.msra.mxu0 0.0
    %645 = vmatprep.subr.mxu0 0.0
    %646 = vmatpush1.xpose.msra.mxu0 0.0
    %647 = vmatprep.subr.mxu0 0.0
    %648 = vmatpush1.xpose.msra.mxu0 0.0
    %649 = vmatprep.subr.mxu0 0.0
    %650 = vmatpush1.xpose.msra.mxu0 0.0
    %651 = vmatprep.subr.mxu0 0.0
    %652 = vmatpush1.xpose.msra.mxu0 0.0
    %653 = vmatprep.subr.mxu0 0.0
    %654 = vmatpush1.xpose.msra.mxu0 0.0
    %655 = vmatprep.subr.mxu0 0.0
    %656 = vmatpush1.xpose.msra.mxu0 0.0
    %657 = vmatprep.subr.mxu0 0.0
    %658 = vmatpush1.xpose.msra.mxu0 0.0
    %659 = vmatprep.subr.mxu0 0.0
    %660 = vmatpush1.xpose.msra.mxu0 0.0
    %661 = vmatprep.subr.mxu0 0.0
    %662 = vmatpush1.xpose.msra.mxu0 0.0
    %663 = vmatprep.subr.mxu0 0.0
    %664 = vmatpush1.xpose.msra.mxu0 0.0
    %665 = vmatprep.subr.mxu0 0.0
    %666 = vmatpush1.xpose.msra.mxu0 0.0
    %667 = vmatprep.subr.mxu0 0.0
    %668 = vmatpush1.xpose.msra.mxu0 0.0
    %669 = vmatprep.subr.mxu0 0.0
    %670 = vmatpush1.xpose.msra.mxu0 0.0
    %671 = vmatprep.subr.mxu0 0.0
    %672 = vmatpush1.xpose.msra.mxu0 0.0
    %673 = vmatprep.subr.mxu0 0.0
    %674 = vmatpush1.xpose.msra.mxu0 0.0
    %675 = vmatprep.subr.mxu0 0.0
    %676 = vmatpush1.xpose.msra.mxu0 0.0
    %677 = vmatprep.subr.mxu0 0.0
    %678 = vmatpush1.xpose.msra.mxu0 0.0
    %679 = vmatprep.subr.mxu0 0.0
    %680 = vmatpush1.xpose.msra.mxu0 0.0
    %681 = vmatprep.subr.mxu0 0.0
    %682 = vmatpush1.xpose.msra.mxu0 0.0
    %683 = vmatprep.mubr.f32.mxu0 0.0
    %684 = vmatmul.mubr.f32.gmra.mrb[0].mxu0 %v615
    %v685 = vpop.f32.mrb[0].mxu0
    %v686 = vadd.f32 0.0, %v685
    %v687 = vpop.f32.mrb[0].mxu0
    %688 = vdwg.mxu0
    %689 = vrot.lane.b32.xlu0 %v277, 120
    %v690 = vpop.permute.xlu0 %689
    %691 = vrot.lane.b32.xlu0 %v277, 88
    %v692 = vpop.permute.xlu0 %691
    %v693 = vsel %vm283, %v690, 0
    %v695 = vsel %vm283, %v692, 0
    %697 = vmatprep.subr.mxu0 0.0
    %698 = vmatpush1.xpose.msra.mxu0 %v695
    %699 = vmatprep.subr.mxu0 0.0
    %700 = vmatpush1.xpose.msra.mxu0 0.0
    %701 = vmatprep.subr.mxu0 0.0
    %702 = vmatpush1.xpose.msra.mxu0 0.0
    %703 = vmatprep.subr.mxu0 0.0
    %704 = vmatpush1.xpose.msra.mxu0 0.0
    %705 = vmatprep.subr.mxu0 0.0
    %706 = vmatpush1.xpose.msra.mxu0 0.0
    %707 = vmatprep.subr.mxu0 0.0
    %708 = vmatpush1.xpose.msra.mxu0 0.0
    %709 = vmatprep.subr.mxu0 0.0
    %710 = vmatpush1.xpose.msra.mxu0 0.0
    %711 = vmatprep.subr.mxu0 0.0
    %712 = vmatpush1.xpose.msra.mxu0 0.0
    %713 = vmatprep.subr.mxu0 0.0
    %714 = vmatpush1.xpose.msra.mxu0 0.0
    %715 = vmatprep.subr.mxu0 0.0
    %716 = vmatpush1.xpose.msra.mxu0 0.0
    %717 = vmatprep.subr.mxu0 0.0
    %718 = vmatpush1.xpose.msra.mxu0 0.0
    %719 = vmatprep.subr.mxu0 0.0
    %720 = vmatpush1.xpose.msra.mxu0 0.0
    %721 = vmatprep.subr.mxu0 0.0
    %722 = vmatpush1.xpose.msra.mxu0 0.0
    %723 = vmatprep.subr.mxu0 0.0
    %724 = vmatpush1.xpose.msra.mxu0 0.0
    %725 = vmatprep.subr.mxu0 0.0
    %726 = vmatpush1.xpose.msra.mxu0 0.0
    %727 = vmatprep.subr.mxu0 0.0
    %728 = vmatpush1.xpose.msra.mxu0 0.0
    %729 = vmatprep.subr.mxu0 0.0
    %730 = vmatpush1.xpose.msra.mxu0 0.0
    %731 = vmatprep.subr.mxu0 0.0
    %732 = vmatpush1.xpose.msra.mxu0 0.0
    %733 = vmatprep.subr.mxu0 0.0
    %734 = vmatpush1.xpose.msra.mxu0 0.0
    %735 = vmatprep.subr.mxu0 0.0
    %736 = vmatpush1.xpose.msra.mxu0 0.0
    %737 = vmatprep.subr.mxu0 0.0
    %738 = vmatpush1.xpose.msra.mxu0 0.0
    %739 = vmatprep.subr.mxu0 0.0
    %740 = vmatpush1.xpose.msra.mxu0 0.0
    %741 = vmatprep.subr.mxu0 0.0
    %742 = vmatpush1.xpose.msra.mxu0 0.0
    %743 = vmatprep.subr.mxu0 0.0
    %744 = vmatpush1.xpose.msra.mxu0 0.0
    %745 = vmatprep.subr.mxu0 0.0
    %746 = vmatpush1.xpose.msra.mxu0 0.0
    %747 = vmatprep.subr.mxu0 0.0
    %748 = vmatpush1.xpose.msra.mxu0 0.0
    %749 = vmatprep.subr.mxu0 0.0
    %750 = vmatpush1.xpose.msra.mxu0 0.0
    %751 = vmatprep.subr.mxu0 0.0
    %752 = vmatpush1.xpose.msra.mxu0 0.0
    %753 = vmatprep.subr.mxu0 0.0
    %754 = vmatpush1.xpose.msra.mxu0 0.0
    %755 = vmatprep.subr.mxu0 0.0
    %756 = vmatpush1.xpose.msra.mxu0 0.0
    %757 = vmatprep.subr.mxu0 0.0
    %758 = vmatpush1.xpose.msra.mxu0 0.0
    %759 = vmatprep.subr.mxu0 0.0
    %760 = vmatpush1.xpose.msra.mxu0 0.0
    %761 = vmatprep.mubr.f32.mxu0 0.0
    %762 = vmatmul.mubr.f32.gmra.mrb[0].mxu0 %v693
    %v763 = vpop.f32.mrb[0].mxu0
    %v764 = vadd.f32 0.0, %v763
    %v765 = vpop.f32.mrb[0].mxu0
    %766 = vdwg.mxu0
    %v767 = vsel %vm283, %v686, -inf
    %768 = vmax.xlane.f32.xlu0 %v767
    %v769 = vpop.xlane.xlu0 %768
    %v770 = vsel %vm283, %v764, -inf
    %771 = vmax.xlane.f32.xlu0 %v770
    %v772 = vpop.xlane.xlu0 %771
    %v773 = vsub.f32 %v686, %v769
    %v774 = vsub.f32 %v764, %v772
    %v775 = vmul.f32 %v773, 1.442695
    %v776 = vpow.pop %v775
    %v777 = vmul.f32 %v774, 1.442695
    %v778 = vpow.pop %v777
    %v779 = vsel %vm283, %v776, 0.0
    %780 = vadd.xlane.f32.xlu0 %v779
    %v781 = vpop.xlane.xlu0 %780
    %v782 = vsel %vm283, %v778, 0.0
    %783 = vadd.xlane.f32.xlu0 %v782
    %v784 = vpop.xlane.xlu0 %783
    %v785 = vrcp.pop %v781
    %v786 = vrcp.pop %v784
    %v787 = vmul.f32 %v776, %v785
    %v788 = vmul.f32 %v778, %v786
    %789 = vrot.lane.b32.xlu0 %v272, 56
    %v790 = vpop.permute.xlu0 %789
    %v793 = vsel %vm283, %v787, 0
    %795 = vmatprep.subr.mxu0 0.0
    %796 = vmatpush1.msra.mxu0 %v790
    %797 = vmatprep.subr.mxu0 0.0
    %798 = vmatpush1.msra.mxu0 0.0
    %799 = vmatprep.subr.mxu0 0.0
    %800 = vmatpush1.msra.mxu0 0.0
    %801 = vmatprep.subr.mxu0 0.0
    %802 = vmatpush1.msra.mxu0 0.0
    %803 = vmatprep.subr.mxu0 0.0
    %804 = vmatpush1.msra.mxu0 0.0
    %805 = vmatprep.subr.mxu0 0.0
    %806 = vmatpush1.msra.mxu0 0.0
    %807 = vmatprep.subr.mxu0 0.0
    %808 = vmatpush1.msra.mxu0 0.0
    %809 = vmatprep.subr.mxu0 0.0
    %810 = vmatpush1.msra.mxu0 0.0
    %811 = vmatprep.subr.mxu0 0.0
    %812 = vmatpush1.msra.mxu0 0.0
    %813 = vmatprep.subr.mxu0 0.0
    %814 = vmatpush1.msra.mxu0 0.0
    %815 = vmatprep.subr.mxu0 0.0
    %816 = vmatpush1.msra.mxu0 0.0
    %817 = vmatprep.subr.mxu0 0.0
    %818 = vmatpush1.msra.mxu0 0.0
    %819 = vmatprep.subr.mxu0 0.0
    %820 = vmatpush1.msra.mxu0 0.0
    %821 = vmatprep.subr.mxu0 0.0
    %822 = vmatpush1.msra.mxu0 0.0
    %823 = vmatprep.subr.mxu0 0.0
    %824 = vmatpush1.msra.mxu0 0.0
    %825 = vmatprep.subr.mxu0 0.0
    %826 = vmatpush1.msra.mxu0 0.0
    %827 = vmatprep.subr.mxu0 0.0
    %828 = vmatpush1.msra.mxu0 0.0
    %829 = vmatprep.subr.mxu0 0.0
    %830 = vmatpush1.msra.mxu0 0.0
    %831 = vmatprep.subr.mxu0 0.0
    %832 = vmatpush1.msra.mxu0 0.0
    %833 = vmatprep.subr.mxu0 0.0
    %834 = vmatpush1.msra.mxu0 0.0
    %835 = vmatprep.subr.mxu0 0.0
    %836 = vmatpush1.msra.mxu0 0.0
    %837 = vmatprep.subr.mxu0 0.0
    %838 = vmatpush1.msra.mxu0 0.0
    %839 = vmatprep.subr.mxu0 0.0
    %840 = vmatpush1.msra.mxu0 0.0
    %841 = vmatprep.subr.mxu0 0.0
    %842 = vmatpush1.msra.mxu0 0.0
    %843 = vmatprep.subr.mxu0 0.0
    %844 = vmatpush1.msra.mxu0 0.0
    %845 = vmatprep.subr.mxu0 0.0
    %846 = vmatpush1.msra.mxu0 0.0
    %847 = vmatprep.subr.mxu0 0.0
    %848 = vmatpush1.msra.mxu0 0.0
    %849 = vmatprep.subr.mxu0 0.0
    %850 = vmatpush1.msra.mxu0 0.0
    %851 = vmatprep.subr.mxu0 0.0
    %852 = vmatpush1.msra.mxu0 0.0
    %853 = vmatprep.subr.mxu0 0.0
    %854 = vmatpush1.msra.mxu0 0.0
    %855 = vmatprep.subr.mxu0 0.0
    %856 = vmatpush1.msra.mxu0 0.0
    %857 = vmatprep.subr.mxu0 0.0
    %858 = vmatpush1.msra.mxu0 0.0
    %859 = vmatprep.mubr.f32.mxu0 0.0
    %860 = vmatmul.mubr.f32.gmra.mrb[0].mxu0 %v793
    %v861 = vpop.f32.mrb[0].mxu0
    %v862 = vadd.f32 0.0, %v861
    %v863 = vpop.f32.mrb[0].mxu0
    %864 = vdwg.mxu0
    %865 = vrot.lane.b32.xlu0 %v277, 56
    %v866 = vpop.permute.xlu0 %865
    %v869 = vsel %vm283, %v788, 0
    %871 = vmatprep.subr.mxu0 0.0
    %872 = vmatpush1.msra.mxu0 %v866
    %873 = vmatprep.subr.mxu0 0.0
    %874 = vmatpush1.msra.mxu0 0.0
    %875 = vmatprep.subr.mxu0 0.0
    %876 = vmatpush1.msra.mxu0 0.0
    %877 = vmatprep.subr.mxu0 0.0
    %878 = vmatpush1.msra.mxu0 0.0
    %879 = vmatprep.subr.mxu0 0.0
    %880 = vmatpush1.msra.mxu0 0.0
    %881 = vmatprep.subr.mxu0 0.0
    %882 = vmatpush1.msra.mxu0 0.0
    %883 = vmatprep.subr.mxu0 0.0
    %884 = vmatpush1.msra.mxu0 0.0
    %885 = vmatprep.subr.mxu0 0.0
    %886 = vmatpush1.msra.mxu0 0.0
    %887 = vmatprep.subr.mxu0 0.0
    %888 = vmatpush1.msra.mxu0 0.0
    %889 = vmatprep.subr.mxu0 0.0
    %890 = vmatpush1.msra.mxu0 0.0
    %891 = vmatprep.subr.mxu0 0.0
    %892 = vmatpush1.msra.mxu0 0.0
    %893 = vmatprep.subr.mxu0 0.0
    %894 = vmatpush1.msra.mxu0 0.0
    %895 = vmatprep.subr.mxu0 0.0
    %896 = vmatpush1.msra.mxu0 0.0
    %897 = vmatprep.subr.mxu0 0.0
    %898 = vmatpush1.msra.mxu0 0.0
    %899 = vmatprep.subr.mxu0 0.0
    %900 = vmatpush1.msra.mxu0 0.0
    %901 = vmatprep.subr.mxu0 0.0
    %902 = vmatpush1.msra.mxu0 0.0
    %903 = vmatprep.subr.mxu0 0.0
    %904 = vmatpush1.msra.mxu0 0.0
    %905 = vmatprep.subr.mxu0 0.0
    %906 = vmatpush1.msra.mxu0 0.0
    %907 = vmatprep.subr.mxu0 0.0
    %908 = vmatpush1.msra.mxu0 0.0
    %909 = vmatprep.subr.mxu0 0.0
    %910 = vmatpush1.msra.mxu0 0.0
    %911 = vmatprep.subr.mxu0 0.0
    %912 = vmatpush1.msra.mxu0 0.0
    %913 = vmatprep.subr.mxu0 0.0
    %914 = vmatpush1.msra.mxu0 0.0
    %915 = vmatprep.subr.mxu0 0.0
    %916 = vmatpush1.msra.mxu0 0.0
    %917 = vmatprep.subr.mxu0 0.0
    %918 = vmatpush1.msra.mxu0 0.0
    %919 = vmatprep.subr.mxu0 0.0
    %920 = vmatpush1.msra.mxu0 0.0
    %921 = vmatprep.subr.mxu0 0.0
    %922 = vmatpush1.msra.mxu0 0.0
    %923 = vmatprep.subr.mxu0 0.0
    %924 = vmatpush1.msra.mxu0 0.0
    %925 = vmatprep.subr.mxu0 0.0
    %926 = vmatpush1.msra.mxu0 0.0
    %927 = vmatprep.subr.mxu0 0.0
    %928 = vmatpush1.msra.mxu0 0.0
    %929 = vmatprep.subr.mxu0 0.0
    %930 = vmatpush1.msra.mxu0 0.0
    %931 = vmatprep.subr.mxu0 0.0
    %932 = vmatpush1.msra.mxu0 0.0
    %933 = vmatprep.subr.mxu0 0.0
    %934 = vmatpush1.msra.mxu0 0.0
    %935 = vmatprep.mubr.f32.mxu0 0.0
    %936 = vmatmul.mubr.f32.gmra.mrb[0].mxu0 %v869
    %v937 = vpop.f32.mrb[0].mxu0
    %v938 = vadd.f32 0.0, %v937
    %v939 = vpop.f32.mrb[0].mxu0
    %940 = vdwg.mxu0
    %943 = vrot.lane.b32.xlu0 %v862, 8
    %v944 = vpop.permute.xlu0 %943
    %945 = vrot.lane.b32.xlu0 %v938, 8
    %v946 = vpop.permute.xlu0 %945
    %vm949 = vcmask 130112
    %950 = vst.msk [vmem:[#allocation2] sm:$0xff] %vm949, %v944
    %951 = vst.msk [vmem:[#allocation2 + $0x8] sm:$0xff] %vm949, %v946
    %952 = vrot.lane.b32.xlu0 %v272, 112
    %v953 = vpop.permute.xlu0 %952
    %954 = vrot.lane.b32.xlu0 %v272, 80
    %v955 = vpop.permute.xlu0 %954
    %v956 = vsel %vm283, %v953, 0
    %v958 = vsel %vm283, %v955, 0
    %960 = vmatprep.subr.mxu0 0.0
    %961 = vmatpush1.xpose.msra.mxu0 %v958
    %962 = vmatprep.subr.mxu0 0.0
    %963 = vmatpush1.xpose.msra.mxu0 0.0
    %964 = vmatprep.subr.mxu0 0.0
    %965 = vmatpush1.xpose.msra.mxu0 0.0
    %966 = vmatprep.subr.mxu0 0.0
    %967 = vmatpush1.xpose.msra.mxu0 0.0
    %968 = vmatprep.subr.mxu0 0.0
    %969 = vmatpush1.xpose.msra.mxu0 0.0
    %970 = vmatprep.subr.mxu0 0.0
    %971 = vmatpush1.xpose.msra.mxu0 0.0
    %972 = vmatprep.subr.mxu0 0.0
    %973 = vmatpush1.xpose.msra.mxu0 0.0
    %974 = vmatprep.subr.mxu0 0.0
    %975 = vmatpush1.xpose.msra.mxu0 0.0
    %976 = vmatprep.subr.mxu0 0.0
    %977 = vmatpush1.xpose.msra.mxu0 0.0
    %978 = vmatprep.subr.mxu0 0.0
    %979 = vmatpush1.xpose.msra.mxu0 0.0
    %980 = vmatprep.subr.mxu0 0.0
    %981 = vmatpush1.xpose.msra.mxu0 0.0
    %982 = vmatprep.subr.mxu0 0.0
    %983 = vmatpush1.xpose.msra.mxu0 0.0
    %984 = vmatprep.subr.mxu0 0.0
    %985 = vmatpush1.xpose.msra.mxu0 0.0
    %986 = vmatprep.subr.mxu0 0.0
    %987 = vmatpush1.xpose.msra.mxu0 0.0
    %988 = vmatprep.subr.mxu0 0.0
    %989 = vmatpush1.xpose.msra.mxu0 0.0
    %990 = vmatprep.subr.mxu0 0.0
    %991 = vmatpush1.xpose.msra.mxu0 0.0
    %992 = vmatprep.subr.mxu0 0.0
    %993 = vmatpush1.xpose.msra.mxu0 0.0
    %994 = vmatprep.subr.mxu0 0.0
    %995 = vmatpush1.xpose.msra.mxu0 0.0
    %996 = vmatprep.subr.mxu0 0.0
    %997 = vmatpush1.xpose.msra.mxu0 0.0
    %998 = vmatprep.subr.mxu0 0.0
    %999 = vmatpush1.xpose.msra.mxu0 0.0
    %1000 = vmatprep.subr.mxu0 0.0
    %1001 = vmatpush1.xpose.msra.mxu0 0.0
    %1002 = vmatprep.subr.mxu0 0.0
    %1003 = vmatpush1.xpose.msra.mxu0 0.0
    %1004 = vmatprep.subr.mxu0 0.0
    %1005 = vmatpush1.xpose.msra.mxu0 0.0
    %1006 = vmatprep.subr.mxu0 0.0
    %1007 = vmatpush1.xpose.msra.mxu0 0.0
    %1008 = vmatprep.subr.mxu0 0.0
    %1009 = vmatpush1.xpose.msra.mxu0 0.0
    %1010 = vmatprep.subr.mxu0 0.0
    %1011 = vmatpush1.xpose.msra.mxu0 0.0
    %1012 = vmatprep.subr.mxu0 0.0
    %1013 = vmatpush1.xpose.msra.mxu0 0.0
    %1014 = vmatprep.subr.mxu0 0.0
    %1015 = vmatpush1.xpose.msra.mxu0 0.0
    %1016 = vmatprep.subr.mxu0 0.0
    %1017 = vmatpush1.xpose.msra.mxu0 0.0
    %1018 = vmatprep.subr.mxu0 0.0
    %1019 = vmatpush1.xpose.msra.mxu0 0.0
    %1020 = vmatprep.subr.mxu0 0.0
    %1021 = vmatpush1.xpose.msra.mxu0 0.0
    %1022 = vmatprep.subr.mxu0 0.0
    %1023 = vmatpush1.xpose.msra.mxu0 0.0
    %1024 = vmatprep.mubr.f32.mxu0 0.0
    %1025 = vmatmul.mubr.f32.gmra.mrb[0].mxu0 %v956
    %v1026 = vpop.f32.mrb[0].mxu0
    %v1027 = vadd.f32 0.0, %v1026
    %v1028 = vpop.f32.mrb[0].mxu0
    %1029 = vdwg.mxu0
    %1030 = vrot.lane.b32.xlu0 %v277, 112
    %v1031 = vpop.permute.xlu0 %1030
    %1032 = vrot.lane.b32.xlu0 %v277, 80
    %v1033 = vpop.permute.xlu0 %1032
    %v1034 = vsel %vm283, %v1031, 0
    %v1036 = vsel %vm283, %v1033, 0
    %1038 = vmatprep.subr.mxu0 0.0
    %1039 = vmatpush1.xpose.msra.mxu0 %v1036
    %1040 = vmatprep.subr.mxu0 0.0
    %1041 = vmatpush1.xpose.msra.mxu0 0.0
    %1042 = vmatprep.subr.mxu0 0.0
    %1043 = vmatpush1.xpose.msra.mxu0 0.0
    %1044 = vmatprep.subr.mxu0 0.0
    %1045 = vmatpush1.xpose.msra.mxu0 0.0
    %1046 = vmatprep.subr.mxu0 0.0
    %1047 = vmatpush1.xpose.msra.mxu0 0.0
    %1048 = vmatprep.subr.mxu0 0.0
    %1049 = vmatpush1.xpose.msra.mxu0 0.0
    %1050 = vmatprep.subr.mxu0 0.0
    %1051 = vmatpush1.xpose.msra.mxu0 0.0
    %1052 = vmatprep.subr.mxu0 0.0
    %1053 = vmatpush1.xpose.msra.mxu0 0.0
    %1054 = vmatprep.subr.mxu0 0.0
    %1055 = vmatpush1.xpose.msra.mxu0 0.0
    %1056 = vmatprep.subr.mxu0 0.0
    %1057 = vmatpush1.xpose.msra.mxu0 0.0
    %1058 = vmatprep.subr.mxu0 0.0
    %1059 = vmatpush1.xpose.msra.mxu0 0.0
    %1060 = vmatprep.subr.mxu0 0.0
    %1061 = vmatpush1.xpose.msra.mxu0 0.0
    %1062 = vmatprep.subr.mxu0 0.0
    %1063 = vmatpush1.xpose.msra.mxu0 0.0
    %1064 = vmatprep.subr.mxu0 0.0
    %1065 = vmatpush1.xpose.msra.mxu0 0.0
    %1066 = vmatprep.subr.mxu0 0.0
    %1067 = vmatpush1.xpose.msra.mxu0 0.0
    %1068 = vmatprep.subr.mxu0 0.0
    %1069 = vmatpush1.xpose.msra.mxu0 0.0
    %1070 = vmatprep.subr.mxu0 0.0
    %1071 = vmatpush1.xpose.msra.mxu0 0.0
    %1072 = vmatprep.subr.mxu0 0.0
    %1073 = vmatpush1.xpose.msra.mxu0 0.0
    %1074 = vmatprep.subr.mxu0 0.0
    %1075 = vmatpush1.xpose.msra.mxu0 0.0
    %1076 = vmatprep.subr.mxu0 0.0
    %1077 = vmatpush1.xpose.msra.mxu0 0.0
    %1078 = vmatprep.subr.mxu0 0.0
    %1079 = vmatpush1.xpose.msra.mxu0 0.0
    %1080 = vmatprep.subr.mxu0 0.0
    %1081 = vmatpush1.xpose.msra.mxu0 0.0
    %1082 = vmatprep.subr.mxu0 0.0
    %1083 = vmatpush1.xpose.msra.mxu0 0.0
    %1084 = vmatprep.subr.mxu0 0.0
    %1085 = vmatpush1.xpose.msra.mxu0 0.0
    %1086 = vmatprep.subr.mxu0 0.0
    %1087 = vmatpush1.xpose.msra.mxu0 0.0
    %1088 = vmatprep.subr.mxu0 0.0
    %1089 = vmatpush1.xpose.msra.mxu0 0.0
    %1090 = vmatprep.subr.mxu0 0.0
    %1091 = vmatpush1.xpose.msra.mxu0 0.0
    %1092 = vmatprep.subr.mxu0 0.0
    %1093 = vmatpush1.xpose.msra.mxu0 0.0
    %1094 = vmatprep.subr.mxu0 0.0
    %1095 = vmatpush1.xpose.msra.mxu0 0.0
    %1096 = vmatprep.subr.mxu0 0.0
    %1097 = vmatpush1.xpose.msra.mxu0 0.0
    %1098 = vmatprep.subr.mxu0 0.0
    %1099 = vmatpush1.xpose.msra.mxu0 0.0
    %1100 = vmatprep.subr.mxu0 0.0
    %1101 = vmatpush1.xpose.msra.mxu0 0.0
    %1102 = vmatprep.mubr.f32.mxu0 0.0
    %1103 = vmatmul.mubr.f32.gmra.mrb[0].mxu0 %v1034
    %v1104 = vpop.f32.mrb[0].mxu0
    %v1105 = vadd.f32 0.0, %v1104
    %v1106 = vpop.f32.mrb[0].mxu0
    %1107 = vdwg.mxu0
    %v1108 = vsel %vm283, %v1027, -inf
    %1109 = vmax.xlane.f32.xlu0 %v1108
    %v1110 = vpop.xlane.xlu0 %1109
    %v1111 = vsel %vm283, %v1105, -inf
    %1112 = vmax.xlane.f32.xlu0 %v1111
    %v1113 = vpop.xlane.xlu0 %1112
    %v1114 = vsub.f32 %v1027, %v1110
    %v1115 = vsub.f32 %v1105, %v1113
    %v1116 = vmul.f32 %v1114, 1.442695
    %v1117 = vpow.pop %v1116
    %v1118 = vmul.f32 %v1115, 1.442695
    %v1119 = vpow.pop %v1118
    %v1120 = vsel %vm283, %v1117, 0.0
    %1121 = vadd.xlane.f32.xlu0 %v1120
    %v1122 = vpop.xlane.xlu0 %1121
    %v1123 = vsel %vm283, %v1119, 0.0
    %1124 = vadd.xlane.f32.xlu0 %v1123
    %v1125 = vpop.xlane.xlu0 %1124
    %v1126 = vrcp.pop %v1122
    %v1127 = vrcp.pop %v1125
    %v1128 = vmul.f32 %v1117, %v1126
    %v1129 = vmul.f32 %v1119, %v1127
    %1130 = vrot.lane.b32.xlu0 %v272, 48
    %v1131 = vpop.permute.xlu0 %1130
    %v1134 = vsel %vm283, %v1128, 0
    %1136 = vmatprep.subr.mxu0 0.0
    %1137 = vmatpush1.msra.mxu0 %v1131
    %1138 = vmatprep.subr.mxu0 0.0
    %1139 = vmatpush1.msra.mxu0 0.0
    %1140 = vmatprep.subr.mxu0 0.0
    %1141 = vmatpush1.msra.mxu0 0.0
    %1142 = vmatprep.subr.mxu0 0.0
    %1143 = vmatpush1.msra.mxu0 0.0
    %1144 = vmatprep.subr.mxu0 0.0
    %1145 = vmatpush1.msra.mxu0 0.0
    %1146 = vmatprep.subr.mxu0 0.0
    %1147 = vmatpush1.msra.mxu0 0.0
    %1148 = vmatprep.subr.mxu0 0.0
    %1149 = vmatpush1.msra.mxu0 0.0
    %1150 = vmatprep.subr.mxu0 0.0
    %1151 = vmatpush1.msra.mxu0 0.0
    %1152 = vmatprep.subr.mxu0 0.0
    %1153 = vmatpush1.msra.mxu0 0.0
    %1154 = vmatprep.subr.mxu0 0.0
    %1155 = vmatpush1.msra.mxu0 0.0
    %1156 = vmatprep.subr.mxu0 0.0
    %1157 = vmatpush1.msra.mxu0 0.0
    %1158 = vmatprep.subr.mxu0 0.0
    %1159 = vmatpush1.msra.mxu0 0.0
    %1160 = vmatprep.subr.mxu0 0.0
    %1161 = vmatpush1.msra.mxu0 0.0
    %1162 = vmatprep.subr.mxu0 0.0
    %1163 = vmatpush1.msra.mxu0 0.0
    %1164 = vmatprep.subr.mxu0 0.0
    %1165 = vmatpush1.msra.mxu0 0.0
    %1166 = vmatprep.subr.mxu0 0.0
    %1167 = vmatpush1.msra.mxu0 0.0
    %1168 = vmatprep.subr.mxu0 0.0
    %1169 = vmatpush1.msra.mxu0 0.0
    %1170 = vmatprep.subr.mxu0 0.0
    %1171 = vmatpush1.msra.mxu0 0.0
    %1172 = vmatprep.subr.mxu0 0.0
    %1173 = vmatpush1.msra.mxu0 0.0
    %1174 = vmatprep.subr.mxu0 0.0
    %1175 = vmatpush1.msra.mxu0 0.0
    %1176 = vmatprep.subr.mxu0 0.0
    %1177 = vmatpush1.msra.mxu0 0.0
    %1178 = vmatprep.subr.mxu0 0.0
    %1179 = vmatpush1.msra.mxu0 0.0
    %1180 = vmatprep.subr.mxu0 0.0
    %1181 = vmatpush1.msra.mxu0 0.0
    %1182 = vmatprep.subr.mxu0 0.0
    %1183 = vmatpush1.msra.mxu0 0.0
    %1184 = vmatprep.subr.mxu0 0.0
    %1185 = vmatpush1.msra.mxu0 0.0
    %1186 = vmatprep.subr.mxu0 0.0
    %1187 = vmatpush1.msra.mxu0 0.0
    %1188 = vmatprep.subr.mxu0 0.0
    %1189 = vmatpush1.msra.mxu0 0.0
    %1190 = vmatprep.subr.mxu0 0.0
    %1191 = vmatpush1.msra.mxu0 0.0
    %1192 = vmatprep.subr.mxu0 0.0
    %1193 = vmatpush1.msra.mxu0 0.0
    %1194 = vmatprep.subr.mxu0 0.0
    %1195 = vmatpush1.msra.mxu0 0.0
    %1196 = vmatprep.subr.mxu0 0.0
    %1197 = vmatpush1.msra.mxu0 0.0
    %1198 = vmatprep.subr.mxu0 0.0
    %1199 = vmatpush1.msra.mxu0 0.0
    %1200 = vmatprep.mubr.f32.mxu0 0.0
    %1201 = vmatmul.mubr.f32.gmra.mrb[0].mxu0 %v1134
    %v1202 = vpop.f32.mrb[0].mxu0
    %v1203 = vadd.f32 0.0, %v1202
    %v1204 = vpop.f32.mrb[0].mxu0
    %1205 = vdwg.mxu0
    %1206 = vrot.lane.b32.xlu0 %v277, 48
    %v1207 = vpop.permute.xlu0 %1206
    %v1210 = vsel %vm283, %v1129, 0
    %1212 = vmatprep.subr.mxu0 0.0
    %1213 = vmatpush1.msra.mxu0 %v1207
    %1214 = vmatprep.subr.mxu0 0.0
    %1215 = vmatpush1.msra.mxu0 0.0
    %1216 = vmatprep.subr.mxu0 0.0
    %1217 = vmatpush1.msra.mxu0 0.0
    %1218 = vmatprep.subr.mxu0 0.0
    %1219 = vmatpush1.msra.mxu0 0.0
    %1220 = vmatprep.subr.mxu0 0.0
    %1221 = vmatpush1.msra.mxu0 0.0
    %1222 = vmatprep.subr.mxu0 0.0
    %1223 = vmatpush1.msra.mxu0 0.0
    %1224 = vmatprep.subr.mxu0 0.0
    %1225 = vmatpush1.msra.mxu0 0.0
    %1226 = vmatprep.subr.mxu0 0.0
    %1227 = vmatpush1.msra.mxu0 0.0
    %1228 = vmatprep.subr.mxu0 0.0
    %1229 = vmatpush1.msra.mxu0 0.0
    %1230 = vmatprep.subr.mxu0 0.0
    %1231 = vmatpush1.msra.mxu0 0.0
    %1232 = vmatprep.subr.mxu0 0.0
    %1233 = vmatpush1.msra.mxu0 0.0
    %1234 = vmatprep.subr.mxu0 0.0
    %1235 = vmatpush1.msra.mxu0 0.0
    %1236 = vmatprep.subr.mxu0 0.0
    %1237 = vmatpush1.msra.mxu0 0.0
    %1238 = vmatprep.subr.mxu0 0.0
    %1239 = vmatpush1.msra.mxu0 0.0
    %1240 = vmatprep.subr.mxu0 0.0
    %1241 = vmatpush1.msra.mxu0 0.0
    %1242 = vmatprep.subr.mxu0 0.0
    %1243 = vmatpush1.msra.mxu0 0.0
    %1244 = vmatprep.subr.mxu0 0.0
    %1245 = vmatpush1.msra.mxu0 0.0
    %1246 = vmatprep.subr.mxu0 0.0
    %1247 = vmatpush1.msra.mxu0 0.0
    %1248 = vmatprep.subr.mxu0 0.0
    %1249 = vmatpush1.msra.mxu0 0.0
    %1250 = vmatprep.subr.mxu0 0.0
    %1251 = vmatpush1.msra.mxu0 0.0
    %1252 = vmatprep.subr.mxu0 0.0
    %1253 = vmatpush1.msra.mxu0 0.0
    %1254 = vmatprep.subr.mxu0 0.0
    %1255 = vmatpush1.msra.mxu0 0.0
    %1256 = vmatprep.subr.mxu0 0.0
    %1257 = vmatpush1.msra.mxu0 0.0
    %1258 = vmatprep.subr.mxu0 0.0
    %1259 = vmatpush1.msra.mxu0 0.0
    %1260 = vmatprep.subr.mxu0 0.0
    %1261 = vmatpush1.msra.mxu0 0.0
    %1262 = vmatprep.subr.mxu0 0.0
    %1263 = vmatpush1.msra.mxu0 0.0
    %1264 = vmatprep.subr.mxu0 0.0
    %1265 = vmatpush1.msra.mxu0 0.0
    %1266 = vmatprep.subr.mxu0 0.0
    %1267 = vmatpush1.msra.mxu0 0.0
    %1268 = vmatprep.subr.mxu0 0.0
    %1269 = vmatpush1.msra.mxu0 0.0
    %1270 = vmatprep.subr.mxu0 0.0
    %1271 = vmatpush1.msra.mxu0 0.0
    %1272 = vmatprep.subr.mxu0 0.0
    %1273 = vmatpush1.msra.mxu0 0.0
    %1274 = vmatprep.subr.mxu0 0.0
    %1275 = vmatpush1.msra.mxu0 0.0
    %1276 = vmatprep.mubr.f32.mxu0 0.0
    %1277 = vmatmul.mubr.f32.gmra.mrb[0].mxu0 %v1210
    %v1278 = vpop.f32.mrb[0].mxu0
    %v1279 = vadd.f32 0.0, %v1278
    %v1280 = vpop.f32.mrb[0].mxu0
    %1281 = vdwg.mxu0
    %1284 = vrot.lane.b32.xlu0 %v1203, 16
    %v1285 = vpop.permute.xlu0 %1284
    %1286 = vrot.lane.b32.xlu0 %v1279, 16
    %v1287 = vpop.permute.xlu0 %1286
    %vm1290 = vcmask 195712
    %1291 = vst.msk [vmem:[#allocation2] sm:$0xff] %vm1290, %v1285
    %1292 = vst.msk [vmem:[#allocation2 + $0x8] sm:$0xff] %vm1290, %v1287
    %1293 = vrot.lane.b32.xlu0 %v272, 104
    %v1294 = vpop.permute.xlu0 %1293
    %1295 = vrot.lane.b32.xlu0 %v272, 72
    %v1296 = vpop.permute.xlu0 %1295
    %v1297 = vsel %vm283, %v1294, 0
    %v1299 = vsel %vm283, %v1296, 0
    %1301 = vmatprep.subr.mxu0 0.0
    %1302 = vmatpush1.xpose.msra.mxu0 %v1299
    %1303 = vmatprep.subr.mxu0 0.0
    %1304 = vmatpush1.xpose.msra.mxu0 0.0
    %1305 = vmatprep.subr.mxu0 0.0
    %1306 = vmatpush1.xpose.msra.mxu0 0.0
    %1307 = vmatprep.subr.mxu0 0.0
    %1308 = vmatpush1.xpose.msra.mxu0 0.0
    %1309 = vmatprep.subr.mxu0 0.0
    %1310 = vmatpush1.xpose.msra.mxu0 0.0
    %1311 = vmatprep.subr.mxu0 0.0
    %1312 = vmatpush1.xpose.msra.mxu0 0.0
    %1313 = vmatprep.subr.mxu0 0.0
    %1314 = vmatpush1.xpose.msra.mxu0 0.0
    %1315 = vmatprep.subr.mxu0 0.0
    %1316 = vmatpush1.xpose.msra.mxu0 0.0
    %1317 = vmatprep.subr.mxu0 0.0
    %1318 = vmatpush1.xpose.msra.mxu0 0.0
    %1319 = vmatprep.subr.mxu0 0.0
    %1320 = vmatpush1.xpose.msra.mxu0 0.0
    %1321 = vmatprep.subr.mxu0 0.0
    %1322 = vmatpush1.xpose.msra.mxu0 0.0
    %1323 = vmatprep.subr.mxu0 0.0
    %1324 = vmatpush1.xpose.msra.mxu0 0.0
    %1325 = vmatprep.subr.mxu0 0.0
    %1326 = vmatpush1.xpose.msra.mxu0 0.0
    %1327 = vmatprep.subr.mxu0 0.0
    %1328 = vmatpush1.xpose.msra.mxu0 0.0
    %1329 = vmatprep.subr.mxu0 0.0
    %1330 = vmatpush1.xpose.msra.mxu0 0.0
    %1331 = vmatprep.subr.mxu0 0.0
    %1332 = vmatpush1.xpose.msra.mxu0 0.0
    %1333 = vmatprep.subr.mxu0 0.0
    %1334 = vmatpush1.xpose.msra.mxu0 0.0
    %1335 = vmatprep.subr.mxu0 0.0
    %1336 = vmatpush1.xpose.msra.mxu0 0.0
    %1337 = vmatprep.subr.mxu0 0.0
    %1338 = vmatpush1.xpose.msra.mxu0 0.0
    %1339 = vmatprep.subr.mxu0 0.0
    %1340 = vmatpush1.xpose.msra.mxu0 0.0
    %1341 = vmatprep.subr.mxu0 0.0
    %1342 = vmatpush1.xpose.msra.mxu0 0.0
    %1343 = vmatprep.subr.mxu0 0.0
    %1344 = vmatpush1.xpose.msra.mxu0 0.0
    %1345 = vmatprep.subr.mxu0 0.0
    %1346 = vmatpush1.xpose.msra.mxu0 0.0
    %1347 = vmatprep.subr.mxu0 0.0
    %1348 = vmatpush1.xpose.msra.mxu0 0.0
    %1349 = vmatprep.subr.mxu0 0.0
    %1350 = vmatpush1.xpose.msra.mxu0 0.0
    %1351 = vmatprep.subr.mxu0 0.0
    %1352 = vmatpush1.xpose.msra.mxu0 0.0
    %1353 = vmatprep.subr.mxu0 0.0
    %1354 = vmatpush1.xpose.msra.mxu0 0.0
    %1355 = vmatprep.subr.mxu0 0.0
    %1356 = vmatpush1.xpose.msra.mxu0 0.0
    %1357 = vmatprep.subr.mxu0 0.0
    %1358 = vmatpush1.xpose.msra.mxu0 0.0
    %1359 = vmatprep.subr.mxu0 0.0
    %1360 = vmatpush1.xpose.msra.mxu0 0.0
    %1361 = vmatprep.subr.mxu0 0.0
    %1362 = vmatpush1.xpose.msra.mxu0 0.0
    %1363 = vmatprep.subr.mxu0 0.0
    %1364 = vmatpush1.xpose.msra.mxu0 0.0
    %1365 = vmatprep.mubr.f32.mxu0 0.0
    %1366 = vmatmul.mubr.f32.gmra.mrb[0].mxu0 %v1297
    %v1367 = vpop.f32.mrb[0].mxu0
    %v1368 = vadd.f32 0.0, %v1367
    %v1369 = vpop.f32.mrb[0].mxu0
    %1370 = vdwg.mxu0
    %1371 = vrot.lane.b32.xlu0 %v277, 104
    %v1372 = vpop.permute.xlu0 %1371
    %1373 = vrot.lane.b32.xlu0 %v277, 72
    %v1374 = vpop.permute.xlu0 %1373
    %v1375 = vsel %vm283, %v1372, 0
    %v1377 = vsel %vm283, %v1374, 0
    %1379 = vmatprep.subr.mxu0 0.0
    %1380 = vmatpush1.xpose.msra.mxu0 %v1377
    %1381 = vmatprep.subr.mxu0 0.0
    %1382 = vmatpush1.xpose.msra.mxu0 0.0
    %1383 = vmatprep.subr.mxu0 0.0
    %1384 = vmatpush1.xpose.msra.mxu0 0.0
    %1385 = vmatprep.subr.mxu0 0.0
    %1386 = vmatpush1.xpose.msra.mxu0 0.0
    %1387 = vmatprep.subr.mxu0 0.0
    %1388 = vmatpush1.xpose.msra.mxu0 0.0
    %1389 = vmatprep.subr.mxu0 0.0
    %1390 = vmatpush1.xpose.msra.mxu0 0.0
    %1391 = vmatprep.subr.mxu0 0.0
    %1392 = vmatpush1.xpose.msra.mxu0 0.0
    %1393 = vmatprep.subr.mxu0 0.0
    %1394 = vmatpush1.xpose.msra.mxu0 0.0
    %1395 = vmatprep.subr.mxu0 0.0
    %1396 = vmatpush1.xpose.msra.mxu0 0.0
    %1397 = vmatprep.subr.mxu0 0.0
    %1398 = vmatpush1.xpose.msra.mxu0 0.0
    %1399 = vmatprep.subr.mxu0 0.0
    %1400 = vmatpush1.xpose.msra.mxu0 0.0
    %1401 = vmatprep.subr.mxu0 0.0
    %1402 = vmatpush1.xpose.msra.mxu0 0.0
    %1403 = vmatprep.subr.mxu0 0.0
    %1404 = vmatpush1.xpose.msra.mxu0 0.0
    %1405 = vmatprep.subr.mxu0 0.0
    %1406 = vmatpush1.xpose.msra.mxu0 0.0
    %1407 = vmatprep.subr.mxu0 0.0
    %1408 = vmatpush1.xpose.msra.mxu0 0.0
    %1409 = vmatprep.subr.mxu0 0.0
    %1410 = vmatpush1.xpose.msra.mxu0 0.0
    %1411 = vmatprep.subr.mxu0 0.0
    %1412 = vmatpush1.xpose.msra.mxu0 0.0
    %1413 = vmatprep.subr.mxu0 0.0
    %1414 = vmatpush1.xpose.msra.mxu0 0.0
    %1415 = vmatprep.subr.mxu0 0.0
    %1416 = vmatpush1.xpose.msra.mxu0 0.0
    %1417 = vmatprep.subr.mxu0 0.0
    %1418 = vmatpush1.xpose.msra.mxu0 0.0
    %1419 = vmatprep.subr.mxu0 0.0
    %1420 = vmatpush1.xpose.msra.mxu0 0.0
    %1421 = vmatprep.subr.mxu0 0.0
    %1422 = vmatpush1.xpose.msra.mxu0 0.0
    %1423 = vmatprep.subr.mxu0 0.0
    %1424 = vmatpush1.xpose.msra.mxu0 0.0
    %1425 = vmatprep.subr.mxu0 0.0
    %1426 = vmatpush1.xpose.msra.mxu0 0.0
    %1427 = vmatprep.subr.mxu0 0.0
    %1428 = vmatpush1.xpose.msra.mxu0 0.0
    %1429 = vmatprep.subr.mxu0 0.0
    %1430 = vmatpush1.xpose.msra.mxu0 0.0
    %1431 = vmatprep.subr.mxu0 0.0
    %1432 = vmatpush1.xpose.msra.mxu0 0.0
    %1433 = vmatprep.subr.mxu0 0.0
    %1434 = vmatpush1.xpose.msra.mxu0 0.0
    %1435 = vmatprep.subr.mxu0 0.0
    %1436 = vmatpush1.xpose.msra.mxu0 0.0
    %1437 = vmatprep.subr.mxu0 0.0
    %1438 = vmatpush1.xpose.msra.mxu0 0.0
    %1439 = vmatprep.subr.mxu0 0.0
    %1440 = vmatpush1.xpose.msra.mxu0 0.0
    %1441 = vmatprep.subr.mxu0 0.0
    %1442 = vmatpush1.xpose.msra.mxu0 0.0
    %1443 = vmatprep.mubr.f32.mxu0 0.0
    %1444 = vmatmul.mubr.f32.gmra.mrb[0].mxu0 %v1375
    %v1445 = vpop.f32.mrb[0].mxu0
    %v1446 = vadd.f32 0.0, %v1445
    %v1447 = vpop.f32.mrb[0].mxu0
    %1448 = vdwg.mxu0
    %v1449 = vsel %vm283, %v1368, -inf
    %1450 = vmax.xlane.f32.xlu0 %v1449
    %v1451 = vpop.xlane.xlu0 %1450
    %v1452 = vsel %vm283, %v1446, -inf
    %1453 = vmax.xlane.f32.xlu0 %v1452
    %v1454 = vpop.xlane.xlu0 %1453
    %v1455 = vsub.f32 %v1368, %v1451
    %v1456 = vsub.f32 %v1446, %v1454
    %v1457 = vmul.f32 %v1455, 1.442695
    %v1458 = vpow.pop %v1457
    %v1459 = vmul.f32 %v1456, 1.442695
    %v1460 = vpow.pop %v1459
    %v1461 = vsel %vm283, %v1458, 0.0
    %1462 = vadd.xlane.f32.xlu0 %v1461
    %v1463 = vpop.xlane.xlu0 %1462
    %v1464 = vsel %vm283, %v1460, 0.0
    %1465 = vadd.xlane.f32.xlu0 %v1464
    %v1466 = vpop.xlane.xlu0 %1465
    %v1467 = vrcp.pop %v1463
    %v1468 = vrcp.pop %v1466
    %v1469 = vmul.f32 %v1458, %v1467
    %v1470 = vmul.f32 %v1460, %v1468
    %1471 = vrot.lane.b32.xlu0 %v272, 40
    %v1472 = vpop.permute.xlu0 %1471
    %v1475 = vsel %vm283, %v1469, 0
    %1477 = vmatprep.subr.mxu0 0.0
    %1478 = vmatpush1.msra.mxu0 %v1472
    %1479 = vmatprep.subr.mxu0 0.0
    %1480 = vmatpush1.msra.mxu0 0.0
    %1481 = vmatprep.subr.mxu0 0.0
    %1482 = vmatpush1.msra.mxu0 0.0
    %1483 = vmatprep.subr.mxu0 0.0
    %1484 = vmatpush1.msra.mxu0 0.0
    %1485 = vmatprep.subr.mxu0 0.0
    %1486 = vmatpush1.msra.mxu0 0.0
    %1487 = vmatprep.subr.mxu0 0.0
    %1488 = vmatpush1.msra.mxu0 0.0
    %1489 = vmatprep.subr.mxu0 0.0
    %1490 = vmatpush1.msra.mxu0 0.0
    %1491 = vmatprep.subr.mxu0 0.0
    %1492 = vmatpush1.msra.mxu0 0.0
    %1493 = vmatprep.subr.mxu0 0.0
    %1494 = vmatpush1.msra.mxu0 0.0
    %1495 = vmatprep.subr.mxu0 0.0
    %1496 = vmatpush1.msra.mxu0 0.0
    %1497 = vmatprep.subr.mxu0 0.0
    %1498 = vmatpush1.msra.mxu0 0.0
    %1499 = vmatprep.subr.mxu0 0.0
    %1500 = vmatpush1.msra.mxu0 0.0
    %1501 = vmatprep.subr.mxu0 0.0
    %1502 = vmatpush1.msra.mxu0 0.0
    %1503 = vmatprep.subr.mxu0 0.0
    %1504 = vmatpush1.msra.mxu0 0.0
    %1505 = vmatprep.subr.mxu0 0.0
    %1506 = vmatpush1.msra.mxu0 0.0
    %1507 = vmatprep.subr.mxu0 0.0
    %1508 = vmatpush1.msra.mxu0 0.0
    %1509 = vmatprep.subr.mxu0 0.0
    %1510 = vmatpush1.msra.mxu0 0.0
    %1511 = vmatprep.subr.mxu0 0.0
    %1512 = vmatpush1.msra.mxu0 0.0
    %1513 = vmatprep.subr.mxu0 0.0
    %1514 = vmatpush1.msra.mxu0 0.0
    %1515 = vmatprep.subr.mxu0 0.0
    %1516 = vmatpush1.msra.mxu0 0.0
    %1517 = vmatprep.subr.mxu0 0.0
    %1518 = vmatpush1.msra.mxu0 0.0
    %1519 = vmatprep.subr.mxu0 0.0
    %1520 = vmatpush1.msra.mxu0 0.0
    %1521 = vmatprep.subr.mxu0 0.0
    %1522 = vmatpush1.msra.mxu0 0.0
    %1523 = vmatprep.subr.mxu0 0.0
    %1524 = vmatpush1.msra.mxu0 0.0
    %1525 = vmatprep.subr.mxu0 0.0
    %1526 = vmatpush1.msra.mxu0 0.0
    %1527 = vmatprep.subr.mxu0 0.0
    %1528 = vmatpush1.msra.mxu0 0.0
    %1529 = vmatprep.subr.mxu0 0.0
    %1530 = vmatpush1.msra.mxu0 0.0
    %1531 = vmatprep.subr.mxu0 0.0
    %1532 = vmatpush1.msra.mxu0 0.0
    %1533 = vmatprep.subr.mxu0 0.0
    %1534 = vmatpush1.msra.mxu0 0.0
    %1535 = vmatprep.subr.mxu0 0.0
    %1536 = vmatpush1.msra.mxu0 0.0
    %1537 = vmatprep.subr.mxu0 0.0
    %1538 = vmatpush1.msra.mxu0 0.0
    %1539 = vmatprep.subr.mxu0 0.0
    %1540 = vmatpush1.msra.mxu0 0.0
    %1541 = vmatprep.mubr.f32.mxu0 0.0
    %1542 = vmatmul.mubr.f32.gmra.mrb[0].mxu0 %v1475
    %v1543 = vpop.f32.mrb[0].mxu0
    %v1544 = vadd.f32 0.0, %v1543
    %v1545 = vpop.f32.mrb[0].mxu0
    %1546 = vdwg.mxu0
    %1547 = vrot.lane.b32.xlu0 %v277, 40
    %v1548 = vpop.permute.xlu0 %1547
    %v1551 = vsel %vm283, %v1470, 0
    %1553 = vmatprep.subr.mxu0 0.0
    %1554 = vmatpush1.msra.mxu0 %v1548
    %1555 = vmatprep.subr.mxu0 0.0
    %1556 = vmatpush1.msra.mxu0 0.0
    %1557 = vmatprep.subr.mxu0 0.0
    %1558 = vmatpush1.msra.mxu0 0.0
    %1559 = vmatprep.subr.mxu0 0.0
    %1560 = vmatpush1.msra.mxu0 0.0
    %1561 = vmatprep.subr.mxu0 0.0
    %1562 = vmatpush1.msra.mxu0 0.0
    %1563 = vmatprep.subr.mxu0 0.0
    %1564 = vmatpush1.msra.mxu0 0.0
    %1565 = vmatprep.subr.mxu0 0.0
    %1566 = vmatpush1.msra.mxu0 0.0
    %1567 = vmatprep.subr.mxu0 0.0
    %1568 = vmatpush1.msra.mxu0 0.0
    %1569 = vmatprep.subr.mxu0 0.0
    %1570 = vmatpush1.msra.mxu0 0.0
    %1571 = vmatprep.subr.mxu0 0.0
    %1572 = vmatpush1.msra.mxu0 0.0
    %1573 = vmatprep.subr.mxu0 0.0
    %1574 = vmatpush1.msra.mxu0 0.0
    %1575 = vmatprep.subr.mxu0 0.0
    %1576 = vmatpush1.msra.mxu0 0.0
    %1577 = vmatprep.subr.mxu0 0.0
    %1578 = vmatpush1.msra.mxu0 0.0
    %1579 = vmatprep.subr.mxu0 0.0
    %1580 = vmatpush1.msra.mxu0 0.0
    %1581 = vmatprep.subr.mxu0 0.0
    %1582 = vmatpush1.msra.mxu0 0.0
    %1583 = vmatprep.subr.mxu0 0.0
    %1584 = vmatpush1.msra.mxu0 0.0
    %1585 = vmatprep.subr.mxu0 0.0
    %1586 = vmatpush1.msra.mxu0 0.0
    %1587 = vmatprep.subr.mxu0 0.0
    %1588 = vmatpush1.msra.mxu0 0.0
    %1589 = vmatprep.subr.mxu0 0.0
    %1590 = vmatpush1.msra.mxu0 0.0
    %1591 = vmatprep.subr.mxu0 0.0
    %1592 = vmatpush1.msra.mxu0 0.0
    %1593 = vmatprep.subr.mxu0 0.0
    %1594 = vmatpush1.msra.mxu0 0.0
    %1595 = vmatprep.subr.mxu0 0.0
    %1596 = vmatpush1.msra.mxu0 0.0
    %1597 = vmatprep.subr.mxu0 0.0
    %1598 = vmatpush1.msra.mxu0 0.0
    %1599 = vmatprep.subr.mxu0 0.0
    %1600 = vmatpush1.msra.mxu0 0.0
    %1601 = vmatprep.subr.mxu0 0.0
    %1602 = vmatpush1.msra.mxu0 0.0
    %1603 = vmatprep.subr.mxu0 0.0
    %1604 = vmatpush1.msra.mxu0 0.0
    %1605 = vmatprep.subr.mxu0 0.0
    %1606 = vmatpush1.msra.mxu0 0.0
    %1607 = vmatprep.subr.mxu0 0.0
    %1608 = vmatpush1.msra.mxu0 0.0
    %1609 = vmatprep.subr.mxu0 0.0
    %1610 = vmatpush1.msra.mxu0 0.0
    %1611 = vmatprep.subr.mxu0 0.0
    %1612 = vmatpush1.msra.mxu0 0.0
    %1613 = vmatprep.subr.mxu0 0.0
    %1614 = vmatpush1.msra.mxu0 0.0
    %1615 = vmatprep.subr.mxu0 0.0
    %1616 = vmatpush1.msra.mxu0 0.0
    %1617 = vmatprep.mubr.f32.mxu0 0.0
    %1618 = vmatmul.mubr.f32.gmra.mrb[0].mxu0 %v1551
    %v1619 = vpop.f32.mrb[0].mxu0
    %v1620 = vadd.f32 0.0, %v1619
    %v1621 = vpop.f32.mrb[0].mxu0
    %1622 = vdwg.mxu0
    %1625 = vrot.lane.b32.xlu0 %v1544, 24
    %v1626 = vpop.permute.xlu0 %1625
    %1627 = vrot.lane.b32.xlu0 %v1620, 24
    %v1628 = vpop.permute.xlu0 %1627
    %vm1631 = vcmask 261312
    %1632 = vst.msk [vmem:[#allocation2] sm:$0xff] %vm1631, %v1626
    %1633 = vst.msk [vmem:[#allocation2 + $0x8] sm:$0xff] %vm1631, %v1628
    %v1634 = vld [vmem:[#allocation2] sm:$0xff]
    %v1635 = vld [vmem:[#allocation2 + $0x8] sm:$0xff]
    %v1637 = vlaneseq
    %v1638 = vshrl.u32 %v1637, 7
    %v1639 = vsub.s32 0, %v1638
    %v1640 = vrot.slane %v175, %v1639
    %v1643 = vsel %vm198, %v1634, 0
    %v1646 = vsel %vm198, %v1635, 0
    %1648 = vmatprep.subr.mxu0 0.0
    %1649 = vmatpush1.msra.mxu0 %v171
    %1650 = vmatprep.subr.mxu0 0.0
    %1651 = vmatpush1.msra.mxu0 %v172
    %1652 = vmatprep.subr.mxu0 0.0
    %1653 = vmatpush1.msra.mxu0 %v173
    %1654 = vmatprep.subr.mxu0 0.0
    %1655 = vmatpush1.msra.mxu0 %v174
    %1656 = vmatprep.subr.mxu0 0.0
    %1657 = vmatpush1.msra.mxu0 0.0
    %1658 = vmatprep.subr.mxu0 0.0
    %1659 = vmatpush1.msra.mxu0 0.0
    %1660 = vmatprep.subr.mxu0 0.0
    %1661 = vmatpush1.msra.mxu0 0.0
    %1662 = vmatprep.subr.mxu0 0.0
    %1663 = vmatpush1.msra.mxu0 0.0
    %1664 = vmatprep.subr.mxu0 0.0
    %1665 = vmatpush1.msra.mxu0 0.0
    %1666 = vmatprep.subr.mxu0 0.0
    %1667 = vmatpush1.msra.mxu0 0.0
    %1668 = vmatprep.subr.mxu0 0.0
    %1669 = vmatpush1.msra.mxu0 0.0
    %1670 = vmatprep.subr.mxu0 0.0
    %1671 = vmatpush1.msra.mxu0 0.0
    %1672 = vmatprep.subr.mxu0 0.0
    %1673 = vmatpush1.msra.mxu0 0.0
    %1674 = vmatprep.subr.mxu0 0.0
    %1675 = vmatpush1.msra.mxu0 0.0
    %1676 = vmatprep.subr.mxu0 0.0
    %1677 = vmatpush1.msra.mxu0 0.0
    %1678 = vmatprep.subr.mxu0 0.0
    %1679 = vmatpush1.msra.mxu0 0.0
    %1680 = vmatprep.subr.mxu0 0.0
    %1681 = vmatpush1.msra.mxu0 0.0
    %1682 = vmatprep.subr.mxu0 0.0
    %1683 = vmatpush1.msra.mxu0 0.0
    %1684 = vmatprep.subr.mxu0 0.0
    %1685 = vmatpush1.msra.mxu0 0.0
    %1686 = vmatprep.subr.mxu0 0.0
    %1687 = vmatpush1.msra.mxu0 0.0
    %1688 = vmatprep.subr.mxu0 0.0
    %1689 = vmatpush1.msra.mxu0 0.0
    %1690 = vmatprep.subr.mxu0 0.0
    %1691 = vmatpush1.msra.mxu0 0.0
    %1692 = vmatprep.subr.mxu0 0.0
    %1693 = vmatpush1.msra.mxu0 0.0
    %1694 = vmatprep.subr.mxu0 0.0
    %1695 = vmatpush1.msra.mxu0 0.0
    %1696 = vmatprep.subr.mxu0 0.0
    %1697 = vmatpush1.msra.mxu0 0.0
    %1698 = vmatprep.subr.mxu0 0.0
    %1699 = vmatpush1.msra.mxu0 0.0
    %1700 = vmatprep.subr.mxu0 0.0
    %1701 = vmatpush1.msra.mxu0 0.0
    %1702 = vmatprep.subr.mxu0 0.0
    %1703 = vmatpush1.msra.mxu0 0.0
    %1704 = vmatprep.subr.mxu0 0.0
    %1705 = vmatpush1.msra.mxu0 0.0
    %1706 = vmatprep.subr.mxu0 0.0
    %1707 = vmatpush1.msra.mxu0 0.0
    %1708 = vmatprep.subr.mxu0 0.0
    %1709 = vmatpush1.msra.mxu0 0.0
    %1710 = vmatprep.subr.mxu0 0.0
    %1711 = vmatpush1.msra.mxu0 0.0
    %1712 = vmatprep.mubr.f32.mxu0 0.0
    %1713 = vmatmul.mubr.f32.gmra.mrb[0].mxu0 %v1643
    %v1714 = vpop.f32.mrb[0].mxu0
    %v1715 = vadd.f32 %v1640, %v1714
    %v1716 = vpop.f32.mrb[0].mxu0
    %1717 = vmatprep.mubr.f32.mxu0 0.0
    %1718 = vmatmul.mubr.f32.gmra.mrb[0].mxu0 %v1646
    %v1719 = vpop.f32.mrb[0].mxu0
    %v1720 = vadd.f32 %v1640, %v1719
    %v1721 = vpop.f32.mrb[0].mxu0
    %1722 = vdwg.mxu0
    %v1723 = vadd.f32 %v164, %v1715
    %v1724 = vadd.f32 %v165, %v1720
    %v1725 = vsel %vm198, %v1723, 0.0
    %1726 = vadd.xlane.f32.xlu0 %v1725
    %v1727 = vpop.xlane.xlu0 %1726
    %v1728 = vsel %vm198, %v1724, 0.0
    %1729 = vadd.xlane.f32.xlu0 %v1728
    %v1730 = vpop.xlane.xlu0 %1729
    %v1731 = vrcp.pop 32.0
    %v1732 = vmul.f32 %v1727, %v1731
    %v1733 = vmul.f32 %v1730, %v1731
    %v1734 = vsub.f32 %v1723, %v1732
    %v1735 = vsub.f32 %v1724, %v1733
    %v1736 = vmul.f32 %v1734, %v1734
    %v1737 = vmul.f32 %v1735, %v1735
    %v1738 = vsel %vm198, %v1736, 0.0
    %1739 = vadd.xlane.f32.xlu0 %v1738
    %v1740 = vpop.xlane.xlu0 %1739
    %v1741 = vsel %vm198, %v1737, 0.0
    %1742 = vadd.xlane.f32.xlu0 %v1741
    %v1743 = vpop.xlane.xlu0 %1742
    %v1744 = vmul.f32 %v1740, %v1731
    %v1745 = vmul.f32 %v1743, %v1731
    %v1746 = vadd.f32 %v1744, 1e-05
    %v1747 = vadd.f32 %v1745, 1e-05
    %v1748 = vrsqrt.pop %v1746
    %v1749 = vrsqrt.pop %v1747
    %v1750 = vmul.f32 %v1734, %v1748
    %v1751 = vmul.f32 %v1735, %v1749
    %v1753 = vlaneseq
    %v1754 = vshrl.u32 %v1753, 7
    %v1755 = vsub.s32 0, %v1754
    %v1756 = vrot.slane %v176, %v1755
    %v1758 = vmul.f32 %v1750, %v1756
    %v1759 = vmul.f32 %v1751, %v1756
    %v1761 = vlaneseq
    %v1762 = vshrl.u32 %v1761, 7
    %v1763 = vsub.s32 0, %v1762
    %v1764 = vrot.slane %v177, %v1763
    %v1766 = vadd.f32 %v1758, %v1764
    %v1767 = vadd.f32 %v1759, %v1764
    %v1769 = vlaneseq
    %v1770 = vshrl.u32 %v1769, 7
    %v1771 = vsub.s32 0, %v1770
    %v1772 = vrot.slane %v182, %v1771
    %v1775 = vsel %vm198, %v1766, 0
    %v1778 = vsel %vm198, %v1767, 0
    %1780 = vmatprep.subr.mxu0 0.0
    %1781 = vmatpush1.msra.mxu0 %v178
    %1782 = vmatprep.subr.mxu0 0.0
    %1783 = vmatpush1.msra.mxu0 %v179
    %1784 = vmatprep.subr.mxu0 0.0
    %1785 = vmatpush1.msra.mxu0 %v180
    %1786 = vmatprep.subr.mxu0 0.0
    %1787 = vmatpush1.msra.mxu0 %v181
    %1788 = vmatprep.subr.mxu0 0.0
    %1789 = vmatpush1.msra.mxu0 0.0
    %1790 = vmatprep.subr.mxu0 0.0
    %1791 = vmatpush1.msra.mxu0 0.0
    %1792 = vmatprep.subr.mxu0 0.0
    %1793 = vmatpush1.msra.mxu0 0.0
    %1794 = vmatprep.subr.mxu0 0.0
    %1795 = vmatpush1.msra.mxu0 0.0
    %1796 = vmatprep.subr.mxu0 0.0
    %1797 = vmatpush1.msra.mxu0 0.0
    %1798 = vmatprep.subr.mxu0 0.0
    %1799 = vmatpush1.msra.mxu0 0.0
    %1800 = vmatprep.subr.mxu0 0.0
    %1801 = vmatpush1.msra.mxu0 0.0
    %1802 = vmatprep.subr.mxu0 0.0
    %1803 = vmatpush1.msra.mxu0 0.0
    %1804 = vmatprep.subr.mxu0 0.0
    %1805 = vmatpush1.msra.mxu0 0.0
    %1806 = vmatprep.subr.mxu0 0.0
    %1807 = vmatpush1.msra.mxu0 0.0
    %1808 = vmatprep.subr.mxu0 0.0
    %1809 = vmatpush1.msra.mxu0 0.0
    %1810 = vmatprep.subr.mxu0 0.0
    %1811 = vmatpush1.msra.mxu0 0.0
    %1812 = vmatprep.subr.mxu0 0.0
    %1813 = vmatpush1.msra.mxu0 0.0
    %1814 = vmatprep.subr.mxu0 0.0
    %1815 = vmatpush1.msra.mxu0 0.0
    %1816 = vmatprep.subr.mxu0 0.0
    %1817 = vmatpush1.msra.mxu0 0.0
    %1818 = vmatprep.subr.mxu0 0.0
    %1819 = vmatpush1.msra.mxu0 0.0
    %1820 = vmatprep.subr.mxu0 0.0
    %1821 = vmatpush1.msra.mxu0 0.0
    %1822 = vmatprep.subr.mxu0 0.0
    %1823 = vmatpush1.msra.mxu0 0.0
    %1824 = vmatprep.subr.mxu0 0.0
    %1825 = vmatpush1.msra.mxu0 0.0
    %1826 = vmatprep.subr.mxu0 0.0
    %1827 = vmatpush1.msra.mxu0 0.0
    %1828 = vmatprep.subr.mxu0 0.0
    %1829 = vmatpush1.msra.mxu0 0.0
    %1830 = vmatprep.subr.mxu0 0.0
    %1831 = vmatpush1.msra.mxu0 0.0
    %1832 = vmatprep.subr.mxu0 0.0
    %1833 = vmatpush1.msra.mxu0 0.0
    %1834 = vmatprep.subr.mxu0 0.0
    %1835 = vmatpush1.msra.mxu0 0.0
    %1836 = vmatprep.subr.mxu0 0.0
    %1837 = vmatpush1.msra.mxu0 0.0
    %1838 = vmatprep.subr.mxu0 0.0
    %1839 = vmatpush1.msra.mxu0 0.0
    %1840 = vmatprep.subr.mxu0 0.0
    %1841 = vmatpush1.msra.mxu0 0.0
    %1842 = vmatprep.subr.mxu0 0.0
    %1843 = vmatpush1.msra.mxu0 0.0
    %1844 = vmatprep.mubr.f32.mxu0 0.0
    %1845 = vmatmul.mubr.f32.gmra.mrb[0].mxu0 %v1775
    %v1846 = vpop.f32.mrb[0].mxu0
    %v1847 = vadd.f32 %v1772, %v1846
    %v1848 = vpop.f32.mrb[0].mxu0
    %1849 = vmatprep.mubr.f32.mxu0 0.0
    %1850 = vmatmul.mubr.f32.gmra.mrb[0].mxu0 %v1778
    %v1851 = vpop.f32.mrb[0].mxu0
    %v1852 = vadd.f32 %v1772, %v1851
    %v1853 = vpop.f32.mrb[0].mxu0
    %1854 = vdwg.mxu0
    %v1855 = vmul.f32 %v1847, 0.5
    %v1856 = vmul.f32 %v1852, 0.5
    %v1857 = vmul.f32 %v1847, 0.70710677
    %v1858 = vmul.f32 %v1852, 0.70710677
    %vm1859 = vcmp.ge.f32.partialorder %v1857, 0.0
    %vm1860 = vcmp.ge.f32.partialorder %v1858, 0.0
    %v1861 = vsel %vm1859, 1.0, -1.0
    %v1862 = vsel %vm1860, 1.0, -1.0
    %v1863 = vand.u32 2147483647, %v1857
    %v1864 = vand.u32 2147483647, %v1858
    %v1865 = vmul.f32 %v1863, 0.3275911
    %v1866 = vmul.f32 %v1864, 0.3275911
    %v1867 = vadd.f32 %v1865, 1.0
    %v1868 = vadd.f32 %v1866, 1.0
    %v1869 = vrcp.pop %v1867
    %v1870 = vrcp.pop %v1868
    %v1871 = vmul.f32 %v1869, 1.0614054
    %v1872 = vmul.f32 %v1870, 1.0614054
    %v1873 = vadd.f32 %v1871, -1.4531521
    %v1874 = vadd.f32 %v1872, -1.4531521
    %v1875 = vmul.f32 %v1873, %v1869
    %v1876 = vmul.f32 %v1874, %v1870
    %v1877 = vadd.f32 %v1875, 1.4214138
    %v1878 = vadd.f32 %v1876, 1.4214138
    %v1879 = vmul.f32 %v1877, %v1869
    %v1880 = vmul.f32 %v1878, %v1870
    %v1881 = vadd.f32 %v1879, -0.28449672
    %v1882 = vadd.f32 %v1880, -0.28449672
    %v1883 = vmul.f32 %v1881, %v1869
    %v1884 = vmul.f32 %v1882, %v1870
    %v1885 = vadd.f32 %v1883, 0.2548296
    %v1886 = vadd.f32 %v1884, 0.2548296
    %v1887 = vmul.f32 %v1885, %v1869
    %v1888 = vmul.f32 %v1886, %v1870
    %v1889 = vsub.f32 0.0, %v1863
    %v1890 = vsub.f32 0.0, %v1864
    %v1891 = vmul.f32 %v1889, %v1863
    %v1892 = vmul.f32 %v1890, %v1864
    %v1893 = vmul.f32 %v1891, 1.442695
    %v1894 = vpow.pop %v1893
    %v1895 = vmul.f32 %v1892, 1.442695
    %v1896 = vpow.pop %v1895
    %v1897 = vmul.f32 %v1887, %v1894
    %v1898 = vmul.f32 %v1888, %v1896
    %v1899 = vsub.f32 1.0, %v1897
    %v1900 = vsub.f32 1.0, %v1898
    %v1901 = vmul.f32 %v1861, %v1899
    %v1902 = vmul.f32 %v1862, %v1900
    %v1903 = vadd.f32 %v1901, 1.0
    %v1904 = vadd.f32 %v1902, 1.0
    %v1905 = vmul.f32 %v1855, %v1903
    %v1906 = vmul.f32 %v1856, %v1904
    %v1908 = vlaneseq
    %v1909 = vshrl.u32 %v1908, 7
    %v1910 = vsub.s32 0, %v1909
    %v1911 = vrot.slane %v189, %v1910
    %vm1913 = vcmask 392192
    %v1915 = vsel %vm1913, %v1905, 0
    %v1918 = vsel %vm1913, %v1906, 0
    %1920 = vmatprep.subr.mxu0 0.0
    %1921 = vmatpush1.msra.mxu0 %v183
    %1922 = vmatprep.subr.mxu0 0.0
    %1923 = vmatpush1.msra.mxu0 %v184
    %1924 = vmatprep.subr.mxu0 0.0
    %1925 = vmatpush1.msra.mxu0 %v185
    %1926 = vmatprep.subr.mxu0 0.0
    %1927 = vmatpush1.msra.mxu0 %v186
    %1928 = vmatprep.subr.mxu0 0.0
    %1929 = vmatpush1.msra.mxu0 %v187
    %1930 = vmatprep.subr.mxu0 0.0
    %1931 = vmatpush1.msra.mxu0 %v188
    %1932 = vmatprep.subr.mxu0 0.0
    %1933 = vmatpush1.msra.mxu0 0.0
    %1934 = vmatprep.subr.mxu0 0.0
    %1935 = vmatpush1.msra.mxu0 0.0
    %1936 = vmatprep.subr.mxu0 0.0
    %1937 = vmatpush1.msra.mxu0 0.0
    %1938 = vmatprep.subr.mxu0 0.0
    %1939 = vmatpush1.msra.mxu0 0.0
    %1940 = vmatprep.subr.mxu0 0.0
    %1941 = vmatpush1.msra.mxu0 0.0
    %1942 = vmatprep.subr.mxu0 0.0
    %1943 = vmatpush1.msra.mxu0 0.0
    %1944 = vmatprep.subr.mxu0 0.0
    %1945 = vmatpush1.msra.mxu0 0.0
    %1946 = vmatprep.subr.mxu0 0.0
    %1947 = vmatpush1.msra.mxu0 0.0
    %1948 = vmatprep.subr.mxu0 0.0
    %1949 = vmatpush1.msra.mxu0 0.0
    %1950 = vmatprep.subr.mxu0 0.0
    %1951 = vmatpush1.msra.mxu0 0.0
    %1952 = vmatprep.subr.mxu0 0.0
    %1953 = vmatpush1.msra.mxu0 0.0
    %1954 = vmatprep.subr.mxu0 0.0
    %1955 = vmatpush1.msra.mxu0 0.0
    %1956 = vmatprep.subr.mxu0 0.0
    %1957 = vmatpush1.msra.mxu0 0.0
    %1958 = vmatprep.subr.mxu0 0.0
    %1959 = vmatpush1.msra.mxu0 0.0
    %1960 = vmatprep.subr.mxu0 0.0
    %1961 = vmatpush1.msra.mxu0 0.0
    %1962 = vmatprep.subr.mxu0 0.0
    %1963 = vmatpush1.msra.mxu0 0.0
    %1964 = vmatprep.subr.mxu0 0.0
    %1965 = vmatpush1.msra.mxu0 0.0
    %1966 = vmatprep.subr.mxu0 0.0
    %1967 = vmatpush1.msra.mxu0 0.0
    %1968 = vmatprep.subr.mxu0 0.0
    %1969 = vmatpush1.msra.mxu0 0.0
    %1970 = vmatprep.subr.mxu0 0.0
    %1971 = vmatpush1.msra.mxu0 0.0
    %1972 = vmatprep.subr.mxu0 0.0
    %1973 = vmatpush1.msra.mxu0 0.0
    %1974 = vmatprep.subr.mxu0 0.0
    %1975 = vmatpush1.msra.mxu0 0.0
    %1976 = vmatprep.subr.mxu0 0.0
    %1977 = vmatpush1.msra.mxu0 0.0
    %1978 = vmatprep.subr.mxu0 0.0
    %1979 = vmatpush1.msra.mxu0 0.0
    %1980 = vmatprep.subr.mxu0 0.0
    %1981 = vmatpush1.msra.mxu0 0.0
    %1982 = vmatprep.subr.mxu0 0.0
    %1983 = vmatpush1.msra.mxu0 0.0
    %1984 = vmatprep.mubr.f32.mxu0 0.0
    %1985 = vmatmul.mubr.f32.gmra.mrb[0].mxu0 %v1915
    %v1986 = vpop.f32.mrb[0].mxu0
    %v1987 = vadd.f32 %v1911, %v1986
    %v1988 = vpop.f32.mrb[0].mxu0
    %1989 = vmatprep.mubr.f32.mxu0 0.0
    %1990 = vmatmul.mubr.f32.gmra.mrb[0].mxu0 %v1918
    %v1991 = vpop.f32.mrb[0].mxu0
    %v1992 = vadd.f32 %v1911, %v1991
    %v1993 = vpop.f32.mrb[0].mxu0
    %1994 = vdwg.mxu0
    %v1995 = vadd.f32 %v1766, %v1987
    %v1996 = vadd.f32 %v1767, %v1992
    %v1997 = vsel %vm198, %v1995, 0.0
    %1998 = vadd.xlane.f32.xlu0 %v1997
    %v1999 = vpop.xlane.xlu0 %1998
    %v2000 = vsel %vm198, %v1996, 0.0
    %2001 = vadd.xlane.f32.xlu0 %v2000
    %v2002 = vpop.xlane.xlu0 %2001
    %v2003 = vmul.f32 %v1999, %v1731
    %v2004 = vmul.f32 %v2002, %v1731
    %v2005 = vsub.f32 %v1995, %v2003
    %v2006 = vsub.f32 %v1996, %v2004
    %v2007 = vmul.f32 %v2005, %v2005
    %v2008 = vmul.f32 %v2006, %v2006
    %v2009 = vsel %vm198, %v2007, 0.0
    %2010 = vadd.xlane.f32.xlu0 %v2009
    %v2011 = vpop.xlane.xlu0 %2010
    %v2012 = vsel %vm198, %v2008, 0.0
    %2013 = vadd.xlane.f32.xlu0 %v2012
    %v2014 = vpop.xlane.xlu0 %2013
    %v2015 = vmul.f32 %v2011, %v1731
    %v2016 = vmul.f32 %v2014, %v1731
    %v2017 = vadd.f32 %v2015, 1e-05
    %v2018 = vadd.f32 %v2016, 1e-05
    %v2019 = vrsqrt.pop %v2017
    %v2020 = vrsqrt.pop %v2018
    %v2021 = vmul.f32 %v2005, %v2019
    %v2022 = vmul.f32 %v2006, %v2020
    %v2024 = vlaneseq
    %v2025 = vshrl.u32 %v2024, 7
    %v2026 = vsub.s32 0, %v2025
    %v2027 = vrot.slane %v190, %v2026
    %v2029 = vmul.f32 %v2021, %v2027
    %v2030 = vmul.f32 %v2022, %v2027
    %v2032 = vlaneseq
    %v2033 = vshrl.u32 %v2032, 7
    %v2034 = vsub.s32 0, %v2033
    %v2035 = vrot.slane %v191, %v2034
    %v2037 = vadd.f32 %v2029, %v2035
    %v2038 = vadd.f32 %v2030, %v2035
    %s2039 = scalar_lea.vmem %s4, 32
    %v2040 = vld [vmem:[%s2039] sm:$0xff]
    %v2041 = vld [vmem:[%s2039 + $0x8] sm:$0xff]
    %v2042 = vld [vmem:[%s2039 + $0x10] sm:$0xff]
    %v2043 = vld [vmem:[%s2039 + $0x18] sm:$0xff]
    %s2044 = scalar_lea.vmem %s5, 1
    %v2045 = vld [vmem:[%s2044] sm:$0x1]
    %s2046 = scalar_lea.vmem %s6, 32
    %v2047 = vld [vmem:[%s2046] sm:$0xff]
    %v2048 = vld [vmem:[%s2046 + $0x8] sm:$0xff]
    %v2049 = vld [vmem:[%s2046 + $0x10] sm:$0xff]
    %v2050 = vld [vmem:[%s2046 + $0x18] sm:$0xff]
    %s2051 = scalar_lea.vmem [#allocation9], 1
    %v2052 = vld [vmem:[%s2051] sm:$0x1]
    %s2053 = scalar_lea.vmem [#allocation11], 1
    %v2054 = vld [vmem:[%s2053] sm:$0x1]
    %s2055 = scalar_lea.vmem [#allocation12], 1
    %v2056 = vld [vmem:[%s2055] sm:$0x1]
    %s2057 = scalar_lea.vmem %s10, 32
    %v2058 = vld [vmem:[%s2057] sm:$0xff]
    %v2059 = vld [vmem:[%s2057 + $0x8] sm:$0xff]
    %v2060 = vld [vmem:[%s2057 + $0x10] sm:$0xff]
    %v2061 = vld [vmem:[%s2057 + $0x18] sm:$0xff]
    %s2062 = scalar_lea.vmem %s11, 1
    %v2063 = vld [vmem:[%s2062] sm:$0x1]
    %s2064 = scalar_lea.vmem %s12, 48
    %v2065 = vld [vmem:[%s2064] sm:$0xff]
    %v2066 = vld [vmem:[%s2064 + $0x8] sm:$0xff]
    %v2067 = vld [vmem:[%s2064 + $0x10] sm:$0xff]
    %v2068 = vld [vmem:[%s2064 + $0x18] sm:$0xff]
    %v2069 = vld [vmem:[%s2064 + $0x20] sm:$0xff]
    %v2070 = vld [vmem:[%s2064 + $0x28] sm:$0xff]
    %s2071 = scalar_lea.vmem %s13, 1
    %v2072 = vld [vmem:[%s2071] sm:$0x1]
    %s2073 = scalar_lea.vmem %s14, 1
    %v2074 = vld [vmem:[%s2073] sm:$0x1]
    %s2075 = scalar_lea.vmem %s15, 1
    %v2076 = vld [vmem:[%s2075] sm:$0x1]
    %v2078 = vlaneseq
    %v2079 = vshrl.u32 %v2078, 7
    %v2080 = vsub.s32 0, %v2079
    %v2081 = vrot.slane %v2045, %v2080
    %v2084 = vsel %vm198, %v2037, 0
    %v2087 = vsel %vm198, %v2038, 0
    %2089 = vmatprep.subr.mxu0 0.0
    %2090 = vmatpush1.msra.mxu0 %v2040
    %2091 = vmatprep.subr.mxu0 0.0
    %2092 = vmatpush1.msra.mxu0 %v2041
    %2093 = vmatprep.subr.mxu0 0.0
    %2094 = vmatpush1.msra.mxu0 %v2042
    %2095 = vmatprep.subr.mxu0 0.0
    %2096 = vmatpush1.msra.mxu0 %v2043
    %2097 = vmatprep.subr.mxu0 0.0
    %2098 = vmatpush1.msra.mxu0 0.0
    %2099 = vmatprep.subr.mxu0 0.0
    %2100 = vmatpush1.msra.mxu0 0.0
    %2101 = vmatprep.subr.mxu0 0.0
    %2102 = vmatpush1.msra.mxu0 0.0
    %2103 = vmatprep.subr.mxu0 0.0
    %2104 = vmatpush1.msra.mxu0 0.0
    %2105 = vmatprep.subr.mxu0 0.0
    %2106 = vmatpush1.msra.mxu0 0.0
    %2107 = vmatprep.subr.mxu0 0.0
    %2108 = vmatpush1.msra.mxu0 0.0
    %2109 = vmatprep.subr.mxu0 0.0
    %2110 = vmatpush1.msra.mxu0 0.0
    %2111 = vmatprep.subr.mxu0 0.0
    %2112 = vmatpush1.msra.mxu0 0.0
    %2113 = vmatprep.subr.mxu0 0.0
    %2114 = vmatpush1.msra.mxu0 0.0
    %2115 = vmatprep.subr.mxu0 0.0
    %2116 = vmatpush1.msra.mxu0 0.0
    %2117 = vmatprep.subr.mxu0 0.0
    %2118 = vmatpush1.msra.mxu0 0.0
    %2119 = vmatprep.subr.mxu0 0.0
    %2120 = vmatpush1.msra.mxu0 0.0
    %2121 = vmatprep.subr.mxu0 0.0
    %2122 = vmatpush1.msra.mxu0 0.0
    %2123 = vmatprep.subr.mxu0 0.0
    %2124 = vmatpush1.msra.mxu0 0.0
    %2125 = vmatprep.subr.mxu0 0.0
    %2126 = vmatpush1.msra.mxu0 0.0
    %2127 = vmatprep.subr.mxu0 0.0
    %2128 = vmatpush1.msra.mxu0 0.0
    %2129 = vmatprep.subr.mxu0 0.0
    %2130 = vmatpush1.msra.mxu0 0.0
    %2131 = vmatprep.subr.mxu0 0.0
    %2132 = vmatpush1.msra.mxu0 0.0
    %2133 = vmatprep.subr.mxu0 0.0
    %2134 = vmatpush1.msra.mxu0 0.0
    %2135 = vmatprep.subr.mxu0 0.0
    %2136 = vmatpush1.msra.mxu0 0.0
    %2137 = vmatprep.subr.mxu0 0.0
    %2138 = vmatpush1.msra.mxu0 0.0
    %2139 = vmatprep.subr.mxu0 0.0
    %2140 = vmatpush1.msra.mxu0 0.0
    %2141 = vmatprep.subr.mxu0 0.0
    %2142 = vmatpush1.msra.mxu0 0.0
    %2143 = vmatprep.subr.mxu0 0.0
    %2144 = vmatpush1.msra.mxu0 0.0
    %2145 = vmatprep.subr.mxu0 0.0
    %2146 = vmatpush1.msra.mxu0 0.0
    %2147 = vmatprep.subr.mxu0 0.0
    %2148 = vmatpush1.msra.mxu0 0.0
    %2149 = vmatprep.subr.mxu0 0.0
    %2150 = vmatpush1.msra.mxu0 0.0
    %2151 = vmatprep.subr.mxu0 0.0
    %2152 = vmatpush1.msra.mxu0 0.0
    %2153 = vmatprep.mubr.f32.mxu0 0.0
    %2154 = vmatmul.mubr.f32.gmra.mrb[0].mxu0 %v2084
    %v2155 = vpop.f32.mrb[0].mxu0
    %v2156 = vadd.f32 %v2081, %v2155
    %v2157 = vpop.f32.mrb[0].mxu0
    %2158 = vmatprep.mubr.f32.mxu0 0.0
    %2159 = vmatmul.mubr.f32.gmra.mrb[0].mxu0 %v2087
    %v2160 = vpop.f32.mrb[0].mxu0
    %v2161 = vadd.f32 %v2081, %v2160
    %v2162 = vpop.f32.mrb[0].mxu0
    %2163 = vdwg.mxu0
    %2165 = vrot.lane.b32.xlu0 %v2156, 96
    %v2166 = vpop.permute.xlu0 %2165
    %v2167 = vsel %vm283, %v2156, 0
    %v2169 = vsel %vm283, %v2166, 0
    %2171 = vmatprep.subr.mxu0 0.0
    %2172 = vmatpush1.xpose.msra.mxu0 %v2169
    %2173 = vmatprep.subr.mxu0 0.0
    %2174 = vmatpush1.xpose.msra.mxu0 0.0
    %2175 = vmatprep.subr.mxu0 0.0
    %2176 = vmatpush1.xpose.msra.mxu0 0.0
    %2177 = vmatprep.subr.mxu0 0.0
    %2178 = vmatpush1.xpose.msra.mxu0 0.0
    %2179 = vmatprep.subr.mxu0 0.0
    %2180 = vmatpush1.xpose.msra.mxu0 0.0
    %2181 = vmatprep.subr.mxu0 0.0
    %2182 = vmatpush1.xpose.msra.mxu0 0.0
    %2183 = vmatprep.subr.mxu0 0.0
    %2184 = vmatpush1.xpose.msra.mxu0 0.0
    %2185 = vmatprep.subr.mxu0 0.0
    %2186 = vmatpush1.xpose.msra.mxu0 0.0
    %2187 = vmatprep.subr.mxu0 0.0
    %2188 = vmatpush1.xpose.msra.mxu0 0.0
    %2189 = vmatprep.subr.mxu0 0.0
    %2190 = vmatpush1.xpose.msra.mxu0 0.0
    %2191 = vmatprep.subr.mxu0 0.0
    %2192 = vmatpush1.xpose.msra.mxu0 0.0
    %2193 = vmatprep.subr.mxu0 0.0
    %2194 = vmatpush1.xpose.msra.mxu0 0.0
    %2195 = vmatprep.subr.mxu0 0.0
    %2196 = vmatpush1.xpose.msra.mxu0 0.0
    %2197 = vmatprep.subr.mxu0 0.0
    %2198 = vmatpush1.xpose.msra.mxu0 0.0
    %2199 = vmatprep.subr.mxu0 0.0
    %2200 = vmatpush1.xpose.msra.mxu0 0.0
    %2201 = vmatprep.subr.mxu0 0.0
    %2202 = vmatpush1.xpose.msra.mxu0 0.0
    %2203 = vmatprep.subr.mxu0 0.0
    %2204 = vmatpush1.xpose.msra.mxu0 0.0
    %2205 = vmatprep.subr.mxu0 0.0
    %2206 = vmatpush1.xpose.msra.mxu0 0.0
    %2207 = vmatprep.subr.mxu0 0.0
    %2208 = vmatpush1.xpose.msra.mxu0 0.0
    %2209 = vmatprep.subr.mxu0 0.0
    %2210 = vmatpush1.xpose.msra.mxu0 0.0
    %2211 = vmatprep.subr.mxu0 0.0
    %2212 = vmatpush1.xpose.msra.mxu0 0.0
    %2213 = vmatprep.subr.mxu0 0.0
    %2214 = vmatpush1.xpose.msra.mxu0 0.0
    %2215 = vmatprep.subr.mxu0 0.0
    %2216 = vmatpush1.xpose.msra.mxu0 0.0
    %2217 = vmatprep.subr.mxu0 0.0
    %2218 = vmatpush1.xpose.msra.mxu0 0.0
    %2219 = vmatprep.subr.mxu0 0.0
    %2220 = vmatpush1.xpose.msra.mxu0 0.0
    %2221 = vmatprep.subr.mxu0 0.0
    %2222 = vmatpush1.xpose.msra.mxu0 0.0
    %2223 = vmatprep.subr.mxu0 0.0
    %2224 = vmatpush1.xpose.msra.mxu0 0.0
    %2225 = vmatprep.subr.mxu0 0.0
    %2226 = vmatpush1.xpose.msra.mxu0 0.0
    %2227 = vmatprep.subr.mxu0 0.0
    %2228 = vmatpush1.xpose.msra.mxu0 0.0
    %2229 = vmatprep.subr.mxu0 0.0
    %2230 = vmatpush1.xpose.msra.mxu0 0.0
    %2231 = vmatprep.subr.mxu0 0.0
    %2232 = vmatpush1.xpose.msra.mxu0 0.0
    %2233 = vmatprep.subr.mxu0 0.0
    %2234 = vmatpush1.xpose.msra.mxu0 0.0
    %2235 = vmatprep.mubr.f32.mxu0 0.0
    %2236 = vmatmul.mubr.f32.gmra.mrb[0].mxu0 %v2167
    %v2237 = vpop.f32.mrb[0].mxu0
    %v2238 = vadd.f32 0.0, %v2237
    %v2239 = vpop.f32.mrb[0].mxu0
    %2240 = vdwg.mxu0
    %2242 = vrot.lane.b32.xlu0 %v2161, 96
    %v2243 = vpop.permute.xlu0 %2242
    %v2244 = vsel %vm283, %v2161, 0
    %v2246 = vsel %vm283, %v2243, 0
    %2248 = vmatprep.subr.mxu0 0.0
    %2249 = vmatpush1.xpose.msra.mxu0 %v2246
    %2250 = vmatprep.subr.mxu0 0.0
    %2251 = vmatpush1.xpose.msra.mxu0 0.0
    %2252 = vmatprep.subr.mxu0 0.0
    %2253 = vmatpush1.xpose.msra.mxu0 0.0
    %2254 = vmatprep.subr.mxu0 0.0
    %2255 = vmatpush1.xpose.msra.mxu0 0.0
    %2256 = vmatprep.subr.mxu0 0.0
    %2257 = vmatpush1.xpose.msra.mxu0 0.0
    %2258 = vmatprep.subr.mxu0 0.0
    %2259 = vmatpush1.xpose.msra.mxu0 0.0
    %2260 = vmatprep.subr.mxu0 0.0
    %2261 = vmatpush1.xpose.msra.mxu0 0.0
    %2262 = vmatprep.subr.mxu0 0.0
    %2263 = vmatpush1.xpose.msra.mxu0 0.0
    %2264 = vmatprep.subr.mxu0 0.0
    %2265 = vmatpush1.xpose.msra.mxu0 0.0
    %2266 = vmatprep.subr.mxu0 0.0
    %2267 = vmatpush1.xpose.msra.mxu0 0.0
    %2268 = vmatprep.subr.mxu0 0.0
    %2269 = vmatpush1.xpose.msra.mxu0 0.0
    %2270 = vmatprep.subr.mxu0 0.0
    %2271 = vmatpush1.xpose.msra.mxu0 0.0
    %2272 = vmatprep.subr.mxu0 0.0
    %2273 = vmatpush1.xpose.msra.mxu0 0.0
    %2274 = vmatprep.subr.mxu0 0.0
    %2275 = vmatpush1.xpose.msra.mxu0 0.0
    %2276 = vmatprep.subr.mxu0 0.0
    %2277 = vmatpush1.xpose.msra.mxu0 0.0
    %2278 = vmatprep.subr.mxu0 0.0
    %2279 = vmatpush1.xpose.msra.mxu0 0.0
    %2280 = vmatprep.subr.mxu0 0.0
    %2281 = vmatpush1.xpose.msra.mxu0 0.0
    %2282 = vmatprep.subr.mxu0 0.0
    %2283 = vmatpush1.xpose.msra.mxu0 0.0
    %2284 = vmatprep.subr.mxu0 0.0
    %2285 = vmatpush1.xpose.msra.mxu0 0.0
    %2286 = vmatprep.subr.mxu0 0.0
    %2287 = vmatpush1.xpose.msra.mxu0 0.0
    %2288 = vmatprep.subr.mxu0 0.0
    %2289 = vmatpush1.xpose.msra.mxu0 0.0
    %2290 = vmatprep.subr.mxu0 0.0
    %2291 = vmatpush1.xpose.msra.mxu0 0.0
    %2292 = vmatprep.subr.mxu0 0.0
    %2293 = vmatpush1.xpose.msra.mxu0 0.0
    %2294 = vmatprep.subr.mxu0 0.0
    %2295 = vmatpush1.xpose.msra.mxu0 0.0
    %2296 = vmatprep.subr.mxu0 0.0
    %2297 = vmatpush1.xpose.msra.mxu0 0.0
    %2298 = vmatprep.subr.mxu0 0.0
    %2299 = vmatpush1.xpose.msra.mxu0 0.0
    %2300 = vmatprep.subr.mxu0 0.0
    %2301 = vmatpush1.xpose.msra.mxu0 0.0
    %2302 = vmatprep.subr.mxu0 0.0
    %2303 = vmatpush1.xpose.msra.mxu0 0.0
    %2304 = vmatprep.subr.mxu0 0.0
    %2305 = vmatpush1.xpose.msra.mxu0 0.0
    %2306 = vmatprep.subr.mxu0 0.0
    %2307 = vmatpush1.xpose.msra.mxu0 0.0
    %2308 = vmatprep.subr.mxu0 0.0
    %2309 = vmatpush1.xpose.msra.mxu0 0.0
    %2310 = vmatprep.subr.mxu0 0.0
    %2311 = vmatpush1.xpose.msra.mxu0 0.0
    %2312 = vmatprep.mubr.f32.mxu0 0.0
    %2313 = vmatmul.mubr.f32.gmra.mrb[0].mxu0 %v2244
    %v2314 = vpop.f32.mrb[0].mxu0
    %v2315 = vadd.f32 0.0, %v2314
    %v2316 = vpop.f32.mrb[0].mxu0
    %2317 = vdwg.mxu0
    %v2318 = vsel %vm283, %v2238, -inf
    %2319 = vmax.xlane.f32.xlu0 %v2318
    %v2320 = vpop.xlane.xlu0 %2319
    %v2321 = vsel %vm283, %v2315, -inf
    %2322 = vmax.xlane.f32.xlu0 %v2321
    %v2323 = vpop.xlane.xlu0 %2322
    %v2324 = vsub.f32 %v2238, %v2320
    %v2325 = vsub.f32 %v2315, %v2323
    %v2326 = vmul.f32 %v2324, 1.442695
    %v2327 = vpow.pop %v2326
    %v2328 = vmul.f32 %v2325, 1.442695
    %v2329 = vpow.pop %v2328
    %v2330 = vsel %vm283, %v2327, 0.0
    %2331 = vadd.xlane.f32.xlu0 %v2330
    %v2332 = vpop.xlane.xlu0 %2331
    %v2333 = vsel %vm283, %v2329, 0.0
    %2334 = vadd.xlane.f32.xlu0 %v2333
    %v2335 = vpop.xlane.xlu0 %2334
    %v2336 = vrcp.pop %v2332
    %v2337 = vrcp.pop %v2335
    %v2338 = vmul.f32 %v2327, %v2336
    %v2339 = vmul.f32 %v2329, %v2337
    %2340 = vrot.lane.b32.xlu0 %v2156, 64
    %v2341 = vpop.permute.xlu0 %2340
    %v2344 = vsel %vm283, %v2338, 0
    %2346 = vmatprep.subr.mxu0 0.0
    %2347 = vmatpush1.msra.mxu0 %v2341
    %2348 = vmatprep.subr.mxu0 0.0
    %2349 = vmatpush1.msra.mxu0 0.0
    %2350 = vmatprep.subr.mxu0 0.0
    %2351 = vmatpush1.msra.mxu0 0.0
    %2352 = vmatprep.subr.mxu0 0.0
    %2353 = vmatpush1.msra.mxu0 0.0
    %2354 = vmatprep.subr.mxu0 0.0
    %2355 = vmatpush1.msra.mxu0 0.0
    %2356 = vmatprep.subr.mxu0 0.0
    %2357 = vmatpush1.msra.mxu0 0.0
    %2358 = vmatprep.subr.mxu0 0.0
    %2359 = vmatpush1.msra.mxu0 0.0
    %2360 = vmatprep.subr.mxu0 0.0
    %2361 = vmatpush1.msra.mxu0 0.0
    %2362 = vmatprep.subr.mxu0 0.0
    %2363 = vmatpush1.msra.mxu0 0.0
    %2364 = vmatprep.subr.mxu0 0.0
    %2365 = vmatpush1.msra.mxu0 0.0
    %2366 = vmatprep.subr.mxu0 0.0
    %2367 = vmatpush1.msra.mxu0 0.0
    %2368 = vmatprep.subr.mxu0 0.0
    %2369 = vmatpush1.msra.mxu0 0.0
    %2370 = vmatprep.subr.mxu0 0.0
    %2371 = vmatpush1.msra.mxu0 0.0
    %2372 = vmatprep.subr.mxu0 0.0
    %2373 = vmatpush1.msra.mxu0 0.0
    %2374 = vmatprep.subr.mxu0 0.0
    %2375 = vmatpush1.msra.mxu0 0.0
    %2376 = vmatprep.subr.mxu0 0.0
    %2377 = vmatpush1.msra.mxu0 0.0
    %2378 = vmatprep.subr.mxu0 0.0
    %2379 = vmatpush1.msra.mxu0 0.0
    %2380 = vmatprep.subr.mxu0 0.0
    %2381 = vmatpush1.msra.mxu0 0.0
    %2382 = vmatprep.subr.mxu0 0.0
    %2383 = vmatpush1.msra.mxu0 0.0
    %2384 = vmatprep.subr.mxu0 0.0
    %2385 = vmatpush1.msra.mxu0 0.0
    %2386 = vmatprep.subr.mxu0 0.0
    %2387 = vmatpush1.msra.mxu0 0.0
    %2388 = vmatprep.subr.mxu0 0.0
    %2389 = vmatpush1.msra.mxu0 0.0
    %2390 = vmatprep.subr.mxu0 0.0
    %2391 = vmatpush1.msra.mxu0 0.0
    %2392 = vmatprep.subr.mxu0 0.0
    %2393 = vmatpush1.msra.mxu0 0.0
    %2394 = vmatprep.subr.mxu0 0.0
    %2395 = vmatpush1.msra.mxu0 0.0
    %2396 = vmatprep.subr.mxu0 0.0
    %2397 = vmatpush1.msra.mxu0 0.0
    %2398 = vmatprep.subr.mxu0 0.0
    %2399 = vmatpush1.msra.mxu0 0.0
    %2400 = vmatprep.subr.mxu0 0.0
    %2401 = vmatpush1.msra.mxu0 0.0
    %2402 = vmatprep.subr.mxu0 0.0
    %2403 = vmatpush1.msra.mxu0 0.0
    %2404 = vmatprep.subr.mxu0 0.0
    %2405 = vmatpush1.msra.mxu0 0.0
    %2406 = vmatprep.subr.mxu0 0.0
    %2407 = vmatpush1.msra.mxu0 0.0
    %2408 = vmatprep.subr.mxu0 0.0
    %2409 = vmatpush1.msra.mxu0 0.0
    %2410 = vmatprep.mubr.f32.mxu0 0.0
    %2411 = vmatmul.mubr.f32.gmra.mrb[0].mxu0 %v2344
    %v2412 = vpop.f32.mrb[0].mxu0
    %v2413 = vadd.f32 0.0, %v2412
    %v2414 = vpop.f32.mrb[0].mxu0
    %2415 = vdwg.mxu0
    %2416 = vrot.lane.b32.xlu0 %v2161, 64
    %v2417 = vpop.permute.xlu0 %2416
    %v2420 = vsel %vm283, %v2339, 0
    %2422 = vmatprep.subr.mxu0 0.0
    %2423 = vmatpush1.msra.mxu0 %v2417
    %2424 = vmatprep.subr.mxu0 0.0
    %2425 = vmatpush1.msra.mxu0 0.0
    %2426 = vmatprep.subr.mxu0 0.0
    %2427 = vmatpush1.msra.mxu0 0.0
    %2428 = vmatprep.subr.mxu0 0.0
    %2429 = vmatpush1.msra.mxu0 0.0
    %2430 = vmatprep.subr.mxu0 0.0
    %2431 = vmatpush1.msra.mxu0 0.0
    %2432 = vmatprep.subr.mxu0 0.0
    %2433 = vmatpush1.msra.mxu0 0.0
    %2434 = vmatprep.subr.mxu0 0.0
    %2435 = vmatpush1.msra.mxu0 0.0
    %2436 = vmatprep.subr.mxu0 0.0
    %2437 = vmatpush1.msra.mxu0 0.0
    %2438 = vmatprep.subr.mxu0 0.0
    %2439 = vmatpush1.msra.mxu0 0.0
    %2440 = vmatprep.subr.mxu0 0.0
    %2441 = vmatpush1.msra.mxu0 0.0
    %2442 = vmatprep.subr.mxu0 0.0
    %2443 = vmatpush1.msra.mxu0 0.0
    %2444 = vmatprep.subr.mxu0 0.0
    %2445 = vmatpush1.msra.mxu0 0.0
    %2446 = vmatprep.subr.mxu0 0.0
    %2447 = vmatpush1.msra.mxu0 0.0
    %2448 = vmatprep.subr.mxu0 0.0
    %2449 = vmatpush1.msra.mxu0 0.0
    %2450 = vmatprep.subr.mxu0 0.0
    %2451 = vmatpush1.msra.mxu0 0.0
    %2452 = vmatprep.subr.mxu0 0.0
    %2453 = vmatpush1.msra.mxu0 0.0
    %2454 = vmatprep.subr.mxu0 0.0
    %2455 = vmatpush1.msra.mxu0 0.0
    %2456 = vmatprep.subr.mxu0 0.0
    %2457 = vmatpush1.msra.mxu0 0.0
    %2458 = vmatprep.subr.mxu0 0.0
    %2459 = vmatpush1.msra.mxu0 0.0
    %2460 = vmatprep.subr.mxu0 0.0
    %2461 = vmatpush1.msra.mxu0 0.0
    %2462 = vmatprep.subr.mxu0 0.0
    %2463 = vmatpush1.msra.mxu0 0.0
    %2464 = vmatprep.subr.mxu0 0.0
    %2465 = vmatpush1.msra.mxu0 0.0
    %2466 = vmatprep.subr.mxu0 0.0
    %2467 = vmatpush1.msra.mxu0 0.0
    %2468 = vmatprep.subr.mxu0 0.0
    %2469 = vmatpush1.msra.mxu0 0.0
    %2470 = vmatprep.subr.mxu0 0.0
    %2471 = vmatpush1.msra.mxu0 0.0
    %2472 = vmatprep.subr.mxu0 0.0
    %2473 = vmatpush1.msra.mxu0 0.0
    %2474 = vmatprep.subr.mxu0 0.0
    %2475 = vmatpush1.msra.mxu0 0.0
    %2476 = vmatprep.subr.mxu0 0.0
    %2477 = vmatpush1.msra.mxu0 0.0
    %2478 = vmatprep.subr.mxu0 0.0
    %2479 = vmatpush1.msra.mxu0 0.0
    %2480 = vmatprep.subr.mxu0 0.0
    %2481 = vmatpush1.msra.mxu0 0.0
    %2482 = vmatprep.subr.mxu0 0.0
    %2483 = vmatpush1.msra.mxu0 0.0
    %2484 = vmatprep.subr.mxu0 0.0
    %2485 = vmatpush1.msra.mxu0 0.0
    %2486 = vmatprep.mubr.f32.mxu0 0.0
    %2487 = vmatmul.mubr.f32.gmra.mrb[0].mxu0 %v2420
    %v2488 = vpop.f32.mrb[0].mxu0
    %v2489 = vadd.f32 0.0, %v2488
    %v2490 = vpop.f32.mrb[0].mxu0
    %2491 = vdwg.mxu0
    %2492 = vst.msk [vmem:[#allocation2] sm:$0xff] %vm283, %v2413
    %2493 = vst.msk [vmem:[#allocation2 + $0x8] sm:$0xff] %vm283, %v2489
    %2494 = vrot.lane.b32.xlu0 %v2156, 120
    %v2495 = vpop.permute.xlu0 %2494
    %2496 = vrot.lane.b32.xlu0 %v2156, 88
    %v2497 = vpop.permute.xlu0 %2496
    %v2498 = vsel %vm283, %v2495, 0
    %v2500 = vsel %vm283, %v2497, 0
    %2502 = vmatprep.subr.mxu0 0.0
    %2503 = vmatpush1.xpose.msra.mxu0 %v2500
    %2504 = vmatprep.subr.mxu0 0.0
    %2505 = vmatpush1.xpose.msra.mxu0 0.0
    %2506 = vmatprep.subr.mxu0 0.0
    %2507 = vmatpush1.xpose.msra.mxu0 0.0
    %2508 = vmatprep.subr.mxu0 0.0
    %2509 = vmatpush1.xpose.msra.mxu0 0.0
    %2510 = vmatprep.subr.mxu0 0.0
    %2511 = vmatpush1.xpose.msra.mxu0 0.0
    %2512 = vmatprep.subr.mxu0 0.0
    %2513 = vmatpush1.xpose.msra.mxu0 0.0
    %2514 = vmatprep.subr.mxu0 0.0
    %2515 = vmatpush1.xpose.msra.mxu0 0.0
    %2516 = vmatprep.subr.mxu0 0.0
    %2517 = vmatpush1.xpose.msra.mxu0 0.0
    %2518 = vmatprep.subr.mxu0 0.0
    %2519 = vmatpush1.xpose.msra.mxu0 0.0
    %2520 = vmatprep.subr.mxu0 0.0
    %2521 = vmatpush1.xpose.msra.mxu0 0.0
    %2522 = vmatprep.subr.mxu0 0.0
    %2523 = vmatpush1.xpose.msra.mxu0 0.0
    %2524 = vmatprep.subr.mxu0 0.0
    %2525 = vmatpush1.xpose.msra.mxu0 0.0
    %2526 = vmatprep.subr.mxu0 0.0
    %2527 = vmatpush1.xpose.msra.mxu0 0.0
    %2528 = vmatprep.subr.mxu0 0.0
    %2529 = vmatpush1.xpose.msra.mxu0 0.0
    %2530 = vmatprep.subr.mxu0 0.0
    %2531 = vmatpush1.xpose.msra.mxu0 0.0
    %2532 = vmatprep.subr.mxu0 0.0
    %2533 = vmatpush1.xpose.msra.mxu0 0.0
    %2534 = vmatprep.subr.mxu0 0.0
    %2535 = vmatpush1.xpose.msra.mxu0 0.0
    %2536 = vmatprep.subr.mxu0 0.0
    %2537 = vmatpush1.xpose.msra.mxu0 0.0
    %2538 = vmatprep.subr.mxu0 0.0
    %2539 = vmatpush1.xpose.msra.mxu0 0.0
    %2540 = vmatprep.subr.mxu0 0.0
    %2541 = vmatpush1.xpose.msra.mxu0 0.0
    %2542 = vmatprep.subr.mxu0 0.0
    %2543 = vmatpush1.xpose.msra.mxu0 0.0
    %2544 = vmatprep.subr.mxu0 0.0
    %2545 = vmatpush1.xpose.msra.mxu0 0.0
    %2546 = vmatprep.subr.mxu0 0.0
    %2547 = vmatpush1.xpose.msra.mxu0 0.0
    %2548 = vmatprep.subr.mxu0 0.0
    %2549 = vmatpush1.xpose.msra.mxu0 0.0
    %2550 = vmatprep.subr.mxu0 0.0
    %2551 = vmatpush1.xpose.msra.mxu0 0.0
    %2552 = vmatprep.subr.mxu0 0.0
    %2553 = vmatpush1.xpose.msra.mxu0 0.0
    %2554 = vmatprep.subr.mxu0 0.0
    %2555 = vmatpush1.xpose.msra.mxu0 0.0
    %2556 = vmatprep.subr.mxu0 0.0
    %2557 = vmatpush1.xpose.msra.mxu0 0.0
    %2558 = vmatprep.subr.mxu0 0.0
    %2559 = vmatpush1.xpose.msra.mxu0 0.0
    %2560 = vmatprep.subr.mxu0 0.0
    %2561 = vmatpush1.xpose.msra.mxu0 0.0
    %2562 = vmatprep.subr.mxu0 0.0
    %2563 = vmatpush1.xpose.msra.mxu0 0.0
    %2564 = vmatprep.subr.mxu0 0.0
    %2565 = vmatpush1.xpose.msra.mxu0 0.0
    %2566 = vmatprep.mubr.f32.mxu0 0.0
    %2567 = vmatmul.mubr.f32.gmra.mrb[0].mxu0 %v2498
    %v2568 = vpop.f32.mrb[0].mxu0
    %v2569 = vadd.f32 0.0, %v2568
    %v2570 = vpop.f32.mrb[0].mxu0
    %2571 = vdwg.mxu0
    %2572 = vrot.lane.b32.xlu0 %v2161, 120
    %v2573 = vpop.permute.xlu0 %2572
    %2574 = vrot.lane.b32.xlu0 %v2161, 88
    %v2575 = vpop.permute.xlu0 %2574
    %v2576 = vsel %vm283, %v2573, 0
    %v2578 = vsel %vm283, %v2575, 0
    %2580 = vmatprep.subr.mxu0 0.0
    %2581 = vmatpush1.xpose.msra.mxu0 %v2578
    %2582 = vmatprep.subr.mxu0 0.0
    %2583 = vmatpush1.xpose.msra.mxu0 0.0
    %2584 = vmatprep.subr.mxu0 0.0
    %2585 = vmatpush1.xpose.msra.mxu0 0.0
    %2586 = vmatprep.subr.mxu0 0.0
    %2587 = vmatpush1.xpose.msra.mxu0 0.0
    %2588 = vmatprep.subr.mxu0 0.0
    %2589 = vmatpush1.xpose.msra.mxu0 0.0
    %2590 = vmatprep.subr.mxu0 0.0
    %2591 = vmatpush1.xpose.msra.mxu0 0.0
    %2592 = vmatprep.subr.mxu0 0.0
    %2593 = vmatpush1.xpose.msra.mxu0 0.0
    %2594 = vmatprep.subr.mxu0 0.0
    %2595 = vmatpush1.xpose.msra.mxu0 0.0
    %2596 = vmatprep.subr.mxu0 0.0
    %2597 = vmatpush1.xpose.msra.mxu0 0.0
    %2598 = vmatprep.subr.mxu0 0.0
    %2599 = vmatpush1.xpose.msra.mxu0 0.0
    %2600 = vmatprep.subr.mxu0 0.0
    %2601 = vmatpush1.xpose.msra.mxu0 0.0
    %2602 = vmatprep.subr.mxu0 0.0
    %2603 = vmatpush1.xpose.msra.mxu0 0.0
    %2604 = vmatprep.subr.mxu0 0.0
    %2605 = vmatpush1.xpose.msra.mxu0 0.0
    %2606 = vmatprep.subr.mxu0 0.0
    %2607 = vmatpush1.xpose.msra.mxu0 0.0
    %2608 = vmatprep.subr.mxu0 0.0
    %2609 = vmatpush1.xpose.msra.mxu0 0.0
    %2610 = vmatprep.subr.mxu0 0.0
    %2611 = vmatpush1.xpose.msra.mxu0 0.0
    %2612 = vmatprep.subr.mxu0 0.0
    %2613 = vmatpush1.xpose.msra.mxu0 0.0
    %2614 = vmatprep.subr.mxu0 0.0
    %2615 = vmatpush1.xpose.msra.mxu0 0.0
    %2616 = vmatprep.subr.mxu0 0.0
    %2617 = vmatpush1.xpose.msra.mxu0 0.0
    %2618 = vmatprep.subr.mxu0 0.0
    %2619 = vmatpush1.xpose.msra.mxu0 0.0
    %2620 = vmatprep.subr.mxu0 0.0
    %2621 = vmatpush1.xpose.msra.mxu0 0.0
    %2622 = vmatprep.subr.mxu0 0.0
    %2623 = vmatpush1.xpose.msra.mxu0 0.0
    %2624 = vmatprep.subr.mxu0 0.0
    %2625 = vmatpush1.xpose.msra.mxu0 0.0
    %2626 = vmatprep.subr.mxu0 0.0
    %2627 = vmatpush1.xpose.msra.mxu0 0.0
    %2628 = vmatprep.subr.mxu0 0.0
    %2629 = vmatpush1.xpose.msra.mxu0 0.0
    %2630 = vmatprep.subr.mxu0 0.0
    %2631 = vmatpush1.xpose.msra.mxu0 0.0
    %2632 = vmatprep.subr.mxu0 0.0
    %2633 = vmatpush1.xpose.msra.mxu0 0.0
    %2634 = vmatprep.subr.mxu0 0.0
    %2635 = vmatpush1.xpose.msra.mxu0 0.0
    %2636 = vmatprep.subr.mxu0 0.0
    %2637 = vmatpush1.xpose.msra.mxu0 0.0
    %2638 = vmatprep.subr.mxu0 0.0
    %2639 = vmatpush1.xpose.msra.mxu0 0.0
    %2640 = vmatprep.subr.mxu0 0.0
    %2641 = vmatpush1.xpose.msra.mxu0 0.0
    %2642 = vmatprep.subr.mxu0 0.0
    %2643 = vmatpush1.xpose.msra.mxu0 0.0
    %2644 = vmatprep.mubr.f32.mxu0 0.0
    %2645 = vmatmul.mubr.f32.gmra.mrb[0].mxu0 %v2576
    %v2646 = vpop.f32.mrb[0].mxu0
    %v2647 = vadd.f32 0.0, %v2646
    %v2648 = vpop.f32.mrb[0].mxu0
    %2649 = vdwg.mxu0
    %v2650 = vsel %vm283, %v2569, -inf
    %2651 = vmax.xlane.f32.xlu0 %v2650
    %v2652 = vpop.xlane.xlu0 %2651
    %v2653 = vsel %vm283, %v2647, -inf
    %2654 = vmax.xlane.f32.xlu0 %v2653
    %v2655 = vpop.xlane.xlu0 %2654
    %v2656 = vsub.f32 %v2569, %v2652
    %v2657 = vsub.f32 %v2647, %v2655
    %v2658 = vmul.f32 %v2656, 1.442695
    %v2659 = vpow.pop %v2658
    %v2660 = vmul.f32 %v2657, 1.442695
    %v2661 = vpow.pop %v2660
    %v2662 = vsel %vm283, %v2659, 0.0
    %2663 = vadd.xlane.f32.xlu0 %v2662
    %v2664 = vpop.xlane.xlu0 %2663
    %v2665 = vsel %vm283, %v2661, 0.0
    %2666 = vadd.xlane.f32.xlu0 %v2665
    %v2667 = vpop.xlane.xlu0 %2666
    %v2668 = vrcp.pop %v2664
    %v2669 = vrcp.pop %v2667
    %v2670 = vmul.f32 %v2659, %v2668
    %v2671 = vmul.f32 %v2661, %v2669
    %2672 = vrot.lane.b32.xlu0 %v2156, 56
    %v2673 = vpop.permute.xlu0 %2672
    %v2676 = vsel %vm283, %v2670, 0
    %2678 = vmatprep.subr.mxu0 0.0
    %2679 = vmatpush1.msra.mxu0 %v2673
    %2680 = vmatprep.subr.mxu0 0.0
    %2681 = vmatpush1.msra.mxu0 0.0
    %2682 = vmatprep.subr.mxu0 0.0
    %2683 = vmatpush1.msra.mxu0 0.0
    %2684 = vmatprep.subr.mxu0 0.0
    %2685 = vmatpush1.msra.mxu0 0.0
    %2686 = vmatprep.subr.mxu0 0.0
    %2687 = vmatpush1.msra.mxu0 0.0
    %2688 = vmatprep.subr.mxu0 0.0
    %2689 = vmatpush1.msra.mxu0 0.0
    %2690 = vmatprep.subr.mxu0 0.0
    %2691 = vmatpush1.msra.mxu0 0.0
    %2692 = vmatprep.subr.mxu0 0.0
    %2693 = vmatpush1.msra.mxu0 0.0
    %2694 = vmatprep.subr.mxu0 0.0
    %2695 = vmatpush1.msra.mxu0 0.0
    %2696 = vmatprep.subr.mxu0 0.0
    %2697 = vmatpush1.msra.mxu0 0.0
    %2698 = vmatprep.subr.mxu0 0.0
    %2699 = vmatpush1.msra.mxu0 0.0
    %2700 = vmatprep.subr.mxu0 0.0
    %2701 = vmatpush1.msra.mxu0 0.0
    %2702 = vmatprep.subr.mxu0 0.0
    %2703 = vmatpush1.msra.mxu0 0.0
    %2704 = vmatprep.subr.mxu0 0.0
    %2705 = vmatpush1.msra.mxu0 0.0
    %2706 = vmatprep.subr.mxu0 0.0
    %2707 = vmatpush1.msra.mxu0 0.0
    %2708 = vmatprep.subr.mxu0 0.0
    %2709 = vmatpush1.msra.mxu0 0.0
    %2710 = vmatprep.subr.mxu0 0.0
    %2711 = vmatpush1.msra.mxu0 0.0
    %2712 = vmatprep.subr.mxu0 0.0
    %2713 = vmatpush1.msra.mxu0 0.0
    %2714 = vmatprep.subr.mxu0 0.0
    %2715 = vmatpush1.msra.mxu0 0.0
    %2716 = vmatprep.subr.mxu0 0.0
    %2717 = vmatpush1.msra.mxu0 0.0
    %2718 = vmatprep.subr.mxu0 0.0
    %2719 = vmatpush1.msra.mxu0 0.0
    %2720 = vmatprep.subr.mxu0 0.0
    %2721 = vmatpush1.msra.mxu0 0.0
    %2722 = vmatprep.subr.mxu0 0.0
    %2723 = vmatpush1.msra.mxu0 0.0
    %2724 = vmatprep.subr.mxu0 0.0
    %2725 = vmatpush1.msra.mxu0 0.0
    %2726 = vmatprep.subr.mxu0 0.0
    %2727 = vmatpush1.msra.mxu0 0.0
    %2728 = vmatprep.subr.mxu0 0.0
    %2729 = vmatpush1.msra.mxu0 0.0
    %2730 = vmatprep.subr.mxu0 0.0
    %2731 = vmatpush1.msra.mxu0 0.0
    %2732 = vmatprep.subr.mxu0 0.0
    %2733 = vmatpush1.msra.mxu0 0.0
    %2734 = vmatprep.subr.mxu0 0.0
    %2735 = vmatpush1.msra.mxu0 0.0
    %2736 = vmatprep.subr.mxu0 0.0
    %2737 = vmatpush1.msra.mxu0 0.0
    %2738 = vmatprep.subr.mxu0 0.0
    %2739 = vmatpush1.msra.mxu0 0.0
    %2740 = vmatprep.subr.mxu0 0.0
    %2741 = vmatpush1.msra.mxu0 0.0
    %2742 = vmatprep.mubr.f32.mxu0 0.0
    %2743 = vmatmul.mubr.f32.gmra.mrb[0].mxu0 %v2676
    %v2744 = vpop.f32.mrb[0].mxu0
    %v2745 = vadd.f32 0.0, %v2744
    %v2746 = vpop.f32.mrb[0].mxu0
    %2747 = vdwg.mxu0
    %2748 = vrot.lane.b32.xlu0 %v2161, 56
    %v2749 = vpop.permute.xlu0 %2748
    %v2752 = vsel %vm283, %v2671, 0
    %2754 = vmatprep.subr.mxu0 0.0
    %2755 = vmatpush1.msra.mxu0 %v2749
    %2756 = vmatprep.subr.mxu0 0.0
    %2757 = vmatpush1.msra.mxu0 0.0
    %2758 = vmatprep.subr.mxu0 0.0
    %2759 = vmatpush1.msra.mxu0 0.0
    %2760 = vmatprep.subr.mxu0 0.0
    %2761 = vmatpush1.msra.mxu0 0.0
    %2762 = vmatprep.subr.mxu0 0.0
    %2763 = vmatpush1.msra.mxu0 0.0
    %2764 = vmatprep.subr.mxu0 0.0
    %2765 = vmatpush1.msra.mxu0 0.0
    %2766 = vmatprep.subr.mxu0 0.0
    %2767 = vmatpush1.msra.mxu0 0.0
    %2768 = vmatprep.subr.mxu0 0.0
    %2769 = vmatpush1.msra.mxu0 0.0
    %2770 = vmatprep.subr.mxu0 0.0
    %2771 = vmatpush1.msra.mxu0 0.0
    %2772 = vmatprep.subr.mxu0 0.0
    %2773 = vmatpush1.msra.mxu0 0.0
    %2774 = vmatprep.subr.mxu0 0.0
    %2775 = vmatpush1.msra.mxu0 0.0
    %2776 = vmatprep.subr.mxu0 0.0
    %2777 = vmatpush1.msra.mxu0 0.0
    %2778 = vmatprep.subr.mxu0 0.0
    %2779 = vmatpush1.msra.mxu0 0.0
    %2780 = vmatprep.subr.mxu0 0.0
    %2781 = vmatpush1.msra.mxu0 0.0
    %2782 = vmatprep.subr.mxu0 0.0
    %2783 = vmatpush1.msra.mxu0 0.0
    %2784 = vmatprep.subr.mxu0 0.0
    %2785 = vmatpush1.msra.mxu0 0.0
    %2786 = vmatprep.subr.mxu0 0.0
    %2787 = vmatpush1.msra.mxu0 0.0
    %2788 = vmatprep.subr.mxu0 0.0
    %2789 = vmatpush1.msra.mxu0 0.0
    %2790 = vmatprep.subr.mxu0 0.0
    %2791 = vmatpush1.msra.mxu0 0.0
    %2792 = vmatprep.subr.mxu0 0.0
    %2793 = vmatpush1.msra.mxu0 0.0
    %2794 = vmatprep.subr.mxu0 0.0
    %2795 = vmatpush1.msra.mxu0 0.0
    %2796 = vmatprep.subr.mxu0 0.0
    %2797 = vmatpush1.msra.mxu0 0.0
    %2798 = vmatprep.subr.mxu0 0.0
    %2799 = vmatpush1.msra.mxu0 0.0
    %2800 = vmatprep.subr.mxu0 0.0
    %2801 = vmatpush1.msra.mxu0 0.0
    %2802 = vmatprep.subr.mxu0 0.0
    %2803 = vmatpush1.msra.mxu0 0.0
    %2804 = vmatprep.subr.mxu0 0.0
    %2805 = vmatpush1.msra.mxu0 0.0
    %2806 = vmatprep.subr.mxu0 0.0
    %2807 = vmatpush1.msra.mxu0 0.0
    %2808 = vmatprep.subr.mxu0 0.0
    %2809 = vmatpush1.msra.mxu0 0.0
    %2810 = vmatprep.subr.mxu0 0.0
    %2811 = vmatpush1.msra.mxu0 0.0
    %2812 = vmatprep.subr.mxu0 0.0
    %2813 = vmatpush1.msra.mxu0 0.0
    %2814 = vmatprep.subr.mxu0 0.0
    %2815 = vmatpush1.msra.mxu0 0.0
    %2816 = vmatprep.subr.mxu0 0.0
    %2817 = vmatpush1.msra.mxu0 0.0
    %2818 = vmatprep.mubr.f32.mxu0 0.0
    %2819 = vmatmul.mubr.f32.gmra.mrb[0].mxu0 %v2752
    %v2820 = vpop.f32.mrb[0].mxu0
    %v2821 = vadd.f32 0.0, %v2820
    %v2822 = vpop.f32.mrb[0].mxu0
    %2823 = vdwg.mxu0
    %2826 = vrot.lane.b32.xlu0 %v2745, 8
    %v2827 = vpop.permute.xlu0 %2826
    %2828 = vrot.lane.b32.xlu0 %v2821, 8
    %v2829 = vpop.permute.xlu0 %2828
    %2832 = vst.msk [vmem:[#allocation2] sm:$0xff] %vm949, %v2827
    %2833 = vst.msk [vmem:[#allocation2 + $0x8] sm:$0xff] %vm949, %v2829
    %2834 = vrot.lane.b32.xlu0 %v2156, 112
    %v2835 = vpop.permute.xlu0 %2834
    %2836 = vrot.lane.b32.xlu0 %v2156, 80
    %v2837 = vpop.permute.xlu0 %2836
    %v2838 = vsel %vm283, %v2835, 0
    %v2840 = vsel %vm283, %v2837, 0
    %2842 = vmatprep.subr.mxu0 0.0
    %2843 = vmatpush1.xpose.msra.mxu0 %v2840
    %2844 = vmatprep.subr.mxu0 0.0
    %2845 = vmatpush1.xpose.msra.mxu0 0.0
    %2846 = vmatprep.subr.mxu0 0.0
    %2847 = vmatpush1.xpose.msra.mxu0 0.0
    %2848 = vmatprep.subr.mxu0 0.0
    %2849 = vmatpush1.xpose.msra.mxu0 0.0
    %2850 = vmatprep.subr.mxu0 0.0
    %2851 = vmatpush1.xpose.msra.mxu0 0.0
    %2852 = vmatprep.subr.mxu0 0.0
    %2853 = vmatpush1.xpose.msra.mxu0 0.0
    %2854 = vmatprep.subr.mxu0 0.0
    %2855 = vmatpush1.xpose.msra.mxu0 0.0
    %2856 = vmatprep.subr.mxu0 0.0
    %2857 = vmatpush1.xpose.msra.mxu0 0.0
    %2858 = vmatprep.subr.mxu0 0.0
    %2859 = vmatpush1.xpose.msra.mxu0 0.0
    %2860 = vmatprep.subr.mxu0 0.0
    %2861 = vmatpush1.xpose.msra.mxu0 0.0
    %2862 = vmatprep.subr.mxu0 0.0
    %2863 = vmatpush1.xpose.msra.mxu0 0.0
    %2864 = vmatprep.subr.mxu0 0.0
    %2865 = vmatpush1.xpose.msra.mxu0 0.0
    %2866 = vmatprep.subr.mxu0 0.0
    %2867 = vmatpush1.xpose.msra.mxu0 0.0
    %2868 = vmatprep.subr.mxu0 0.0
    %2869 = vmatpush1.xpose.msra.mxu0 0.0
    %2870 = vmatprep.subr.mxu0 0.0
    %2871 = vmatpush1.xpose.msra.mxu0 0.0
    %2872 = vmatprep.subr.mxu0 0.0
    %2873 = vmatpush1.xpose.msra.mxu0 0.0
    %2874 = vmatprep.subr.mxu0 0.0
    %2875 = vmatpush1.xpose.msra.mxu0 0.0
    %2876 = vmatprep.subr.mxu0 0.0
    %2877 = vmatpush1.xpose.msra.mxu0 0.0
    %2878 = vmatprep.subr.mxu0 0.0
    %2879 = vmatpush1.xpose.msra.mxu0 0.0
    %2880 = vmatprep.subr.mxu0 0.0
    %2881 = vmatpush1.xpose.msra.mxu0 0.0
    %2882 = vmatprep.subr.mxu0 0.0
    %2883 = vmatpush1.xpose.msra.mxu0 0.0
    %2884 = vmatprep.subr.mxu0 0.0
    %2885 = vmatpush1.xpose.msra.mxu0 0.0
    %2886 = vmatprep.subr.mxu0 0.0
    %2887 = vmatpush1.xpose.msra.mxu0 0.0
    %2888 = vmatprep.subr.mxu0 0.0
    %2889 = vmatpush1.xpose.msra.mxu0 0.0
    %2890 = vmatprep.subr.mxu0 0.0
    %2891 = vmatpush1.xpose.msra.mxu0 0.0
    %2892 = vmatprep.subr.mxu0 0.0
    %2893 = vmatpush1.xpose.msra.mxu0 0.0
    %2894 = vmatprep.subr.mxu0 0.0
    %2895 = vmatpush1.xpose.msra.mxu0 0.0
    %2896 = vmatprep.subr.mxu0 0.0
    %2897 = vmatpush1.xpose.msra.mxu0 0.0
    %2898 = vmatprep.subr.mxu0 0.0
    %2899 = vmatpush1.xpose.msra.mxu0 0.0
    %2900 = vmatprep.subr.mxu0 0.0
    %2901 = vmatpush1.xpose.msra.mxu0 0.0
    %2902 = vmatprep.subr.mxu0 0.0
    %2903 = vmatpush1.xpose.msra.mxu0 0.0
    %2904 = vmatprep.subr.mxu0 0.0
    %2905 = vmatpush1.xpose.msra.mxu0 0.0
    %2906 = vmatprep.mubr.f32.mxu0 0.0
    %2907 = vmatmul.mubr.f32.gmra.mrb[0].mxu0 %v2838
    %v2908 = vpop.f32.mrb[0].mxu0
    %v2909 = vadd.f32 0.0, %v2908
    %v2910 = vpop.f32.mrb[0].mxu0
    %2911 = vdwg.mxu0
    %2912 = vrot.lane.b32.xlu0 %v2161, 112
    %v2913 = vpop.permute.xlu0 %2912
    %2914 = vrot.lane.b32.xlu0 %v2161, 80
    %v2915 = vpop.permute.xlu0 %2914
    %v2916 = vsel %vm283, %v2913, 0
    %v2918 = vsel %vm283, %v2915, 0
    %2920 = vmatprep.subr.mxu0 0.0
    %2921 = vmatpush1.xpose.msra.mxu0 %v2918
    %2922 = vmatprep.subr.mxu0 0.0
    %2923 = vmatpush1.xpose.msra.mxu0 0.0
    %2924 = vmatprep.subr.mxu0 0.0
    %2925 = vmatpush1.xpose.msra.mxu0 0.0
    %2926 = vmatprep.subr.mxu0 0.0
    %2927 = vmatpush1.xpose.msra.mxu0 0.0
    %2928 = vmatprep.subr.mxu0 0.0
    %2929 = vmatpush1.xpose.msra.mxu0 0.0
    %2930 = vmatprep.subr.mxu0 0.0
    %2931 = vmatpush1.xpose.msra.mxu0 0.0
    %2932 = vmatprep.subr.mxu0 0.0
    %2933 = vmatpush1.xpose.msra.mxu0 0.0
    %2934 = vmatprep.subr.mxu0 0.0
    %2935 = vmatpush1.xpose.msra.mxu0 0.0
    %2936 = vmatprep.subr.mxu0 0.0
    %2937 = vmatpush1.xpose.msra.mxu0 0.0
    %2938 = vmatprep.subr.mxu0 0.0
    %2939 = vmatpush1.xpose.msra.mxu0 0.0
    %2940 = vmatprep.subr.mxu0 0.0
    %2941 = vmatpush1.xpose.msra.mxu0 0.0
    %2942 = vmatprep.subr.mxu0 0.0
    %2943 = vmatpush1.xpose.msra.mxu0 0.0
    %2944 = vmatprep.subr.mxu0 0.0
    %2945 = vmatpush1.xpose.msra.mxu0 0.0
    %2946 = vmatprep.subr.mxu0 0.0
    %2947 = vmatpush1.xpose.msra.mxu0 0.0
    %2948 = vmatprep.subr.mxu0 0.0
    %2949 = vmatpush1.xpose.msra.mxu0 0.0
    %2950 = vmatprep.subr.mxu0 0.0
    %2951 = vmatpush1.xpose.msra.mxu0 0.0
    %2952 = vmatprep.subr.mxu0 0.0
    %2953 = vmatpush1.xpose.msra.mxu0 0.0
    %2954 = vmatprep.subr.mxu0 0.0
    %2955 = vmatpush1.xpose.msra.mxu0 0.0
    %2956 = vmatprep.subr.mxu0 0.0
    %2957 = vmatpush1.xpose.msra.mxu0 0.0
    %2958 = vmatprep.subr.mxu0 0.0
    %2959 = vmatpush1.xpose.msra.mxu0 0.0
    %2960 = vmatprep.subr.mxu0 0.0
    %2961 = vmatpush1.xpose.msra.mxu0 0.0
    %2962 = vmatprep.subr.mxu0 0.0
    %2963 = vmatpush1.xpose.msra.mxu0 0.0
    %2964 = vmatprep.subr.mxu0 0.0
    %2965 = vmatpush1.xpose.msra.mxu0 0.0
    %2966 = vmatprep.subr.mxu0 0.0
    %2967 = vmatpush1.xpose.msra.mxu0 0.0
    %2968 = vmatprep.subr.mxu0 0.0
    %2969 = vmatpush1.xpose.msra.mxu0 0.0
    %2970 = vmatprep.subr.mxu0 0.0
    %2971 = vmatpush1.xpose.msra.mxu0 0.0
    %2972 = vmatprep.subr.mxu0 0.0
    %2973 = vmatpush1.xpose.msra.mxu0 0.0
    %2974 = vmatprep.subr.mxu0 0.0
    %2975 = vmatpush1.xpose.msra.mxu0 0.0
    %2976 = vmatprep.subr.mxu0 0.0
    %2977 = vmatpush1.xpose.msra.mxu0 0.0
    %2978 = vmatprep.subr.mxu0 0.0
    %2979 = vmatpush1.xpose.msra.mxu0 0.0
    %2980 = vmatprep.subr.mxu0 0.0
    %2981 = vmatpush1.xpose.msra.mxu0 0.0
    %2982 = vmatprep.subr.mxu0 0.0
    %2983 = vmatpush1.xpose.msra.mxu0 0.0
    %2984 = vmatprep.mubr.f32.mxu0 0.0
    %2985 = vmatmul.mubr.f32.gmra.mrb[0].mxu0 %v2916
    %v2986 = vpop.f32.mrb[0].mxu0
    %v2987 = vadd.f32 0.0, %v2986
    %v2988 = vpop.f32.mrb[0].mxu0
    %2989 = vdwg.mxu0
    %v2990 = vsel %vm283, %v2909, -inf
    %2991 = vmax.xlane.f32.xlu0 %v2990
    %v2992 = vpop.xlane.xlu0 %2991
    %v2993 = vsel %vm283, %v2987, -inf
    %2994 = vmax.xlane.f32.xlu0 %v2993
    %v2995 = vpop.xlane.xlu0 %2994
    %v2996 = vsub.f32 %v2909, %v2992
    %v2997 = vsub.f32 %v2987, %v2995
    %v2998 = vmul.f32 %v2996, 1.442695
    %v2999 = vpow.pop %v2998
    %v3000 = vmul.f32 %v2997, 1.442695
    %v3001 = vpow.pop %v3000
    %v3002 = vsel %vm283, %v2999, 0.0
    %3003 = vadd.xlane.f32.xlu0 %v3002
    %v3004 = vpop.xlane.xlu0 %3003
    %v3005 = vsel %vm283, %v3001, 0.0
    %3006 = vadd.xlane.f32.xlu0 %v3005
    %v3007 = vpop.xlane.xlu0 %3006
    %v3008 = vrcp.pop %v3004
    %v3009 = vrcp.pop %v3007
    %v3010 = vmul.f32 %v2999, %v3008
    %v3011 = vmul.f32 %v3001, %v3009
    %3012 = vrot.lane.b32.xlu0 %v2156, 48
    %v3013 = vpop.permute.xlu0 %3012
    %v3016 = vsel %vm283, %v3010, 0
    %3018 = vmatprep.subr.mxu0 0.0
    %3019 = vmatpush1.msra.mxu0 %v3013
    %3020 = vmatprep.subr.mxu0 0.0
    %3021 = vmatpush1.msra.mxu0 0.0
    %3022 = vmatprep.subr.mxu0 0.0
    %3023 = vmatpush1.msra.mxu0 0.0
    %3024 = vmatprep.subr.mxu0 0.0
    %3025 = vmatpush1.msra.mxu0 0.0
    %3026 = vmatprep.subr.mxu0 0.0
    %3027 = vmatpush1.msra.mxu0 0.0
    %3028 = vmatprep.subr.mxu0 0.0
    %3029 = vmatpush1.msra.mxu0 0.0
    %3030 = vmatprep.subr.mxu0 0.0
    %3031 = vmatpush1.msra.mxu0 0.0
    %3032 = vmatprep.subr.mxu0 0.0
    %3033 = vmatpush1.msra.mxu0 0.0
    %3034 = vmatprep.subr.mxu0 0.0
    %3035 = vmatpush1.msra.mxu0 0.0
    %3036 = vmatprep.subr.mxu0 0.0
    %3037 = vmatpush1.msra.mxu0 0.0
    %3038 = vmatprep.subr.mxu0 0.0
    %3039 = vmatpush1.msra.mxu0 0.0
    %3040 = vmatprep.subr.mxu0 0.0
    %3041 = vmatpush1.msra.mxu0 0.0
    %3042 = vmatprep.subr.mxu0 0.0
    %3043 = vmatpush1.msra.mxu0 0.0
    %3044 = vmatprep.subr.mxu0 0.0
    %3045 = vmatpush1.msra.mxu0 0.0
    %3046 = vmatprep.subr.mxu0 0.0
    %3047 = vmatpush1.msra.mxu0 0.0
    %3048 = vmatprep.subr.mxu0 0.0
    %3049 = vmatpush1.msra.mxu0 0.0
    %3050 = vmatprep.subr.mxu0 0.0
    %3051 = vmatpush1.msra.mxu0 0.0
    %3052 = vmatprep.subr.mxu0 0.0
    %3053 = vmatpush1.msra.mxu0 0.0
    %3054 = vmatprep.subr.mxu0 0.0
    %3055 = vmatpush1.msra.mxu0 0.0
    %3056 = vmatprep.subr.mxu0 0.0
    %3057 = vmatpush1.msra.mxu0 0.0
    %3058 = vmatprep.subr.mxu0 0.0
    %3059 = vmatpush1.msra.mxu0 0.0
    %3060 = vmatprep.subr.mxu0 0.0
    %3061 = vmatpush1.msra.mxu0 0.0
    %3062 = vmatprep.subr.mxu0 0.0
    %3063 = vmatpush1.msra.mxu0 0.0
    %3064 = vmatprep.subr.mxu0 0.0
    %3065 = vmatpush1.msra.mxu0 0.0
    %3066 = vmatprep.subr.mxu0 0.0
    %3067 = vmatpush1.msra.mxu0 0.0
    %3068 = vmatprep.subr.mxu0 0.0
    %3069 = vmatpush1.msra.mxu0 0.0
    %3070 = vmatprep.subr.mxu0 0.0
    %3071 = vmatpush1.msra.mxu0 0.0
    %3072 = vmatprep.subr.mxu0 0.0
    %3073 = vmatpush1.msra.mxu0 0.0
    %3074 = vmatprep.subr.mxu0 0.0
    %3075 = vmatpush1.msra.mxu0 0.0
    %3076 = vmatprep.subr.mxu0 0.0
    %3077 = vmatpush1.msra.mxu0 0.0
    %3078 = vmatprep.subr.mxu0 0.0
    %3079 = vmatpush1.msra.mxu0 0.0
    %3080 = vmatprep.subr.mxu0 0.0
    %3081 = vmatpush1.msra.mxu0 0.0
    %3082 = vmatprep.mubr.f32.mxu0 0.0
    %3083 = vmatmul.mubr.f32.gmra.mrb[0].mxu0 %v3016
    %v3084 = vpop.f32.mrb[0].mxu0
    %v3085 = vadd.f32 0.0, %v3084
    %v3086 = vpop.f32.mrb[0].mxu0
    %3087 = vdwg.mxu0
    %3088 = vrot.lane.b32.xlu0 %v2161, 48
    %v3089 = vpop.permute.xlu0 %3088
    %v3092 = vsel %vm283, %v3011, 0
    %3094 = vmatprep.subr.mxu0 0.0
    %3095 = vmatpush1.msra.mxu0 %v3089
    %3096 = vmatprep.subr.mxu0 0.0
    %3097 = vmatpush1.msra.mxu0 0.0
    %3098 = vmatprep.subr.mxu0 0.0
    %3099 = vmatpush1.msra.mxu0 0.0
    %3100 = vmatprep.subr.mxu0 0.0
    %3101 = vmatpush1.msra.mxu0 0.0
    %3102 = vmatprep.subr.mxu0 0.0
    %3103 = vmatpush1.msra.mxu0 0.0
    %3104 = vmatprep.subr.mxu0 0.0
    %3105 = vmatpush1.msra.mxu0 0.0
    %3106 = vmatprep.subr.mxu0 0.0
    %3107 = vmatpush1.msra.mxu0 0.0
    %3108 = vmatprep.subr.mxu0 0.0
    %3109 = vmatpush1.msra.mxu0 0.0
    %3110 = vmatprep.subr.mxu0 0.0
    %3111 = vmatpush1.msra.mxu0 0.0
    %3112 = vmatprep.subr.mxu0 0.0
    %3113 = vmatpush1.msra.mxu0 0.0
    %3114 = vmatprep.subr.mxu0 0.0
    %3115 = vmatpush1.msra.mxu0 0.0
    %3116 = vmatprep.subr.mxu0 0.0
    %3117 = vmatpush1.msra.mxu0 0.0
    %3118 = vmatprep.subr.mxu0 0.0
    %3119 = vmatpush1.msra.mxu0 0.0
    %3120 = vmatprep.subr.mxu0 0.0
    %3121 = vmatpush1.msra.mxu0 0.0
    %3122 = vmatprep.subr.mxu0 0.0
    %3123 = vmatpush1.msra.mxu0 0.0
    %3124 = vmatprep.subr.mxu0 0.0
    %3125 = vmatpush1.msra.mxu0 0.0
    %3126 = vmatprep.subr.mxu0 0.0
    %3127 = vmatpush1.msra.mxu0 0.0
    %3128 = vmatprep.subr.mxu0 0.0
    %3129 = vmatpush1.msra.mxu0 0.0
    %3130 = vmatprep.subr.mxu0 0.0
    %3131 = vmatpush1.msra.mxu0 0.0
    %3132 = vmatprep.subr.mxu0 0.0
    %3133 = vmatpush1.msra.mxu0 0.0
    %3134 = vmatprep.subr.mxu0 0.0
    %3135 = vmatpush1.msra.mxu0 0.0
    %3136 = vmatprep.subr.mxu0 0.0
    %3137 = vmatpush1.msra.mxu0 0.0
    %3138 = vmatprep.subr.mxu0 0.0
    %3139 = vmatpush1.msra.mxu0 0.0
    %3140 = vmatprep.subr.mxu0 0.0
    %3141 = vmatpush1.msra.mxu0 0.0
    %3142 = vmatprep.subr.mxu0 0.0
    %3143 = vmatpush1.msra.mxu0 0.0
    %3144 = vmatprep.subr.mxu0 0.0
    %3145 = vmatpush1.msra.mxu0 0.0
    %3146 = vmatprep.subr.mxu0 0.0
    %3147 = vmatpush1.msra.mxu0 0.0
    %3148 = vmatprep.subr.mxu0 0.0
    %3149 = vmatpush1.msra.mxu0 0.0
    %3150 = vmatprep.subr.mxu0 0.0
    %3151 = vmatpush1.msra.mxu0 0.0
    %3152 = vmatprep.subr.mxu0 0.0
    %3153 = vmatpush1.msra.mxu0 0.0
    %3154 = vmatprep.subr.mxu0 0.0
    %3155 = vmatpush1.msra.mxu0 0.0
    %3156 = vmatprep.subr.mxu0 0.0
    %3157 = vmatpush1.msra.mxu0 0.0
    %3158 = vmatprep.mubr.f32.mxu0 0.0
    %3159 = vmatmul.mubr.f32.gmra.mrb[0].mxu0 %v3092
    %v3160 = vpop.f32.mrb[0].mxu0
    %v3161 = vadd.f32 0.0, %v3160
    %v3162 = vpop.f32.mrb[0].mxu0
    %3163 = vdwg.mxu0
    %3166 = vrot.lane.b32.xlu0 %v3085, 16
    %v3167 = vpop.permute.xlu0 %3166
    %3168 = vrot.lane.b32.xlu0 %v3161, 16
    %v3169 = vpop.permute.xlu0 %3168
    %3172 = vst.msk [vmem:[#allocation2] sm:$0xff] %vm1290, %v3167
    %3173 = vst.msk [vmem:[#allocation2 + $0x8] sm:$0xff] %vm1290, %v3169
    %3174 = vrot.lane.b32.xlu0 %v2156, 104
    %v3175 = vpop.permute.xlu0 %3174
    %3176 = vrot.lane.b32.xlu0 %v2156, 72
    %v3177 = vpop.permute.xlu0 %3176
    %v3178 = vsel %vm283, %v3175, 0
    %v3180 = vsel %vm283, %v3177, 0
    %3182 = vmatprep.subr.mxu0 0.0
    %3183 = vmatpush1.xpose.msra.mxu0 %v3180
    %3184 = vmatprep.subr.mxu0 0.0
    %3185 = vmatpush1.xpose.msra.mxu0 0.0
    %3186 = vmatprep.subr.mxu0 0.0
    %3187 = vmatpush1.xpose.msra.mxu0 0.0
    %3188 = vmatprep.subr.mxu0 0.0
    %3189 = vmatpush1.xpose.msra.mxu0 0.0
    %3190 = vmatprep.subr.mxu0 0.0
    %3191 = vmatpush1.xpose.msra.mxu0 0.0
    %3192 = vmatprep.subr.mxu0 0.0
    %3193 = vmatpush1.xpose.msra.mxu0 0.0
    %3194 = vmatprep.subr.mxu0 0.0
    %3195 = vmatpush1.xpose.msra.mxu0 0.0
    %3196 = vmatprep.subr.mxu0 0.0
    %3197 = vmatpush1.xpose.msra.mxu0 0.0
    %3198 = vmatprep.subr.mxu0 0.0
    %3199 = vmatpush1.xpose.msra.mxu0 0.0
    %3200 = vmatprep.subr.mxu0 0.0
    %3201 = vmatpush1.xpose.msra.mxu0 0.0
    %3202 = vmatprep.subr.mxu0 0.0
    %3203 = vmatpush1.xpose.msra.mxu0 0.0
    %3204 = vmatprep.subr.mxu0 0.0
    %3205 = vmatpush1.xpose.msra.mxu0 0.0
    %3206 = vmatprep.subr.mxu0 0.0
    %3207 = vmatpush1.xpose.msra.mxu0 0.0
    %3208 = vmatprep.subr.mxu0 0.0
    %3209 = vmatpush1.xpose.msra.mxu0 0.0
    %3210 = vmatprep.subr.mxu0 0.0
    %3211 = vmatpush1.xpose.msra.mxu0 0.0
    %3212 = vmatprep.subr.mxu0 0.0
    %3213 = vmatpush1.xpose.msra.mxu0 0.0
    %3214 = vmatprep.subr.mxu0 0.0
    %3215 = vmatpush1.xpose.msra.mxu0 0.0
    %3216 = vmatprep.subr.mxu0 0.0
    %3217 = vmatpush1.xpose.msra.mxu0 0.0
    %3218 = vmatprep.subr.mxu0 0.0
    %3219 = vmatpush1.xpose.msra.mxu0 0.0
    %3220 = vmatprep.subr.mxu0 0.0
    %3221 = vmatpush1.xpose.msra.mxu0 0.0
    %3222 = vmatprep.subr.mxu0 0.0
    %3223 = vmatpush1.xpose.msra.mxu0 0.0
    %3224 = vmatprep.subr.mxu0 0.0
    %3225 = vmatpush1.xpose.msra.mxu0 0.0
    %3226 = vmatprep.subr.mxu0 0.0
    %3227 = vmatpush1.xpose.msra.mxu0 0.0
    %3228 = vmatprep.subr.mxu0 0.0
    %3229 = vmatpush1.xpose.msra.mxu0 0.0
    %3230 = vmatprep.subr.mxu0 0.0
    %3231 = vmatpush1.xpose.msra.mxu0 0.0
    %3232 = vmatprep.subr.mxu0 0.0
    %3233 = vmatpush1.xpose.msra.mxu0 0.0
    %3234 = vmatprep.subr.mxu0 0.0
    %3235 = vmatpush1.xpose.msra.mxu0 0.0
    %3236 = vmatprep.subr.mxu0 0.0
    %3237 = vmatpush1.xpose.msra.mxu0 0.0
    %3238 = vmatprep.subr.mxu0 0.0
    %3239 = vmatpush1.xpose.msra.mxu0 0.0
    %3240 = vmatprep.subr.mxu0 0.0
    %3241 = vmatpush1.xpose.msra.mxu0 0.0
    %3242 = vmatprep.subr.mxu0 0.0
    %3243 = vmatpush1.xpose.msra.mxu0 0.0
    %3244 = vmatprep.subr.mxu0 0.0
    %3245 = vmatpush1.xpose.msra.mxu0 0.0
    %3246 = vmatprep.mubr.f32.mxu0 0.0
    %3247 = vmatmul.mubr.f32.gmra.mrb[0].mxu0 %v3178
    %v3248 = vpop.f32.mrb[0].mxu0
    %v3249 = vadd.f32 0.0, %v3248
    %v3250 = vpop.f32.mrb[0].mxu0
    %3251 = vdwg.mxu0
    %3252 = vrot.lane.b32.xlu0 %v2161, 104
    %v3253 = vpop.permute.xlu0 %3252
    %3254 = vrot.lane.b32.xlu0 %v2161, 72
    %v3255 = vpop.permute.xlu0 %3254
    %v3256 = vsel %vm283, %v3253, 0
    %v3258 = vsel %vm283, %v3255, 0
    %3260 = vmatprep.subr.mxu0 0.0
    %3261 = vmatpush1.xpose.msra.mxu0 %v3258
    %3262 = vmatprep.subr.mxu0 0.0
    %3263 = vmatpush1.xpose.msra.mxu0 0.0
    %3264 = vmatprep.subr.mxu0 0.0
    %3265 = vmatpush1.xpose.msra.mxu0 0.0
    %3266 = vmatprep.subr.mxu0 0.0
    %3267 = vmatpush1.xpose.msra.mxu0 0.0
    %3268 = vmatprep.subr.mxu0 0.0
    %3269 = vmatpush1.xpose.msra.mxu0 0.0
    %3270 = vmatprep.subr.mxu0 0.0
    %3271 = vmatpush1.xpose.msra.mxu0 0.0
    %3272 = vmatprep.subr.mxu0 0.0
    %3273 = vmatpush1.xpose.msra.mxu0 0.0
    %3274 = vmatprep.subr.mxu0 0.0
    %3275 = vmatpush1.xpose.msra.mxu0 0.0
    %3276 = vmatprep.subr.mxu0 0.0
    %3277 = vmatpush1.xpose.msra.mxu0 0.0
    %3278 = vmatprep.subr.mxu0 0.0
    %3279 = vmatpush1.xpose.msra.mxu0 0.0
    %3280 = vmatprep.subr.mxu0 0.0
    %3281 = vmatpush1.xpose.msra.mxu0 0.0
    %3282 = vmatprep.subr.mxu0 0.0
    %3283 = vmatpush1.xpose.msra.mxu0 0.0
    %3284 = vmatprep.subr.mxu0 0.0
    %3285 = vmatpush1.xpose.msra.mxu0 0.0
    %3286 = vmatprep.subr.mxu0 0.0
    %3287 = vmatpush1.xpose.msra.mxu0 0.0
    %3288 = vmatprep.subr.mxu0 0.0
    %3289 = vmatpush1.xpose.msra.mxu0 0.0
    %3290 = vmatprep.subr.mxu0 0.0
    %3291 = vmatpush1.xpose.msra.mxu0 0.0
    %3292 = vmatprep.subr.mxu0 0.0
    %3293 = vmatpush1.xpose.msra.mxu0 0.0
    %3294 = vmatprep.subr.mxu0 0.0
    %3295 = vmatpush1.xpose.msra.mxu0 0.0
    %3296 = vmatprep.subr.mxu0 0.0
    %3297 = vmatpush1.xpose.msra.mxu0 0.0
    %3298 = vmatprep.subr.mxu0 0.0
    %3299 = vmatpush1.xpose.msra.mxu0 0.0
    %3300 = vmatprep.subr.mxu0 0.0
    %3301 = vmatpush1.xpose.msra.mxu0 0.0
    %3302 = vmatprep.subr.mxu0 0.0
    %3303 = vmatpush1.xpose.msra.mxu0 0.0
    %3304 = vmatprep.subr.mxu0 0.0
    %3305 = vmatpush1.xpose.msra.mxu0 0.0
    %3306 = vmatprep.subr.mxu0 0.0
    %3307 = vmatpush1.xpose.msra.mxu0 0.0
    %3308 = vmatprep.subr.mxu0 0.0
    %3309 = vmatpush1.xpose.msra.mxu0 0.0
    %3310 = vmatprep.subr.mxu0 0.0
    %3311 = vmatpush1.xpose.msra.mxu0 0.0
    %3312 = vmatprep.subr.mxu0 0.0
    %3313 = vmatpush1.xpose.msra.mxu0 0.0
    %3314 = vmatprep.subr.mxu0 0.0
    %3315 = vmatpush1.xpose.msra.mxu0 0.0
    %3316 = vmatprep.subr.mxu0 0.0
    %3317 = vmatpush1.xpose.msra.mxu0 0.0
    %3318 = vmatprep.subr.mxu0 0.0
    %3319 = vmatpush1.xpose.msra.mxu0 0.0
    %3320 = vmatprep.subr.mxu0 0.0
    %3321 = vmatpush1.xpose.msra.mxu0 0.0
    %3322 = vmatprep.subr.mxu0 0.0
    %3323 = vmatpush1.xpose.msra.mxu0 0.0
    %3324 = vmatprep.mubr.f32.mxu0 0.0
    %3325 = vmatmul.mubr.f32.gmra.mrb[0].mxu0 %v3256
    %v3326 = vpop.f32.mrb[0].mxu0
    %v3327 = vadd.f32 0.0, %v3326
    %v3328 = vpop.f32.mrb[0].mxu0
    %3329 = vdwg.mxu0
    %v3330 = vsel %vm283, %v3249, -inf
    %3331 = vmax.xlane.f32.xlu0 %v3330
    %v3332 = vpop.xlane.xlu0 %3331
    %v3333 = vsel %vm283, %v3327, -inf
    %3334 = vmax.xlane.f32.xlu0 %v3333
    %v3335 = vpop.xlane.xlu0 %3334
    %v3336 = vsub.f32 %v3249, %v3332
    %v3337 = vsub.f32 %v3327, %v3335
    %v3338 = vmul.f32 %v3336, 1.442695
    %v3339 = vpow.pop %v3338
    %v3340 = vmul.f32 %v3337, 1.442695
    %v3341 = vpow.pop %v3340
    %v3342 = vsel %vm283, %v3339, 0.0
    %3343 = vadd.xlane.f32.xlu0 %v3342
    %v3344 = vpop.xlane.xlu0 %3343
    %v3345 = vsel %vm283, %v3341, 0.0
    %3346 = vadd.xlane.f32.xlu0 %v3345
    %v3347 = vpop.xlane.xlu0 %3346
    %v3348 = vrcp.pop %v3344
    %v3349 = vrcp.pop %v3347
    %v3350 = vmul.f32 %v3339, %v3348
    %v3351 = vmul.f32 %v3341, %v3349
    %3352 = vrot.lane.b32.xlu0 %v2156, 40
    %v3353 = vpop.permute.xlu0 %3352
    %v3356 = vsel %vm283, %v3350, 0
    %3358 = vmatprep.subr.mxu0 0.0
    %3359 = vmatpush1.msra.mxu0 %v3353
    %3360 = vmatprep.subr.mxu0 0.0
    %3361 = vmatpush1.msra.mxu0 0.0
    %3362 = vmatprep.subr.mxu0 0.0
    %3363 = vmatpush1.msra.mxu0 0.0
    %3364 = vmatprep.subr.mxu0 0.0
    %3365 = vmatpush1.msra.mxu0 0.0
    %3366 = vmatprep.subr.mxu0 0.0
    %3367 = vmatpush1.msra.mxu0 0.0
    %3368 = vmatprep.subr.mxu0 0.0
    %3369 = vmatpush1.msra.mxu0 0.0
    %3370 = vmatprep.subr.mxu0 0.0
    %3371 = vmatpush1.msra.mxu0 0.0
    %3372 = vmatprep.subr.mxu0 0.0
    %3373 = vmatpush1.msra.mxu0 0.0
    %3374 = vmatprep.subr.mxu0 0.0
    %3375 = vmatpush1.msra.mxu0 0.0
    %3376 = vmatprep.subr.mxu0 0.0
    %3377 = vmatpush1.msra.mxu0 0.0
    %3378 = vmatprep.subr.mxu0 0.0
    %3379 = vmatpush1.msra.mxu0 0.0
    %3380 = vmatprep.subr.mxu0 0.0
    %3381 = vmatpush1.msra.mxu0 0.0
    %3382 = vmatprep.subr.mxu0 0.0
    %3383 = vmatpush1.msra.mxu0 0.0
    %3384 = vmatprep.subr.mxu0 0.0
    %3385 = vmatpush1.msra.mxu0 0.0
    %3386 = vmatprep.subr.mxu0 0.0
    %3387 = vmatpush1.msra.mxu0 0.0
    %3388 = vmatprep.subr.mxu0 0.0
    %3389 = vmatpush1.msra.mxu0 0.0
    %3390 = vmatprep.subr.mxu0 0.0
    %3391 = vmatpush1.msra.mxu0 0.0
    %3392 = vmatprep.subr.mxu0 0.0
    %3393 = vmatpush1.msra.mxu0 0.0
    %3394 = vmatprep.subr.mxu0 0.0
    %3395 = vmatpush1.msra.mxu0 0.0
    %3396 = vmatprep.subr.mxu0 0.0
    %3397 = vmatpush1.msra.mxu0 0.0
    %3398 = vmatprep.subr.mxu0 0.0
    %3399 = vmatpush1.msra.mxu0 0.0
    %3400 = vmatprep.subr.mxu0 0.0
    %3401 = vmatpush1.msra.mxu0 0.0
    %3402 = vmatprep.subr.mxu0 0.0
    %3403 = vmatpush1.msra.mxu0 0.0
    %3404 = vmatprep.subr.mxu0 0.0
    %3405 = vmatpush1.msra.mxu0 0.0
    %3406 = vmatprep.subr.mxu0 0.0
    %3407 = vmatpush1.msra.mxu0 0.0
    %3408 = vmatprep.subr.mxu0 0.0
    %3409 = vmatpush1.msra.mxu0 0.0
    %3410 = vmatprep.subr.mxu0 0.0
    %3411 = vmatpush1.msra.mxu0 0.0
    %3412 = vmatprep.subr.mxu0 0.0
    %3413 = vmatpush1.msra.mxu0 0.0
    %3414 = vmatprep.subr.mxu0 0.0
    %3415 = vmatpush1.msra.mxu0 0.0
    %3416 = vmatprep.subr.mxu0 0.0
    %3417 = vmatpush1.msra.mxu0 0.0
    %3418 = vmatprep.subr.mxu0 0.0
    %3419 = vmatpush1.msra.mxu0 0.0
    %3420 = vmatprep.subr.mxu0 0.0
    %3421 = vmatpush1.msra.mxu0 0.0
    %3422 = vmatprep.mubr.f32.mxu0 0.0
    %3423 = vmatmul.mubr.f32.gmra.mrb[0].mxu0 %v3356
    %v3424 = vpop.f32.mrb[0].mxu0
    %v3425 = vadd.f32 0.0, %v3424
    %v3426 = vpop.f32.mrb[0].mxu0
    %3427 = vdwg.mxu0
    %3428 = vrot.lane.b32.xlu0 %v2161, 40
    %v3429 = vpop.permute.xlu0 %3428
    %v3432 = vsel %vm283, %v3351, 0
    %3434 = vmatprep.subr.mxu0 0.0
    %3435 = vmatpush1.msra.mxu0 %v3429
    %3436 = vmatprep.subr.mxu0 0.0
    %3437 = vmatpush1.msra.mxu0 0.0
    %3438 = vmatprep.subr.mxu0 0.0
    %3439 = vmatpush1.msra.mxu0 0.0
    %3440 = vmatprep.subr.mxu0 0.0
    %3441 = vmatpush1.msra.mxu0 0.0
    %3442 = vmatprep.subr.mxu0 0.0
    %3443 = vmatpush1.msra.mxu0 0.0
    %3444 = vmatprep.subr.mxu0 0.0
    %3445 = vmatpush1.msra.mxu0 0.0
    %3446 = vmatprep.subr.mxu0 0.0
    %3447 = vmatpush1.msra.mxu0 0.0
    %3448 = vmatprep.subr.mxu0 0.0
    %3449 = vmatpush1.msra.mxu0 0.0
    %3450 = vmatprep.subr.mxu0 0.0
    %3451 = vmatpush1.msra.mxu0 0.0
    %3452 = vmatprep.subr.mxu0 0.0
    %3453 = vmatpush1.msra.mxu0 0.0
    %3454 = vmatprep.subr.mxu0 0.0
    %3455 = vmatpush1.msra.mxu0 0.0
    %3456 = vmatprep.subr.mxu0 0.0
    %3457 = vmatpush1.msra.mxu0 0.0
    %3458 = vmatprep.subr.mxu0 0.0
    %3459 = vmatpush1.msra.mxu0 0.0
    %3460 = vmatprep.subr.mxu0 0.0
    %3461 = vmatpush1.msra.mxu0 0.0
    %3462 = vmatprep.subr.mxu0 0.0
    %3463 = vmatpush1.msra.mxu0 0.0
    %3464 = vmatprep.subr.mxu0 0.0
    %3465 = vmatpush1.msra.mxu0 0.0
    %3466 = vmatprep.subr.mxu0 0.0
    %3467 = vmatpush1.msra.mxu0 0.0
    %3468 = vmatprep.subr.mxu0 0.0
    %3469 = vmatpush1.msra.mxu0 0.0
    %3470 = vmatprep.subr.mxu0 0.0
    %3471 = vmatpush1.msra.mxu0 0.0
    %3472 = vmatprep.subr.mxu0 0.0
    %3473 = vmatpush1.msra.mxu0 0.0
    %3474 = vmatprep.subr.mxu0 0.0
    %3475 = vmatpush1.msra.mxu0 0.0
    %3476 = vmatprep.subr.mxu0 0.0
    %3477 = vmatpush1.msra.mxu0 0.0
    %3478 = vmatprep.subr.mxu0 0.0
    %3479 = vmatpush1.msra.mxu0 0.0
    %3480 = vmatprep.subr.mxu0 0.0
    %3481 = vmatpush1.msra.mxu0 0.0
    %3482 = vmatprep.subr.mxu0 0.0
    %3483 = vmatpush1.msra.mxu0 0.0
    %3484 = vmatprep.subr.mxu0 0.0
    %3485 = vmatpush1.msra.mxu0 0.0
    %3486 = vmatprep.subr.mxu0 0.0
    %3487 = vmatpush1.msra.mxu0 0.0
    %3488 = vmatprep.subr.mxu0 0.0
    %3489 = vmatpush1.msra.mxu0 0.0
    %3490 = vmatprep.subr.mxu0 0.0
    %3491 = vmatpush1.msra.mxu0 0.0
    %3492 = vmatprep.subr.mxu0 0.0
    %3493 = vmatpush1.msra.mxu0 0.0
    %3494 = vmatprep.subr.mxu0 0.0
    %3495 = vmatpush1.msra.mxu0 0.0
    %3496 = vmatprep.subr.mxu0 0.0
    %3497 = vmatpush1.msra.mxu0 0.0
    %3498 = vmatprep.mubr.f32.mxu0 0.0
    %3499 = vmatmul.mubr.f32.gmra.mrb[0].mxu0 %v3432
    %v3500 = vpop.f32.mrb[0].mxu0
    %v3501 = vadd.f32 0.0, %v3500
    %v3502 = vpop.f32.mrb[0].mxu0
    %3503 = vdwg.mxu0
    %3506 = vrot.lane.b32.xlu0 %v3425, 24
    %v3507 = vpop.permute.xlu0 %3506
    %3508 = vrot.lane.b32.xlu0 %v3501, 24
    %v3509 = vpop.permute.xlu0 %3508
    %3512 = vst.msk [vmem:[#allocation2] sm:$0xff] %vm1631, %v3507
    %3513 = vst.msk [vmem:[#allocation2 + $0x8] sm:$0xff] %vm1631, %v3509
    %v3514 = vld [vmem:[#allocation2] sm:$0xff]
    %v3515 = vld [vmem:[#allocation2 + $0x8] sm:$0xff]
    %v3517 = vlaneseq
    %v3518 = vshrl.u32 %v3517, 7
    %v3519 = vsub.s32 0, %v3518
    %v3520 = vrot.slane %v2052, %v3519
    %v3523 = vsel %vm198, %v3514, 0
    %v3526 = vsel %vm198, %v3515, 0
    %3528 = vmatprep.subr.mxu0 0.0
    %3529 = vmatpush1.msra.mxu0 %v2047
    %3530 = vmatprep.subr.mxu0 0.0
    %3531 = vmatpush1.msra.mxu0 %v2048
    %3532 = vmatprep.subr.mxu0 0.0
    %3533 = vmatpush1.msra.mxu0 %v2049
    %3534 = vmatprep.subr.mxu0 0.0
    %3535 = vmatpush1.msra.mxu0 %v2050
    %3536 = vmatprep.subr.mxu0 0.0
    %3537 = vmatpush1.msra.mxu0 0.0
    %3538 = vmatprep.subr.mxu0 0.0
    %3539 = vmatpush1.msra.mxu0 0.0
    %3540 = vmatprep.subr.mxu0 0.0
    %3541 = vmatpush1.msra.mxu0 0.0
    %3542 = vmatprep.subr.mxu0 0.0
    %3543 = vmatpush1.msra.mxu0 0.0
    %3544 = vmatprep.subr.mxu0 0.0
    %3545 = vmatpush1.msra.mxu0 0.0
    %3546 = vmatprep.subr.mxu0 0.0
    %3547 = vmatpush1.msra.mxu0 0.0
    %3548 = vmatprep.subr.mxu0 0.0
    %3549 = vmatpush1.msra.mxu0 0.0
    %3550 = vmatprep.subr.mxu0 0.0
    %3551 = vmatpush1.msra.mxu0 0.0
    %3552 = vmatprep.subr.mxu0 0.0
    %3553 = vmatpush1.msra.mxu0 0.0
    %3554 = vmatprep.subr.mxu0 0.0
    %3555 = vmatpush1.msra.mxu0 0.0
    %3556 = vmatprep.subr.mxu0 0.0
    %3557 = vmatpush1.msra.mxu0 0.0
    %3558 = vmatprep.subr.mxu0 0.0
    %3559 = vmatpush1.msra.mxu0 0.0
    %3560 = vmatprep.subr.mxu0 0.0
    %3561 = vmatpush1.msra.mxu0 0.0
    %3562 = vmatprep.subr.mxu0 0.0
    %3563 = vmatpush1.msra.mxu0 0.0
    %3564 = vmatprep.subr.mxu0 0.0
    %3565 = vmatpush1.msra.mxu0 0.0
    %3566 = vmatprep.subr.mxu0 0.0
    %3567 = vmatpush1.msra.mxu0 0.0
    %3568 = vmatprep.subr.mxu0 0.0
    %3569 = vmatpush1.msra.mxu0 0.0
    %3570 = vmatprep.subr.mxu0 0.0
    %3571 = vmatpush1.msra.mxu0 0.0
    %3572 = vmatprep.subr.mxu0 0.0
    %3573 = vmatpush1.msra.mxu0 0.0
    %3574 = vmatprep.subr.mxu0 0.0
    %3575 = vmatpush1.msra.mxu0 0.0
    %3576 = vmatprep.subr.mxu0 0.0
    %3577 = vmatpush1.msra.mxu0 0.0
    %3578 = vmatprep.subr.mxu0 0.0
    %3579 = vmatpush1.msra.mxu0 0.0
    %3580 = vmatprep.subr.mxu0 0.0
    %3581 = vmatpush1.msra.mxu0 0.0
    %3582 = vmatprep.subr.mxu0 0.0
    %3583 = vmatpush1.msra.mxu0 0.0
    %3584 = vmatprep.subr.mxu0 0.0
    %3585 = vmatpush1.msra.mxu0 0.0
    %3586 = vmatprep.subr.mxu0 0.0
    %3587 = vmatpush1.msra.mxu0 0.0
    %3588 = vmatprep.subr.mxu0 0.0
    %3589 = vmatpush1.msra.mxu0 0.0
    %3590 = vmatprep.subr.mxu0 0.0
    %3591 = vmatpush1.msra.mxu0 0.0
    %3592 = vmatprep.mubr.f32.mxu0 0.0
    %3593 = vmatmul.mubr.f32.gmra.mrb[0].mxu0 %v3523
    %v3594 = vpop.f32.mrb[0].mxu0
    %v3595 = vadd.f32 %v3520, %v3594
    %v3596 = vpop.f32.mrb[0].mxu0
    %3597 = vmatprep.mubr.f32.mxu0 0.0
    %3598 = vmatmul.mubr.f32.gmra.mrb[0].mxu0 %v3526
    %v3599 = vpop.f32.mrb[0].mxu0
    %v3600 = vadd.f32 %v3520, %v3599
    %v3601 = vpop.f32.mrb[0].mxu0
    %3602 = vdwg.mxu0
    %v3603 = vadd.f32 %v2037, %v3595
    %v3604 = vadd.f32 %v2038, %v3600
    %v3605 = vsel %vm198, %v3603, 0.0
    %3606 = vadd.xlane.f32.xlu0 %v3605
    %v3607 = vpop.xlane.xlu0 %3606
    %v3608 = vsel %vm198, %v3604, 0.0
    %3609 = vadd.xlane.f32.xlu0 %v3608
    %v3610 = vpop.xlane.xlu0 %3609
    %v3611 = vmul.f32 %v3607, %v1731
    %v3612 = vmul.f32 %v3610, %v1731
    %v3613 = vsub.f32 %v3603, %v3611
    %v3614 = vsub.f32 %v3604, %v3612
    %v3615 = vmul.f32 %v3613, %v3613
    %v3616 = vmul.f32 %v3614, %v3614
    %v3617 = vsel %vm198, %v3615, 0.0
    %3618 = vadd.xlane.f32.xlu0 %v3617
    %v3619 = vpop.xlane.xlu0 %3618
    %v3620 = vsel %vm198, %v3616, 0.0
    %3621 = vadd.xlane.f32.xlu0 %v3620
    %v3622 = vpop.xlane.xlu0 %3621
    %v3623 = vmul.f32 %v3619, %v1731
    %v3624 = vmul.f32 %v3622, %v1731
    %v3625 = vadd.f32 %v3623, 1e-05
    %v3626 = vadd.f32 %v3624, 1e-05
    %v3627 = vrsqrt.pop %v3625
    %v3628 = vrsqrt.pop %v3626
    %v3629 = vmul.f32 %v3613, %v3627
    %v3630 = vmul.f32 %v3614, %v3628
    %v3632 = vlaneseq
    %v3633 = vshrl.u32 %v3632, 7
    %v3634 = vsub.s32 0, %v3633
    %v3635 = vrot.slane %v2054, %v3634
    %v3637 = vmul.f32 %v3629, %v3635
    %v3638 = vmul.f32 %v3630, %v3635
    %v3640 = vlaneseq
    %v3641 = vshrl.u32 %v3640, 7
    %v3642 = vsub.s32 0, %v3641
    %v3643 = vrot.slane %v2056, %v3642
    %v3645 = vadd.f32 %v3637, %v3643
    %v3646 = vadd.f32 %v3638, %v3643
    %v3648 = vlaneseq
    %v3649 = vshrl.u32 %v3648, 7
    %v3650 = vsub.s32 0, %v3649
    %v3651 = vrot.slane %v2063, %v3650
    %v3654 = vsel %vm198, %v3645, 0
    %v3657 = vsel %vm198, %v3646, 0
    %3659 = vmatprep.subr.mxu0 0.0
    %3660 = vmatpush1.msra.mxu0 %v2058
    %3661 = vmatprep.subr.mxu0 0.0
    %3662 = vmatpush1.msra.mxu0 %v2059
    %3663 = vmatprep.subr.mxu0 0.0
    %3664 = vmatpush1.msra.mxu0 %v2060
    %3665 = vmatprep.subr.mxu0 0.0
    %3666 = vmatpush1.msra.mxu0 %v2061
    %3667 = vmatprep.subr.mxu0 0.0
    %3668 = vmatpush1.msra.mxu0 0.0
    %3669 = vmatprep.subr.mxu0 0.0
    %3670 = vmatpush1.msra.mxu0 0.0
    %3671 = vmatprep.subr.mxu0 0.0
    %3672 = vmatpush1.msra.mxu0 0.0
    %3673 = vmatprep.subr.mxu0 0.0
    %3674 = vmatpush1.msra.mxu0 0.0
    %3675 = vmatprep.subr.mxu0 0.0
    %3676 = vmatpush1.msra.mxu0 0.0
    %3677 = vmatprep.subr.mxu0 0.0
    %3678 = vmatpush1.msra.mxu0 0.0
    %3679 = vmatprep.subr.mxu0 0.0
    %3680 = vmatpush1.msra.mxu0 0.0
    %3681 = vmatprep.subr.mxu0 0.0
    %3682 = vmatpush1.msra.mxu0 0.0
    %3683 = vmatprep.subr.mxu0 0.0
    %3684 = vmatpush1.msra.mxu0 0.0
    %3685 = vmatprep.subr.mxu0 0.0
    %3686 = vmatpush1.msra.mxu0 0.0
    %3687 = vmatprep.subr.mxu0 0.0
    %3688 = vmatpush1.msra.mxu0 0.0
    %3689 = vmatprep.subr.mxu0 0.0
    %3690 = vmatpush1.msra.mxu0 0.0
    %3691 = vmatprep.subr.mxu0 0.0
    %3692 = vmatpush1.msra.mxu0 0.0
    %3693 = vmatprep.subr.mxu0 0.0
    %3694 = vmatpush1.msra.mxu0 0.0
    %3695 = vmatprep.subr.mxu0 0.0
    %3696 = vmatpush1.msra.mxu0 0.0
    %3697 = vmatprep.subr.mxu0 0.0
    %3698 = vmatpush1.msra.mxu0 0.0
    %3699 = vmatprep.subr.mxu0 0.0
    %3700 = vmatpush1.msra.mxu0 0.0
    %3701 = vmatprep.subr.mxu0 0.0
    %3702 = vmatpush1.msra.mxu0 0.0
    %3703 = vmatprep.subr.mxu0 0.0
    %3704 = vmatpush1.msra.mxu0 0.0
    %3705 = vmatprep.subr.mxu0 0.0
    %3706 = vmatpush1.msra.mxu0 0.0
    %3707 = vmatprep.subr.mxu0 0.0
    %3708 = vmatpush1.msra.mxu0 0.0
    %3709 = vmatprep.subr.mxu0 0.0
    %3710 = vmatpush1.msra.mxu0 0.0
    %3711 = vmatprep.subr.mxu0 0.0
    %3712 = vmatpush1.msra.mxu0 0.0
    %3713 = vmatprep.subr.mxu0 0.0
    %3714 = vmatpush1.msra.mxu0 0.0
    %3715 = vmatprep.subr.mxu0 0.0
    %3716 = vmatpush1.msra.mxu0 0.0
    %3717 = vmatprep.subr.mxu0 0.0
    %3718 = vmatpush1.msra.mxu0 0.0
    %3719 = vmatprep.subr.mxu0 0.0
    %3720 = vmatpush1.msra.mxu0 0.0
    %3721 = vmatprep.subr.mxu0 0.0
    %3722 = vmatpush1.msra.mxu0 0.0
    %3723 = vmatprep.mubr.f32.mxu0 0.0
    %3724 = vmatmul.mubr.f32.gmra.mrb[0].mxu0 %v3654
    %v3725 = vpop.f32.mrb[0].mxu0
    %v3726 = vadd.f32 %v3651, %v3725
    %v3727 = vpop.f32.mrb[0].mxu0
    %3728 = vmatprep.mubr.f32.mxu0 0.0
    %3729 = vmatmul.mubr.f32.gmra.mrb[0].mxu0 %v3657
    %v3730 = vpop.f32.mrb[0].mxu0
    %v3731 = vadd.f32 %v3651, %v3730
    %v3732 = vpop.f32.mrb[0].mxu0
    %3733 = vdwg.mxu0
    %v3734 = vmul.f32 %v3726, 0.5
    %v3735 = vmul.f32 %v3731, 0.5
    %v3736 = vmul.f32 %v3726, 0.70710677
    %v3737 = vmul.f32 %v3731, 0.70710677
    %vm3738 = vcmp.ge.f32.partialorder %v3736, 0.0
    %vm3739 = vcmp.ge.f32.partialorder %v3737, 0.0
    %v3740 = vsel %vm3738, 1.0, -1.0
    %v3741 = vsel %vm3739, 1.0, -1.0
    %v3742 = vand.u32 2147483647, %v3736
    %v3743 = vand.u32 2147483647, %v3737
    %v3744 = vmul.f32 %v3742, 0.3275911
    %v3745 = vmul.f32 %v3743, 0.3275911
    %v3746 = vadd.f32 %v3744, 1.0
    %v3747 = vadd.f32 %v3745, 1.0
    %v3748 = vrcp.pop %v3746
    %v3749 = vrcp.pop %v3747
    %v3750 = vmul.f32 %v3748, 1.0614054
    %v3751 = vmul.f32 %v3749, 1.0614054
    %v3752 = vadd.f32 %v3750, -1.4531521
    %v3753 = vadd.f32 %v3751, -1.4531521
    %v3754 = vmul.f32 %v3752, %v3748
    %v3755 = vmul.f32 %v3753, %v3749
    %v3756 = vadd.f32 %v3754, 1.4214138
    %v3757 = vadd.f32 %v3755, 1.4214138
    %v3758 = vmul.f32 %v3756, %v3748
    %v3759 = vmul.f32 %v3757, %v3749
    %v3760 = vadd.f32 %v3758, -0.28449672
    %v3761 = vadd.f32 %v3759, -0.28449672
    %v3762 = vmul.f32 %v3760, %v3748
    %v3763 = vmul.f32 %v3761, %v3749
    %v3764 = vadd.f32 %v3762, 0.2548296
    %v3765 = vadd.f32 %v3763, 0.2548296
    %v3766 = vmul.f32 %v3764, %v3748
    %v3767 = vmul.f32 %v3765, %v3749
    %v3768 = vsub.f32 0.0, %v3742
    %v3769 = vsub.f32 0.0, %v3743
    %v3770 = vmul.f32 %v3768, %v3742
    %v3771 = vmul.f32 %v3769, %v3743
    %v3772 = vmul.f32 %v3770, 1.442695
    %v3773 = vpow.pop %v3772
    %v3774 = vmul.f32 %v3771, 1.442695
    %v3775 = vpow.pop %v3774
    %v3776 = vmul.f32 %v3766, %v3773
    %v3777 = vmul.f32 %v3767, %v3775
    %v3778 = vsub.f32 1.0, %v3776
    %v3779 = vsub.f32 1.0, %v3777
    %v3780 = vmul.f32 %v3740, %v3778
    %v3781 = vmul.f32 %v3741, %v3779
    %v3782 = vadd.f32 %v3780, 1.0
    %v3783 = vadd.f32 %v3781, 1.0
    %v3784 = vmul.f32 %v3734, %v3782
    %v3785 = vmul.f32 %v3735, %v3783
    %v3787 = vlaneseq
    %v3788 = vshrl.u32 %v3787, 7
    %v3789 = vsub.s32 0, %v3788
    %v3790 = vrot.slane %v2072, %v3789
    %v3793 = vsel %vm1913, %v3784, 0
    %v3796 = vsel %vm1913, %v3785, 0
    %3798 = vmatprep.subr.mxu0 0.0
    %3799 = vmatpush1.msra.mxu0 %v2065
    %3800 = vmatprep.subr.mxu0 0.0
    %3801 = vmatpush1.msra.mxu0 %v2066
    %3802 = vmatprep.subr.mxu0 0.0
    %3803 = vmatpush1.msra.mxu0 %v2067
    %3804 = vmatprep.subr.mxu0 0.0
    %3805 = vmatpush1.msra.mxu0 %v2068
    %3806 = vmatprep.subr.mxu0 0.0
    %3807 = vmatpush1.msra.mxu0 %v2069
    %3808 = vmatprep.subr.mxu0 0.0
    %3809 = vmatpush1.msra.mxu0 %v2070
    %3810 = vmatprep.subr.mxu0 0.0
    %3811 = vmatpush1.msra.mxu0 0.0
    %3812 = vmatprep.subr.mxu0 0.0
    %3813 = vmatpush1.msra.mxu0 0.0
    %3814 = vmatprep.subr.mxu0 0.0
    %3815 = vmatpush1.msra.mxu0 0.0
    %3816 = vmatprep.subr.mxu0 0.0
    %3817 = vmatpush1.msra.mxu0 0.0
    %3818 = vmatprep.subr.mxu0 0.0
    %3819 = vmatpush1.msra.mxu0 0.0
    %3820 = vmatprep.subr.mxu0 0.0
    %3821 = vmatpush1.msra.mxu0 0.0
    %3822 = vmatprep.subr.mxu0 0.0
    %3823 = vmatpush1.msra.mxu0 0.0
    %3824 = vmatprep.subr.mxu0 0.0
    %3825 = vmatpush1.msra.mxu0 0.0
    %3826 = vmatprep.subr.mxu0 0.0
    %3827 = vmatpush1.msra.mxu0 0.0
    %3828 = vmatprep.subr.mxu0 0.0
    %3829 = vmatpush1.msra.mxu0 0.0
    %3830 = vmatprep.subr.mxu0 0.0
    %3831 = vmatpush1.msra.mxu0 0.0
    %3832 = vmatprep.subr.mxu0 0.0
    %3833 = vmatpush1.msra.mxu0 0.0
    %3834 = vmatprep.subr.mxu0 0.0
    %3835 = vmatpush1.msra.mxu0 0.0
    %3836 = vmatprep.subr.mxu0 0.0
    %3837 = vmatpush1.msra.mxu0 0.0
    %3838 = vmatprep.subr.mxu0 0.0
    %3839 = vmatpush1.msra.mxu0 0.0
    %3840 = vmatprep.subr.mxu0 0.0
    %3841 = vmatpush1.msra.mxu0 0.0
    %3842 = vmatprep.subr.mxu0 0.0
    %3843 = vmatpush1.msra.mxu0 0.0
    %3844 = vmatprep.subr.mxu0 0.0
    %3845 = vmatpush1.msra.mxu0 0.0
    %3846 = vmatprep.subr.mxu0 0.0
    %3847 = vmatpush1.msra.mxu0 0.0
    %3848 = vmatprep.subr.mxu0 0.0
    %3849 = vmatpush1.msra.mxu0 0.0
    %3850 = vmatprep.subr.mxu0 0.0
    %3851 = vmatpush1.msra.mxu0 0.0
    %3852 = vmatprep.subr.mxu0 0.0
    %3853 = vmatpush1.msra.mxu0 0.0
    %3854 = vmatprep.subr.mxu0 0.0
    %3855 = vmatpush1.msra.mxu0 0.0
    %3856 = vmatprep.subr.mxu0 0.0
    %3857 = vmatpush1.msra.mxu0 0.0
    %3858 = vmatprep.subr.mxu0 0.0
    %3859 = vmatpush1.msra.mxu0 0.0
    %3860 = vmatprep.subr.mxu0 0.0
    %3861 = vmatpush1.msra.mxu0 0.0
    %3862 = vmatprep.mubr.f32.mxu0 0.0
    %3863 = vmatmul.mubr.f32.gmra.mrb[0].mxu0 %v3793
    %v3864 = vpop.f32.mrb[0].mxu0
    %v3865 = vadd.f32 %v3790, %v3864
    %v3866 = vpop.f32.mrb[0].mxu0
    %3867 = vmatprep.mubr.f32.mxu0 0.0
    %3868 = vmatmul.mubr.f32.gmra.mrb[0].mxu0 %v3796
    %v3869 = vpop.f32.mrb[0].mxu0
    %v3870 = vadd.f32 %v3790, %v3869
    %v3871 = vpop.f32.mrb[0].mxu0
    %3872 = vdwg.mxu0
    %v3873 = vadd.f32 %v3645, %v3865
    %v3874 = vadd.f32 %v3646, %v3870
    %v3875 = vsel %vm198, %v3873, 0.0
    %3876 = vadd.xlane.f32.xlu0 %v3875
    %v3877 = vpop.xlane.xlu0 %3876
    %v3878 = vsel %vm198, %v3874, 0.0
    %3879 = vadd.xlane.f32.xlu0 %v3878
    %v3880 = vpop.xlane.xlu0 %3879
    %v3881 = vmul.f32 %v3877, %v1731
    %v3882 = vmul.f32 %v3880, %v1731
    %v3883 = vsub.f32 %v3873, %v3881
    %v3884 = vsub.f32 %v3874, %v3882
    %v3885 = vmul.f32 %v3883, %v3883
    %v3886 = vmul.f32 %v3884, %v3884
    %v3887 = vsel %vm198, %v3885, 0.0
    %3888 = vadd.xlane.f32.xlu0 %v3887
    %v3889 = vpop.xlane.xlu0 %3888
    %v3890 = vsel %vm198, %v3886, 0.0
    %3891 = vadd.xlane.f32.xlu0 %v3890
    %v3892 = vpop.xlane.xlu0 %3891
    %v3893 = vmul.f32 %v3889, %v1731
    %v3894 = vmul.f32 %v3892, %v1731
    %v3895 = vadd.f32 %v3893, 1e-05
    %v3896 = vadd.f32 %v3894, 1e-05
    %v3897 = vrsqrt.pop %v3895
    %v3898 = vrsqrt.pop %v3896
    %v3899 = vmul.f32 %v3883, %v3897
    %v3900 = vmul.f32 %v3884, %v3898
    %v3902 = vlaneseq
    %v3903 = vshrl.u32 %v3902, 7
    %v3904 = vsub.s32 0, %v3903
    %v3905 = vrot.slane %v2074, %v3904
    %v3907 = vmul.f32 %v3899, %v3905
    %v3908 = vmul.f32 %v3900, %v3905
    %v3910 = vlaneseq
    %v3911 = vshrl.u32 %v3910, 7
    %v3912 = vsub.s32 0, %v3911
    %v3913 = vrot.slane %v2076, %v3912
    %v3915 = vadd.f32 %v3907, %v3913
    %v3916 = vadd.f32 %v3908, %v3913
    %s3917 = scalar_lea.vmem %s4, 64
    %v3918 = vld [vmem:[%s3917] sm:$0xff]
    %v3919 = vld [vmem:[%s3917 + $0x8] sm:$0xff]
    %v3920 = vld [vmem:[%s3917 + $0x10] sm:$0xff]
    %v3921 = vld [vmem:[%s3917 + $0x18] sm:$0xff]
    %s3922 = scalar_lea.vmem %s5, 2
    %v3923 = vld [vmem:[%s3922] sm:$0x1]
    %s3924 = scalar_lea.vmem %s6, 64
    %v3925 = vld [vmem:[%s3924] sm:$0xff]
    %v3926 = vld [vmem:[%s3924 + $0x8] sm:$0xff]
    %v3927 = vld [vmem:[%s3924 + $0x10] sm:$0xff]
    %v3928 = vld [vmem:[%s3924 + $0x18] sm:$0xff]
    %s3929 = scalar_lea.vmem [#allocation9], 2
    %v3930 = vld [vmem:[%s3929] sm:$0x1]
    %s3931 = scalar_lea.vmem [#allocation11], 2
    %v3932 = vld [vmem:[%s3931] sm:$0x1]
    %s3933 = scalar_lea.vmem [#allocation12], 2
    %v3934 = vld [vmem:[%s3933] sm:$0x1]
    %s3935 = scalar_lea.vmem %s10, 64
    %v3936 = vld [vmem:[%s3935] sm:$0xff]
    %v3937 = vld [vmem:[%s3935 + $0x8] sm:$0xff]
    %v3938 = vld [vmem:[%s3935 + $0x10] sm:$0xff]
    %v3939 = vld [vmem:[%s3935 + $0x18] sm:$0xff]
    %s3940 = scalar_lea.vmem %s11, 2
    %v3941 = vld [vmem:[%s3940] sm:$0x1]
    %s3942 = scalar_lea.vmem %s12, 96
    %v3943 = vld [vmem:[%s3942] sm:$0xff]
    %v3944 = vld [vmem:[%s3942 + $0x8] sm:$0xff]
    %v3945 = vld [vmem:[%s3942 + $0x10] sm:$0xff]
    %v3946 = vld [vmem:[%s3942 + $0x18] sm:$0xff]
    %v3947 = vld [vmem:[%s3942 + $0x20] sm:$0xff]
    %v3948 = vld [vmem:[%s3942 + $0x28] sm:$0xff]
    %s3949 = scalar_lea.vmem %s13, 2
    %v3950 = vld [vmem:[%s3949] sm:$0x1]
    %s3951 = scalar_lea.vmem %s14, 2
    %v3952 = vld [vmem:[%s3951] sm:$0x1]
    %s3953 = scalar_lea.vmem %s15, 2
    %v3954 = vld [vmem:[%s3953] sm:$0x1]
    %v3956 = vlaneseq
    %v3957 = vshrl.u32 %v3956, 7
    %v3958 = vsub.s32 0, %v3957
    %v3959 = vrot.slane %v3923, %v3958
    %v3962 = vsel %vm198, %v3915, 0
    %v3965 = vsel %vm198, %v3916, 0
    %3967 = vmatprep.subr.mxu0 0.0
    %3968 = vmatpush1.msra.mxu0 %v3918
    %3969 = vmatprep.subr.mxu0 0.0
    %3970 = vmatpush1.msra.mxu0 %v3919
    %3971 = vmatprep.subr.mxu0 0.0
    %3972 = vmatpush1.msra.mxu0 %v3920
    %3973 = vmatprep.subr.mxu0 0.0
    %3974 = vmatpush1.msra.mxu0 %v3921
    %3975 = vmatprep.subr.mxu0 0.0
    %3976 = vmatpush1.msra.mxu0 0.0
    %3977 = vmatprep.subr.mxu0 0.0
    %3978 = vmatpush1.msra.mxu0 0.0
    %3979 = vmatprep.subr.mxu0 0.0
    %3980 = vmatpush1.msra.mxu0 0.0
    %3981 = vmatprep.subr.mxu0 0.0
    %3982 = vmatpush1.msra.mxu0 0.0
    %3983 = vmatprep.subr.mxu0 0.0
    %3984 = vmatpush1.msra.mxu0 0.0
    %3985 = vmatprep.subr.mxu0 0.0
    %3986 = vmatpush1.msra.mxu0 0.0
    %3987 = vmatprep.subr.mxu0 0.0
    %3988 = vmatpush1.msra.mxu0 0.0
    %3989 = vmatprep.subr.mxu0 0.0
    %3990 = vmatpush1.msra.mxu0 0.0
    %3991 = vmatprep.subr.mxu0 0.0
    %3992 = vmatpush1.msra.mxu0 0.0
    %3993 = vmatprep.subr.mxu0 0.0
    %3994 = vmatpush1.msra.mxu0 0.0
    %3995 = vmatprep.subr.mxu0 0.0
    %3996 = vmatpush1.msra.mxu0 0.0
    %3997 = vmatprep.subr.mxu0 0.0
    %3998 = vmatpush1.msra.mxu0 0.0
    %3999 = vmatprep.subr.mxu0 0.0
    %4000 = vmatpush1.msra.mxu0 0.0
    %4001 = vmatprep.subr.mxu0 0.0
    %4002 = vmatpush1.msra.mxu0 0.0
    %4003 = vmatprep.subr.mxu0 0.0
    %4004 = vmatpush1.msra.mxu0 0.0
    %4005 = vmatprep.subr.mxu0 0.0
    %4006 = vmatpush1.msra.mxu0 0.0
    %4007 = vmatprep.subr.mxu0 0.0
    %4008 = vmatpush1.msra.mxu0 0.0
    %4009 = vmatprep.subr.mxu0 0.0
    %4010 = vmatpush1.msra.mxu0 0.0
    %4011 = vmatprep.subr.mxu0 0.0
    %4012 = vmatpush1.msra.mxu0 0.0
    %4013 = vmatprep.subr.mxu0 0.0
    %4014 = vmatpush1.msra.mxu0 0.0
    %4015 = vmatprep.subr.mxu0 0.0
    %4016 = vmatpush1.msra.mxu0 0.0
    %4017 = vmatprep.subr.mxu0 0.0
    %4018 = vmatpush1.msra.mxu0 0.0
    %4019 = vmatprep.subr.mxu0 0.0
    %4020 = vmatpush1.msra.mxu0 0.0
    %4021 = vmatprep.subr.mxu0 0.0
    %4022 = vmatpush1.msra.mxu0 0.0
    %4023 = vmatprep.subr.mxu0 0.0
    %4024 = vmatpush1.msra.mxu0 0.0
    %4025 = vmatprep.subr.mxu0 0.0
    %4026 = vmatpush1.msra.mxu0 0.0
    %4027 = vmatprep.subr.mxu0 0.0
    %4028 = vmatpush1.msra.mxu0 0.0
    %4029 = vmatprep.subr.mxu0 0.0
    %4030 = vmatpush1.msra.mxu0 0.0
    %4031 = vmatprep.mubr.f32.mxu0 0.0
    %4032 = vmatmul.mubr.f32.gmra.mrb[0].mxu0 %v3962
    %v4033 = vpop.f32.mrb[0].mxu0
    %v4034 = vadd.f32 %v3959, %v4033
    %v4035 = vpop.f32.mrb[0].mxu0
    %4036 = vmatprep.mubr.f32.mxu0 0.0
    %4037 = vmatmul.mubr.f32.gmra.mrb[0].mxu0 %v3965
    %v4038 = vpop.f32.mrb[0].mxu0
    %v4039 = vadd.f32 %v3959, %v4038
    %v4040 = vpop.f32.mrb[0].mxu0
    %4041 = vdwg.mxu0
    %4043 = vrot.lane.b32.xlu0 %v4034, 96
    %v4044 = vpop.permute.xlu0 %4043
    %v4045 = vsel %vm283, %v4034, 0
    %v4047 = vsel %vm283, %v4044, 0
    %4049 = vmatprep.subr.mxu0 0.0
    %4050 = vmatpush1.xpose.msra.mxu0 %v4047
    %4051 = vmatprep.subr.mxu0 0.0
    %4052 = vmatpush1.xpose.msra.mxu0 0.0
    %4053 = vmatprep.subr.mxu0 0.0
    %4054 = vmatpush1.xpose.msra.mxu0 0.0
    %4055 = vmatprep.subr.mxu0 0.0
    %4056 = vmatpush1.xpose.msra.mxu0 0.0
    %4057 = vmatprep.subr.mxu0 0.0
    %4058 = vmatpush1.xpose.msra.mxu0 0.0
    %4059 = vmatprep.subr.mxu0 0.0
    %4060 = vmatpush1.xpose.msra.mxu0 0.0
    %4061 = vmatprep.subr.mxu0 0.0
    %4062 = vmatpush1.xpose.msra.mxu0 0.0
    %4063 = vmatprep.subr.mxu0 0.0
    %4064 = vmatpush1.xpose.msra.mxu0 0.0
    %4065 = vmatprep.subr.mxu0 0.0
    %4066 = vmatpush1.xpose.msra.mxu0 0.0
    %4067 = vmatprep.subr.mxu0 0.0
    %4068 = vmatpush1.xpose.msra.mxu0 0.0
    %4069 = vmatprep.subr.mxu0 0.0
    %4070 = vmatpush1.xpose.msra.mxu0 0.0
    %4071 = vmatprep.subr.mxu0 0.0
    %4072 = vmatpush1.xpose.msra.mxu0 0.0
    %4073 = vmatprep.subr.mxu0 0.0
    %4074 = vmatpush1.xpose.msra.mxu0 0.0
    %4075 = vmatprep.subr.mxu0 0.0
    %4076 = vmatpush1.xpose.msra.mxu0 0.0
    %4077 = vmatprep.subr.mxu0 0.0
    %4078 = vmatpush1.xpose.msra.mxu0 0.0
    %4079 = vmatprep.subr.mxu0 0.0
    %4080 = vmatpush1.xpose.msra.mxu0 0.0
    %4081 = vmatprep.subr.mxu0 0.0
    %4082 = vmatpush1.xpose.msra.mxu0 0.0
    %4083 = vmatprep.subr.mxu0 0.0
    %4084 = vmatpush1.xpose.msra.mxu0 0.0
    %4085 = vmatprep.subr.mxu0 0.0
    %4086 = vmatpush1.xpose.msra.mxu0 0.0
    %4087 = vmatprep.subr.mxu0 0.0
    %4088 = vmatpush1.xpose.msra.mxu0 0.0
    %4089 = vmatprep.subr.mxu0 0.0
    %4090 = vmatpush1.xpose.msra.mxu0 0.0
    %4091 = vmatprep.subr.mxu0 0.0
    %4092 = vmatpush1.xpose.msra.mxu0 0.0
    %4093 = vmatprep.subr.mxu0 0.0
    %4094 = vmatpush1.xpose.msra.mxu0 0.0
    %4095 = vmatprep.subr.mxu0 0.0
    %4096 = vmatpush1.xpose.msra.mxu0 0.0
    %4097 = vmatprep.subr.mxu0 0.0
    %4098 = vmatpush1.xpose.msra.mxu0 0.0
    %4099 = vmatprep.subr.mxu0 0.0
    %4100 = vmatpush1.xpose.msra.mxu0 0.0
    %4101 = vmatprep.subr.mxu0 0.0
    %4102 = vmatpush1.xpose.msra.mxu0 0.0
    %4103 = vmatprep.subr.mxu0 0.0
    %4104 = vmatpush1.xpose.msra.mxu0 0.0
    %4105 = vmatprep.subr.mxu0 0.0
    %4106 = vmatpush1.xpose.msra.mxu0 0.0
    %4107 = vmatprep.subr.mxu0 0.0
    %4108 = vmatpush1.xpose.msra.mxu0 0.0
    %4109 = vmatprep.subr.mxu0 0.0
    %4110 = vmatpush1.xpose.msra.mxu0 0.0
    %4111 = vmatprep.subr.mxu0 0.0
    %4112 = vmatpush1.xpose.msra.mxu0 0.0
    %4113 = vmatprep.mubr.f32.mxu0 0.0
    %4114 = vmatmul.mubr.f32.gmra.mrb[0].mxu0 %v4045
    %v4115 = vpop.f32.mrb[0].mxu0
    %v4116 = vadd.f32 0.0, %v4115
    %v4117 = vpop.f32.mrb[0].mxu0
    %4118 = vdwg.mxu0
    %4120 = vrot.lane.b32.xlu0 %v4039, 96
    %v4121 = vpop.permute.xlu0 %4120
    %v4122 = vsel %vm283, %v4039, 0
    %v4124 = vsel %vm283, %v4121, 0
    %4126 = vmatprep.subr.mxu0 0.0
    %4127 = vmatpush1.xpose.msra.mxu0 %v4124
    %4128 = vmatprep.subr.mxu0 0.0
    %4129 = vmatpush1.xpose.msra.mxu0 0.0
    %4130 = vmatprep.subr.mxu0 0.0
    %4131 = vmatpush1.xpose.msra.mxu0 0.0
    %4132 = vmatprep.subr.mxu0 0.0
    %4133 = vmatpush1.xpose.msra.mxu0 0.0
    %4134 = vmatprep.subr.mxu0 0.0
    %4135 = vmatpush1.xpose.msra.mxu0 0.0
    %4136 = vmatprep.subr.mxu0 0.0
    %4137 = vmatpush1.xpose.msra.mxu0 0.0
    %4138 = vmatprep.subr.mxu0 0.0
    %4139 = vmatpush1.xpose.msra.mxu0 0.0
    %4140 = vmatprep.subr.mxu0 0.0
    %4141 = vmatpush1.xpose.msra.mxu0 0.0
    %4142 = vmatprep.subr.mxu0 0.0
    %4143 = vmatpush1.xpose.msra.mxu0 0.0
    %4144 = vmatprep.subr.mxu0 0.0
    %4145 = vmatpush1.xpose.msra.mxu0 0.0
    %4146 = vmatprep.subr.mxu0 0.0
    %4147 = vmatpush1.xpose.msra.mxu0 0.0
    %4148 = vmatprep.subr.mxu0 0.0
    %4149 = vmatpush1.xpose.msra.mxu0 0.0
    %4150 = vmatprep.subr.mxu0 0.0
    %4151 = vmatpush1.xpose.msra.mxu0 0.0
    %4152 = vmatprep.subr.mxu0 0.0
    %4153 = vmatpush1.xpose.msra.mxu0 0.0
    %4154 = vmatprep.subr.mxu0 0.0
    %4155 = vmatpush1.xpose.msra.mxu0 0.0
    %4156 = vmatprep.subr.mxu0 0.0
    %4157 = vmatpush1.xpose.msra.mxu0 0.0
    %4158 = vmatprep.subr.mxu0 0.0
    %4159 = vmatpush1.xpose.msra.mxu0 0.0
    %4160 = vmatprep.subr.mxu0 0.0
    %4161 = vmatpush1.xpose.msra.mxu0 0.0
    %4162 = vmatprep.subr.mxu0 0.0
    %4163 = vmatpush1.xpose.msra.mxu0 0.0
    %4164 = vmatprep.subr.mxu0 0.0
    %4165 = vmatpush1.xpose.msra.mxu0 0.0
    %4166 = vmatprep.subr.mxu0 0.0
    %4167 = vmatpush1.xpose.msra.mxu0 0.0
    %4168 = vmatprep.subr.mxu0 0.0
    %4169 = vmatpush1.xpose.msra.mxu0 0.0
    %4170 = vmatprep.subr.mxu0 0.0
    %4171 = vmatpush1.xpose.msra.mxu0 0.0
    %4172 = vmatprep.subr.mxu0 0.0
    %4173 = vmatpush1.xpose.msra.mxu0 0.0
    %4174 = vmatprep.subr.mxu0 0.0
    %4175 = vmatpush1.xpose.msra.mxu0 0.0
    %4176 = vmatprep.subr.mxu0 0.0
    %4177 = vmatpush1.xpose.msra.mxu0 0.0
    %4178 = vmatprep.subr.mxu0 0.0
    %4179 = vmatpush1.xpose.msra.mxu0 0.0
    %4180 = vmatprep.subr.mxu0 0.0
    %4181 = vmatpush1.xpose.msra.mxu0 0.0
    %4182 = vmatprep.subr.mxu0 0.0
    %4183 = vmatpush1.xpose.msra.mxu0 0.0
    %4184 = vmatprep.subr.mxu0 0.0
    %4185 = vmatpush1.xpose.msra.mxu0 0.0
    %4186 = vmatprep.subr.mxu0 0.0
    %4187 = vmatpush1.xpose.msra.mxu0 0.0
    %4188 = vmatprep.subr.mxu0 0.0
    %4189 = vmatpush1.xpose.msra.mxu0 0.0
    %4190 = vmatprep.mubr.f32.mxu0 0.0
    %4191 = vmatmul.mubr.f32.gmra.mrb[0].mxu0 %v4122
    %v4192 = vpop.f32.mrb[0].mxu0
    %v4193 = vadd.f32 0.0, %v4192
    %v4194 = vpop.f32.mrb[0].mxu0
    %4195 = vdwg.mxu0
    %v4196 = vsel %vm283, %v4116, -inf
    %4197 = vmax.xlane.f32.xlu0 %v4196
    %v4198 = vpop.xlane.xlu0 %4197
    %v4199 = vsel %vm283, %v4193, -inf
    %4200 = vmax.xlane.f32.xlu0 %v4199
    %v4201 = vpop.xlane.xlu0 %4200
    %v4202 = vsub.f32 %v4116, %v4198
    %v4203 = vsub.f32 %v4193, %v4201
    %v4204 = vmul.f32 %v4202, 1.442695
    %v4205 = vpow.pop %v4204
    %v4206 = vmul.f32 %v4203, 1.442695
    %v4207 = vpow.pop %v4206
    %v4208 = vsel %vm283, %v4205, 0.0
    %4209 = vadd.xlane.f32.xlu0 %v4208
    %v4210 = vpop.xlane.xlu0 %4209
    %v4211 = vsel %vm283, %v4207, 0.0
    %4212 = vadd.xlane.f32.xlu0 %v4211
    %v4213 = vpop.xlane.xlu0 %4212
    %v4214 = vrcp.pop %v4210
    %v4215 = vrcp.pop %v4213
    %v4216 = vmul.f32 %v4205, %v4214
    %v4217 = vmul.f32 %v4207, %v4215
    %4218 = vrot.lane.b32.xlu0 %v4034, 64
    %v4219 = vpop.permute.xlu0 %4218
    %v4222 = vsel %vm283, %v4216, 0
    %4224 = vmatprep.subr.mxu0 0.0
    %4225 = vmatpush1.msra.mxu0 %v4219
    %4226 = vmatprep.subr.mxu0 0.0
    %4227 = vmatpush1.msra.mxu0 0.0
    %4228 = vmatprep.subr.mxu0 0.0
    %4229 = vmatpush1.msra.mxu0 0.0
    %4230 = vmatprep.subr.mxu0 0.0
    %4231 = vmatpush1.msra.mxu0 0.0
    %4232 = vmatprep.subr.mxu0 0.0
    %4233 = vmatpush1.msra.mxu0 0.0
    %4234 = vmatprep.subr.mxu0 0.0
    %4235 = vmatpush1.msra.mxu0 0.0
    %4236 = vmatprep.subr.mxu0 0.0
    %4237 = vmatpush1.msra.mxu0 0.0
    %4238 = vmatprep.subr.mxu0 0.0
    %4239 = vmatpush1.msra.mxu0 0.0
    %4240 = vmatprep.subr.mxu0 0.0
    %4241 = vmatpush1.msra.mxu0 0.0
    %4242 = vmatprep.subr.mxu0 0.0
    %4243 = vmatpush1.msra.mxu0 0.0
    %4244 = vmatprep.subr.mxu0 0.0
    %4245 = vmatpush1.msra.mxu0 0.0
    %4246 = vmatprep.subr.mxu0 0.0
    %4247 = vmatpush1.msra.mxu0 0.0
    %4248 = vmatprep.subr.mxu0 0.0
    %4249 = vmatpush1.msra.mxu0 0.0
    %4250 = vmatprep.subr.mxu0 0.0
    %4251 = vmatpush1.msra.mxu0 0.0
    %4252 = vmatprep.subr.mxu0 0.0
    %4253 = vmatpush1.msra.mxu0 0.0
    %4254 = vmatprep.subr.mxu0 0.0
    %4255 = vmatpush1.msra.mxu0 0.0
    %4256 = vmatprep.subr.mxu0 0.0
    %4257 = vmatpush1.msra.mxu0 0.0
    %4258 = vmatprep.subr.mxu0 0.0
    %4259 = vmatpush1.msra.mxu0 0.0
    %4260 = vmatprep.subr.mxu0 0.0
    %4261 = vmatpush1.msra.mxu0 0.0
    %4262 = vmatprep.subr.mxu0 0.0
    %4263 = vmatpush1.msra.mxu0 0.0
    %4264 = vmatprep.subr.mxu0 0.0
    %4265 = vmatpush1.msra.mxu0 0.0
    %4266 = vmatprep.subr.mxu0 0.0
    %4267 = vmatpush1.msra.mxu0 0.0
    %4268 = vmatprep.subr.mxu0 0.0
    %4269 = vmatpush1.msra.mxu0 0.0
    %4270 = vmatprep.subr.mxu0 0.0
    %4271 = vmatpush1.msra.mxu0 0.0
    %4272 = vmatprep.subr.mxu0 0.0
    %4273 = vmatpush1.msra.mxu0 0.0
    %4274 = vmatprep.subr.mxu0 0.0
    %4275 = vmatpush1.msra.mxu0 0.0
    %4276 = vmatprep.subr.mxu0 0.0
    %4277 = vmatpush1.msra.mxu0 0.0
    %4278 = vmatprep.subr.mxu0 0.0
    %4279 = vmatpush1.msra.mxu0 0.0
    %4280 = vmatprep.subr.mxu0 0.0
    %4281 = vmatpush1.msra.mxu0 0.0
    %4282 = vmatprep.subr.mxu0 0.0
    %4283 = vmatpush1.msra.mxu0 0.0
    %4284 = vmatprep.subr.mxu0 0.0
    %4285 = vmatpush1.msra.mxu0 0.0
    %4286 = vmatprep.subr.mxu0 0.0
    %4287 = vmatpush1.msra.mxu0 0.0
    %4288 = vmatprep.mubr.f32.mxu0 0.0
    %4289 = vmatmul.mubr.f32.gmra.mrb[0].mxu0 %v4222
    %v4290 = vpop.f32.mrb[0].mxu0
    %v4291 = vadd.f32 0.0, %v4290
    %v4292 = vpop.f32.mrb[0].mxu0
    %4293 = vdwg.mxu0
    %4294 = vrot.lane.b32.xlu0 %v4039, 64
    %v4295 = vpop.permute.xlu0 %4294
    %v4298 = vsel %vm283, %v4217, 0
    %4300 = vmatprep.subr.mxu0 0.0
    %4301 = vmatpush1.msra.mxu0 %v4295
    %4302 = vmatprep.subr.mxu0 0.0
    %4303 = vmatpush1.msra.mxu0 0.0
    %4304 = vmatprep.subr.mxu0 0.0
    %4305 = vmatpush1.msra.mxu0 0.0
    %4306 = vmatprep.subr.mxu0 0.0
    %4307 = vmatpush1.msra.mxu0 0.0
    %4308 = vmatprep.subr.mxu0 0.0
    %4309 = vmatpush1.msra.mxu0 0.0
    %4310 = vmatprep.subr.mxu0 0.0
    %4311 = vmatpush1.msra.mxu0 0.0
    %4312 = vmatprep.subr.mxu0 0.0
    %4313 = vmatpush1.msra.mxu0 0.0
    %4314 = vmatprep.subr.mxu0 0.0
    %4315 = vmatpush1.msra.mxu0 0.0
    %4316 = vmatprep.subr.mxu0 0.0
    %4317 = vmatpush1.msra.mxu0 0.0
    %4318 = vmatprep.subr.mxu0 0.0
    %4319 = vmatpush1.msra.mxu0 0.0
    %4320 = vmatprep.subr.mxu0 0.0
    %4321 = vmatpush1.msra.mxu0 0.0
    %4322 = vmatprep.subr.mxu0 0.0
    %4323 = vmatpush1.msra.mxu0 0.0
    %4324 = vmatprep.subr.mxu0 0.0
    %4325 = vmatpush1.msra.mxu0 0.0
    %4326 = vmatprep.subr.mxu0 0.0
    %4327 = vmatpush1.msra.mxu0 0.0
    %4328 = vmatprep.subr.mxu0 0.0
    %4329 = vmatpush1.msra.mxu0 0.0
    %4330 = vmatprep.subr.mxu0 0.0
    %4331 = vmatpush1.msra.mxu0 0.0
    %4332 = vmatprep.subr.mxu0 0.0
    %4333 = vmatpush1.msra.mxu0 0.0
    %4334 = vmatprep.subr.mxu0 0.0
    %4335 = vmatpush1.msra.mxu0 0.0
    %4336 = vmatprep.subr.mxu0 0.0
    %4337 = vmatpush1.msra.mxu0 0.0
    %4338 = vmatprep.subr.mxu0 0.0
    %4339 = vmatpush1.msra.mxu0 0.0
    %4340 = vmatprep.subr.mxu0 0.0
    %4341 = vmatpush1.msra.mxu0 0.0
    %4342 = vmatprep.subr.mxu0 0.0
    %4343 = vmatpush1.msra.mxu0 0.0
    %4344 = vmatprep.subr.mxu0 0.0
    %4345 = vmatpush1.msra.mxu0 0.0
    %4346 = vmatprep.subr.mxu0 0.0
    %4347 = vmatpush1.msra.mxu0 0.0
    %4348 = vmatprep.subr.mxu0 0.0
    %4349 = vmatpush1.msra.mxu0 0.0
    %4350 = vmatprep.subr.mxu0 0.0
    %4351 = vmatpush1.msra.mxu0 0.0
    %4352 = vmatprep.subr.mxu0 0.0
    %4353 = vmatpush1.msra.mxu0 0.0
    %4354 = vmatprep.subr.mxu0 0.0
    %4355 = vmatpush1.msra.mxu0 0.0
    %4356 = vmatprep.subr.mxu0 0.0
    %4357 = vmatpush1.msra.mxu0 0.0
    %4358 = vmatprep.subr.mxu0 0.0
    %4359 = vmatpush1.msra.mxu0 0.0
    %4360 = vmatprep.subr.mxu0 0.0
    %4361 = vmatpush1.msra.mxu0 0.0
    %4362 = vmatprep.subr.mxu0 0.0
    %4363 = vmatpush1.msra.mxu0 0.0
    %4364 = vmatprep.mubr.f32.mxu0 0.0
    %4365 = vmatmul.mubr.f32.gmra.mrb[0].mxu0 %v4298
    %v4366 = vpop.f32.mrb[0].mxu0
    %v4367 = vadd.f32 0.0, %v4366
    %v4368 = vpop.f32.mrb[0].mxu0
    %4369 = vdwg.mxu0
    %4370 = vst.msk [vmem:[#allocation2] sm:$0xff] %vm283, %v4291
    %4371 = vst.msk [vmem:[#allocation2 + $0x8] sm:$0xff] %vm283, %v4367
    %4372 = vrot.lane.b32.xlu0 %v4034, 120
    %v4373 = vpop.permute.xlu0 %4372
    %4374 = vrot.lane.b32.xlu0 %v4034, 88
    %v4375 = vpop.permute.xlu0 %4374
    %v4376 = vsel %vm283, %v4373, 0
    %v4378 = vsel %vm283, %v4375, 0
    %4380 = vmatprep.subr.mxu0 0.0
    %4381 = vmatpush1.xpose.msra.mxu0 %v4378
    %4382 = vmatprep.subr.mxu0 0.0
    %4383 = vmatpush1.xpose.msra.mxu0 0.0
    %4384 = vmatprep.subr.mxu0 0.0
    %4385 = vmatpush1.xpose.msra.mxu0 0.0
    %4386 = vmatprep.subr.mxu0 0.0
    %4387 = vmatpush1.xpose.msra.mxu0 0.0
    %4388 = vmatprep.subr.mxu0 0.0
    %4389 = vmatpush1.xpose.msra.mxu0 0.0
    %4390 = vmatprep.subr.mxu0 0.0
    %4391 = vmatpush1.xpose.msra.mxu0 0.0
    %4392 = vmatprep.subr.mxu0 0.0
    %4393 = vmatpush1.xpose.msra.mxu0 0.0
    %4394 = vmatprep.subr.mxu0 0.0
    %4395 = vmatpush1.xpose.msra.mxu0 0.0
    %4396 = vmatprep.subr.mxu0 0.0
    %4397 = vmatpush1.xpose.msra.mxu0 0.0
    %4398 = vmatprep.subr.mxu0 0.0
    %4399 = vmatpush1.xpose.msra.mxu0 0.0
    %4400 = vmatprep.subr.mxu0 0.0
    %4401 = vmatpush1.xpose.msra.mxu0 0.0
    %4402 = vmatprep.subr.mxu0 0.0
    %4403 = vmatpush1.xpose.msra.mxu0 0.0
    %4404 = vmatprep.subr.mxu0 0.0
    %4405 = vmatpush1.xpose.msra.mxu0 0.0
    %4406 = vmatprep.subr.mxu0 0.0
    %4407 = vmatpush1.xpose.msra.mxu0 0.0
    %4408 = vmatprep.subr.mxu0 0.0
    %4409 = vmatpush1.xpose.msra.mxu0 0.0
    %4410 = vmatprep.subr.mxu0 0.0
    %4411 = vmatpush1.xpose.msra.mxu0 0.0
    %4412 = vmatprep.subr.mxu0 0.0
    %4413 = vmatpush1.xpose.msra.mxu0 0.0
    %4414 = vmatprep.subr.mxu0 0.0
    %4415 = vmatpush1.xpose.msra.mxu0 0.0
    %4416 = vmatprep.subr.mxu0 0.0
    %4417 = vmatpush1.xpose.msra.mxu0 0.0
    %4418 = vmatprep.subr.mxu0 0.0
    %4419 = vmatpush1.xpose.msra.mxu0 0.0
    %4420 = vmatprep.subr.mxu0 0.0
    %4421 = vmatpush1.xpose.msra.mxu0 0.0
    %4422 = vmatprep.subr.mxu0 0.0
    %4423 = vmatpush1.xpose.msra.mxu0 0.0
    %4424 = vmatprep.subr.mxu0 0.0
    %4425 = vmatpush1.xpose.msra.mxu0 0.0
    %4426 = vmatprep.subr.mxu0 0.0
    %4427 = vmatpush1.xpose.msra.mxu0 0.0
    %4428 = vmatprep.subr.mxu0 0.0
    %4429 = vmatpush1.xpose.msra.mxu0 0.0
    %4430 = vmatprep.subr.mxu0 0.0
    %4431 = vmatpush1.xpose.msra.mxu0 0.0
    %4432 = vmatprep.subr.mxu0 0.0
    %4433 = vmatpush1.xpose.msra.mxu0 0.0
    %4434 = vmatprep.subr.mxu0 0.0
    %4435 = vmatpush1.xpose.msra.mxu0 0.0
    %4436 = vmatprep.subr.mxu0 0.0
    %4437 = vmatpush1.xpose.msra.mxu0 0.0
    %4438 = vmatprep.subr.mxu0 0.0
    %4439 = vmatpush1.xpose.msra.mxu0 0.0
    %4440 = vmatprep.subr.mxu0 0.0
    %4441 = vmatpush1.xpose.msra.mxu0 0.0
    %4442 = vmatprep.subr.mxu0 0.0
    %4443 = vmatpush1.xpose.msra.mxu0 0.0
    %4444 = vmatprep.mubr.f32.mxu0 0.0
    %4445 = vmatmul.mubr.f32.gmra.mrb[0].mxu0 %v4376
    %v4446 = vpop.f32.mrb[0].mxu0
    %v4447 = vadd.f32 0.0, %v4446
    %v4448 = vpop.f32.mrb[0].mxu0
    %4449 = vdwg.mxu0
    %4450 = vrot.lane.b32.xlu0 %v4039, 120
    %v4451 = vpop.permute.xlu0 %4450
    %4452 = vrot.lane.b32.xlu0 %v4039, 88
    %v4453 = vpop.permute.xlu0 %4452
    %v4454 = vsel %vm283, %v4451, 0
    %v4456 = vsel %vm283, %v4453, 0
    %4458 = vmatprep.subr.mxu0 0.0
    %4459 = vmatpush1.xpose.msra.mxu0 %v4456
    %4460 = vmatprep.subr.mxu0 0.0
    %4461 = vmatpush1.xpose.msra.mxu0 0.0
    %4462 = vmatprep.subr.mxu0 0.0
    %4463 = vmatpush1.xpose.msra.mxu0 0.0
    %4464 = vmatprep.subr.mxu0 0.0
    %4465 = vmatpush1.xpose.msra.mxu0 0.0
    %4466 = vmatprep.subr.mxu0 0.0
    %4467 = vmatpush1.xpose.msra.mxu0 0.0
    %4468 = vmatprep.subr.mxu0 0.0
    %4469 = vmatpush1.xpose.msra.mxu0 0.0
    %4470 = vmatprep.subr.mxu0 0.0
    %4471 = vmatpush1.xpose.msra.mxu0 0.0
    %4472 = vmatprep.subr.mxu0 0.0
    %4473 = vmatpush1.xpose.msra.mxu0 0.0
    %4474 = vmatprep.subr.mxu0 0.0
    %4475 = vmatpush1.xpose.msra.mxu0 0.0
    %4476 = vmatprep.subr.mxu0 0.0
    %4477 = vmatpush1.xpose.msra.mxu0 0.0
    %4478 = vmatprep.subr.mxu0 0.0
    %4479 = vmatpush1.xpose.msra.mxu0 0.0
    %4480 = vmatprep.subr.mxu0 0.0
    %4481 = vmatpush1.xpose.msra.mxu0 0.0
    %4482 = vmatprep.subr.mxu0 0.0
    %4483 = vmatpush1.xpose.msra.mxu0 0.0
    %4484 = vmatprep.subr.mxu0 0.0
    %4485 = vmatpush1.xpose.msra.mxu0 0.0
    %4486 = vmatprep.subr.mxu0 0.0
    %4487 = vmatpush1.xpose.msra.mxu0 0.0
    %4488 = vmatprep.subr.mxu0 0.0
    %4489 = vmatpush1.xpose.msra.mxu0 0.0
    %4490 = vmatprep.subr.mxu0 0.0
    %4491 = vmatpush1.xpose.msra.mxu0 0.0
    %4492 = vmatprep.subr.mxu0 0.0
    %4493 = vmatpush1.xpose.msra.mxu0 0.0
    %4494 = vmatprep.subr.mxu0 0.0
    %4495 = vmatpush1.xpose.msra.mxu0 0.0
    %4496 = vmatprep.subr.mxu0 0.0
    %4497 = vmatpush1.xpose.msra.mxu0 0.0
    %4498 = vmatprep.subr.mxu0 0.0
    %4499 = vmatpush1.xpose.msra.mxu0 0.0
    %4500 = vmatprep.subr.mxu0 0.0
    %4501 = vmatpush1.xpose.msra.mxu0 0.0
    %4502 = vmatprep.subr.mxu0 0.0
    %4503 = vmatpush1.xpose.msra.mxu0 0.0
    %4504 = vmatprep.subr.mxu0 0.0
    %4505 = vmatpush1.xpose.msra.mxu0 0.0
    %4506 = vmatprep.subr.mxu0 0.0
    %4507 = vmatpush1.xpose.msra.mxu0 0.0
    %4508 = vmatprep.subr.mxu0 0.0
    %4509 = vmatpush1.xpose.msra.mxu0 0.0
    %4510 = vmatprep.subr.mxu0 0.0
    %4511 = vmatpush1.xpose.msra.mxu0 0.0
    %4512 = vmatprep.subr.mxu0 0.0
    %4513 = vmatpush1.xpose.msra.mxu0 0.0
    %4514 = vmatprep.subr.mxu0 0.0
    %4515 = vmatpush1.xpose.msra.mxu0 0.0
    %4516 = vmatprep.subr.mxu0 0.0
    %4517 = vmatpush1.xpose.msra.mxu0 0.0
    %4518 = vmatprep.subr.mxu0 0.0
    %4519 = vmatpush1.xpose.msra.mxu0 0.0
    %4520 = vmatprep.subr.mxu0 0.0
    %4521 = vmatpush1.xpose.msra.mxu0 0.0
    %4522 = vmatprep.mubr.f32.mxu0 0.0
    %4523 = vmatmul.mubr.f32.gmra.mrb[0].mxu0 %v4454
    %v4524 = vpop.f32.mrb[0].mxu0
    %v4525 = vadd.f32 0.0, %v4524
    %v4526 = vpop.f32.mrb[0].mxu0
    %4527 = vdwg.mxu0
    %v4528 = vsel %vm283, %v4447, -inf
    %4529 = vmax.xlane.f32.xlu0 %v4528
    %v4530 = vpop.xlane.xlu0 %4529
    %v4531 = vsel %vm283, %v4525, -inf
    %4532 = vmax.xlane.f32.xlu0 %v4531
    %v4533 = vpop.xlane.xlu0 %4532
    %v4534 = vsub.f32 %v4447, %v4530
    %v4535 = vsub.f32 %v4525, %v4533
    %v4536 = vmul.f32 %v4534, 1.442695
    %v4537 = vpow.pop %v4536
    %v4538 = vmul.f32 %v4535, 1.442695
    %v4539 = vpow.pop %v4538
    %v4540 = vsel %vm283, %v4537, 0.0
    %4541 = vadd.xlane.f32.xlu0 %v4540
    %v4542 = vpop.xlane.xlu0 %4541
    %v4543 = vsel %vm283, %v4539, 0.0
    %4544 = vadd.xlane.f32.xlu0 %v4543
    %v4545 = vpop.xlane.xlu0 %4544
    %v4546 = vrcp.pop %v4542
    %v4547 = vrcp.pop %v4545
    %v4548 = vmul.f32 %v4537, %v4546
    %v4549 = vmul.f32 %v4539, %v4547
    %4550 = vrot.lane.b32.xlu0 %v4034, 56
    %v4551 = vpop.permute.xlu0 %4550
    %v4554 = vsel %vm283, %v4548, 0
    %4556 = vmatprep.subr.mxu0 0.0
    %4557 = vmatpush1.msra.mxu0 %v4551
    %4558 = vmatprep.subr.mxu0 0.0
    %4559 = vmatpush1.msra.mxu0 0.0
    %4560 = vmatprep.subr.mxu0 0.0
    %4561 = vmatpush1.msra.mxu0 0.0
    %4562 = vmatprep.subr.mxu0 0.0
    %4563 = vmatpush1.msra.mxu0 0.0
    %4564 = vmatprep.subr.mxu0 0.0
    %4565 = vmatpush1.msra.mxu0 0.0
    %4566 = vmatprep.subr.mxu0 0.0
    %4567 = vmatpush1.msra.mxu0 0.0
    %4568 = vmatprep.subr.mxu0 0.0
    %4569 = vmatpush1.msra.mxu0 0.0
    %4570 = vmatprep.subr.mxu0 0.0
    %4571 = vmatpush1.msra.mxu0 0.0
    %4572 = vmatprep.subr.mxu0 0.0
    %4573 = vmatpush1.msra.mxu0 0.0
    %4574 = vmatprep.subr.mxu0 0.0
    %4575 = vmatpush1.msra.mxu0 0.0
    %4576 = vmatprep.subr.mxu0 0.0
    %4577 = vmatpush1.msra.mxu0 0.0
    %4578 = vmatprep.subr.mxu0 0.0
    %4579 = vmatpush1.msra.mxu0 0.0
    %4580 = vmatprep.subr.mxu0 0.0
    %4581 = vmatpush1.msra.mxu0 0.0
    %4582 = vmatprep.subr.mxu0 0.0
    %4583 = vmatpush1.msra.mxu0 0.0
    %4584 = vmatprep.subr.mxu0 0.0
    %4585 = vmatpush1.msra.mxu0 0.0
    %4586 = vmatprep.subr.mxu0 0.0
    %4587 = vmatpush1.msra.mxu0 0.0
    %4588 = vmatprep.subr.mxu0 0.0
    %4589 = vmatpush1.msra.mxu0 0.0
    %4590 = vmatprep.subr.mxu0 0.0
    %4591 = vmatpush1.msra.mxu0 0.0
    %4592 = vmatprep.subr.mxu0 0.0
    %4593 = vmatpush1.msra.mxu0 0.0
    %4594 = vmatprep.subr.mxu0 0.0
    %4595 = vmatpush1.msra.mxu0 0.0
    %4596 = vmatprep.subr.mxu0 0.0
    %4597 = vmatpush1.msra.mxu0 0.0
    %4598 = vmatprep.subr.mxu0 0.0
    %4599 = vmatpush1.msra.mxu0 0.0
    %4600 = vmatprep.subr.mxu0 0.0
    %4601 = vmatpush1.msra.mxu0 0.0
    %4602 = vmatprep.subr.mxu0 0.0
    %4603 = vmatpush1.msra.mxu0 0.0
    %4604 = vmatprep.subr.mxu0 0.0
    %4605 = vmatpush1.msra.mxu0 0.0
    %4606 = vmatprep.subr.mxu0 0.0
    %4607 = vmatpush1.msra.mxu0 0.0
    %4608 = vmatprep.subr.mxu0 0.0
    %4609 = vmatpush1.msra.mxu0 0.0
    %4610 = vmatprep.subr.mxu0 0.0
    %4611 = vmatpush1.msra.mxu0 0.0
    %4612 = vmatprep.subr.mxu0 0.0
    %4613 = vmatpush1.msra.mxu0 0.0
    %4614 = vmatprep.subr.mxu0 0.0
    %4615 = vmatpush1.msra.mxu0 0.0
    %4616 = vmatprep.subr.mxu0 0.0
    %4617 = vmatpush1.msra.mxu0 0.0
    %4618 = vmatprep.subr.mxu0 0.0
    %4619 = vmatpush1.msra.mxu0 0.0
    %4620 = vmatprep.mubr.f32.mxu0 0.0
    %4621 = vmatmul.mubr.f32.gmra.mrb[0].mxu0 %v4554
    %v4622 = vpop.f32.mrb[0].mxu0
    %v4623 = vadd.f32 0.0, %v4622
    %v4624 = vpop.f32.mrb[0].mxu0
    %4625 = vdwg.mxu0
    %4626 = vrot.lane.b32.xlu0 %v4039, 56
    %v4627 = vpop.permute.xlu0 %4626
    %v4630 = vsel %vm283, %v4549, 0
    %4632 = vmatprep.subr.mxu0 0.0
    %4633 = vmatpush1.msra.mxu0 %v4627
    %4634 = vmatprep.subr.mxu0 0.0
    %4635 = vmatpush1.msra.mxu0 0.0
    %4636 = vmatprep.subr.mxu0 0.0
    %4637 = vmatpush1.msra.mxu0 0.0
    %4638 = vmatprep.subr.mxu0 0.0
    %4639 = vmatpush1.msra.mxu0 0.0
    %4640 = vmatprep.subr.mxu0 0.0
    %4641 = vmatpush1.msra.mxu0 0.0
    %4642 = vmatprep.subr.mxu0 0.0
    %4643 = vmatpush1.msra.mxu0 0.0
    %4644 = vmatprep.subr.mxu0 0.0
    %4645 = vmatpush1.msra.mxu0 0.0
    %4646 = vmatprep.subr.mxu0 0.0
    %4647 = vmatpush1.msra.mxu0 0.0
    %4648 = vmatprep.subr.mxu0 0.0
    %4649 = vmatpush1.msra.mxu0 0.0
    %4650 = vmatprep.subr.mxu0 0.0
    %4651 = vmatpush1.msra.mxu0 0.0
    %4652 = vmatprep.subr.mxu0 0.0
    %4653 = vmatpush1.msra.mxu0 0.0
    %4654 = vmatprep.subr.mxu0 0.0
    %4655 = vmatpush1.msra.mxu0 0.0
    %4656 = vmatprep.subr.mxu0 0.0
    %4657 = vmatpush1.msra.mxu0 0.0
    %4658 = vmatprep.subr.mxu0 0.0
    %4659 = vmatpush1.msra.mxu0 0.0
    %4660 = vmatprep.subr.mxu0 0.0
    %4661 = vmatpush1.msra.mxu0 0.0
    %4662 = vmatprep.subr.mxu0 0.0
    %4663 = vmatpush1.msra.mxu0 0.0
    %4664 = vmatprep.subr.mxu0 0.0
    %4665 = vmatpush1.msra.mxu0 0.0
    %4666 = vmatprep.subr.mxu0 0.0
    %4667 = vmatpush1.msra.mxu0 0.0
    %4668 = vmatprep.subr.mxu0 0.0
    %4669 = vmatpush1.msra.mxu0 0.0
    %4670 = vmatprep.subr.mxu0 0.0
    %4671 = vmatpush1.msra.mxu0 0.0
    %4672 = vmatprep.subr.mxu0 0.0
    %4673 = vmatpush1.msra.mxu0 0.0
    %4674 = vmatprep.subr.mxu0 0.0
    %4675 = vmatpush1.msra.mxu0 0.0
    %4676 = vmatprep.subr.mxu0 0.0
    %4677 = vmatpush1.msra.mxu0 0.0
    %4678 = vmatprep.subr.mxu0 0.0
    %4679 = vmatpush1.msra.mxu0 0.0
    %4680 = vmatprep.subr.mxu0 0.0
    %4681 = vmatpush1.msra.mxu0 0.0
    %4682 = vmatprep.subr.mxu0 0.0
    %4683 = vmatpush1.msra.mxu0 0.0
    %4684 = vmatprep.subr.mxu0 0.0
    %4685 = vmatpush1.msra.mxu0 0.0
    %4686 = vmatprep.subr.mxu0 0.0
    %4687 = vmatpush1.msra.mxu0 0.0
    %4688 = vmatprep.subr.mxu0 0.0
    %4689 = vmatpush1.msra.mxu0 0.0
    %4690 = vmatprep.subr.mxu0 0.0
    %4691 = vmatpush1.msra.mxu0 0.0
    %4692 = vmatprep.subr.mxu0 0.0
    %4693 = vmatpush1.msra.mxu0 0.0
    %4694 = vmatprep.subr.mxu0 0.0
    %4695 = vmatpush1.msra.mxu0 0.0
    %4696 = vmatprep.mubr.f32.mxu0 0.0
    %4697 = vmatmul.mubr.f32.gmra.mrb[0].mxu0 %v4630
    %v4698 = vpop.f32.mrb[0].mxu0
    %v4699 = vadd.f32 0.0, %v4698
    %v4700 = vpop.f32.mrb[0].mxu0
    %4701 = vdwg.mxu0
    %4704 = vrot.lane.b32.xlu0 %v4623, 8
    %v4705 = vpop.permute.xlu0 %4704
    %4706 = vrot.lane.b32.xlu0 %v4699, 8
    %v4707 = vpop.permute.xlu0 %4706
    %4710 = vst.msk [vmem:[#allocation2] sm:$0xff] %vm949, %v4705
    %4711 = vst.msk [vmem:[#allocation2 + $0x8] sm:$0xff] %vm949, %v4707
    %4712 = vrot.lane.b32.xlu0 %v4034, 112
    %v4713 = vpop.permute.xlu0 %4712
    %4714 = vrot.lane.b32.xlu0 %v4034, 80
    %v4715 = vpop.permute.xlu0 %4714
    %v4716 = vsel %vm283, %v4713, 0
    %v4718 = vsel %vm283, %v4715, 0
    %4720 = vmatprep.subr.mxu0 0.0
    %4721 = vmatpush1.xpose.msra.mxu0 %v4718
    %4722 = vmatprep.subr.mxu0 0.0
    %4723 = vmatpush1.xpose.msra.mxu0 0.0
    %4724 = vmatprep.subr.mxu0 0.0
    %4725 = vmatpush1.xpose.msra.mxu0 0.0
    %4726 = vmatprep.subr.mxu0 0.0
    %4727 = vmatpush1.xpose.msra.mxu0 0.0
    %4728 = vmatprep.subr.mxu0 0.0
    %4729 = vmatpush1.xpose.msra.mxu0 0.0
    %4730 = vmatprep.subr.mxu0 0.0
    %4731 = vmatpush1.xpose.msra.mxu0 0.0
    %4732 = vmatprep.subr.mxu0 0.0
    %4733 = vmatpush1.xpose.msra.mxu0 0.0
    %4734 = vmatprep.subr.mxu0 0.0
    %4735 = vmatpush1.xpose.msra.mxu0 0.0
    %4736 = vmatprep.subr.mxu0 0.0
    %4737 = vmatpush1.xpose.msra.mxu0 0.0
    %4738 = vmatprep.subr.mxu0 0.0
    %4739 = vmatpush1.xpose.msra.mxu0 0.0
    %4740 = vmatprep.subr.mxu0 0.0
    %4741 = vmatpush1.xpose.msra.mxu0 0.0
    %4742 = vmatprep.subr.mxu0 0.0
    %4743 = vmatpush1.xpose.msra.mxu0 0.0
    %4744 = vmatprep.subr.mxu0 0.0
    %4745 = vmatpush1.xpose.msra.mxu0 0.0
    %4746 = vmatprep.subr.mxu0 0.0
    %4747 = vmatpush1.xpose.msra.mxu0 0.0
    %4748 = vmatprep.subr.mxu0 0.0
    %4749 = vmatpush1.xpose.msra.mxu0 0.0
    %4750 = vmatprep.subr.mxu0 0.0
    %4751 = vmatpush1.xpose.msra.mxu0 0.0
    %4752 = vmatprep.subr.mxu0 0.0
    %4753 = vmatpush1.xpose.msra.mxu0 0.0
    %4754 = vmatprep.subr.mxu0 0.0
    %4755 = vmatpush1.xpose.msra.mxu0 0.0
    %4756 = vmatprep.subr.mxu0 0.0
    %4757 = vmatpush1.xpose.msra.mxu0 0.0
    %4758 = vmatprep.subr.mxu0 0.0
    %4759 = vmatpush1.xpose.msra.mxu0 0.0
    %4760 = vmatprep.subr.mxu0 0.0
    %4761 = vmatpush1.xpose.msra.mxu0 0.0
    %4762 = vmatprep.subr.mxu0 0.0
    %4763 = vmatpush1.xpose.msra.mxu0 0.0
    %4764 = vmatprep.subr.mxu0 0.0
    %4765 = vmatpush1.xpose.msra.mxu0 0.0
    %4766 = vmatprep.subr.mxu0 0.0
    %4767 = vmatpush1.xpose.msra.mxu0 0.0
    %4768 = vmatprep.subr.mxu0 0.0
    %4769 = vmatpush1.xpose.msra.mxu0 0.0
    %4770 = vmatprep.subr.mxu0 0.0
    %4771 = vmatpush1.xpose.msra.mxu0 0.0
    %4772 = vmatprep.subr.mxu0 0.0
    %4773 = vmatpush1.xpose.msra.mxu0 0.0
    %4774 = vmatprep.subr.mxu0 0.0
    %4775 = vmatpush1.xpose.msra.mxu0 0.0
    %4776 = vmatprep.subr.mxu0 0.0
    %4777 = vmatpush1.xpose.msra.mxu0 0.0
    %4778 = vmatprep.subr.mxu0 0.0
    %4779 = vmatpush1.xpose.msra.mxu0 0.0
    %4780 = vmatprep.subr.mxu0 0.0
    %4781 = vmatpush1.xpose.msra.mxu0 0.0
    %4782 = vmatprep.subr.mxu0 0.0
    %4783 = vmatpush1.xpose.msra.mxu0 0.0
    %4784 = vmatprep.mubr.f32.mxu0 0.0
    %4785 = vmatmul.mubr.f32.gmra.mrb[0].mxu0 %v4716
    %v4786 = vpop.f32.mrb[0].mxu0
    %v4787 = vadd.f32 0.0, %v4786
    %v4788 = vpop.f32.mrb[0].mxu0
    %4789 = vdwg.mxu0
    %4790 = vrot.lane.b32.xlu0 %v4039, 112
    %v4791 = vpop.permute.xlu0 %4790
    %4792 = vrot.lane.b32.xlu0 %v4039, 80
    %v4793 = vpop.permute.xlu0 %4792
    %v4794 = vsel %vm283, %v4791, 0
    %v4796 = vsel %vm283, %v4793, 0
    %4798 = vmatprep.subr.mxu0 0.0
    %4799 = vmatpush1.xpose.msra.mxu0 %v4796
    %4800 = vmatprep.subr.mxu0 0.0
    %4801 = vmatpush1.xpose.msra.mxu0 0.0
    %4802 = vmatprep.subr.mxu0 0.0
    %4803 = vmatpush1.xpose.msra.mxu0 0.0
    %4804 = vmatprep.subr.mxu0 0.0
    %4805 = vmatpush1.xpose.msra.mxu0 0.0
    %4806 = vmatprep.subr.mxu0 0.0
    %4807 = vmatpush1.xpose.msra.mxu0 0.0
    %4808 = vmatprep.subr.mxu0 0.0
    %4809 = vmatpush1.xpose.msra.mxu0 0.0
    %4810 = vmatprep.subr.mxu0 0.0
    %4811 = vmatpush1.xpose.msra.mxu0 0.0
    %4812 = vmatprep.subr.mxu0 0.0
    %4813 = vmatpush1.xpose.msra.mxu0 0.0
    %4814 = vmatprep.subr.mxu0 0.0
    %4815 = vmatpush1.xpose.msra.mxu0 0.0
    %4816 = vmatprep.subr.mxu0 0.0
    %4817 = vmatpush1.xpose.msra.mxu0 0.0
    %4818 = vmatprep.subr.mxu0 0.0
    %4819 = vmatpush1.xpose.msra.mxu0 0.0
    %4820 = vmatprep.subr.mxu0 0.0
    %4821 = vmatpush1.xpose.msra.mxu0 0.0
    %4822 = vmatprep.subr.mxu0 0.0
    %4823 = vmatpush1.xpose.msra.mxu0 0.0
    %4824 = vmatprep.subr.mxu0 0.0
    %4825 = vmatpush1.xpose.msra.mxu0 0.0
    %4826 = vmatprep.subr.mxu0 0.0
    %4827 = vmatpush1.xpose.msra.mxu0 0.0
    %4828 = vmatprep.subr.mxu0 0.0
    %4829 = vmatpush1.xpose.msra.mxu0 0.0
    %4830 = vmatprep.subr.mxu0 0.0
    %4831 = vmatpush1.xpose.msra.mxu0 0.0
    %4832 = vmatprep.subr.mxu0 0.0
    %4833 = vmatpush1.xpose.msra.mxu0 0.0
    %4834 = vmatprep.subr.mxu0 0.0
    %4835 = vmatpush1.xpose.msra.mxu0 0.0
    %4836 = vmatprep.subr.mxu0 0.0
    %4837 = vmatpush1.xpose.msra.mxu0 0.0
    %4838 = vmatprep.subr.mxu0 0.0
    %4839 = vmatpush1.xpose.msra.mxu0 0.0
    %4840 = vmatprep.subr.mxu0 0.0
    %4841 = vmatpush1.xpose.msra.mxu0 0.0
    %4842 = vmatprep.subr.mxu0 0.0
    %4843 = vmatpush1.xpose.msra.mxu0 0.0
    %4844 = vmatprep.subr.mxu0 0.0
    %4845 = vmatpush1.xpose.msra.mxu0 0.0
    %4846 = vmatprep.subr.mxu0 0.0
    %4847 = vmatpush1.xpose.msra.mxu0 0.0
    %4848 = vmatprep.subr.mxu0 0.0
    %4849 = vmatpush1.xpose.msra.mxu0 0.0
    %4850 = vmatprep.subr.mxu0 0.0
    %4851 = vmatpush1.xpose.msra.mxu0 0.0
    %4852 = vmatprep.subr.mxu0 0.0
    %4853 = vmatpush1.xpose.msra.mxu0 0.0
    %4854 = vmatprep.subr.mxu0 0.0
    %4855 = vmatpush1.xpose.msra.mxu0 0.0
    %4856 = vmatprep.subr.mxu0 0.0
    %4857 = vmatpush1.xpose.msra.mxu0 0.0
    %4858 = vmatprep.subr.mxu0 0.0
    %4859 = vmatpush1.xpose.msra.mxu0 0.0
    %4860 = vmatprep.subr.mxu0 0.0
    %4861 = vmatpush1.xpose.msra.mxu0 0.0
    %4862 = vmatprep.mubr.f32.mxu0 0.0
    %4863 = vmatmul.mubr.f32.gmra.mrb[0].mxu0 %v4794
    %v4864 = vpop.f32.mrb[0].mxu0
    %v4865 = vadd.f32 0.0, %v4864
    %v4866 = vpop.f32.mrb[0].mxu0
    %4867 = vdwg.mxu0
    %v4868 = vsel %vm283, %v4787, -inf
    %4869 = vmax.xlane.f32.xlu0 %v4868
    %v4870 = vpop.xlane.xlu0 %4869
    %v4871 = vsel %vm283, %v4865, -inf
    %4872 = vmax.xlane.f32.xlu0 %v4871
    %v4873 = vpop.xlane.xlu0 %4872
    %v4874 = vsub.f32 %v4787, %v4870
    %v4875 = vsub.f32 %v4865, %v4873
    %v4876 = vmul.f32 %v4874, 1.442695
    %v4877 = vpow.pop %v4876
    %v4878 = vmul.f32 %v4875, 1.442695
    %v4879 = vpow.pop %v4878
    %v4880 = vsel %vm283, %v4877, 0.0
    %4881 = vadd.xlane.f32.xlu0 %v4880
    %v4882 = vpop.xlane.xlu0 %4881
    %v4883 = vsel %vm283, %v4879, 0.0
    %4884 = vadd.xlane.f32.xlu0 %v4883
    %v4885 = vpop.xlane.xlu0 %4884
    %v4886 = vrcp.pop %v4882
    %v4887 = vrcp.pop %v4885
    %v4888 = vmul.f32 %v4877, %v4886
    %v4889 = vmul.f32 %v4879, %v4887
    %4890 = vrot.lane.b32.xlu0 %v4034, 48
    %v4891 = vpop.permute.xlu0 %4890
    %v4894 = vsel %vm283, %v4888, 0
    %4896 = vmatprep.subr.mxu0 0.0
    %4897 = vmatpush1.msra.mxu0 %v4891
    %4898 = vmatprep.subr.mxu0 0.0
    %4899 = vmatpush1.msra.mxu0 0.0
    %4900 = vmatprep.subr.mxu0 0.0
    %4901 = vmatpush1.msra.mxu0 0.0
    %4902 = vmatprep.subr.mxu0 0.0
    %4903 = vmatpush1.msra.mxu0 0.0
    %4904 = vmatprep.subr.mxu0 0.0
    %4905 = vmatpush1.msra.mxu0 0.0
    %4906 = vmatprep.subr.mxu0 0.0
    %4907 = vmatpush1.msra.mxu0 0.0
    %4908 = vmatprep.subr.mxu0 0.0
    %4909 = vmatpush1.msra.mxu0 0.0
    %4910 = vmatprep.subr.mxu0 0.0
    %4911 = vmatpush1.msra.mxu0 0.0
    %4912 = vmatprep.subr.mxu0 0.0
    %4913 = vmatpush1.msra.mxu0 0.0
    %4914 = vmatprep.subr.mxu0 0.0
    %4915 = vmatpush1.msra.mxu0 0.0
    %4916 = vmatprep.subr.mxu0 0.0
    %4917 = vmatpush1.msra.mxu0 0.0
    %4918 = vmatprep.subr.mxu0 0.0
    %4919 = vmatpush1.msra.mxu0 0.0
    %4920 = vmatprep.subr.mxu0 0.0
    %4921 = vmatpush1.msra.mxu0 0.0
    %4922 = vmatprep.subr.mxu0 0.0
    %4923 = vmatpush1.msra.mxu0 0.0
    %4924 = vmatprep.subr.mxu0 0.0
    %4925 = vmatpush1.msra.mxu0 0.0
    %4926 = vmatprep.subr.mxu0 0.0
    %4927 = vmatpush1.msra.mxu0 0.0
    %4928 = vmatprep.subr.mxu0 0.0
    %4929 = vmatpush1.msra.mxu0 0.0
    %4930 = vmatprep.subr.mxu0 0.0
    %4931 = vmatpush1.msra.mxu0 0.0
    %4932 = vmatprep.subr.mxu0 0.0
    %4933 = vmatpush1.msra.mxu0 0.0
    %4934 = vmatprep.subr.mxu0 0.0
    %4935 = vmatpush1.msra.mxu0 0.0
    %4936 = vmatprep.subr.mxu0 0.0
    %4937 = vmatpush1.msra.mxu0 0.0
    %4938 = vmatprep.subr.mxu0 0.0
    %4939 = vmatpush1.msra.mxu0 0.0
    %4940 = vmatprep.subr.mxu0 0.0
    %4941 = vmatpush1.msra.mxu0 0.0
    %4942 = vmatprep.subr.mxu0 0.0
    %4943 = vmatpush1.msra.mxu0 0.0
    %4944 = vmatprep.subr.mxu0 0.0
    %4945 = vmatpush1.msra.mxu0 0.0
    %4946 = vmatprep.subr.mxu0 0.0
    %4947 = vmatpush1.msra.mxu0 0.0
    %4948 = vmatprep.subr.mxu0 0.0
    %4949 = vmatpush1.msra.mxu0 0.0
    %4950 = vmatprep.subr.mxu0 0.0
    %4951 = vmatpush1.msra.mxu0 0.0
    %4952 = vmatprep.subr.mxu0 0.0
    %4953 = vmatpush1.msra.mxu0 0.0
    %4954 = vmatprep.subr.mxu0 0.0
    %4955 = vmatpush1.msra.mxu0 0.0
    %4956 = vmatprep.subr.mxu0 0.0
    %4957 = vmatpush1.msra.mxu0 0.0
    %4958 = vmatprep.subr.mxu0 0.0
    %4959 = vmatpush1.msra.mxu0 0.0
    %4960 = vmatprep.mubr.f32.mxu0 0.0
    %4961 = vmatmul.mubr.f32.gmra.mrb[0].mxu0 %v4894
    %v4962 = vpop.f32.mrb[0].mxu0
    %v4963 = vadd.f32 0.0, %v4962
    %v4964 = vpop.f32.mrb[0].mxu0
    %4965 = vdwg.mxu0
    %4966 = vrot.lane.b32.xlu0 %v4039, 48
    %v4967 = vpop.permute.xlu0 %4966
    %v4970 = vsel %vm283, %v4889, 0
    %4972 = vmatprep.subr.mxu0 0.0
    %4973 = vmatpush1.msra.mxu0 %v4967
    %4974 = vmatprep.subr.mxu0 0.0
    %4975 = vmatpush1.msra.mxu0 0.0
    %4976 = vmatprep.subr.mxu0 0.0
    %4977 = vmatpush1.msra.mxu0 0.0
    %4978 = vmatprep.subr.mxu0 0.0
    %4979 = vmatpush1.msra.mxu0 0.0
    %4980 = vmatprep.subr.mxu0 0.0
    %4981 = vmatpush1.msra.mxu0 0.0
    %4982 = vmatprep.subr.mxu0 0.0
    %4983 = vmatpush1.msra.mxu0 0.0
    %4984 = vmatprep.subr.mxu0 0.0
    %4985 = vmatpush1.msra.mxu0 0.0
    %4986 = vmatprep.subr.mxu0 0.0
    %4987 = vmatpush1.msra.mxu0 0.0
    %4988 = vmatprep.subr.mxu0 0.0
    %4989 = vmatpush1.msra.mxu0 0.0
    %4990 = vmatprep.subr.mxu0 0.0
    %4991 = vmatpush1.msra.mxu0 0.0
    %4992 = vmatprep.subr.mxu0 0.0
    %4993 = vmatpush1.msra.mxu0 0.0
    %4994 = vmatprep.subr.mxu0 0.0
    %4995 = vmatpush1.msra.mxu0 0.0
    %4996 = vmatprep.subr.mxu0 0.0
    %4997 = vmatpush1.msra.mxu0 0.0
    %4998 = vmatprep.subr.mxu0 0.0
    %4999 = vmatpush1.msra.mxu0 0.0
    %5000 = vmatprep.subr.mxu0 0.0
    %5001 = vmatpush1.msra.mxu0 0.0
    %5002 = vmatprep.subr.mxu0 0.0
    %5003 = vmatpush1.msra.mxu0 0.0
    %5004 = vmatprep.subr.mxu0 0.0
    %5005 = vmatpush1.msra.mxu0 0.0
    %5006 = vmatprep.subr.mxu0 0.0
    %5007 = vmatpush1.msra.mxu0 0.0
    %5008 = vmatprep.subr.mxu0 0.0
    %5009 = vmatpush1.msra.mxu0 0.0
    %5010 = vmatprep.subr.mxu0 0.0
    %5011 = vmatpush1.msra.mxu0 0.0
    %5012 = vmatprep.subr.mxu0 0.0
    %5013 = vmatpush1.msra.mxu0 0.0
    %5014 = vmatprep.subr.mxu0 0.0
    %5015 = vmatpush1.msra.mxu0 0.0
    %5016 = vmatprep.subr.mxu0 0.0
    %5017 = vmatpush1.msra.mxu0 0.0
    %5018 = vmatprep.subr.mxu0 0.0
    %5019 = vmatpush1.msra.mxu0 0.0
    %5020 = vmatprep.subr.mxu0 0.0
    %5021 = vmatpush1.msra.mxu0 0.0
    %5022 = vmatprep.subr.mxu0 0.0
    %5023 = vmatpush1.msra.mxu0 0.0
    %5024 = vmatprep.subr.mxu0 0.0
    %5025 = vmatpush1.msra.mxu0 0.0
    %5026 = vmatprep.subr.mxu0 0.0
    %5027 = vmatpush1.msra.mxu0 0.0
    %5028 = vmatprep.subr.mxu0 0.0
    %5029 = vmatpush1.msra.mxu0 0.0
    %5030 = vmatprep.subr.mxu0 0.0
    %5031 = vmatpush1.msra.mxu0 0.0
    %5032 = vmatprep.subr.mxu0 0.0
    %5033 = vmatpush1.msra.mxu0 0.0
    %5034 = vmatprep.subr.mxu0 0.0
    %5035 = vmatpush1.msra.mxu0 0.0
    %5036 = vmatprep.mubr.f32.mxu0 0.0
    %5037 = vmatmul.mubr.f32.gmra.mrb[0].mxu0 %v4970
    %v5038 = vpop.f32.mrb[0].mxu0
    %v5039 = vadd.f32 0.0, %v5038
    %v5040 = vpop.f32.mrb[0].mxu0
    %5041 = vdwg.mxu0
    %5044 = vrot.lane.b32.xlu0 %v4963, 16
    %v5045 = vpop.permute.xlu0 %5044
    %5046 = vrot.lane.b32.xlu0 %v5039, 16
    %v5047 = vpop.permute.xlu0 %5046
    %5050 = vst.msk [vmem:[#allocation2] sm:$0xff] %vm1290, %v5045
    %5051 = vst.msk [vmem:[#allocation2 + $0x8] sm:$0xff] %vm1290, %v5047
    %5052 = vrot.lane.b32.xlu0 %v4034, 104
    %v5053 = vpop.permute.xlu0 %5052
    %5054 = vrot.lane.b32.xlu0 %v4034, 72
    %v5055 = vpop.permute.xlu0 %5054
    %v5056 = vsel %vm283, %v5053, 0
    %v5058 = vsel %vm283, %v5055, 0
    %5060 = vmatprep.subr.mxu0 0.0
    %5061 = vmatpush1.xpose.msra.mxu0 %v5058
    %5062 = vmatprep.subr.mxu0 0.0
    %5063 = vmatpush1.xpose.msra.mxu0 0.0
    %5064 = vmatprep.subr.mxu0 0.0
    %5065 = vmatpush1.xpose.msra.mxu0 0.0
    %5066 = vmatprep.subr.mxu0 0.0
    %5067 = vmatpush1.xpose.msra.mxu0 0.0
    %5068 = vmatprep.subr.mxu0 0.0
    %5069 = vmatpush1.xpose.msra.mxu0 0.0
    %5070 = vmatprep.subr.mxu0 0.0
    %5071 = vmatpush1.xpose.msra.mxu0 0.0
    %5072 = vmatprep.subr.mxu0 0.0
    %5073 = vmatpush1.xpose.msra.mxu0 0.0
    %5074 = vmatprep.subr.mxu0 0.0
    %5075 = vmatpush1.xpose.msra.mxu0 0.0
    %5076 = vmatprep.subr.mxu0 0.0
    %5077 = vmatpush1.xpose.msra.mxu0 0.0
    %5078 = vmatprep.subr.mxu0 0.0
    %5079 = vmatpush1.xpose.msra.mxu0 0.0
    %5080 = vmatprep.subr.mxu0 0.0
    %5081 = vmatpush1.xpose.msra.mxu0 0.0
    %5082 = vmatprep.subr.mxu0 0.0
    %5083 = vmatpush1.xpose.msra.mxu0 0.0
    %5084 = vmatprep.subr.mxu0 0.0
    %5085 = vmatpush1.xpose.msra.mxu0 0.0
    %5086 = vmatprep.subr.mxu0 0.0
    %5087 = vmatpush1.xpose.msra.mxu0 0.0
    %5088 = vmatprep.subr.mxu0 0.0
    %5089 = vmatpush1.xpose.msra.mxu0 0.0
    %5090 = vmatprep.subr.mxu0 0.0
    %5091 = vmatpush1.xpose.msra.mxu0 0.0
    %5092 = vmatprep.subr.mxu0 0.0
    %5093 = vmatpush1.xpose.msra.mxu0 0.0
    %5094 = vmatprep.subr.mxu0 0.0
    %5095 = vmatpush1.xpose.msra.mxu0 0.0
    %5096 = vmatprep.subr.mxu0 0.0
    %5097 = vmatpush1.xpose.msra.mxu0 0.0
    %5098 = vmatprep.subr.mxu0 0.0
    %5099 = vmatpush1.xpose.msra.mxu0 0.0
    %5100 = vmatprep.subr.mxu0 0.0
    %5101 = vmatpush1.xpose.msra.mxu0 0.0
    %5102 = vmatprep.subr.mxu0 0.0
    %5103 = vmatpush1.xpose.msra.mxu0 0.0
    %5104 = vmatprep.subr.mxu0 0.0
    %5105 = vmatpush1.xpose.msra.mxu0 0.0
    %5106 = vmatprep.subr.mxu0 0.0
    %5107 = vmatpush1.xpose.msra.mxu0 0.0
    %5108 = vmatprep.subr.mxu0 0.0
    %5109 = vmatpush1.xpose.msra.mxu0 0.0
    %5110 = vmatprep.subr.mxu0 0.0
    %5111 = vmatpush1.xpose.msra.mxu0 0.0
    %5112 = vmatprep.subr.mxu0 0.0
    %5113 = vmatpush1.xpose.msra.mxu0 0.0
    %5114 = vmatprep.subr.mxu0 0.0
    %5115 = vmatpush1.xpose.msra.mxu0 0.0
    %5116 = vmatprep.subr.mxu0 0.0
    %5117 = vmatpush1.xpose.msra.mxu0 0.0
    %5118 = vmatprep.subr.mxu0 0.0
    %5119 = vmatpush1.xpose.msra.mxu0 0.0
    %5120 = vmatprep.subr.mxu0 0.0
    %5121 = vmatpush1.xpose.msra.mxu0 0.0
    %5122 = vmatprep.subr.mxu0 0.0
    %5123 = vmatpush1.xpose.msra.mxu0 0.0
    %5124 = vmatprep.mubr.f32.mxu0 0.0
    %5125 = vmatmul.mubr.f32.gmra.mrb[0].mxu0 %v5056
    %v5126 = vpop.f32.mrb[0].mxu0
    %v5127 = vadd.f32 0.0, %v5126
    %v5128 = vpop.f32.mrb[0].mxu0
    %5129 = vdwg.mxu0
    %5130 = vrot.lane.b32.xlu0 %v4039, 104
    %v5131 = vpop.permute.xlu0 %5130
    %5132 = vrot.lane.b32.xlu0 %v4039, 72
    %v5133 = vpop.permute.xlu0 %5132
    %v5134 = vsel %vm283, %v5131, 0
    %v5136 = vsel %vm283, %v5133, 0
    %5138 = vmatprep.subr.mxu0 0.0
    %5139 = vmatpush1.xpose.msra.mxu0 %v5136
    %5140 = vmatprep.subr.mxu0 0.0
    %5141 = vmatpush1.xpose.msra.mxu0 0.0
    %5142 = vmatprep.subr.mxu0 0.0
    %5143 = vmatpush1.xpose.msra.mxu0 0.0
    %5144 = vmatprep.subr.mxu0 0.0
    %5145 = vmatpush1.xpose.msra.mxu0 0.0
    %5146 = vmatprep.subr.mxu0 0.0
    %5147 = vmatpush1.xpose.msra.mxu0 0.0
    %5148 = vmatprep.subr.mxu0 0.0
    %5149 = vmatpush1.xpose.msra.mxu0 0.0
    %5150 = vmatprep.subr.mxu0 0.0
    %5151 = vmatpush1.xpose.msra.mxu0 0.0
    %5152 = vmatprep.subr.mxu0 0.0
    %5153 = vmatpush1.xpose.msra.mxu0 0.0
    %5154 = vmatprep.subr.mxu0 0.0
    %5155 = vmatpush1.xpose.msra.mxu0 0.0
    %5156 = vmatprep.subr.mxu0 0.0
    %5157 = vmatpush1.xpose.msra.mxu0 0.0
    %5158 = vmatprep.subr.mxu0 0.0
    %5159 = vmatpush1.xpose.msra.mxu0 0.0
    %5160 = vmatprep.subr.mxu0 0.0
    %5161 = vmatpush1.xpose.msra.mxu0 0.0
    %5162 = vmatprep.subr.mxu0 0.0
    %5163 = vmatpush1.xpose.msra.mxu0 0.0
    %5164 = vmatprep.subr.mxu0 0.0
    %5165 = vmatpush1.xpose.msra.mxu0 0.0
    %5166 = vmatprep.subr.mxu0 0.0
    %5167 = vmatpush1.xpose.msra.mxu0 0.0
    %5168 = vmatprep.subr.mxu0 0.0
    %5169 = vmatpush1.xpose.msra.mxu0 0.0
    %5170 = vmatprep.subr.mxu0 0.0
    %5171 = vmatpush1.xpose.msra.mxu0 0.0
    %5172 = vmatprep.subr.mxu0 0.0
    %5173 = vmatpush1.xpose.msra.mxu0 0.0
    %5174 = vmatprep.subr.mxu0 0.0
    %5175 = vmatpush1.xpose.msra.mxu0 0.0
    %5176 = vmatprep.subr.mxu0 0.0
    %5177 = vmatpush1.xpose.msra.mxu0 0.0
    %5178 = vmatprep.subr.mxu0 0.0
    %5179 = vmatpush1.xpose.msra.mxu0 0.0
    %5180 = vmatprep.subr.mxu0 0.0
    %5181 = vmatpush1.xpose.msra.mxu0 0.0
    %5182 = vmatprep.subr.mxu0 0.0
    %5183 = vmatpush1.xpose.msra.mxu0 0.0
    %5184 = vmatprep.subr.mxu0 0.0
    %5185 = vmatpush1.xpose.msra.mxu0 0.0
    %5186 = vmatprep.subr.mxu0 0.0
    %5187 = vmatpush1.xpose.msra.mxu0 0.0
    %5188 = vmatprep.subr.mxu0 0.0
    %5189 = vmatpush1.xpose.msra.mxu0 0.0
    %5190 = vmatprep.subr.mxu0 0.0
    %5191 = vmatpush1.xpose.msra.mxu0 0.0
    %5192 = vmatprep.subr.mxu0 0.0
    %5193 = vmatpush1.xpose.msra.mxu0 0.0
    %5194 = vmatprep.subr.mxu0 0.0
    %5195 = vmatpush1.xpose.msra.mxu0 0.0
    %5196 = vmatprep.subr.mxu0 0.0
    %5197 = vmatpush1.xpose.msra.mxu0 0.0
    %5198 = vmatprep.subr.mxu0 0.0
    %5199 = vmatpush1.xpose.msra.mxu0 0.0
    %5200 = vmatprep.subr.mxu0 0.0
    %5201 = vmatpush1.xpose.msra.mxu0 0.0
    %5202 = vmatprep.mubr.f32.mxu0 0.0
    %5203 = vmatmul.mubr.f32.gmra.mrb[0].mxu0 %v5134
    %v5204 = vpop.f32.mrb[0].mxu0
    %v5205 = vadd.f32 0.0, %v5204
    %v5206 = vpop.f32.mrb[0].mxu0
    %5207 = vdwg.mxu0
    %v5208 = vsel %vm283, %v5127, -inf
    %5209 = vmax.xlane.f32.xlu0 %v5208
    %v5210 = vpop.xlane.xlu0 %5209
    %v5211 = vsel %vm283, %v5205, -inf
    %5212 = vmax.xlane.f32.xlu0 %v5211
    %v5213 = vpop.xlane.xlu0 %5212
    %v5214 = vsub.f32 %v5127, %v5210
    %v5215 = vsub.f32 %v5205, %v5213
    %v5216 = vmul.f32 %v5214, 1.442695
    %v5217 = vpow.pop %v5216
    %v5218 = vmul.f32 %v5215, 1.442695
    %v5219 = vpow.pop %v5218
    %v5220 = vsel %vm283, %v5217, 0.0
    %5221 = vadd.xlane.f32.xlu0 %v5220
    %v5222 = vpop.xlane.xlu0 %5221
    %v5223 = vsel %vm283, %v5219, 0.0
    %5224 = vadd.xlane.f32.xlu0 %v5223
    %v5225 = vpop.xlane.xlu0 %5224
    %v5226 = vrcp.pop %v5222
    %v5227 = vrcp.pop %v5225
    %v5228 = vmul.f32 %v5217, %v5226
    %v5229 = vmul.f32 %v5219, %v5227
    %5230 = vrot.lane.b32.xlu0 %v4034, 40
    %v5231 = vpop.permute.xlu0 %5230
    %v5234 = vsel %vm283, %v5228, 0
    %5236 = vmatprep.subr.mxu0 0.0
    %5237 = vmatpush1.msra.mxu0 %v5231
    %5238 = vmatprep.subr.mxu0 0.0
    %5239 = vmatpush1.msra.mxu0 0.0
    %5240 = vmatprep.subr.mxu0 0.0
    %5241 = vmatpush1.msra.mxu0 0.0
    %5242 = vmatprep.subr.mxu0 0.0
    %5243 = vmatpush1.msra.mxu0 0.0
    %5244 = vmatprep.subr.mxu0 0.0
    %5245 = vmatpush1.msra.mxu0 0.0
    %5246 = vmatprep.subr.mxu0 0.0
    %5247 = vmatpush1.msra.mxu0 0.0
    %5248 = vmatprep.subr.mxu0 0.0
    %5249 = vmatpush1.msra.mxu0 0.0
    %5250 = vmatprep.subr.mxu0 0.0
    %5251 = vmatpush1.msra.mxu0 0.0
    %5252 = vmatprep.subr.mxu0 0.0
    %5253 = vmatpush1.msra.mxu0 0.0
    %5254 = vmatprep.subr.mxu0 0.0
    %5255 = vmatpush1.msra.mxu0 0.0
    %5256 = vmatprep.subr.mxu0 0.0
    %5257 = vmatpush1.msra.mxu0 0.0
    %5258 = vmatprep.subr.mxu0 0.0
    %5259 = vmatpush1.msra.mxu0 0.0
    %5260 = vmatprep.subr.mxu0 0.0
    %5261 = vmatpush1.msra.mxu0 0.0
    %5262 = vmatprep.subr.mxu0 0.0
    %5263 = vmatpush1.msra.mxu0 0.0
    %5264 = vmatprep.subr.mxu0 0.0
    %5265 = vmatpush1.msra.mxu0 0.0
    %5266 = vmatprep.subr.mxu0 0.0
    %5267 = vmatpush1.msra.mxu0 0.0
    %5268 = vmatprep.subr.mxu0 0.0
    %5269 = vmatpush1.msra.mxu0 0.0
    %5270 = vmatprep.subr.mxu0 0.0
    %5271 = vmatpush1.msra.mxu0 0.0
    %5272 = vmatprep.subr.mxu0 0.0
    %5273 = vmatpush1.msra.mxu0 0.0
    %5274 = vmatprep.subr.mxu0 0.0
    %5275 = vmatpush1.msra.mxu0 0.0
    %5276 = vmatprep.subr.mxu0 0.0
    %5277 = vmatpush1.msra.mxu0 0.0
    %5278 = vmatprep.subr.mxu0 0.0
    %5279 = vmatpush1.msra.mxu0 0.0
    %5280 = vmatprep.subr.mxu0 0.0
    %5281 = vmatpush1.msra.mxu0 0.0
    %5282 = vmatprep.subr.mxu0 0.0
    %5283 = vmatpush1.msra.mxu0 0.0
    %5284 = vmatprep.subr.mxu0 0.0
    %5285 = vmatpush1.msra.mxu0 0.0
    %5286 = vmatprep.subr.mxu0 0.0
    %5287 = vmatpush1.msra.mxu0 0.0
    %5288 = vmatprep.subr.mxu0 0.0
    %5289 = vmatpush1.msra.mxu0 0.0
    %5290 = vmatprep.subr.mxu0 0.0
    %5291 = vmatpush1.msra.mxu0 0.0
    %5292 = vmatprep.subr.mxu0 0.0
    %5293 = vmatpush1.msra.mxu0 0.0
    %5294 = vmatprep.subr.mxu0 0.0
    %5295 = vmatpush1.msra.mxu0 0.0
    %5296 = vmatprep.subr.mxu0 0.0
    %5297 = vmatpush1.msra.mxu0 0.0
    %5298 = vmatprep.subr.mxu0 0.0
    %5299 = vmatpush1.msra.mxu0 0.0
    %5300 = vmatprep.mubr.f32.mxu0 0.0
    %5301 = vmatmul.mubr.f32.gmra.mrb[0].mxu0 %v5234
    %v5302 = vpop.f32.mrb[0].mxu0
    %v5303 = vadd.f32 0.0, %v5302
    %v5304 = vpop.f32.mrb[0].mxu0
    %5305 = vdwg.mxu0
    %5306 = vrot.lane.b32.xlu0 %v4039, 40
    %v5307 = vpop.permute.xlu0 %5306
    %v5310 = vsel %vm283, %v5229, 0
    %5312 = vmatprep.subr.mxu0 0.0
    %5313 = vmatpush1.msra.mxu0 %v5307
    %5314 = vmatprep.subr.mxu0 0.0
    %5315 = vmatpush1.msra.mxu0 0.0
    %5316 = vmatprep.subr.mxu0 0.0
    %5317 = vmatpush1.msra.mxu0 0.0
    %5318 = vmatprep.subr.mxu0 0.0
    %5319 = vmatpush1.msra.mxu0 0.0
    %5320 = vmatprep.subr.mxu0 0.0
    %5321 = vmatpush1.msra.mxu0 0.0
    %5322 = vmatprep.subr.mxu0 0.0
    %5323 = vmatpush1.msra.mxu0 0.0
    %5324 = vmatprep.subr.mxu0 0.0
    %5325 = vmatpush1.msra.mxu0 0.0
    %5326 = vmatprep.subr.mxu0 0.0
    %5327 = vmatpush1.msra.mxu0 0.0
    %5328 = vmatprep.subr.mxu0 0.0
    %5329 = vmatpush1.msra.mxu0 0.0
    %5330 = vmatprep.subr.mxu0 0.0
    %5331 = vmatpush1.msra.mxu0 0.0
    %5332 = vmatprep.subr.mxu0 0.0
    %5333 = vmatpush1.msra.mxu0 0.0
    %5334 = vmatprep.subr.mxu0 0.0
    %5335 = vmatpush1.msra.mxu0 0.0
    %5336 = vmatprep.subr.mxu0 0.0
    %5337 = vmatpush1.msra.mxu0 0.0
    %5338 = vmatprep.subr.mxu0 0.0
    %5339 = vmatpush1.msra.mxu0 0.0
    %5340 = vmatprep.subr.mxu0 0.0
    %5341 = vmatpush1.msra.mxu0 0.0
    %5342 = vmatprep.subr.mxu0 0.0
    %5343 = vmatpush1.msra.mxu0 0.0
    %5344 = vmatprep.subr.mxu0 0.0
    %5345 = vmatpush1.msra.mxu0 0.0
    %5346 = vmatprep.subr.mxu0 0.0
    %5347 = vmatpush1.msra.mxu0 0.0
    %5348 = vmatprep.subr.mxu0 0.0
    %5349 = vmatpush1.msra.mxu0 0.0
    %5350 = vmatprep.subr.mxu0 0.0
    %5351 = vmatpush1.msra.mxu0 0.0
    %5352 = vmatprep.subr.mxu0 0.0
    %5353 = vmatpush1.msra.mxu0 0.0
    %5354 = vmatprep.subr.mxu0 0.0
    %5355 = vmatpush1.msra.mxu0 0.0
    %5356 = vmatprep.subr.mxu0 0.0
    %5357 = vmatpush1.msra.mxu0 0.0
    %5358 = vmatprep.subr.mxu0 0.0
    %5359 = vmatpush1.msra.mxu0 0.0
    %5360 = vmatprep.subr.mxu0 0.0
    %5361 = vmatpush1.msra.mxu0 0.0
    %5362 = vmatprep.subr.mxu0 0.0
    %5363 = vmatpush1.msra.mxu0 0.0
    %5364 = vmatprep.subr.mxu0 0.0
    %5365 = vmatpush1.msra.mxu0 0.0
    %5366 = vmatprep.subr.mxu0 0.0
    %5367 = vmatpush1.msra.mxu0 0.0
    %5368 = vmatprep.subr.mxu0 0.0
    %5369 = vmatpush1.msra.mxu0 0.0
    %5370 = vmatprep.subr.mxu0 0.0
    %5371 = vmatpush1.msra.mxu0 0.0
    %5372 = vmatprep.subr.mxu0 0.0
    %5373 = vmatpush1.msra.mxu0 0.0
    %5374 = vmatprep.subr.mxu0 0.0
    %5375 = vmatpush1.msra.mxu0 0.0
    %5376 = vmatprep.mubr.f32.mxu0 0.0
    %5377 = vmatmul.mubr.f32.gmra.mrb[0].mxu0 %v5310
    %v5378 = vpop.f32.mrb[0].mxu0
    %v5379 = vadd.f32 0.0, %v5378
    %v5380 = vpop.f32.mrb[0].mxu0
    %5381 = vdwg.mxu0
    %5384 = vrot.lane.b32.xlu0 %v5303, 24
    %v5385 = vpop.permute.xlu0 %5384
    %5386 = vrot.lane.b32.xlu0 %v5379, 24
    %v5387 = vpop.permute.xlu0 %5386
    %5390 = vst.msk [vmem:[#allocation2] sm:$0xff] %vm1631, %v5385
    %5391 = vst.msk [vmem:[#allocation2 + $0x8] sm:$0xff] %vm1631, %v5387
    %v5392 = vld [vmem:[#allocation2] sm:$0xff]
    %v5393 = vld [vmem:[#allocation2 + $0x8] sm:$0xff]
    %v5395 = vlaneseq
    %v5396 = vshrl.u32 %v5395, 7
    %v5397 = vsub.s32 0, %v5396
    %v5398 = vrot.slane %v3930, %v5397
    %v5401 = vsel %vm198, %v5392, 0
    %v5404 = vsel %vm198, %v5393, 0
    %5406 = vmatprep.subr.mxu0 0.0
    %5407 = vmatpush1.msra.mxu0 %v3925
    %5408 = vmatprep.subr.mxu0 0.0
    %5409 = vmatpush1.msra.mxu0 %v3926
    %5410 = vmatprep.subr.mxu0 0.0
    %5411 = vmatpush1.msra.mxu0 %v3927
    %5412 = vmatprep.subr.mxu0 0.0
    %5413 = vmatpush1.msra.mxu0 %v3928
    %5414 = vmatprep.subr.mxu0 0.0
    %5415 = vmatpush1.msra.mxu0 0.0
    %5416 = vmatprep.subr.mxu0 0.0
    %5417 = vmatpush1.msra.mxu0 0.0
    %5418 = vmatprep.subr.mxu0 0.0
    %5419 = vmatpush1.msra.mxu0 0.0
    %5420 = vmatprep.subr.mxu0 0.0
    %5421 = vmatpush1.msra.mxu0 0.0
    %5422 = vmatprep.subr.mxu0 0.0
    %5423 = vmatpush1.msra.mxu0 0.0
    %5424 = vmatprep.subr.mxu0 0.0
    %5425 = vmatpush1.msra.mxu0 0.0
    %5426 = vmatprep.subr.mxu0 0.0
    %5427 = vmatpush1.msra.mxu0 0.0
    %5428 = vmatprep.subr.mxu0 0.0
    %5429 = vmatpush1.msra.mxu0 0.0
    %5430 = vmatprep.subr.mxu0 0.0
    %5431 = vmatpush1.msra.mxu0 0.0
    %5432 = vmatprep.subr.mxu0 0.0
    %5433 = vmatpush1.msra.mxu0 0.0
    %5434 = vmatprep.subr.mxu0 0.0
    %5435 = vmatpush1.msra.mxu0 0.0
    %5436 = vmatprep.subr.mxu0 0.0
    %5437 = vmatpush1.msra.mxu0 0.0
    %5438 = vmatprep.subr.mxu0 0.0
    %5439 = vmatpush1.msra.mxu0 0.0
    %5440 = vmatprep.subr.mxu0 0.0
    %5441 = vmatpush1.msra.mxu0 0.0
    %5442 = vmatprep.subr.mxu0 0.0
    %5443 = vmatpush1.msra.mxu0 0.0
    %5444 = vmatprep.subr.mxu0 0.0
    %5445 = vmatpush1.msra.mxu0 0.0
    %5446 = vmatprep.subr.mxu0 0.0
    %5447 = vmatpush1.msra.mxu0 0.0
    %5448 = vmatprep.subr.mxu0 0.0
    %5449 = vmatpush1.msra.mxu0 0.0
    %5450 = vmatprep.subr.mxu0 0.0
    %5451 = vmatpush1.msra.mxu0 0.0
    %5452 = vmatprep.subr.mxu0 0.0
    %5453 = vmatpush1.msra.mxu0 0.0
    %5454 = vmatprep.subr.mxu0 0.0
    %5455 = vmatpush1.msra.mxu0 0.0
    %5456 = vmatprep.subr.mxu0 0.0
    %5457 = vmatpush1.msra.mxu0 0.0
    %5458 = vmatprep.subr.mxu0 0.0
    %5459 = vmatpush1.msra.mxu0 0.0
    %5460 = vmatprep.subr.mxu0 0.0
    %5461 = vmatpush1.msra.mxu0 0.0
    %5462 = vmatprep.subr.mxu0 0.0
    %5463 = vmatpush1.msra.mxu0 0.0
    %5464 = vmatprep.subr.mxu0 0.0
    %5465 = vmatpush1.msra.mxu0 0.0
    %5466 = vmatprep.subr.mxu0 0.0
    %5467 = vmatpush1.msra.mxu0 0.0
    %5468 = vmatprep.subr.mxu0 0.0
    %5469 = vmatpush1.msra.mxu0 0.0
    %5470 = vmatprep.mubr.f32.mxu0 0.0
    %5471 = vmatmul.mubr.f32.gmra.mrb[0].mxu0 %v5401
    %v5472 = vpop.f32.mrb[0].mxu0
    %v5473 = vadd.f32 %v5398, %v5472
    %v5474 = vpop.f32.mrb[0].mxu0
    %5475 = vmatprep.mubr.f32.mxu0 0.0
    %5476 = vmatmul.mubr.f32.gmra.mrb[0].mxu0 %v5404
    %v5477 = vpop.f32.mrb[0].mxu0
    %v5478 = vadd.f32 %v5398, %v5477
    %v5479 = vpop.f32.mrb[0].mxu0
    %5480 = vdwg.mxu0
    %v5481 = vadd.f32 %v3915, %v5473
    %v5482 = vadd.f32 %v3916, %v5478
    %v5483 = vsel %vm198, %v5481, 0.0
    %5484 = vadd.xlane.f32.xlu0 %v5483
    %v5485 = vpop.xlane.xlu0 %5484
    %v5486 = vsel %vm198, %v5482, 0.0
    %5487 = vadd.xlane.f32.xlu0 %v5486
    %v5488 = vpop.xlane.xlu0 %5487
    %v5489 = vmul.f32 %v5485, %v1731
    %v5490 = vmul.f32 %v5488, %v1731
    %v5491 = vsub.f32 %v5481, %v5489
    %v5492 = vsub.f32 %v5482, %v5490
    %v5493 = vmul.f32 %v5491, %v5491
    %v5494 = vmul.f32 %v5492, %v5492
    %v5495 = vsel %vm198, %v5493, 0.0
    %5496 = vadd.xlane.f32.xlu0 %v5495
    %v5497 = vpop.xlane.xlu0 %5496
    %v5498 = vsel %vm198, %v5494, 0.0
    %5499 = vadd.xlane.f32.xlu0 %v5498
    %v5500 = vpop.xlane.xlu0 %5499
    %v5501 = vmul.f32 %v5497, %v1731
    %v5502 = vmul.f32 %v5500, %v1731
    %v5503 = vadd.f32 %v5501, 1e-05
    %v5504 = vadd.f32 %v5502, 1e-05
    %v5505 = vrsqrt.pop %v5503
    %v5506 = vrsqrt.pop %v5504
    %v5507 = vmul.f32 %v5491, %v5505
    %v5508 = vmul.f32 %v5492, %v5506
    %v5510 = vlaneseq
    %v5511 = vshrl.u32 %v5510, 7
    %v5512 = vsub.s32 0, %v5511
    %v5513 = vrot.slane %v3932, %v5512
    %v5515 = vmul.f32 %v5507, %v5513
    %v5516 = vmul.f32 %v5508, %v5513
    %v5518 = vlaneseq
    %v5519 = vshrl.u32 %v5518, 7
    %v5520 = vsub.s32 0, %v5519
    %v5521 = vrot.slane %v3934, %v5520
    %v5523 = vadd.f32 %v5515, %v5521
    %v5524 = vadd.f32 %v5516, %v5521
    %v5526 = vlaneseq
    %v5527 = vshrl.u32 %v5526, 7
    %v5528 = vsub.s32 0, %v5527
    %v5529 = vrot.slane %v3941, %v5528
    %v5532 = vsel %vm198, %v5523, 0
    %v5535 = vsel %vm198, %v5524, 0
    %5537 = vmatprep.subr.mxu0 0.0
    %5538 = vmatpush1.msra.mxu0 %v3936
    %5539 = vmatprep.subr.mxu0 0.0
    %5540 = vmatpush1.msra.mxu0 %v3937
    %5541 = vmatprep.subr.mxu0 0.0
    %5542 = vmatpush1.msra.mxu0 %v3938
    %5543 = vmatprep.subr.mxu0 0.0
    %5544 = vmatpush1.msra.mxu0 %v3939
    %5545 = vmatprep.subr.mxu0 0.0
    %5546 = vmatpush1.msra.mxu0 0.0
    %5547 = vmatprep.subr.mxu0 0.0
    %5548 = vmatpush1.msra.mxu0 0.0
    %5549 = vmatprep.subr.mxu0 0.0
    %5550 = vmatpush1.msra.mxu0 0.0
    %5551 = vmatprep.subr.mxu0 0.0
    %5552 = vmatpush1.msra.mxu0 0.0
    %5553 = vmatprep.subr.mxu0 0.0
    %5554 = vmatpush1.msra.mxu0 0.0
    %5555 = vmatprep.subr.mxu0 0.0
    %5556 = vmatpush1.msra.mxu0 0.0
    %5557 = vmatprep.subr.mxu0 0.0
    %5558 = vmatpush1.msra.mxu0 0.0
    %5559 = vmatprep.subr.mxu0 0.0
    %5560 = vmatpush1.msra.mxu0 0.0
    %5561 = vmatprep.subr.mxu0 0.0
    %5562 = vmatpush1.msra.mxu0 0.0
    %5563 = vmatprep.subr.mxu0 0.0
    %5564 = vmatpush1.msra.mxu0 0.0
    %5565 = vmatprep.subr.mxu0 0.0
    %5566 = vmatpush1.msra.mxu0 0.0
    %5567 = vmatprep.subr.mxu0 0.0
    %5568 = vmatpush1.msra.mxu0 0.0
    %5569 = vmatprep.subr.mxu0 0.0
    %5570 = vmatpush1.msra.mxu0 0.0
    %5571 = vmatprep.subr.mxu0 0.0
    %5572 = vmatpush1.msra.mxu0 0.0
    %5573 = vmatprep.subr.mxu0 0.0
    %5574 = vmatpush1.msra.mxu0 0.0
    %5575 = vmatprep.subr.mxu0 0.0
    %5576 = vmatpush1.msra.mxu0 0.0
    %5577 = vmatprep.subr.mxu0 0.0
    %5578 = vmatpush1.msra.mxu0 0.0
    %5579 = vmatprep.subr.mxu0 0.0
    %5580 = vmatpush1.msra.mxu0 0.0
    %5581 = vmatprep.subr.mxu0 0.0
    %5582 = vmatpush1.msra.mxu0 0.0
    %5583 = vmatprep.subr.mxu0 0.0
    %5584 = vmatpush1.msra.mxu0 0.0
    %5585 = vmatprep.subr.mxu0 0.0
    %5586 = vmatpush1.msra.mxu0 0.0
    %5587 = vmatprep.subr.mxu0 0.0
    %5588 = vmatpush1.msra.mxu0 0.0
    %5589 = vmatprep.subr.mxu0 0.0
    %5590 = vmatpush1.msra.mxu0 0.0
    %5591 = vmatprep.subr.mxu0 0.0
    %5592 = vmatpush1.msra.mxu0 0.0
    %5593 = vmatprep.subr.mxu0 0.0
    %5594 = vmatpush1.msra.mxu0 0.0
    %5595 = vmatprep.subr.mxu0 0.0
    %5596 = vmatpush1.msra.mxu0 0.0
    %5597 = vmatprep.subr.mxu0 0.0
    %5598 = vmatpush1.msra.mxu0 0.0
    %5599 = vmatprep.subr.mxu0 0.0
    %5600 = vmatpush1.msra.mxu0 0.0
    %5601 = vmatprep.mubr.f32.mxu0 0.0
    %5602 = vmatmul.mubr.f32.gmra.mrb[0].mxu0 %v5532
    %v5603 = vpop.f32.mrb[0].mxu0
    %v5604 = vadd.f32 %v5529, %v5603
    %v5605 = vpop.f32.mrb[0].mxu0
    %5606 = vmatprep.mubr.f32.mxu0 0.0
    %5607 = vmatmul.mubr.f32.gmra.mrb[0].mxu0 %v5535
    %v5608 = vpop.f32.mrb[0].mxu0
    %v5609 = vadd.f32 %v5529, %v5608
    %v5610 = vpop.f32.mrb[0].mxu0
    %5611 = vdwg.mxu0
    %v5612 = vmul.f32 %v5604, 0.5
    %v5613 = vmul.f32 %v5609, 0.5
    %v5614 = vmul.f32 %v5604, 0.70710677
    %v5615 = vmul.f32 %v5609, 0.70710677
    %vm5616 = vcmp.ge.f32.partialorder %v5614, 0.0
    %vm5617 = vcmp.ge.f32.partialorder %v5615, 0.0
    %v5618 = vsel %vm5616, 1.0, -1.0
    %v5619 = vsel %vm5617, 1.0, -1.0
    %v5620 = vand.u32 2147483647, %v5614
    %v5621 = vand.u32 2147483647, %v5615
    %v5622 = vmul.f32 %v5620, 0.3275911
    %v5623 = vmul.f32 %v5621, 0.3275911
    %v5624 = vadd.f32 %v5622, 1.0
    %v5625 = vadd.f32 %v5623, 1.0
    %v5626 = vrcp.pop %v5624
    %v5627 = vrcp.pop %v5625
    %v5628 = vmul.f32 %v5626, 1.0614054
    %v5629 = vmul.f32 %v5627, 1.0614054
    %v5630 = vadd.f32 %v5628, -1.4531521
    %v5631 = vadd.f32 %v5629, -1.4531521
    %v5632 = vmul.f32 %v5630, %v5626
    %v5633 = vmul.f32 %v5631, %v5627
    %v5634 = vadd.f32 %v5632, 1.4214138
    %v5635 = vadd.f32 %v5633, 1.4214138
    %v5636 = vmul.f32 %v5634, %v5626
    %v5637 = vmul.f32 %v5635, %v5627
    %v5638 = vadd.f32 %v5636, -0.28449672
    %v5639 = vadd.f32 %v5637, -0.28449672
    %v5640 = vmul.f32 %v5638, %v5626
    %v5641 = vmul.f32 %v5639, %v5627
    %v5642 = vadd.f32 %v5640, 0.2548296
    %v5643 = vadd.f32 %v5641, 0.2548296
    %v5644 = vmul.f32 %v5642, %v5626
    %v5645 = vmul.f32 %v5643, %v5627
    %v5646 = vsub.f32 0.0, %v5620
    %v5647 = vsub.f32 0.0, %v5621
    %v5648 = vmul.f32 %v5646, %v5620
    %v5649 = vmul.f32 %v5647, %v5621
    %v5650 = vmul.f32 %v5648, 1.442695
    %v5651 = vpow.pop %v5650
    %v5652 = vmul.f32 %v5649, 1.442695
    %v5653 = vpow.pop %v5652
    %v5654 = vmul.f32 %v5644, %v5651
    %v5655 = vmul.f32 %v5645, %v5653
    %v5656 = vsub.f32 1.0, %v5654
    %v5657 = vsub.f32 1.0, %v5655
    %v5658 = vmul.f32 %v5618, %v5656
    %v5659 = vmul.f32 %v5619, %v5657
    %v5660 = vadd.f32 %v5658, 1.0
    %v5661 = vadd.f32 %v5659, 1.0
    %v5662 = vmul.f32 %v5612, %v5660
    %v5663 = vmul.f32 %v5613, %v5661
    %v5665 = vlaneseq
    %v5666 = vshrl.u32 %v5665, 7
    %v5667 = vsub.s32 0, %v5666
    %v5668 = vrot.slane %v3950, %v5667
    %v5671 = vsel %vm1913, %v5662, 0
    %v5674 = vsel %vm1913, %v5663, 0
    %5676 = vmatprep.subr.mxu0 0.0
    %5677 = vmatpush1.msra.mxu0 %v3943
    %5678 = vmatprep.subr.mxu0 0.0
    %5679 = vmatpush1.msra.mxu0 %v3944
    %5680 = vmatprep.subr.mxu0 0.0
    %5681 = vmatpush1.msra.mxu0 %v3945
    %5682 = vmatprep.subr.mxu0 0.0
    %5683 = vmatpush1.msra.mxu0 %v3946
    %5684 = vmatprep.subr.mxu0 0.0
    %5685 = vmatpush1.msra.mxu0 %v3947
    %5686 = vmatprep.subr.mxu0 0.0
    %5687 = vmatpush1.msra.mxu0 %v3948
    %5688 = vmatprep.subr.mxu0 0.0
    %5689 = vmatpush1.msra.mxu0 0.0
    %5690 = vmatprep.subr.mxu0 0.0
    %5691 = vmatpush1.msra.mxu0 0.0
    %5692 = vmatprep.subr.mxu0 0.0
    %5693 = vmatpush1.msra.mxu0 0.0
    %5694 = vmatprep.subr.mxu0 0.0
    %5695 = vmatpush1.msra.mxu0 0.0
    %5696 = vmatprep.subr.mxu0 0.0
    %5697 = vmatpush1.msra.mxu0 0.0
    %5698 = vmatprep.subr.mxu0 0.0
    %5699 = vmatpush1.msra.mxu0 0.0
    %5700 = vmatprep.subr.mxu0 0.0
    %5701 = vmatpush1.msra.mxu0 0.0
    %5702 = vmatprep.subr.mxu0 0.0
    %5703 = vmatpush1.msra.mxu0 0.0
    %5704 = vmatprep.subr.mxu0 0.0
    %5705 = vmatpush1.msra.mxu0 0.0
    %5706 = vmatprep.subr.mxu0 0.0
    %5707 = vmatpush1.msra.mxu0 0.0
    %5708 = vmatprep.subr.mxu0 0.0
    %5709 = vmatpush1.msra.mxu0 0.0
    %5710 = vmatprep.subr.mxu0 0.0
    %5711 = vmatpush1.msra.mxu0 0.0
    %5712 = vmatprep.subr.mxu0 0.0
    %5713 = vmatpush1.msra.mxu0 0.0
    %5714 = vmatprep.subr.mxu0 0.0
    %5715 = vmatpush1.msra.mxu0 0.0
    %5716 = vmatprep.subr.mxu0 0.0
    %5717 = vmatpush1.msra.mxu0 0.0
    %5718 = vmatprep.subr.mxu0 0.0
    %5719 = vmatpush1.msra.mxu0 0.0
    %5720 = vmatprep.subr.mxu0 0.0
    %5721 = vmatpush1.msra.mxu0 0.0
    %5722 = vmatprep.subr.mxu0 0.0
    %5723 = vmatpush1.msra.mxu0 0.0
    %5724 = vmatprep.subr.mxu0 0.0
    %5725 = vmatpush1.msra.mxu0 0.0
    %5726 = vmatprep.subr.mxu0 0.0
    %5727 = vmatpush1.msra.mxu0 0.0
    %5728 = vmatprep.subr.mxu0 0.0
    %5729 = vmatpush1.msra.mxu0 0.0
    %5730 = vmatprep.subr.mxu0 0.0
    %5731 = vmatpush1.msra.mxu0 0.0
    %5732 = vmatprep.subr.mxu0 0.0
    %5733 = vmatpush1.msra.mxu0 0.0
    %5734 = vmatprep.subr.mxu0 0.0
    %5735 = vmatpush1.msra.mxu0 0.0
    %5736 = vmatprep.subr.mxu0 0.0
    %5737 = vmatpush1.msra.mxu0 0.0
    %5738 = vmatprep.subr.mxu0 0.0
    %5739 = vmatpush1.msra.mxu0 0.0
    %5740 = vmatprep.mubr.f32.mxu0 0.0
    %5741 = vmatmul.mubr.f32.gmra.mrb[0].mxu0 %v5671
    %v5742 = vpop.f32.mrb[0].mxu0
    %v5743 = vadd.f32 %v5668, %v5742
    %v5744 = vpop.f32.mrb[0].mxu0
    %5745 = vmatprep.mubr.f32.mxu0 0.0
    %5746 = vmatmul.mubr.f32.gmra.mrb[0].mxu0 %v5674
    %v5747 = vpop.f32.mrb[0].mxu0
    %v5748 = vadd.f32 %v5668, %v5747
    %v5749 = vpop.f32.mrb[0].mxu0
    %5750 = vdwg.mxu0
    %v5751 = vadd.f32 %v5523, %v5743
    %v5752 = vadd.f32 %v5524, %v5748
    %v5753 = vsel %vm198, %v5751, 0.0
    %5754 = vadd.xlane.f32.xlu0 %v5753
    %v5755 = vpop.xlane.xlu0 %5754
    %v5756 = vsel %vm198, %v5752, 0.0
    %5757 = vadd.xlane.f32.xlu0 %v5756
    %v5758 = vpop.xlane.xlu0 %5757
    %v5759 = vmul.f32 %v5755, %v1731
    %v5760 = vmul.f32 %v5758, %v1731
    %v5761 = vsub.f32 %v5751, %v5759
    %v5762 = vsub.f32 %v5752, %v5760
    %v5763 = vmul.f32 %v5761, %v5761
    %v5764 = vmul.f32 %v5762, %v5762
    %v5765 = vsel %vm198, %v5763, 0.0
    %5766 = vadd.xlane.f32.xlu0 %v5765
    %v5767 = vpop.xlane.xlu0 %5766
    %v5768 = vsel %vm198, %v5764, 0.0
    %5769 = vadd.xlane.f32.xlu0 %v5768
    %v5770 = vpop.xlane.xlu0 %5769
    %v5771 = vmul.f32 %v5767, %v1731
    %v5772 = vmul.f32 %v5770, %v1731
    %v5773 = vadd.f32 %v5771, 1e-05
    %v5774 = vadd.f32 %v5772, 1e-05
    %v5775 = vrsqrt.pop %v5773
    %v5776 = vrsqrt.pop %v5774
    %v5777 = vmul.f32 %v5761, %v5775
    %v5778 = vmul.f32 %v5762, %v5776
    %v5780 = vlaneseq
    %v5781 = vshrl.u32 %v5780, 7
    %v5782 = vsub.s32 0, %v5781
    %v5783 = vrot.slane %v3952, %v5782
    %v5785 = vmul.f32 %v5777, %v5783
    %v5786 = vmul.f32 %v5778, %v5783
    %v5788 = vlaneseq
    %v5789 = vshrl.u32 %v5788, 7
    %v5790 = vsub.s32 0, %v5789
    %v5791 = vrot.slane %v3954, %v5790
    %v5793 = vadd.f32 %v5785, %v5791
    %v5794 = vadd.f32 %v5786, %v5791
    %5795 = vst.msk [vmem:[#allocation14] sm:$0xff] %vm198, %v5793
    %5796 = vst.msk [vmem:[#allocation14 + $0x8] sm:$0xff] %vm198, %v5794
    // Predicated region
    $region90: #{tpu_custom_call.1} parent=1 // pred_check
      _
    $region91: #{tpu_custom_call.1} parent=1 // pred_check_branch
      %5798 = sbr.rel (0) target = $region93
    $region92: #{tpu_custom_call.1} parent=1 // pred_region
      %s5800 = ssub.s32 256, 256
      %5801 = vsyncadd [#allocation5], %s5800
      %s5802 = sshll.u32 [#allocation14], 4
      %s5803 = int_to_ptr.vmem [resolvable:$true] %s5802
      %5808 = dma.vmem_to_hbm [thread:$0]  %s5803, 256, %s16, [#allocation5], 128, 128, 8
    $region93: #{tpu_custom_call.1} parent=1 // pred_fallthru
      _
    // Predicated region
    $region94: #{tpu_custom_call.1} parent=1 // pred_check
      _
    $region95: #{tpu_custom_call.1} parent=1 // pred_check_branch
      %5810 = sbr.rel (0) target = $region97
    $region96: #{tpu_custom_call.1} parent=1 // pred_region
      %5811 = dma.done [#allocation5], 256
    $region97: #{tpu_custom_call.1} parent=1 // pred_fallthru
      _
    %5812 = vsyncpa [#allocation4], 1
    %5813 = vsyncpa [#allocation7], 1
    %5814 = vsyncpa [#allocation10], 1
    %5815 = vsyncpa [#allocation13], 1
    %5816 = vsyncpa [#allocation5], 1

</llo_original>
